<compile_context>
chip_gen: v7x
topology: tpu7x:2x2x1
jax: 0.10.0
libtpu: 0.0.40
codegen_flags: <defaults>
</compile_context>

<pallas_src>
import functools

import jax
import jax.numpy as jnp
from jax.experimental import pallas as pl
from jax.experimental.pallas import tpu as pltpu

BN_EPS = 1e-5


def _full_spec(shape):
    """Whole-array block (valid since block dims == full array dims)."""
    zeros = (0,) * len(shape)
    return pl.BlockSpec(shape, lambda: zeros)


def _bn_affine(gamma, beta, mean, var):
    scale = gamma / jnp.sqrt(var + BN_EPS)
    return scale, beta - mean * scale


# ---------------------------------------------------------------------------
# Kernel 1: conv1 -> ReLU -> BN1 -> conv2 -> ReLU -> BN2, fully VMEM resident.
#   p1_ref : (P1, K1)        zero-padded im2col of the input for conv1
#   w1_ref : (K1, C1)        conv1 weight as a matrix
#   w2_ref : (k2*k2, C1, C2) conv2 per-tap weight matrices
#   o_ref  : (N1, C2)        conv2-block output on the FULL conv1 frame (rows
#                            at invalid conv2 positions hold finite garbage;
#                            they are zeroed by the padded fc1 weight later)
#   a1_ref : (P1, C1)        VMEM scratch holding the conv1-block activation
# ---------------------------------------------------------------------------
def _conv_pipeline_kernel(p1_ref, w1_ref, b1_ref, s1_ref, t1_ref,
                          w2_ref, b2_ref, s2_ref, t2_ref,
                          o_ref, a1_ref, *, n_rows, row_stride, k2):
    # conv1 (single MXU matmul) + bias + ReLU + BN1 affine, kept in VMEM.
    z1 = jnp.dot(p1_ref[...], w1_ref[...], preferred_element_type=jnp.float32)
    a1_ref[...] = jnp.maximum(z1 + b1_ref[...], 0.0) * s1_ref[...] + t1_ref[...]

    # conv2 as k2*k2 accumulated per-tap matmuls on shifted windows of a1.
    acc = None
    for dy in range(k2):
        for dx in range(k2):
            off = dy * row_stride + dx                    # static shift
            tap = a1_ref[pl.ds(off, n_rows), :]           # (n_rows, C1)
            wt = w2_ref[dy * k2 + dx]                      # (C1, C2)
            part = jnp.dot(tap, wt, preferred_element_type=jnp.float32)
            acc = part if acc is None else acc + part

    # conv2 bias + ReLU + BN2 affine.
    o_ref[...] = (jnp.maximum(acc + b2_ref[...], 0.0) * s2_ref[...]
                  + t2_ref[...]).astype(o_ref.dtype)


# ---------------------------------------------------------------------------
# Kernel 2: fc1 + fc2 (no activation between them, matching the module).
# ---------------------------------------------------------------------------
def _fc_head_kernel(x_ref, w1_ref, b1_ref, w2_ref, b2_ref, o_ref):
    h = (jnp.dot(x_ref[...], w1_ref[...], preferred_element_type=jnp.float32)
         + b1_ref[...])
    o_ref[...] = (jnp.dot(h, w2_ref[...], preferred_element_type=jnp.float32)
                  + b2_ref[...]).astype(o_ref.dtype)


# ---------------------------------------------------------------------------
# One-time parameter re-layout / folding (hoisted out of the per-call path).
# ---------------------------------------------------------------------------
def prepare_params(p, seq_len, input_dim):
    conv1_w, conv2_w = p['conv1_w'], p['conv2_w']
    C1, Ci1, k1, _ = conv1_w.shape
    C2, _, k2, _ = conv2_w.shape
    assert Ci1 == 1, "TINY_CONV has a single input channel"
    H1, W1 = seq_len - k1 + 1, input_dim - k1 + 1         # conv1 output frame
    H2, W2 = H1 - k2 + 1, W1 - k2 + 1                     # conv2 output frame

    # Conv weights as matrices; feature order (dy, dx, c_in) matches im2col.
    w1m = jnp.transpose(conv1_w, (2, 3, 1, 0)).reshape(k1 * k1 * Ci1, C1)
    w2t = jnp.transpose(conv2_w, (2, 3, 1, 0)).reshape(k2 * k2, C1, C2)

    s1, t1 = _bn_affine(p['bn1_w'], p['bn1_b'], p['bn1_mean'], p['bn1_var'])
    s2, t2 = _bn_affine(p['bn2_w'], p['bn2_b'], p['bn2_mean'], p['bn2_var'])

    # fc1 weight: PyTorch flattens conv2 output as (c, y, x) over the valid
    # (H2, W2) frame; our conv kernel emits (y, x, c) over the full (H1, W1)
    # frame.  Permute the columns once and zero-pad the invalid positions.
    FC1 = p['fc1_w'].shape[0]
    wf = p['fc1_w'].reshape(FC1, C2, H2, W2)
    wf = jnp.transpose(wf, (2, 3, 1, 0))                   # (H2, W2, C2, FC1)
    wf = jnp.pad(wf, ((0, H1 - H2), (0, W1 - W2), (0, 0), (0, 0)))
    fc1_w_pad = wf.reshape(H1 * W1 * C2, FC1)

    OD = p['fc2_w'].shape[0]
    return dict(
        w1m=w1m,
        b1=p['conv1_b'].reshape(1, C1).astype(jnp.float32),
        s1=s1.reshape(1, C1).astype(jnp.float32),
        t1=t1.reshape(1, C1).astype(jnp.float32),
        w2taps=w2t,
        b2=p['conv2_b'].reshape(1, C2).astype(jnp.float32),
        s2=s2.reshape(1, C2).astype(jnp.float32),
        t2=t2.reshape(1, C2).astype(jnp.float32),
        fc1_w=fc1_w_pad,
        fc1_b=p['fc1_b'].reshape(1, FC1),
        fc2_w=p['fc2_w'].T,
        fc2_b=p['fc2_b'].reshape(1, OD),
    )


# ---------------------------------------------------------------------------
# Forward pass (jit this; prepare_params is called once outside).
# ---------------------------------------------------------------------------
def tiny_conv_forward(x, prm):
    """x: (B, 1, H, W) as in PyTorch.  prm: output of prepare_params."""
    B, Ci, H, W = x.shape
    K1, C1 = prm['w1m'].shape
    k1 = int(round((K1 // Ci) ** 0.5))
    k2 = int(round(prm['w2taps'].shape[0] ** 0.5))
    C2 = prm['w2taps'].shape[2]
    H1, W1 = H - k1 + 1, W - k1 + 1                        # conv1 output frame
    N1 = B * H1 * W1                                       # rows on that frame
    max_off = (k2 - 1) * W1 + (k2 - 1)
    P1 = -(-(N1 + max_off) // 8) * 8                       # padded a1 rows

    # --- XLA glue: conv1 im2col on the (tiny) network input ---------------
    x2 = x.reshape(B, H, W)                                # single input channel
    pat1 = jnp.stack([x2[:, dy:dy + H1, dx:dx + W1]
                      for dy in range(k1) for dx in range(k1)],
                     axis=-1).reshape(N1, K1)
    pat1 = jnp.pad(pat1, ((0, P1 - N1), (0, 0)))

    # --- kernel 1: conv1 + ReLU + BN1 + conv2 + ReLU + BN2 -----------------
    ce1 = pl.CostEstimate(
        flops=2 * P1 * K1 * C1 + 2 * k2 * k2 * N1 * C1 * C2,
        transcendentals=0,
        bytes_accessed=4 * (P1 * K1 + K1 * C1 + 3 * C1
                            + k2 * k2 * C1 * C2 + 3 * C2 + N1 * C2))
    a2 = pl.pallas_call(
        functools.partial(_conv_pipeline_kernel,
                          n_rows=N1, row_stride=W1, k2=k2),
        out_shape=jax.ShapeDtypeStruct((N1, C2), jnp.float32),
        in_specs=[_full_spec((P1, K1)), _full_spec((K1, C1)),
                  _full_spec((1, C1)), _full_spec((1, C1)), _full_spec((1, C1)),
                  _full_spec((k2 * k2, C1, C2)),
                  _full_spec((1, C2)), _full_spec((1, C2)), _full_spec((1, C2))],
        out_specs=_full_spec((N1, C2)),
        scratch_shapes=[pltpu.VMEM((P1, C1), jnp.float32)],
        cost_estimate=ce1,
    )(pat1, prm['w1m'], prm['b1'], prm['s1'], prm['t1'],
      prm['w2taps'], prm['b2'], prm['s2'], prm['t2'])

    # --- XLA glue: flatten (B*H1*W1, C2) -> (B, H1*W1*C2) (31 KB relayout);
    #     invalid frame positions are zeroed by the padded fc1 weight.
    F = H1 * W1 * C2
    x_fc = a2.reshape(B, F)

    # --- kernel 2: fc1 + fc2 ----------------------------------------------
    FC1 = prm['fc1_w'].shape[1]
    OD = prm['fc2_w'].shape[1]
    ce2 = pl.CostEstimate(
        flops=2 * B * F * FC1 + 2 * B * FC1 * OD,
        transcendentals=0,
        bytes_accessed=4 * (B * F + F * FC1 + FC1 + FC1 * OD + OD + B * OD))
    return pl.pallas_call(
        _fc_head_kernel,
        out_shape=jax.ShapeDtypeStruct((B, OD), jnp.float32),
        in_specs=[_full_spec((B, F)), _full_spec((F, FC1)), _full_spec((1, FC1)),
                  _full_spec((FC1, OD)), _full_spec((1, OD))],
        out_specs=_full_spec((B, OD)),
        cost_estimate=ce2,
    )(x_fc, prm['fc1_w'], prm['fc1_b'], prm['fc2_w'], prm['fc2_b'])


# ---------------------------------------------------------------------------
# Pure-JAX reference (mirrors the PyTorch forward with eval-mode BatchNorm).
# ---------------------------------------------------------------------------
def tiny_conv_ref(x, p):
    P = jax.lax.Precision.HIGHEST

    def bn(o, g, b, m, v):
        return ((o - m[None, :, None, None])
                * (g / jnp.sqrt(v + BN_EPS))[None, :, None, None]
                + b[None, :, None, None])

    o = jax.lax.conv_general_dilated(
        x, p['conv1_w'], (1, 1), 'VALID',
        dimension_numbers=('NCHW', 'OIHW', 'NCHW'), precision=P)
    o = jnp.maximum(o + p['conv1_b'][None, :, None, None], 0.0)
    o = bn(o, p['bn1_w'], p['bn1_b'], p['bn1_mean'], p['bn1_var'])
    o = jax.lax.conv_general_dilated(
        o, p['conv2_w'], (1, 1), 'VALID',
        dimension_numbers=('NCHW', 'OIHW', 'NCHW'), precision=P)
    o = jnp.maximum(o + p['conv2_b'][None, :, None, None], 0.0)
    o = bn(o, p['bn2_w'], p['bn2_b'], p['bn2_mean'], p['bn2_var'])
    o = o.reshape(o.shape[0], -1)                          # PyTorch flatten (C, H, W)
    o = jnp.dot(o, p['fc1_w'].T, precision=P) + p['fc1_b']
    o = jnp.dot(o, p['fc2_w'].T, precision=P) + p['fc2_b']
    return o


if __name__ == "__main__":
    B, seq_len, input_dim = 2, 16, 16
    ker = (3, 3)
    output_dim = 4
    C1, C2, FC1 = 160, 20, 64
    H2 = seq_len - sum(ker) + len(ker)
    W2 = input_dim - sum(ker) + len(ker)
    fc_in = H2 * W2 * C2                                   # == fc1 in_features

    key = jax.random.PRNGKey(0)
    ks = jax.random.split(key, 16)

    def unif(k, shape, bound):
        return jax.random.uniform(k, shape, jnp.float32, -bound, bound)

    params = dict(
        conv1_w=unif(ks[0], (C1, 1, ker[0], ker[0]), (1 * ker[0] ** 2) ** -0.5),
        conv1_b=unif(ks[1], (C1,), 0.1),
        bn1_w=1.0 + 0.1 * jax.random.normal(ks[2], (C1,), jnp.float32),
        bn1_b=0.1 * jax.random.normal(ks[3], (C1,), jnp.float32),
        bn1_mean=0.1 * jax.random.normal(ks[4], (C1,), jnp.float32),
        bn1_var=0.5 + jnp.abs(jax.random.normal(ks[5], (C1,), jnp.float32)),
        conv2_w=unif(ks[6], (C2, C1, ker[1], ker[1]), (C1 * ker[1] ** 2) ** -0.5),
        conv2_b=unif(ks[7], (C2,), 0.1),
        bn2_w=1.0 + 0.1 * jax.random.normal(ks[8], (C2,), jnp.float32),
        bn2_b=0.1 * jax.random.normal(ks[9], (C2,), jnp.float32),
        bn2_mean=0.1 * jax.random.normal(ks[10], (C2,), jnp.float32),
        bn2_var=0.5 + jnp.abs(jax.random.normal(ks[11], (C2,), jnp.float32)),
        fc1_w=unif(ks[12], (FC1, fc_in), fc_in ** -0.5),
        fc1_b=unif(ks[13], (FC1,), 0.1),
        fc2_w=unif(ks[14], (output_dim, FC1), FC1 ** -0.5),
        fc2_b=unif(ks[15], (output_dim,), 0.1),
    )

    x = jax.random.normal(jax.random.PRNGKey(42),
                          (B, 1, seq_len, input_dim), jnp.float32)

    # One-time parameter preparation (hoisted out of the per-call path).
    prm = jax.tree_util.tree_map(jnp.asarray,
                                 prepare_params(params, seq_len, input_dim))

    fwd = jax.jit(tiny_conv_forward)
    out = jax.block_until_ready(fwd(x, prm))
    ref = tiny_conv_ref(x, params)

    assert out.shape == (B, output_dim), out.shape
    max_err = float(jnp.max(jnp.abs(out - ref)))
    assert jnp.allclose(out, ref, atol=1e-2, rtol=1e-2), max_err
    print("KERNEL_OK")
</pallas_src>

<mosaic_0001>
module attributes {stable_mosaic.version = 11 : i64} {
  func.func @_conv_pipeline_kernel(%arg0: memref<424x9xf32, #tpu.memory_space<vmem>>, %arg1: memref<9x160xf32, #tpu.memory_space<vmem>>, %arg2: memref<1x160xf32, #tpu.memory_space<vmem>>, %arg3: memref<1x160xf32, #tpu.memory_space<vmem>>, %arg4: memref<1x160xf32, #tpu.memory_space<vmem>>, %arg5: memref<9x160x20xf32, #tpu.memory_space<vmem>>, %arg6: memref<1x20xf32, #tpu.memory_space<vmem>>, %arg7: memref<1x20xf32, #tpu.memory_space<vmem>>, %arg8: memref<1x20xf32, #tpu.memory_space<vmem>>, %arg9: memref<392x20xf32, #tpu.memory_space<vmem>>, %arg10: memref<424x160xf32, #tpu.memory_space<vmem>>) attributes {dimension_semantics = [], scalar_prefetch = 0 : i64, scratch_operands = 1 : i64, tpu.core_type = #tpu.core_type<tc>} {
    %c0 = arith.constant 0 : index
    %c0_0 = arith.constant 0 : index
    %0 = vector.load %arg0[%c0, %c0_0] : memref<424x9xf32, #tpu.memory_space<vmem>>, vector<424x9xf32>
    %c0_1 = arith.constant 0 : index
    %c0_2 = arith.constant 0 : index
    %1 = vector.load %arg1[%c0_1, %c0_2] : memref<9x160xf32, #tpu.memory_space<vmem>>, vector<9x160xf32>
    %cst = arith.constant dense<0.000000e+00> : vector<424x160xf32>
    %2 = tpu.matmul %0, %1, %cst {dimension_numbers = #tpu.dot_dimension_numbers<[1], [0], [0], [1], [0, 0, 1, 1], [], []>} : vector<424x9xf32>, vector<9x160xf32>, vector<424x160xf32> -> vector<424x160xf32>
    %c0_3 = arith.constant 0 : index
    %c0_4 = arith.constant 0 : index
    %3 = vector.load %arg2[%c0_3, %c0_4] : memref<1x160xf32, #tpu.memory_space<vmem>>, vector<1x160xf32>
    %4 = vector.broadcast %3 : vector<1x160xf32> to vector<424x160xf32>
    %5 = arith.addf %2, %4 : vector<424x160xf32>
    %cst_5 = arith.constant 0.000000e+00 : f32
    %6 = vector.broadcast %cst_5 : f32 to vector<424x160xf32>
    %7 = arith.maximumf %5, %6 : vector<424x160xf32>
    %c0_6 = arith.constant 0 : index
    %c0_7 = arith.constant 0 : index
    %8 = vector.load %arg3[%c0_6, %c0_7] : memref<1x160xf32, #tpu.memory_space<vmem>>, vector<1x160xf32>
    %9 = vector.broadcast %8 : vector<1x160xf32> to vector<424x160xf32>
    %10 = arith.mulf %7, %9 : vector<424x160xf32>
    %c0_8 = arith.constant 0 : index
    %c0_9 = arith.constant 0 : index
    %11 = vector.load %arg4[%c0_8, %c0_9] : memref<1x160xf32, #tpu.memory_space<vmem>>, vector<1x160xf32>
    %12 = vector.broadcast %11 : vector<1x160xf32> to vector<424x160xf32>
    %13 = arith.addf %10, %12 : vector<424x160xf32>
    %c0_10 = arith.constant 0 : index
    %c0_11 = arith.constant 0 : index
    %14 = vector.load %arg10[%c0_10, %c0_11] : memref<424x160xf32, #tpu.memory_space<vmem>>, vector<424x160xf32>
    tpu.vector_store %arg10[%c0_10, %c0_11], %13 {strides = array<i32>} : memref<424x160xf32, #tpu.memory_space<vmem>>, vector<424x160xf32>,
    %c0_12 = arith.constant 0 : index
    %c0_13 = arith.constant 0 : index
    %15 = vector.load %arg10[%c0_12, %c0_13] : memref<424x160xf32, #tpu.memory_space<vmem>>, vector<392x160xf32>
    %c0_14 = arith.constant 0 : index
    %c0_15 = arith.constant 0 : index
    %c0_16 = arith.constant 0 : index
    %16 = vector.load %arg5[%c0_14, %c0_15, %c0_16] : memref<9x160x20xf32, #tpu.memory_space<vmem>>, vector<1x160x20xf32>
    %17 = vector.shape_cast %16 : vector<1x160x20xf32> to vector<160x20xf32>
    %cst_17 = arith.constant dense<0.000000e+00> : vector<392x20xf32>
    %18 = tpu.matmul %15, %17, %cst_17 {dimension_numbers = #tpu.dot_dimension_numbers<[1], [0], [0], [1], [0, 0, 1, 1], [], []>} : vector<392x160xf32>, vector<160x20xf32>, vector<392x20xf32> -> vector<392x20xf32>
    %c1 = arith.constant 1 : index
    %c0_18 = arith.constant 0 : index
    %19 = vector.load %arg10[%c1, %c0_18] : memref<424x160xf32, #tpu.memory_space<vmem>>, vector<392x160xf32>
    %c1_19 = arith.constant 1 : index
    %c0_20 = arith.constant 0 : index
    %c0_21 = arith.constant 0 : index
    %20 = vector.load %arg5[%c1_19, %c0_20, %c0_21] : memref<9x160x20xf32, #tpu.memory_space<vmem>>, vector<1x160x20xf32>
    %21 = vector.shape_cast %20 : vector<1x160x20xf32> to vector<160x20xf32>
    %cst_22 = arith.constant dense<0.000000e+00> : vector<392x20xf32>
    %22 = tpu.matmul %19, %21, %cst_22 {dimension_numbers = #tpu.dot_dimension_numbers<[1], [0], [0], [1], [0, 0, 1, 1], [], []>} : vector<392x160xf32>, vector<160x20xf32>, vector<392x20xf32> -> vector<392x20xf32>
    %23 = arith.addf %18, %22 : vector<392x20xf32>
    %c2 = arith.constant 2 : index
    %c0_23 = arith.constant 0 : index
    %24 = vector.load %arg10[%c2, %c0_23] : memref<424x160xf32, #tpu.memory_space<vmem>>, vector<392x160xf32>
    %c2_24 = arith.constant 2 : index
    %c0_25 = arith.constant 0 : index
    %c0_26 = arith.constant 0 : index
    %25 = vector.load %arg5[%c2_24, %c0_25, %c0_26] : memref<9x160x20xf32, #tpu.memory_space<vmem>>, vector<1x160x20xf32>
    %26 = vector.shape_cast %25 : vector<1x160x20xf32> to vector<160x20xf32>
    %cst_27 = arith.constant dense<0.000000e+00> : vector<392x20xf32>
    %27 = tpu.matmul %24, %26, %cst_27 {dimension_numbers = #tpu.dot_dimension_numbers<[1], [0], [0], [1], [0, 0, 1, 1], [], []>} : vector<392x160xf32>, vector<160x20xf32>, vector<392x20xf32> -> vector<392x20xf32>
    %28 = arith.addf %23, %27 : vector<392x20xf32>
    %c14 = arith.constant 14 : index
    %c0_28 = arith.constant 0 : index
    %29 = vector.load %arg10[%c14, %c0_28] : memref<424x160xf32, #tpu.memory_space<vmem>>, vector<392x160xf32>
    %c3 = arith.constant 3 : index
    %c0_29 = arith.constant 0 : index
    %c0_30 = arith.constant 0 : index
    %30 = vector.load %arg5[%c3, %c0_29, %c0_30] : memref<9x160x20xf32, #tpu.memory_space<vmem>>, vector<1x160x20xf32>
    %31 = vector.shape_cast %30 : vector<1x160x20xf32> to vector<160x20xf32>
    %cst_31 = arith.constant dense<0.000000e+00> : vector<392x20xf32>
    %32 = tpu.matmul %29, %31, %cst_31 {dimension_numbers = #tpu.dot_dimension_numbers<[1], [0], [0], [1], [0, 0, 1, 1], [], []>} : vector<392x160xf32>, vector<160x20xf32>, vector<392x20xf32> -> vector<392x20xf32>
    %33 = arith.addf %28, %32 : vector<392x20xf32>
    %c15 = arith.constant 15 : index
    %c0_32 = arith.constant 0 : index
    %34 = vector.load %arg10[%c15, %c0_32] : memref<424x160xf32, #tpu.memory_space<vmem>>, vector<392x160xf32>
    %c4 = arith.constant 4 : index
    %c0_33 = arith.constant 0 : index
    %c0_34 = arith.constant 0 : index
    %35 = vector.load %arg5[%c4, %c0_33, %c0_34] : memref<9x160x20xf32, #tpu.memory_space<vmem>>, vector<1x160x20xf32>
    %36 = vector.shape_cast %35 : vector<1x160x20xf32> to vector<160x20xf32>
    %cst_35 = arith.constant dense<0.000000e+00> : vector<392x20xf32>
    %37 = tpu.matmul %34, %36, %cst_35 {dimension_numbers = #tpu.dot_dimension_numbers<[1], [0], [0], [1], [0, 0, 1, 1], [], []>} : vector<392x160xf32>, vector<160x20xf32>, vector<392x20xf32> -> vector<392x20xf32>
    %38 = arith.addf %33, %37 : vector<392x20xf32>
    %c16 = arith.constant 16 : index
    %c0_36 = arith.constant 0 : index
    %39 = vector.load %arg10[%c16, %c0_36] : memref<424x160xf32, #tpu.memory_space<vmem>>, vector<392x160xf32>
    %c5 = arith.constant 5 : index
    %c0_37 = arith.constant 0 : index
    %c0_38 = arith.constant 0 : index
    %40 = vector.load %arg5[%c5, %c0_37, %c0_38] : memref<9x160x20xf32, #tpu.memory_space<vmem>>, vector<1x160x20xf32>
    %41 = vector.shape_cast %40 : vector<1x160x20xf32> to vector<160x20xf32>
    %cst_39 = arith.constant dense<0.000000e+00> : vector<392x20xf32>
    %42 = tpu.matmul %39, %41, %cst_39 {dimension_numbers = #tpu.dot_dimension_numbers<[1], [0], [0], [1], [0, 0, 1, 1], [], []>} : vector<392x160xf32>, vector<160x20xf32>, vector<392x20xf32> -> vector<392x20xf32>
    %43 = arith.addf %38, %42 : vector<392x20xf32>
    %c28 = arith.constant 28 : index
    %c0_40 = arith.constant 0 : index
    %44 = vector.load %arg10[%c28, %c0_40] : memref<424x160xf32, #tpu.memory_space<vmem>>, vector<392x160xf32>
    %c6 = arith.constant 6 : index
    %c0_41 = arith.constant 0 : index
    %c0_42 = arith.constant 0 : index
    %45 = vector.load %arg5[%c6, %c0_41, %c0_42] : memref<9x160x20xf32, #tpu.memory_space<vmem>>, vector<1x160x20xf32>
    %46 = vector.shape_cast %45 : vector<1x160x20xf32> to vector<160x20xf32>
    %cst_43 = arith.constant dense<0.000000e+00> : vector<392x20xf32>
    %47 = tpu.matmul %44, %46, %cst_43 {dimension_numbers = #tpu.dot_dimension_numbers<[1], [0], [0], [1], [0, 0, 1, 1], [], []>} : vector<392x160xf32>, vector<160x20xf32>, vector<392x20xf32> -> vector<392x20xf32>
    %48 = arith.addf %43, %47 : vector<392x20xf32>
    %c29 = arith.constant 29 : index
    %c0_44 = arith.constant 0 : index
    %49 = vector.load %arg10[%c29, %c0_44] : memref<424x160xf32, #tpu.memory_space<vmem>>, vector<392x160xf32>
    %c7 = arith.constant 7 : index
    %c0_45 = arith.constant 0 : index
    %c0_46 = arith.constant 0 : index
    %50 = vector.load %arg5[%c7, %c0_45, %c0_46] : memref<9x160x20xf32, #tpu.memory_space<vmem>>, vector<1x160x20xf32>
    %51 = vector.shape_cast %50 : vector<1x160x20xf32> to vector<160x20xf32>
    %cst_47 = arith.constant dense<0.000000e+00> : vector<392x20xf32>
    %52 = tpu.matmul %49, %51, %cst_47 {dimension_numbers = #tpu.dot_dimension_numbers<[1], [0], [0], [1], [0, 0, 1, 1], [], []>} : vector<392x160xf32>, vector<160x20xf32>, vector<392x20xf32> -> vector<392x20xf32>
    %53 = arith.addf %48, %52 : vector<392x20xf32>
    %c30 = arith.constant 30 : index
    %c0_48 = arith.constant 0 : index
    %54 = vector.load %arg10[%c30, %c0_48] : memref<424x160xf32, #tpu.memory_space<vmem>>, vector<392x160xf32>
    %c8 = arith.constant 8 : index
    %c0_49 = arith.constant 0 : index
    %c0_50 = arith.constant 0 : index
    %55 = vector.load %arg5[%c8, %c0_49, %c0_50] : memref<9x160x20xf32, #tpu.memory_space<vmem>>, vector<1x160x20xf32>
    %56 = vector.shape_cast %55 : vector<1x160x20xf32> to vector<160x20xf32>
    %cst_51 = arith.constant dense<0.000000e+00> : vector<392x20xf32>
    %57 = tpu.matmul %54, %56, %cst_51 {dimension_numbers = #tpu.dot_dimension_numbers<[1], [0], [0], [1], [0, 0, 1, 1], [], []>} : vector<392x160xf32>, vector<160x20xf32>, vector<392x20xf32> -> vector<392x20xf32>
    %58 = arith.addf %53, %57 : vector<392x20xf32>
    %c0_52 = arith.constant 0 : index
    %c0_53 = arith.constant 0 : index
    %59 = vector.load %arg6[%c0_52, %c0_53] : memref<1x20xf32, #tpu.memory_space<vmem>>, vector<1x20xf32>
    %60 = vector.broadcast %59 : vector<1x20xf32> to vector<392x20xf32>
    %61 = arith.addf %58, %60 : vector<392x20xf32>
    %cst_54 = arith.constant 0.000000e+00 : f32
    %62 = vector.broadcast %cst_54 : f32 to vector<392x20xf32>
    %63 = arith.maximumf %61, %62 : vector<392x20xf32>
    %c0_55 = arith.constant 0 : index
    %c0_56 = arith.constant 0 : index
    %64 = vector.load %arg7[%c0_55, %c0_56] : memref<1x20xf32, #tpu.memory_space<vmem>>, vector<1x20xf32>
    %65 = vector.broadcast %64 : vector<1x20xf32> to vector<392x20xf32>
    %66 = arith.mulf %63, %65 : vector<392x20xf32>
    %c0_57 = arith.constant 0 : index
    %c0_58 = arith.constant 0 : index
    %67 = vector.load %arg8[%c0_57, %c0_58] : memref<1x20xf32, #tpu.memory_space<vmem>>, vector<1x20xf32>
    %68 = vector.broadcast %67 : vector<1x20xf32> to vector<392x20xf32>
    %69 = arith.addf %66, %68 : vector<392x20xf32>
    %c0_59 = arith.constant 0 : index
    %c0_60 = arith.constant 0 : index
    %70 = vector.load %arg9[%c0_59, %c0_60] : memref<392x20xf32, #tpu.memory_space<vmem>>, vector<392x20xf32>
    tpu.vector_store %arg9[%c0_59, %c0_60], %69 {strides = array<i32>} : memref<392x20xf32, #tpu.memory_space<vmem>>, vector<392x20xf32>,
    return
  }
}

module attributes {stable_mosaic.version = 11 : i64} {
  func.func @_fc_head_kernel(%arg0: memref<2x3920xf32, #tpu.memory_space<vmem>>, %arg1: memref<3920x64xf32, #tpu.memory_space<vmem>>, %arg2: memref<1x64xf32, #tpu.memory_space<vmem>>, %arg3: memref<64x4xf32, #tpu.memory_space<vmem>>, %arg4: memref<1x4xf32, #tpu.memory_space<vmem>>, %arg5: memref<2x4xf32, #tpu.memory_space<vmem>>) attributes {dimension_semantics = [], scalar_prefetch = 0 : i64, scratch_operands = 0 : i64, tpu.core_type = #tpu.core_type<tc>} {
    %c0 = arith.constant 0 : index
    %c0_0 = arith.constant 0 : index
    %0 = vector.load %arg0[%c0, %c0_0] : memref<2x3920xf32, #tpu.memory_space<vmem>>, vector<2x3920xf32>
    %c0_1 = arith.constant 0 : index
    %c0_2 = arith.constant 0 : index
    %1 = vector.load %arg1[%c0_1, %c0_2] : memref<3920x64xf32, #tpu.memory_space<vmem>>, vector<3920x64xf32>
    %cst = arith.constant dense<0.000000e+00> : vector<2x64xf32>
    %2 = tpu.matmul %0, %1, %cst {dimension_numbers = #tpu.dot_dimension_numbers<[1], [0], [0], [1], [0, 0, 1, 1], [], []>} : vector<2x3920xf32>, vector<3920x64xf32>, vector<2x64xf32> -> vector<2x64xf32>
    %c0_3 = arith.constant 0 : index
    %c0_4 = arith.constant 0 : index
    %3 = vector.load %arg2[%c0_3, %c0_4] : memref<1x64xf32, #tpu.memory_space<vmem>>, vector<1x64xf32>
    %4 = vector.broadcast %3 : vector<1x64xf32> to vector<2x64xf32>
    %5 = arith.addf %2, %4 : vector<2x64xf32>
    %c0_5 = arith.constant 0 : index
    %c0_6 = arith.constant 0 : index
    %6 = vector.load %arg3[%c0_5, %c0_6] : memref<64x4xf32, #tpu.memory_space<vmem>>, vector<64x4xf32>
    %cst_7 = arith.constant dense<0.000000e+00> : vector<2x4xf32>
    %7 = tpu.matmul %5, %6, %cst_7 {dimension_numbers = #tpu.dot_dimension_numbers<[1], [0], [0], [1], [0, 0, 1, 1], [], []>} : vector<2x64xf32>, vector<64x4xf32>, vector<2x4xf32> -> vector<2x4xf32>
    %c0_8 = arith.constant 0 : index
    %c0_9 = arith.constant 0 : index
    %8 = vector.load %arg4[%c0_8, %c0_9] : memref<1x4xf32, #tpu.memory_space<vmem>>, vector<1x4xf32>
    %9 = vector.broadcast %8 : vector<1x4xf32> to vector<2x4xf32>
    %10 = arith.addf %7, %9 : vector<2x4xf32>
    %c0_10 = arith.constant 0 : index
    %c0_11 = arith.constant 0 : index
    %11 = vector.load %arg5[%c0_10, %c0_11] : memref<2x4xf32, #tpu.memory_space<vmem>>, vector<2x4xf32>
    tpu.vector_store %arg5[%c0_10, %c0_11], %10 {strides = array<i32>} : memref<2x4xf32, #tpu.memory_space<vmem>>, vector<2x4xf32>,
    return
  }
}

</mosaic_0001>

<llo_original>
// kernel: tiny_conv_forward.3
$region0: #{tiny_conv_forward.3}
  #allocation0 [shape = 'u32[]', space=smem, size = 0x4, offset = 0x4, fixed_abs, tag = 'smem constant byte address 0x4 - core index']
  #allocation1 [shape = 'u32[144,128]{1,0:T(1,128)}', space=vmem, size = 0x12000, scoped, tag = 'internal scratch']
  %s0 = inlined_call_operand.vmem [shape: f32[2,3920], index: 0, kind: input, shape index: {}]
  %s1 = inlined_call_operand.vmem [shape: f32[3920,64], index: 1, kind: input, shape index: {}]
  %s2 = inlined_call_operand.vmem [shape: f32[1,64], index: 2, kind: input, shape index: {}]
  %s3 = inlined_call_operand.vmem [shape: f32[64,4], index: 3, kind: input, shape index: {}]
  %s4 = inlined_call_operand.vmem [shape: f32[1,4], index: 4, kind: input, shape index: {}]
  %s5 = inlined_call_operand.hbm [shape: f32[2,4], index: 5, kind: output, shape index: {}]
  %s6 = sld [smem:[#allocation0]]
  $region30: #{tiny_conv_forward.3} parent=0
    _
  %s8 = ssub.s32 1, %s6
  %s9 = scalar_select 0, %s8, %s6
  $region1: #{tiny_conv_forward.3} parent=0
    #allocation2 [shape = 'u8[1024]{0}', space=vmem, size = 0x400, scoped, tag = 'output window, operand 0, single buffered']
    #allocation3 [shape = 's32[1]{0}', space=sflag, size = 0x4, scoped, tag = 'scoped memory for tiny_conv_forward.3']
    %10 = vsyncpa [#allocation3], 0
    // Predicated region
    $region2: #{tiny_conv_forward.3} parent=1 // pred_check
      _
    $region3: #{tiny_conv_forward.3} parent=1 // pred_check_branch
      %12 = sbr.rel (0) target = $region5
    $region4: #{tiny_conv_forward.3} parent=1 // pred_region
      _
    $region5: #{tiny_conv_forward.3} parent=1 // pred_fallthru
      _
    // Predicated region
    $region6: #{tiny_conv_forward.3} parent=1 // pred_check
      _
    $region7: #{tiny_conv_forward.3} parent=1 // pred_check_branch
      %14 = sbr.rel (0) target = $region9
    $region8: #{tiny_conv_forward.3} parent=1 // pred_region
      _
    $region9: #{tiny_conv_forward.3} parent=1 // pred_fallthru
      _
    // Predicated region
    $region10: #{tiny_conv_forward.3} parent=1 // pred_check
      _
    $region11: #{tiny_conv_forward.3} parent=1 // pred_check_branch
      %16 = sbr.rel (0) target = $region13
    $region12: #{tiny_conv_forward.3} parent=1 // pred_region
      _
    $region13: #{tiny_conv_forward.3} parent=1 // pred_fallthru
      _
    // Predicated region
    $region14: #{tiny_conv_forward.3} parent=1 // pred_check
      _
    $region15: #{tiny_conv_forward.3} parent=1 // pred_check_branch
      %18 = sbr.rel (0) target = $region17
    $region16: #{tiny_conv_forward.3} parent=1 // pred_region
      _
    $region17: #{tiny_conv_forward.3} parent=1 // pred_fallthru
      _
    // Predicated region
    $region18: #{tiny_conv_forward.3} parent=1 // pred_check
      _
    $region19: #{tiny_conv_forward.3} parent=1 // pred_check_branch
      %20 = sbr.rel (0) target = $region21
    $region20: #{tiny_conv_forward.3} parent=1 // pred_region
      _
    $region21: #{tiny_conv_forward.3} parent=1 // pred_fallthru
      _
    %v21 = vld [vmem:[%s0] sm:$0xff]
    %v22 = vld [vmem:[%s0 + $0x8] sm:$0xff]
    %v23 = vld [vmem:[%s0 + $0x10] sm:$0xff]
    %v24 = vld [vmem:[%s0 + $0x18] sm:$0xff]
    %v25 = vld [vmem:[%s0 + $0x20] sm:$0xff]
    %v26 = vld [vmem:[%s0 + $0x28] sm:$0xff]
    %v27 = vld [vmem:[%s0 + $0x30] sm:$0xff]
    %v28 = vld [vmem:[%s0 + $0x38] sm:$0x3f]
    %v29 = vld [vmem:[%s1] sm:$0xff]
    %v30 = vld [vmem:[%s1 + $0x8] sm:$0xff]
    %v31 = vld [vmem:[%s1 + $0x10] sm:$0xff]
    %v32 = vld [vmem:[%s1 + $0x18] sm:$0xff]
    %v33 = vld [vmem:[%s1 + $0x20] sm:$0xff]
    %v34 = vld [vmem:[%s1 + $0x28] sm:$0xff]
    %v35 = vld [vmem:[%s1 + $0x30] sm:$0xff]
    %v36 = vld [vmem:[%s1 + $0x38] sm:$0xff]
    %v37 = vld [vmem:[%s1 + $0x40] sm:$0xff]
    %v38 = vld [vmem:[%s1 + $0x48] sm:$0xff]
    %v39 = vld [vmem:[%s1 + $0x50] sm:$0xff]
    %v40 = vld [vmem:[%s1 + $0x58] sm:$0xff]
    %v41 = vld [vmem:[%s1 + $0x60] sm:$0xff]
    %v42 = vld [vmem:[%s1 + $0x68] sm:$0xff]
    %v43 = vld [vmem:[%s1 + $0x70] sm:$0xff]
    %v44 = vld [vmem:[%s1 + $0x78] sm:$0xff]
    %v45 = vld [vmem:[%s1 + $0x80] sm:$0xff]
    %v46 = vld [vmem:[%s1 + $0x88] sm:$0xff]
    %v47 = vld [vmem:[%s1 + $0x90] sm:$0xff]
    %v48 = vld [vmem:[%s1 + $0x98] sm:$0xff]
    %v49 = vld [vmem:[%s1 + $0xa0] sm:$0xff]
    %v50 = vld [vmem:[%s1 + $0xa8] sm:$0xff]
    %v51 = vld [vmem:[%s1 + $0xb0] sm:$0xff]
    %v52 = vld [vmem:[%s1 + $0xb8] sm:$0xff]
    %v53 = vld [vmem:[%s1 + $0xc0] sm:$0xff]
    %v54 = vld [vmem:[%s1 + $0xc8] sm:$0xff]
    %v55 = vld [vmem:[%s1 + $0xd0] sm:$0xff]
    %v56 = vld [vmem:[%s1 + $0xd8] sm:$0xff]
    %v57 = vld [vmem:[%s1 + $0xe0] sm:$0xff]
    %v58 = vld [vmem:[%s1 + $0xe8] sm:$0xff]
    %v59 = vld [vmem:[%s1 + $0xf0] sm:$0xff]
    %v60 = vld [vmem:[%s1 + $0xf8] sm:$0xff]
    %v61 = vld [vmem:[%s1 + $0x100] sm:$0xff]
    %v62 = vld [vmem:[%s1 + $0x108] sm:$0xff]
    %v63 = vld [vmem:[%s1 + $0x110] sm:$0xff]
    %v64 = vld [vmem:[%s1 + $0x118] sm:$0xff]
    %v65 = vld [vmem:[%s1 + $0x120] sm:$0xff]
    %v66 = vld [vmem:[%s1 + $0x128] sm:$0xff]
    %v67 = vld [vmem:[%s1 + $0x130] sm:$0xff]
    %v68 = vld [vmem:[%s1 + $0x138] sm:$0xff]
    %v69 = vld [vmem:[%s1 + $0x140] sm:$0xff]
    %v70 = vld [vmem:[%s1 + $0x148] sm:$0xff]
    %v71 = vld [vmem:[%s1 + $0x150] sm:$0xff]
    %v72 = vld [vmem:[%s1 + $0x158] sm:$0xff]
    %v73 = vld [vmem:[%s1 + $0x160] sm:$0xff]
    %v74 = vld [vmem:[%s1 + $0x168] sm:$0xff]
    %v75 = vld [vmem:[%s1 + $0x170] sm:$0xff]
    %v76 = vld [vmem:[%s1 + $0x178] sm:$0xff]
    %v77 = vld [vmem:[%s1 + $0x180] sm:$0xff]
    %v78 = vld [vmem:[%s1 + $0x188] sm:$0xff]
    %v79 = vld [vmem:[%s1 + $0x190] sm:$0xff]
    %v80 = vld [vmem:[%s1 + $0x198] sm:$0xff]
    %v81 = vld [vmem:[%s1 + $0x1a0] sm:$0xff]
    %v82 = vld [vmem:[%s1 + $0x1a8] sm:$0xff]
    %v83 = vld [vmem:[%s1 + $0x1b0] sm:$0xff]
    %v84 = vld [vmem:[%s1 + $0x1b8] sm:$0xff]
    %v85 = vld [vmem:[%s1 + $0x1c0] sm:$0xff]
    %v86 = vld [vmem:[%s1 + $0x1c8] sm:$0xff]
    %v87 = vld [vmem:[%s1 + $0x1d0] sm:$0xff]
    %v88 = vld [vmem:[%s1 + $0x1d8] sm:$0xff]
    %v89 = vld [vmem:[%s1 + $0x1e0] sm:$0xff]
    %v90 = vld [vmem:[%s1 + $0x1e8] sm:$0xff]
    %v91 = vld [vmem:[%s1 + $0x1f0] sm:$0xff]
    %v92 = vld [vmem:[%s1 + $0x1f8] sm:$0xff]
    %v93 = vld [vmem:[%s1 + $0x200] sm:$0xff]
    %v94 = vld [vmem:[%s1 + $0x208] sm:$0xff]
    %v95 = vld [vmem:[%s1 + $0x210] sm:$0xff]
    %v96 = vld [vmem:[%s1 + $0x218] sm:$0xff]
    %v97 = vld [vmem:[%s1 + $0x220] sm:$0xff]
    %v98 = vld [vmem:[%s1 + $0x228] sm:$0xff]
    %v99 = vld [vmem:[%s1 + $0x230] sm:$0xff]
    %v100 = vld [vmem:[%s1 + $0x238] sm:$0xff]
    %v101 = vld [vmem:[%s1 + $0x240] sm:$0xff]
    %v102 = vld [vmem:[%s1 + $0x248] sm:$0xff]
    %v103 = vld [vmem:[%s1 + $0x250] sm:$0xff]
    %v104 = vld [vmem:[%s1 + $0x258] sm:$0xff]
    %v105 = vld [vmem:[%s1 + $0x260] sm:$0xff]
    %v106 = vld [vmem:[%s1 + $0x268] sm:$0xff]
    %v107 = vld [vmem:[%s1 + $0x270] sm:$0xff]
    %v108 = vld [vmem:[%s1 + $0x278] sm:$0xff]
    %v109 = vld [vmem:[%s1 + $0x280] sm:$0xff]
    %v110 = vld [vmem:[%s1 + $0x288] sm:$0xff]
    %v111 = vld [vmem:[%s1 + $0x290] sm:$0xff]
    %v112 = vld [vmem:[%s1 + $0x298] sm:$0xff]
    %v113 = vld [vmem:[%s1 + $0x2a0] sm:$0xff]
    %v114 = vld [vmem:[%s1 + $0x2a8] sm:$0xff]
    %v115 = vld [vmem:[%s1 + $0x2b0] sm:$0xff]
    %v116 = vld [vmem:[%s1 + $0x2b8] sm:$0xff]
    %v117 = vld [vmem:[%s1 + $0x2c0] sm:$0xff]
    %v118 = vld [vmem:[%s1 + $0x2c8] sm:$0xff]
    %v119 = vld [vmem:[%s1 + $0x2d0] sm:$0xff]
    %v120 = vld [vmem:[%s1 + $0x2d8] sm:$0xff]
    %v121 = vld [vmem:[%s1 + $0x2e0] sm:$0xff]
    %v122 = vld [vmem:[%s1 + $0x2e8] sm:$0xff]
    %v123 = vld [vmem:[%s1 + $0x2f0] sm:$0xff]
    %v124 = vld [vmem:[%s1 + $0x2f8] sm:$0xff]
    %v125 = vld [vmem:[%s1 + $0x300] sm:$0xff]
    %v126 = vld [vmem:[%s1 + $0x308] sm:$0xff]
    %v127 = vld [vmem:[%s1 + $0x310] sm:$0xff]
    %v128 = vld [vmem:[%s1 + $0x318] sm:$0xff]
    %v129 = vld [vmem:[%s1 + $0x320] sm:$0xff]
    %v130 = vld [vmem:[%s1 + $0x328] sm:$0xff]
    %v131 = vld [vmem:[%s1 + $0x330] sm:$0xff]
    %v132 = vld [vmem:[%s1 + $0x338] sm:$0xff]
    %v133 = vld [vmem:[%s1 + $0x340] sm:$0xff]
    %v134 = vld [vmem:[%s1 + $0x348] sm:$0xff]
    %v135 = vld [vmem:[%s1 + $0x350] sm:$0xff]
    %v136 = vld [vmem:[%s1 + $0x358] sm:$0xff]
    %v137 = vld [vmem:[%s1 + $0x360] sm:$0xff]
    %v138 = vld [vmem:[%s1 + $0x368] sm:$0xff]
    %v139 = vld [vmem:[%s1 + $0x370] sm:$0xff]
    %v140 = vld [vmem:[%s1 + $0x378] sm:$0xff]
    %v141 = vld [vmem:[%s1 + $0x380] sm:$0xff]
    %v142 = vld [vmem:[%s1 + $0x388] sm:$0xff]
    %v143 = vld [vmem:[%s1 + $0x390] sm:$0xff]
    %v144 = vld [vmem:[%s1 + $0x398] sm:$0xff]
    %v145 = vld [vmem:[%s1 + $0x3a0] sm:$0xff]
    %v146 = vld [vmem:[%s1 + $0x3a8] sm:$0xff]
    %v147 = vld [vmem:[%s1 + $0x3b0] sm:$0xff]
    %v148 = vld [vmem:[%s1 + $0x3b8] sm:$0xff]
    %v149 = vld [vmem:[%s1 + $0x3c0] sm:$0xff]
    %v150 = vld [vmem:[%s1 + $0x3c8] sm:$0xff]
    %v151 = vld [vmem:[%s1 + $0x3d0] sm:$0xff]
    %v152 = vld [vmem:[%s1 + $0x3d8] sm:$0xff]
    %v153 = vld [vmem:[%s1 + $0x3e0] sm:$0xff]
    %v154 = vld [vmem:[%s1 + $0x3e8] sm:$0xff]
    %v155 = vld [vmem:[%s1 + $0x3f0] sm:$0xff]
    %v156 = vld [vmem:[%s1 + $0x3f8] sm:$0xff]
    %v157 = vld [vmem:[%s1 + $0x400] sm:$0xff]
    %v158 = vld [vmem:[%s1 + $0x408] sm:$0xff]
    %v159 = vld [vmem:[%s1 + $0x410] sm:$0xff]
    %v160 = vld [vmem:[%s1 + $0x418] sm:$0xff]
    %v161 = vld [vmem:[%s1 + $0x420] sm:$0xff]
    %v162 = vld [vmem:[%s1 + $0x428] sm:$0xff]
    %v163 = vld [vmem:[%s1 + $0x430] sm:$0xff]
    %v164 = vld [vmem:[%s1 + $0x438] sm:$0xff]
    %v165 = vld [vmem:[%s1 + $0x440] sm:$0xff]
    %v166 = vld [vmem:[%s1 + $0x448] sm:$0xff]
    %v167 = vld [vmem:[%s1 + $0x450] sm:$0xff]
    %v168 = vld [vmem:[%s1 + $0x458] sm:$0xff]
    %v169 = vld [vmem:[%s1 + $0x460] sm:$0xff]
    %v170 = vld [vmem:[%s1 + $0x468] sm:$0xff]
    %v171 = vld [vmem:[%s1 + $0x470] sm:$0xff]
    %v172 = vld [vmem:[%s1 + $0x478] sm:$0xff]
    %v173 = vld [vmem:[%s1 + $0x480] sm:$0xff]
    %v174 = vld [vmem:[%s1 + $0x488] sm:$0xff]
    %v175 = vld [vmem:[%s1 + $0x490] sm:$0xff]
    %v176 = vld [vmem:[%s1 + $0x498] sm:$0xff]
    %v177 = vld [vmem:[%s1 + $0x4a0] sm:$0xff]
    %v178 = vld [vmem:[%s1 + $0x4a8] sm:$0xff]
    %v179 = vld [vmem:[%s1 + $0x4b0] sm:$0xff]
    %v180 = vld [vmem:[%s1 + $0x4b8] sm:$0xff]
    %v181 = vld [vmem:[%s1 + $0x4c0] sm:$0xff]
    %v182 = vld [vmem:[%s1 + $0x4c8] sm:$0xff]
    %v183 = vld [vmem:[%s1 + $0x4d0] sm:$0xff]
    %v184 = vld [vmem:[%s1 + $0x4d8] sm:$0xff]
    %v185 = vld [vmem:[%s1 + $0x4e0] sm:$0xff]
    %v186 = vld [vmem:[%s1 + $0x4e8] sm:$0xff]
    %v187 = vld [vmem:[%s1 + $0x4f0] sm:$0xff]
    %v188 = vld [vmem:[%s1 + $0x4f8] sm:$0xff]
    %v189 = vld [vmem:[%s1 + $0x500] sm:$0xff]
    %v190 = vld [vmem:[%s1 + $0x508] sm:$0xff]
    %v191 = vld [vmem:[%s1 + $0x510] sm:$0xff]
    %v192 = vld [vmem:[%s1 + $0x518] sm:$0xff]
    %v193 = vld [vmem:[%s1 + $0x520] sm:$0xff]
    %v194 = vld [vmem:[%s1 + $0x528] sm:$0xff]
    %v195 = vld [vmem:[%s1 + $0x530] sm:$0xff]
    %v196 = vld [vmem:[%s1 + $0x538] sm:$0xff]
    %v197 = vld [vmem:[%s1 + $0x540] sm:$0xff]
    %v198 = vld [vmem:[%s1 + $0x548] sm:$0xff]
    %v199 = vld [vmem:[%s1 + $0x550] sm:$0xff]
    %v200 = vld [vmem:[%s1 + $0x558] sm:$0xff]
    %v201 = vld [vmem:[%s1 + $0x560] sm:$0xff]
    %v202 = vld [vmem:[%s1 + $0x568] sm:$0xff]
    %v203 = vld [vmem:[%s1 + $0x570] sm:$0xff]
    %v204 = vld [vmem:[%s1 + $0x578] sm:$0xff]
    %v205 = vld [vmem:[%s1 + $0x580] sm:$0xff]
    %v206 = vld [vmem:[%s1 + $0x588] sm:$0xff]
    %v207 = vld [vmem:[%s1 + $0x590] sm:$0xff]
    %v208 = vld [vmem:[%s1 + $0x598] sm:$0xff]
    %v209 = vld [vmem:[%s1 + $0x5a0] sm:$0xff]
    %v210 = vld [vmem:[%s1 + $0x5a8] sm:$0xff]
    %v211 = vld [vmem:[%s1 + $0x5b0] sm:$0xff]
    %v212 = vld [vmem:[%s1 + $0x5b8] sm:$0xff]
    %v213 = vld [vmem:[%s1 + $0x5c0] sm:$0xff]
    %v214 = vld [vmem:[%s1 + $0x5c8] sm:$0xff]
    %v215 = vld [vmem:[%s1 + $0x5d0] sm:$0xff]
    %v216 = vld [vmem:[%s1 + $0x5d8] sm:$0xff]
    %v217 = vld [vmem:[%s1 + $0x5e0] sm:$0xff]
    %v218 = vld [vmem:[%s1 + $0x5e8] sm:$0xff]
    %v219 = vld [vmem:[%s1 + $0x5f0] sm:$0xff]
    %v220 = vld [vmem:[%s1 + $0x5f8] sm:$0xff]
    %v221 = vld [vmem:[%s1 + $0x600] sm:$0xff]
    %v222 = vld [vmem:[%s1 + $0x608] sm:$0xff]
    %v223 = vld [vmem:[%s1 + $0x610] sm:$0xff]
    %v224 = vld [vmem:[%s1 + $0x618] sm:$0xff]
    %v225 = vld [vmem:[%s1 + $0x620] sm:$0xff]
    %v226 = vld [vmem:[%s1 + $0x628] sm:$0xff]
    %v227 = vld [vmem:[%s1 + $0x630] sm:$0xff]
    %v228 = vld [vmem:[%s1 + $0x638] sm:$0xff]
    %v229 = vld [vmem:[%s1 + $0x640] sm:$0xff]
    %v230 = vld [vmem:[%s1 + $0x648] sm:$0xff]
    %v231 = vld [vmem:[%s1 + $0x650] sm:$0xff]
    %v232 = vld [vmem:[%s1 + $0x658] sm:$0xff]
    %v233 = vld [vmem:[%s1 + $0x660] sm:$0xff]
    %v234 = vld [vmem:[%s1 + $0x668] sm:$0xff]
    %v235 = vld [vmem:[%s1 + $0x670] sm:$0xff]
    %v236 = vld [vmem:[%s1 + $0x678] sm:$0xff]
    %v237 = vld [vmem:[%s1 + $0x680] sm:$0xff]
    %v238 = vld [vmem:[%s1 + $0x688] sm:$0xff]
    %v239 = vld [vmem:[%s1 + $0x690] sm:$0xff]
    %v240 = vld [vmem:[%s1 + $0x698] sm:$0xff]
    %v241 = vld [vmem:[%s1 + $0x6a0] sm:$0xff]
    %v242 = vld [vmem:[%s1 + $0x6a8] sm:$0xff]
    %v243 = vld [vmem:[%s1 + $0x6b0] sm:$0xff]
    %v244 = vld [vmem:[%s1 + $0x6b8] sm:$0xff]
    %v245 = vld [vmem:[%s1 + $0x6c0] sm:$0xff]
    %v246 = vld [vmem:[%s1 + $0x6c8] sm:$0xff]
    %v247 = vld [vmem:[%s1 + $0x6d0] sm:$0xff]
    %v248 = vld [vmem:[%s1 + $0x6d8] sm:$0xff]
    %v249 = vld [vmem:[%s1 + $0x6e0] sm:$0xff]
    %v250 = vld [vmem:[%s1 + $0x6e8] sm:$0xff]
    %v251 = vld [vmem:[%s1 + $0x6f0] sm:$0xff]
    %v252 = vld [vmem:[%s1 + $0x6f8] sm:$0xff]
    %v253 = vld [vmem:[%s1 + $0x700] sm:$0xff]
    %v254 = vld [vmem:[%s1 + $0x708] sm:$0xff]
    %v255 = vld [vmem:[%s1 + $0x710] sm:$0xff]
    %v256 = vld [vmem:[%s1 + $0x718] sm:$0xff]
    %v257 = vld [vmem:[%s1 + $0x720] sm:$0xff]
    %v258 = vld [vmem:[%s1 + $0x728] sm:$0xff]
    %v259 = vld [vmem:[%s1 + $0x730] sm:$0xff]
    %v260 = vld [vmem:[%s1 + $0x738] sm:$0xff]
    %v261 = vld [vmem:[%s1 + $0x740] sm:$0xff]
    %v262 = vld [vmem:[%s1 + $0x748] sm:$0xff]
    %v263 = vld [vmem:[%s1 + $0x750] sm:$0xff]
    %v264 = vld [vmem:[%s1 + $0x758] sm:$0xff]
    %v265 = vld [vmem:[%s1 + $0x760] sm:$0xff]
    %v266 = vld [vmem:[%s1 + $0x768] sm:$0xff]
    %v267 = vld [vmem:[%s1 + $0x770] sm:$0xff]
    %v268 = vld [vmem:[%s1 + $0x778] sm:$0xff]
    %v269 = vld [vmem:[%s1 + $0x780] sm:$0xff]
    %v270 = vld [vmem:[%s1 + $0x788] sm:$0xff]
    %v271 = vld [vmem:[%s1 + $0x790] sm:$0xff]
    %v272 = vld [vmem:[%s1 + $0x798] sm:$0xff]
    %v273 = vld [vmem:[%s1 + $0x7a0] sm:$0xff]
    %v274 = vld [vmem:[%s1 + $0x7a8] sm:$0xff]
    %v275 = vld [vmem:[%s1 + $0x7b0] sm:$0xff]
    %v276 = vld [vmem:[%s1 + $0x7b8] sm:$0xff]
    %v277 = vld [vmem:[%s1 + $0x7c0] sm:$0xff]
    %v278 = vld [vmem:[%s1 + $0x7c8] sm:$0xff]
    %v279 = vld [vmem:[%s1 + $0x7d0] sm:$0xff]
    %v280 = vld [vmem:[%s1 + $0x7d8] sm:$0xff]
    %v281 = vld [vmem:[%s1 + $0x7e0] sm:$0xff]
    %v282 = vld [vmem:[%s1 + $0x7e8] sm:$0xff]
    %v283 = vld [vmem:[%s1 + $0x7f0] sm:$0xff]
    %v284 = vld [vmem:[%s1 + $0x7f8] sm:$0xff]
    %v285 = vld [vmem:[%s1 + $0x800] sm:$0xff]
    %v286 = vld [vmem:[%s1 + $0x808] sm:$0xff]
    %v287 = vld [vmem:[%s1 + $0x810] sm:$0xff]
    %v288 = vld [vmem:[%s1 + $0x818] sm:$0xff]
    %v289 = vld [vmem:[%s1 + $0x820] sm:$0xff]
    %v290 = vld [vmem:[%s1 + $0x828] sm:$0xff]
    %v291 = vld [vmem:[%s1 + $0x830] sm:$0xff]
    %v292 = vld [vmem:[%s1 + $0x838] sm:$0xff]
    %v293 = vld [vmem:[%s1 + $0x840] sm:$0xff]
    %v294 = vld [vmem:[%s1 + $0x848] sm:$0xff]
    %v295 = vld [vmem:[%s1 + $0x850] sm:$0xff]
    %v296 = vld [vmem:[%s1 + $0x858] sm:$0xff]
    %v297 = vld [vmem:[%s1 + $0x860] sm:$0xff]
    %v298 = vld [vmem:[%s1 + $0x868] sm:$0xff]
    %v299 = vld [vmem:[%s1 + $0x870] sm:$0xff]
    %v300 = vld [vmem:[%s1 + $0x878] sm:$0xff]
    %v301 = vld [vmem:[%s1 + $0x880] sm:$0xff]
    %v302 = vld [vmem:[%s1 + $0x888] sm:$0xff]
    %v303 = vld [vmem:[%s1 + $0x890] sm:$0xff]
    %v304 = vld [vmem:[%s1 + $0x898] sm:$0xff]
    %v305 = vld [vmem:[%s1 + $0x8a0] sm:$0xff]
    %v306 = vld [vmem:[%s1 + $0x8a8] sm:$0xff]
    %v307 = vld [vmem:[%s1 + $0x8b0] sm:$0xff]
    %v308 = vld [vmem:[%s1 + $0x8b8] sm:$0xff]
    %v309 = vld [vmem:[%s1 + $0x8c0] sm:$0xff]
    %v310 = vld [vmem:[%s1 + $0x8c8] sm:$0xff]
    %v311 = vld [vmem:[%s1 + $0x8d0] sm:$0xff]
    %v312 = vld [vmem:[%s1 + $0x8d8] sm:$0xff]
    %v313 = vld [vmem:[%s1 + $0x8e0] sm:$0xff]
    %v314 = vld [vmem:[%s1 + $0x8e8] sm:$0xff]
    %v315 = vld [vmem:[%s1 + $0x8f0] sm:$0xff]
    %v316 = vld [vmem:[%s1 + $0x8f8] sm:$0xff]
    %v317 = vld [vmem:[%s1 + $0x900] sm:$0xff]
    %v318 = vld [vmem:[%s1 + $0x908] sm:$0xff]
    %v319 = vld [vmem:[%s1 + $0x910] sm:$0xff]
    %v320 = vld [vmem:[%s1 + $0x918] sm:$0xff]
    %v321 = vld [vmem:[%s1 + $0x920] sm:$0xff]
    %v322 = vld [vmem:[%s1 + $0x928] sm:$0xff]
    %v323 = vld [vmem:[%s1 + $0x930] sm:$0xff]
    %v324 = vld [vmem:[%s1 + $0x938] sm:$0xff]
    %v325 = vld [vmem:[%s1 + $0x940] sm:$0xff]
    %v326 = vld [vmem:[%s1 + $0x948] sm:$0xff]
    %v327 = vld [vmem:[%s1 + $0x950] sm:$0xff]
    %v328 = vld [vmem:[%s1 + $0x958] sm:$0xff]
    %v329 = vld [vmem:[%s1 + $0x960] sm:$0xff]
    %v330 = vld [vmem:[%s1 + $0x968] sm:$0xff]
    %v331 = vld [vmem:[%s1 + $0x970] sm:$0xff]
    %v332 = vld [vmem:[%s1 + $0x978] sm:$0xff]
    %v333 = vld [vmem:[%s1 + $0x980] sm:$0xff]
    %v334 = vld [vmem:[%s1 + $0x988] sm:$0xff]
    %v335 = vld [vmem:[%s1 + $0x990] sm:$0xff]
    %v336 = vld [vmem:[%s1 + $0x998] sm:$0xff]
    %v337 = vld [vmem:[%s1 + $0x9a0] sm:$0xff]
    %v338 = vld [vmem:[%s1 + $0x9a8] sm:$0xff]
    %v339 = vld [vmem:[%s1 + $0x9b0] sm:$0xff]
    %v340 = vld [vmem:[%s1 + $0x9b8] sm:$0xff]
    %v341 = vld [vmem:[%s1 + $0x9c0] sm:$0xff]
    %v342 = vld [vmem:[%s1 + $0x9c8] sm:$0xff]
    %v343 = vld [vmem:[%s1 + $0x9d0] sm:$0xff]
    %v344 = vld [vmem:[%s1 + $0x9d8] sm:$0xff]
    %v345 = vld [vmem:[%s1 + $0x9e0] sm:$0xff]
    %v346 = vld [vmem:[%s1 + $0x9e8] sm:$0xff]
    %v347 = vld [vmem:[%s1 + $0x9f0] sm:$0xff]
    %v348 = vld [vmem:[%s1 + $0x9f8] sm:$0xff]
    %v349 = vld [vmem:[%s1 + $0xa00] sm:$0xff]
    %v350 = vld [vmem:[%s1 + $0xa08] sm:$0xff]
    %v351 = vld [vmem:[%s1 + $0xa10] sm:$0xff]
    %v352 = vld [vmem:[%s1 + $0xa18] sm:$0xff]
    %v353 = vld [vmem:[%s1 + $0xa20] sm:$0xff]
    %v354 = vld [vmem:[%s1 + $0xa28] sm:$0xff]
    %v355 = vld [vmem:[%s1 + $0xa30] sm:$0xff]
    %v356 = vld [vmem:[%s1 + $0xa38] sm:$0xff]
    %v357 = vld [vmem:[%s1 + $0xa40] sm:$0xff]
    %v358 = vld [vmem:[%s1 + $0xa48] sm:$0xff]
    %v359 = vld [vmem:[%s1 + $0xa50] sm:$0xff]
    %v360 = vld [vmem:[%s1 + $0xa58] sm:$0xff]
    %v361 = vld [vmem:[%s1 + $0xa60] sm:$0xff]
    %v362 = vld [vmem:[%s1 + $0xa68] sm:$0xff]
    %v363 = vld [vmem:[%s1 + $0xa70] sm:$0xff]
    %v364 = vld [vmem:[%s1 + $0xa78] sm:$0xff]
    %v365 = vld [vmem:[%s1 + $0xa80] sm:$0xff]
    %v366 = vld [vmem:[%s1 + $0xa88] sm:$0xff]
    %v367 = vld [vmem:[%s1 + $0xa90] sm:$0xff]
    %v368 = vld [vmem:[%s1 + $0xa98] sm:$0xff]
    %v369 = vld [vmem:[%s1 + $0xaa0] sm:$0xff]
    %v370 = vld [vmem:[%s1 + $0xaa8] sm:$0xff]
    %v371 = vld [vmem:[%s1 + $0xab0] sm:$0xff]
    %v372 = vld [vmem:[%s1 + $0xab8] sm:$0xff]
    %v373 = vld [vmem:[%s1 + $0xac0] sm:$0xff]
    %v374 = vld [vmem:[%s1 + $0xac8] sm:$0xff]
    %v375 = vld [vmem:[%s1 + $0xad0] sm:$0xff]
    %v376 = vld [vmem:[%s1 + $0xad8] sm:$0xff]
    %v377 = vld [vmem:[%s1 + $0xae0] sm:$0xff]
    %v378 = vld [vmem:[%s1 + $0xae8] sm:$0xff]
    %v379 = vld [vmem:[%s1 + $0xaf0] sm:$0xff]
    %v380 = vld [vmem:[%s1 + $0xaf8] sm:$0xff]
    %v381 = vld [vmem:[%s1 + $0xb00] sm:$0xff]
    %v382 = vld [vmem:[%s1 + $0xb08] sm:$0xff]
    %v383 = vld [vmem:[%s1 + $0xb10] sm:$0xff]
    %v384 = vld [vmem:[%s1 + $0xb18] sm:$0xff]
    %v385 = vld [vmem:[%s1 + $0xb20] sm:$0xff]
    %v386 = vld [vmem:[%s1 + $0xb28] sm:$0xff]
    %v387 = vld [vmem:[%s1 + $0xb30] sm:$0xff]
    %v388 = vld [vmem:[%s1 + $0xb38] sm:$0xff]
    %v389 = vld [vmem:[%s1 + $0xb40] sm:$0xff]
    %v390 = vld [vmem:[%s1 + $0xb48] sm:$0xff]
    %v391 = vld [vmem:[%s1 + $0xb50] sm:$0xff]
    %v392 = vld [vmem:[%s1 + $0xb58] sm:$0xff]
    %v393 = vld [vmem:[%s1 + $0xb60] sm:$0xff]
    %v394 = vld [vmem:[%s1 + $0xb68] sm:$0xff]
    %v395 = vld [vmem:[%s1 + $0xb70] sm:$0xff]
    %v396 = vld [vmem:[%s1 + $0xb78] sm:$0xff]
    %v397 = vld [vmem:[%s1 + $0xb80] sm:$0xff]
    %v398 = vld [vmem:[%s1 + $0xb88] sm:$0xff]
    %v399 = vld [vmem:[%s1 + $0xb90] sm:$0xff]
    %v400 = vld [vmem:[%s1 + $0xb98] sm:$0xff]
    %v401 = vld [vmem:[%s1 + $0xba0] sm:$0xff]
    %v402 = vld [vmem:[%s1 + $0xba8] sm:$0xff]
    %v403 = vld [vmem:[%s1 + $0xbb0] sm:$0xff]
    %v404 = vld [vmem:[%s1 + $0xbb8] sm:$0xff]
    %v405 = vld [vmem:[%s1 + $0xbc0] sm:$0xff]
    %v406 = vld [vmem:[%s1 + $0xbc8] sm:$0xff]
    %v407 = vld [vmem:[%s1 + $0xbd0] sm:$0xff]
    %v408 = vld [vmem:[%s1 + $0xbd8] sm:$0xff]
    %v409 = vld [vmem:[%s1 + $0xbe0] sm:$0xff]
    %v410 = vld [vmem:[%s1 + $0xbe8] sm:$0xff]
    %v411 = vld [vmem:[%s1 + $0xbf0] sm:$0xff]
    %v412 = vld [vmem:[%s1 + $0xbf8] sm:$0xff]
    %v413 = vld [vmem:[%s1 + $0xc00] sm:$0xff]
    %v414 = vld [vmem:[%s1 + $0xc08] sm:$0xff]
    %v415 = vld [vmem:[%s1 + $0xc10] sm:$0xff]
    %v416 = vld [vmem:[%s1 + $0xc18] sm:$0xff]
    %v417 = vld [vmem:[%s1 + $0xc20] sm:$0xff]
    %v418 = vld [vmem:[%s1 + $0xc28] sm:$0xff]
    %v419 = vld [vmem:[%s1 + $0xc30] sm:$0xff]
    %v420 = vld [vmem:[%s1 + $0xc38] sm:$0xff]
    %v421 = vld [vmem:[%s1 + $0xc40] sm:$0xff]
    %v422 = vld [vmem:[%s1 + $0xc48] sm:$0xff]
    %v423 = vld [vmem:[%s1 + $0xc50] sm:$0xff]
    %v424 = vld [vmem:[%s1 + $0xc58] sm:$0xff]
    %v425 = vld [vmem:[%s1 + $0xc60] sm:$0xff]
    %v426 = vld [vmem:[%s1 + $0xc68] sm:$0xff]
    %v427 = vld [vmem:[%s1 + $0xc70] sm:$0xff]
    %v428 = vld [vmem:[%s1 + $0xc78] sm:$0xff]
    %v429 = vld [vmem:[%s1 + $0xc80] sm:$0xff]
    %v430 = vld [vmem:[%s1 + $0xc88] sm:$0xff]
    %v431 = vld [vmem:[%s1 + $0xc90] sm:$0xff]
    %v432 = vld [vmem:[%s1 + $0xc98] sm:$0xff]
    %v433 = vld [vmem:[%s1 + $0xca0] sm:$0xff]
    %v434 = vld [vmem:[%s1 + $0xca8] sm:$0xff]
    %v435 = vld [vmem:[%s1 + $0xcb0] sm:$0xff]
    %v436 = vld [vmem:[%s1 + $0xcb8] sm:$0xff]
    %v437 = vld [vmem:[%s1 + $0xcc0] sm:$0xff]
    %v438 = vld [vmem:[%s1 + $0xcc8] sm:$0xff]
    %v439 = vld [vmem:[%s1 + $0xcd0] sm:$0xff]
    %v440 = vld [vmem:[%s1 + $0xcd8] sm:$0xff]
    %v441 = vld [vmem:[%s1 + $0xce0] sm:$0xff]
    %v442 = vld [vmem:[%s1 + $0xce8] sm:$0xff]
    %v443 = vld [vmem:[%s1 + $0xcf0] sm:$0xff]
    %v444 = vld [vmem:[%s1 + $0xcf8] sm:$0xff]
    %v445 = vld [vmem:[%s1 + $0xd00] sm:$0xff]
    %v446 = vld [vmem:[%s1 + $0xd08] sm:$0xff]
    %v447 = vld [vmem:[%s1 + $0xd10] sm:$0xff]
    %v448 = vld [vmem:[%s1 + $0xd18] sm:$0xff]
    %v449 = vld [vmem:[%s1 + $0xd20] sm:$0xff]
    %v450 = vld [vmem:[%s1 + $0xd28] sm:$0xff]
    %v451 = vld [vmem:[%s1 + $0xd30] sm:$0xff]
    %v452 = vld [vmem:[%s1 + $0xd38] sm:$0xff]
    %v453 = vld [vmem:[%s1 + $0xd40] sm:$0xff]
    %v454 = vld [vmem:[%s1 + $0xd48] sm:$0xff]
    %v455 = vld [vmem:[%s1 + $0xd50] sm:$0xff]
    %v456 = vld [vmem:[%s1 + $0xd58] sm:$0xff]
    %v457 = vld [vmem:[%s1 + $0xd60] sm:$0xff]
    %v458 = vld [vmem:[%s1 + $0xd68] sm:$0xff]
    %v459 = vld [vmem:[%s1 + $0xd70] sm:$0xff]
    %v460 = vld [vmem:[%s1 + $0xd78] sm:$0xff]
    %v461 = vld [vmem:[%s1 + $0xd80] sm:$0xff]
    %v462 = vld [vmem:[%s1 + $0xd88] sm:$0xff]
    %v463 = vld [vmem:[%s1 + $0xd90] sm:$0xff]
    %v464 = vld [vmem:[%s1 + $0xd98] sm:$0xff]
    %v465 = vld [vmem:[%s1 + $0xda0] sm:$0xff]
    %v466 = vld [vmem:[%s1 + $0xda8] sm:$0xff]
    %v467 = vld [vmem:[%s1 + $0xdb0] sm:$0xff]
    %v468 = vld [vmem:[%s1 + $0xdb8] sm:$0xff]
    %v469 = vld [vmem:[%s1 + $0xdc0] sm:$0xff]
    %v470 = vld [vmem:[%s1 + $0xdc8] sm:$0xff]
    %v471 = vld [vmem:[%s1 + $0xdd0] sm:$0xff]
    %v472 = vld [vmem:[%s1 + $0xdd8] sm:$0xff]
    %v473 = vld [vmem:[%s1 + $0xde0] sm:$0xff]
    %v474 = vld [vmem:[%s1 + $0xde8] sm:$0xff]
    %v475 = vld [vmem:[%s1 + $0xdf0] sm:$0xff]
    %v476 = vld [vmem:[%s1 + $0xdf8] sm:$0xff]
    %v477 = vld [vmem:[%s1 + $0xe00] sm:$0xff]
    %v478 = vld [vmem:[%s1 + $0xe08] sm:$0xff]
    %v479 = vld [vmem:[%s1 + $0xe10] sm:$0xff]
    %v480 = vld [vmem:[%s1 + $0xe18] sm:$0xff]
    %v481 = vld [vmem:[%s1 + $0xe20] sm:$0xff]
    %v482 = vld [vmem:[%s1 + $0xe28] sm:$0xff]
    %v483 = vld [vmem:[%s1 + $0xe30] sm:$0xff]
    %v484 = vld [vmem:[%s1 + $0xe38] sm:$0xff]
    %v485 = vld [vmem:[%s1 + $0xe40] sm:$0xff]
    %v486 = vld [vmem:[%s1 + $0xe48] sm:$0xff]
    %v487 = vld [vmem:[%s1 + $0xe50] sm:$0xff]
    %v488 = vld [vmem:[%s1 + $0xe58] sm:$0xff]
    %v489 = vld [vmem:[%s1 + $0xe60] sm:$0xff]
    %v490 = vld [vmem:[%s1 + $0xe68] sm:$0xff]
    %v491 = vld [vmem:[%s1 + $0xe70] sm:$0xff]
    %v492 = vld [vmem:[%s1 + $0xe78] sm:$0xff]
    %v493 = vld [vmem:[%s1 + $0xe80] sm:$0xff]
    %v494 = vld [vmem:[%s1 + $0xe88] sm:$0xff]
    %v495 = vld [vmem:[%s1 + $0xe90] sm:$0xff]
    %v496 = vld [vmem:[%s1 + $0xe98] sm:$0xff]
    %v497 = vld [vmem:[%s1 + $0xea0] sm:$0xff]
    %v498 = vld [vmem:[%s1 + $0xea8] sm:$0xff]
    %v499 = vld [vmem:[%s1 + $0xeb0] sm:$0xff]
    %v500 = vld [vmem:[%s1 + $0xeb8] sm:$0xff]
    %v501 = vld [vmem:[%s1 + $0xec0] sm:$0xff]
    %v502 = vld [vmem:[%s1 + $0xec8] sm:$0xff]
    %v503 = vld [vmem:[%s1 + $0xed0] sm:$0xff]
    %v504 = vld [vmem:[%s1 + $0xed8] sm:$0xff]
    %v505 = vld [vmem:[%s1 + $0xee0] sm:$0xff]
    %v506 = vld [vmem:[%s1 + $0xee8] sm:$0xff]
    %v507 = vld [vmem:[%s1 + $0xef0] sm:$0xff]
    %v508 = vld [vmem:[%s1 + $0xef8] sm:$0xff]
    %v509 = vld [vmem:[%s1 + $0xf00] sm:$0xff]
    %v510 = vld [vmem:[%s1 + $0xf08] sm:$0xff]
    %v511 = vld [vmem:[%s1 + $0xf10] sm:$0xff]
    %v512 = vld [vmem:[%s1 + $0xf18] sm:$0xff]
    %v513 = vld [vmem:[%s1 + $0xf20] sm:$0xff]
    %v514 = vld [vmem:[%s1 + $0xf28] sm:$0xff]
    %v515 = vld [vmem:[%s1 + $0xf30] sm:$0xff]
    %v516 = vld [vmem:[%s1 + $0xf38] sm:$0xff]
    %v517 = vld [vmem:[%s1 + $0xf40] sm:$0xff]
    %v518 = vld [vmem:[%s1 + $0xf48] sm:$0xff]
    %v519 = vld [vmem:[%s2] sm:$0x1]
    %v521 = vlaneseq
    %v522 = vshrl.u32 %v521, 7
    %v523 = vsub.s32 0, %v522
    %v524 = vrot.slane %v519, %v523
    %v534 = vcombine.high %v21, %v21
    %v536 = vunpack.c.l.s4 1983009808
    %v537 = vunpack.c.0.s8 %v536
    %v538 = vlaneseq
    %v539 = vshrl.u32 %v538, 7
    %v540 = vsub.s32 %v537, %v539
    %v541 = vrot.slane %v21, %v540
    %v543 = vunpack.c.l.s4 1983009808
    %v544 = vunpack.c.0.s8 %v543
    %v545 = vlaneseq
    %v546 = vshrl.u32 %v545, 7
    %v547 = vsub.s32 %v544, %v546
    %v548 = vrot.slane %v534, %v547
    %v549 = vcombine.high %v541, %v541
    %v550 = vcombine.high %v548, %v548
    %v551 = vcombine.high %v22, %v22
    %v553 = vunpack.c.l.s4 1983009808
    %v554 = vunpack.c.0.s8 %v553
    %v555 = vlaneseq
    %v556 = vshrl.u32 %v555, 7
    %v557 = vsub.s32 %v554, %v556
    %v558 = vrot.slane %v22, %v557
    %v560 = vunpack.c.l.s4 1983009808
    %v561 = vunpack.c.0.s8 %v560
    %v562 = vlaneseq
    %v563 = vshrl.u32 %v562, 7
    %v564 = vsub.s32 %v561, %v563
    %v565 = vrot.slane %v551, %v564
    %v566 = vcombine.high %v558, %v558
    %v567 = vcombine.high %v565, %v565
    %v568 = vcombine.high %v23, %v23
    %v570 = vunpack.c.l.s4 1983009808
    %v571 = vunpack.c.0.s8 %v570
    %v572 = vlaneseq
    %v573 = vshrl.u32 %v572, 7
    %v574 = vsub.s32 %v571, %v573
    %v575 = vrot.slane %v23, %v574
    %v577 = vunpack.c.l.s4 1983009808
    %v578 = vunpack.c.0.s8 %v577
    %v579 = vlaneseq
    %v580 = vshrl.u32 %v579, 7
    %v581 = vsub.s32 %v578, %v580
    %v582 = vrot.slane %v568, %v581
    %v583 = vcombine.high %v575, %v575
    %v584 = vcombine.high %v582, %v582
    %v585 = vcombine.high %v24, %v24
    %v587 = vunpack.c.l.s4 1983009808
    %v588 = vunpack.c.0.s8 %v587
    %v589 = vlaneseq
    %v590 = vshrl.u32 %v589, 7
    %v591 = vsub.s32 %v588, %v590
    %v592 = vrot.slane %v24, %v591
    %v594 = vunpack.c.l.s4 1983009808
    %v595 = vunpack.c.0.s8 %v594
    %v596 = vlaneseq
    %v597 = vshrl.u32 %v596, 7
    %v598 = vsub.s32 %v595, %v597
    %v599 = vrot.slane %v585, %v598
    %v600 = vcombine.high %v592, %v592
    %v601 = vcombine.high %v599, %v599
    %v602 = vcombine.high %v25, %v25
    %v604 = vunpack.c.l.s4 1983009808
    %v605 = vunpack.c.0.s8 %v604
    %v606 = vlaneseq
    %v607 = vshrl.u32 %v606, 7
    %v608 = vsub.s32 %v605, %v607
    %v609 = vrot.slane %v25, %v608
    %v611 = vunpack.c.l.s4 1983009808
    %v612 = vunpack.c.0.s8 %v611
    %v613 = vlaneseq
    %v614 = vshrl.u32 %v613, 7
    %v615 = vsub.s32 %v612, %v614
    %v616 = vrot.slane %v602, %v615
    %v617 = vcombine.high %v609, %v609
    %v618 = vcombine.high %v616, %v616
    %v619 = vcombine.high %v26, %v26
    %v621 = vunpack.c.l.s4 1983009808
    %v622 = vunpack.c.0.s8 %v621
    %v623 = vlaneseq
    %v624 = vshrl.u32 %v623, 7
    %v625 = vsub.s32 %v622, %v624
    %v626 = vrot.slane %v26, %v625
    %v628 = vunpack.c.l.s4 1983009808
    %v629 = vunpack.c.0.s8 %v628
    %v630 = vlaneseq
    %v631 = vshrl.u32 %v630, 7
    %v632 = vsub.s32 %v629, %v631
    %v633 = vrot.slane %v619, %v632
    %v634 = vcombine.high %v626, %v626
    %v635 = vcombine.high %v633, %v633
    %v636 = vcombine.high %v27, %v27
    %v638 = vunpack.c.l.s4 1983009808
    %v639 = vunpack.c.0.s8 %v638
    %v640 = vlaneseq
    %v641 = vshrl.u32 %v640, 7
    %v642 = vsub.s32 %v639, %v641
    %v643 = vrot.slane %v27, %v642
    %v645 = vunpack.c.l.s4 1983009808
    %v646 = vunpack.c.0.s8 %v645
    %v647 = vlaneseq
    %v648 = vshrl.u32 %v647, 7
    %v649 = vsub.s32 %v646, %v648
    %v650 = vrot.slane %v636, %v649
    %v651 = vcombine.high %v643, %v643
    %v652 = vcombine.high %v650, %v650
    %v653 = vcombine.high %v28, %v28
    %v655 = vunpack.c.l.s4 1983009808
    %v656 = vunpack.c.0.s8 %v655
    %v657 = vlaneseq
    %v658 = vshrl.u32 %v657, 7
    %v659 = vsub.s32 %v656, %v658
    %v660 = vrot.slane %v28, %v659
    %v662 = vunpack.c.l.s4 1983009808
    %v663 = vunpack.c.0.s8 %v662
    %v664 = vlaneseq
    %v665 = vshrl.u32 %v664, 7
    %v666 = vsub.s32 %v663, %v665
    %v667 = vrot.slane %v653, %v666
    %v668 = vcombine.high %v660, %v660
    %vm699 = vcmask 654336
    %v700 = vsel %vm699, %v667, 0
    %702 = vmatprep.subr.mxu0 0.0
    %703 = vmatpush1.msra.mxu0 %v29
    %704 = vmatprep.subr.mxu0 0.0
    %705 = vmatpush1.msra.mxu0 %v30
    %706 = vmatprep.subr.mxu0 0.0
    %707 = vmatpush1.msra.mxu0 %v31
    %708 = vmatprep.subr.mxu0 0.0
    %709 = vmatpush1.msra.mxu0 %v32
    %710 = vmatprep.subr.mxu0 0.0
    %711 = vmatpush1.msra.mxu0 %v33
    %712 = vmatprep.subr.mxu0 0.0
    %713 = vmatpush1.msra.mxu0 %v34
    %714 = vmatprep.subr.mxu0 0.0
    %715 = vmatpush1.msra.mxu0 %v35
    %716 = vmatprep.subr.mxu0 0.0
    %717 = vmatpush1.msra.mxu0 %v36
    %718 = vmatprep.subr.mxu0 0.0
    %719 = vmatpush1.msra.mxu0 %v37
    %720 = vmatprep.subr.mxu0 0.0
    %721 = vmatpush1.msra.mxu0 %v38
    %722 = vmatprep.subr.mxu0 0.0
    %723 = vmatpush1.msra.mxu0 %v39
    %724 = vmatprep.subr.mxu0 0.0
    %725 = vmatpush1.msra.mxu0 %v40
    %726 = vmatprep.subr.mxu0 0.0
    %727 = vmatpush1.msra.mxu0 %v41
    %728 = vmatprep.subr.mxu0 0.0
    %729 = vmatpush1.msra.mxu0 %v42
    %730 = vmatprep.subr.mxu0 0.0
    %731 = vmatpush1.msra.mxu0 %v43
    %732 = vmatprep.subr.mxu0 0.0
    %733 = vmatpush1.msra.mxu0 %v44
    %734 = vmatprep.subr.mxu0 0.0
    %735 = vmatpush1.msra.mxu0 %v45
    %736 = vmatprep.subr.mxu0 0.0
    %737 = vmatpush1.msra.mxu0 %v46
    %738 = vmatprep.subr.mxu0 0.0
    %739 = vmatpush1.msra.mxu0 %v47
    %740 = vmatprep.subr.mxu0 0.0
    %741 = vmatpush1.msra.mxu0 %v48
    %742 = vmatprep.subr.mxu0 0.0
    %743 = vmatpush1.msra.mxu0 %v49
    %744 = vmatprep.subr.mxu0 0.0
    %745 = vmatpush1.msra.mxu0 %v50
    %746 = vmatprep.subr.mxu0 0.0
    %747 = vmatpush1.msra.mxu0 %v51
    %748 = vmatprep.subr.mxu0 0.0
    %749 = vmatpush1.msra.mxu0 %v52
    %750 = vmatprep.subr.mxu0 0.0
    %751 = vmatpush1.msra.mxu0 %v53
    %752 = vmatprep.subr.mxu0 0.0
    %753 = vmatpush1.msra.mxu0 %v54
    %754 = vmatprep.subr.mxu0 0.0
    %755 = vmatpush1.msra.mxu0 %v55
    %756 = vmatprep.subr.mxu0 0.0
    %757 = vmatpush1.msra.mxu0 %v56
    %758 = vmatprep.subr.mxu0 0.0
    %759 = vmatpush1.msra.mxu0 %v57
    %760 = vmatprep.subr.mxu0 0.0
    %761 = vmatpush1.msra.mxu0 %v58
    %762 = vmatprep.subr.mxu0 0.0
    %763 = vmatpush1.msra.mxu0 %v59
    %764 = vmatprep.subr.mxu0 0.0
    %765 = vmatpush1.msra.mxu0 %v60
    %766 = vmatprep.mubr.f32.mxu0 %v549
    %767 = vmatmul.mubr.f32.gmra.mrb[0].mxu0 %v541
    %v768 = vpop.f32.mrb[0].mxu0
    %v769 = vadd.f32 %v524, %v768
    %v770 = vpop.f32.mrb[0].mxu0
    %771 = vdwg.mxu0
    %772 = vmatprep.subr.mxu0 0.0
    %773 = vmatpush1.msra.mxu0 %v61
    %774 = vmatprep.subr.mxu0 0.0
    %775 = vmatpush1.msra.mxu0 %v62
    %776 = vmatprep.subr.mxu0 0.0
    %777 = vmatpush1.msra.mxu0 %v63
    %778 = vmatprep.subr.mxu0 0.0
    %779 = vmatpush1.msra.mxu0 %v64
    %780 = vmatprep.subr.mxu0 0.0
    %781 = vmatpush1.msra.mxu0 %v65
    %782 = vmatprep.subr.mxu0 0.0
    %783 = vmatpush1.msra.mxu0 %v66
    %784 = vmatprep.subr.mxu0 0.0
    %785 = vmatpush1.msra.mxu0 %v67
    %786 = vmatprep.subr.mxu0 0.0
    %787 = vmatpush1.msra.mxu0 %v68
    %788 = vmatprep.subr.mxu0 0.0
    %789 = vmatpush1.msra.mxu0 %v69
    %790 = vmatprep.subr.mxu0 0.0
    %791 = vmatpush1.msra.mxu0 %v70
    %792 = vmatprep.subr.mxu0 0.0
    %793 = vmatpush1.msra.mxu0 %v71
    %794 = vmatprep.subr.mxu0 0.0
    %795 = vmatpush1.msra.mxu0 %v72
    %796 = vmatprep.subr.mxu0 0.0
    %797 = vmatpush1.msra.mxu0 %v73
    %798 = vmatprep.subr.mxu0 0.0
    %799 = vmatpush1.msra.mxu0 %v74
    %800 = vmatprep.subr.mxu0 0.0
    %801 = vmatpush1.msra.mxu0 %v75
    %802 = vmatprep.subr.mxu0 0.0
    %803 = vmatpush1.msra.mxu0 %v76
    %804 = vmatprep.subr.mxu0 0.0
    %805 = vmatpush1.msra.mxu0 %v77
    %806 = vmatprep.subr.mxu0 0.0
    %807 = vmatpush1.msra.mxu0 %v78
    %808 = vmatprep.subr.mxu0 0.0
    %809 = vmatpush1.msra.mxu0 %v79
    %810 = vmatprep.subr.mxu0 0.0
    %811 = vmatpush1.msra.mxu0 %v80
    %812 = vmatprep.subr.mxu0 0.0
    %813 = vmatpush1.msra.mxu0 %v81
    %814 = vmatprep.subr.mxu0 0.0
    %815 = vmatpush1.msra.mxu0 %v82
    %816 = vmatprep.subr.mxu0 0.0
    %817 = vmatpush1.msra.mxu0 %v83
    %818 = vmatprep.subr.mxu0 0.0
    %819 = vmatpush1.msra.mxu0 %v84
    %820 = vmatprep.subr.mxu0 0.0
    %821 = vmatpush1.msra.mxu0 %v85
    %822 = vmatprep.subr.mxu0 0.0
    %823 = vmatpush1.msra.mxu0 %v86
    %824 = vmatprep.subr.mxu0 0.0
    %825 = vmatpush1.msra.mxu0 %v87
    %826 = vmatprep.subr.mxu0 0.0
    %827 = vmatpush1.msra.mxu0 %v88
    %828 = vmatprep.subr.mxu0 0.0
    %829 = vmatpush1.msra.mxu0 %v89
    %830 = vmatprep.subr.mxu0 0.0
    %831 = vmatpush1.msra.mxu0 %v90
    %832 = vmatprep.subr.mxu0 0.0
    %833 = vmatpush1.msra.mxu0 %v91
    %834 = vmatprep.subr.mxu0 0.0
    %835 = vmatpush1.msra.mxu0 %v92
    %836 = vmatprep.mubr.f32.mxu0 %v550
    %837 = vmatmul.mubr.f32.gmra.mrb[0].mxu0 %v548
    %v838 = vpop.f32.mrb[0].mxu0
    %v839 = vadd.f32 %v769, %v838
    %v840 = vpop.f32.mrb[0].mxu0
    %841 = vdwg.mxu0
    %842 = vmatprep.subr.mxu0 0.0
    %843 = vmatpush1.msra.mxu0 %v93
    %844 = vmatprep.subr.mxu0 0.0
    %845 = vmatpush1.msra.mxu0 %v94
    %846 = vmatprep.subr.mxu0 0.0
    %847 = vmatpush1.msra.mxu0 %v95
    %848 = vmatprep.subr.mxu0 0.0
    %849 = vmatpush1.msra.mxu0 %v96
    %850 = vmatprep.subr.mxu0 0.0
    %851 = vmatpush1.msra.mxu0 %v97
    %852 = vmatprep.subr.mxu0 0.0
    %853 = vmatpush1.msra.mxu0 %v98
    %854 = vmatprep.subr.mxu0 0.0
    %855 = vmatpush1.msra.mxu0 %v99
    %856 = vmatprep.subr.mxu0 0.0
    %857 = vmatpush1.msra.mxu0 %v100
    %858 = vmatprep.subr.mxu0 0.0
    %859 = vmatpush1.msra.mxu0 %v101
    %860 = vmatprep.subr.mxu0 0.0
    %861 = vmatpush1.msra.mxu0 %v102
    %862 = vmatprep.subr.mxu0 0.0
    %863 = vmatpush1.msra.mxu0 %v103
    %864 = vmatprep.subr.mxu0 0.0
    %865 = vmatpush1.msra.mxu0 %v104
    %866 = vmatprep.subr.mxu0 0.0
    %867 = vmatpush1.msra.mxu0 %v105
    %868 = vmatprep.subr.mxu0 0.0
    %869 = vmatpush1.msra.mxu0 %v106
    %870 = vmatprep.subr.mxu0 0.0
    %871 = vmatpush1.msra.mxu0 %v107
    %872 = vmatprep.subr.mxu0 0.0
    %873 = vmatpush1.msra.mxu0 %v108
    %874 = vmatprep.subr.mxu0 0.0
    %875 = vmatpush1.msra.mxu0 %v109
    %876 = vmatprep.subr.mxu0 0.0
    %877 = vmatpush1.msra.mxu0 %v110
    %878 = vmatprep.subr.mxu0 0.0
    %879 = vmatpush1.msra.mxu0 %v111
    %880 = vmatprep.subr.mxu0 0.0
    %881 = vmatpush1.msra.mxu0 %v112
    %882 = vmatprep.subr.mxu0 0.0
    %883 = vmatpush1.msra.mxu0 %v113
    %884 = vmatprep.subr.mxu0 0.0
    %885 = vmatpush1.msra.mxu0 %v114
    %886 = vmatprep.subr.mxu0 0.0
    %887 = vmatpush1.msra.mxu0 %v115
    %888 = vmatprep.subr.mxu0 0.0
    %889 = vmatpush1.msra.mxu0 %v116
    %890 = vmatprep.subr.mxu0 0.0
    %891 = vmatpush1.msra.mxu0 %v117
    %892 = vmatprep.subr.mxu0 0.0
    %893 = vmatpush1.msra.mxu0 %v118
    %894 = vmatprep.subr.mxu0 0.0
    %895 = vmatpush1.msra.mxu0 %v119
    %896 = vmatprep.subr.mxu0 0.0
    %897 = vmatpush1.msra.mxu0 %v120
    %898 = vmatprep.subr.mxu0 0.0
    %899 = vmatpush1.msra.mxu0 %v121
    %900 = vmatprep.subr.mxu0 0.0
    %901 = vmatpush1.msra.mxu0 %v122
    %902 = vmatprep.subr.mxu0 0.0
    %903 = vmatpush1.msra.mxu0 %v123
    %904 = vmatprep.subr.mxu0 0.0
    %905 = vmatpush1.msra.mxu0 %v124
    %906 = vmatprep.mubr.f32.mxu0 %v566
    %907 = vmatmul.mubr.f32.gmra.mrb[0].mxu0 %v558
    %v908 = vpop.f32.mrb[0].mxu0
    %v909 = vadd.f32 %v839, %v908
    %v910 = vpop.f32.mrb[0].mxu0
    %911 = vdwg.mxu0
    %912 = vmatprep.subr.mxu0 0.0
    %913 = vmatpush1.msra.mxu0 %v125
    %914 = vmatprep.subr.mxu0 0.0
    %915 = vmatpush1.msra.mxu0 %v126
    %916 = vmatprep.subr.mxu0 0.0
    %917 = vmatpush1.msra.mxu0 %v127
    %918 = vmatprep.subr.mxu0 0.0
    %919 = vmatpush1.msra.mxu0 %v128
    %920 = vmatprep.subr.mxu0 0.0
    %921 = vmatpush1.msra.mxu0 %v129
    %922 = vmatprep.subr.mxu0 0.0
    %923 = vmatpush1.msra.mxu0 %v130
    %924 = vmatprep.subr.mxu0 0.0
    %925 = vmatpush1.msra.mxu0 %v131
    %926 = vmatprep.subr.mxu0 0.0
    %927 = vmatpush1.msra.mxu0 %v132
    %928 = vmatprep.subr.mxu0 0.0
    %929 = vmatpush1.msra.mxu0 %v133
    %930 = vmatprep.subr.mxu0 0.0
    %931 = vmatpush1.msra.mxu0 %v134
    %932 = vmatprep.subr.mxu0 0.0
    %933 = vmatpush1.msra.mxu0 %v135
    %934 = vmatprep.subr.mxu0 0.0
    %935 = vmatpush1.msra.mxu0 %v136
    %936 = vmatprep.subr.mxu0 0.0
    %937 = vmatpush1.msra.mxu0 %v137
    %938 = vmatprep.subr.mxu0 0.0
    %939 = vmatpush1.msra.mxu0 %v138
    %940 = vmatprep.subr.mxu0 0.0
    %941 = vmatpush1.msra.mxu0 %v139
    %942 = vmatprep.subr.mxu0 0.0
    %943 = vmatpush1.msra.mxu0 %v140
    %944 = vmatprep.subr.mxu0 0.0
    %945 = vmatpush1.msra.mxu0 %v141
    %946 = vmatprep.subr.mxu0 0.0
    %947 = vmatpush1.msra.mxu0 %v142
    %948 = vmatprep.subr.mxu0 0.0
    %949 = vmatpush1.msra.mxu0 %v143
    %950 = vmatprep.subr.mxu0 0.0
    %951 = vmatpush1.msra.mxu0 %v144
    %952 = vmatprep.subr.mxu0 0.0
    %953 = vmatpush1.msra.mxu0 %v145
    %954 = vmatprep.subr.mxu0 0.0
    %955 = vmatpush1.msra.mxu0 %v146
    %956 = vmatprep.subr.mxu0 0.0
    %957 = vmatpush1.msra.mxu0 %v147
    %958 = vmatprep.subr.mxu0 0.0
    %959 = vmatpush1.msra.mxu0 %v148
    %960 = vmatprep.subr.mxu0 0.0
    %961 = vmatpush1.msra.mxu0 %v149
    %962 = vmatprep.subr.mxu0 0.0
    %963 = vmatpush1.msra.mxu0 %v150
    %964 = vmatprep.subr.mxu0 0.0
    %965 = vmatpush1.msra.mxu0 %v151
    %966 = vmatprep.subr.mxu0 0.0
    %967 = vmatpush1.msra.mxu0 %v152
    %968 = vmatprep.subr.mxu0 0.0
    %969 = vmatpush1.msra.mxu0 %v153
    %970 = vmatprep.subr.mxu0 0.0
    %971 = vmatpush1.msra.mxu0 %v154
    %972 = vmatprep.subr.mxu0 0.0
    %973 = vmatpush1.msra.mxu0 %v155
    %974 = vmatprep.subr.mxu0 0.0
    %975 = vmatpush1.msra.mxu0 %v156
    %976 = vmatprep.mubr.f32.mxu0 %v567
    %977 = vmatmul.mubr.f32.gmra.mrb[0].mxu0 %v565
    %v978 = vpop.f32.mrb[0].mxu0
    %v979 = vadd.f32 %v909, %v978
    %v980 = vpop.f32.mrb[0].mxu0
    %981 = vdwg.mxu0
    %982 = vmatprep.subr.mxu0 0.0
    %983 = vmatpush1.msra.mxu0 %v157
    %984 = vmatprep.subr.mxu0 0.0
    %985 = vmatpush1.msra.mxu0 %v158
    %986 = vmatprep.subr.mxu0 0.0
    %987 = vmatpush1.msra.mxu0 %v159
    %988 = vmatprep.subr.mxu0 0.0
    %989 = vmatpush1.msra.mxu0 %v160
    %990 = vmatprep.subr.mxu0 0.0
    %991 = vmatpush1.msra.mxu0 %v161
    %992 = vmatprep.subr.mxu0 0.0
    %993 = vmatpush1.msra.mxu0 %v162
    %994 = vmatprep.subr.mxu0 0.0
    %995 = vmatpush1.msra.mxu0 %v163
    %996 = vmatprep.subr.mxu0 0.0
    %997 = vmatpush1.msra.mxu0 %v164
    %998 = vmatprep.subr.mxu0 0.0
    %999 = vmatpush1.msra.mxu0 %v165
    %1000 = vmatprep.subr.mxu0 0.0
    %1001 = vmatpush1.msra.mxu0 %v166
    %1002 = vmatprep.subr.mxu0 0.0
    %1003 = vmatpush1.msra.mxu0 %v167
    %1004 = vmatprep.subr.mxu0 0.0
    %1005 = vmatpush1.msra.mxu0 %v168
    %1006 = vmatprep.subr.mxu0 0.0
    %1007 = vmatpush1.msra.mxu0 %v169
    %1008 = vmatprep.subr.mxu0 0.0
    %1009 = vmatpush1.msra.mxu0 %v170
    %1010 = vmatprep.subr.mxu0 0.0
    %1011 = vmatpush1.msra.mxu0 %v171
    %1012 = vmatprep.subr.mxu0 0.0
    %1013 = vmatpush1.msra.mxu0 %v172
    %1014 = vmatprep.subr.mxu0 0.0
    %1015 = vmatpush1.msra.mxu0 %v173
    %1016 = vmatprep.subr.mxu0 0.0
    %1017 = vmatpush1.msra.mxu0 %v174
    %1018 = vmatprep.subr.mxu0 0.0
    %1019 = vmatpush1.msra.mxu0 %v175
    %1020 = vmatprep.subr.mxu0 0.0
    %1021 = vmatpush1.msra.mxu0 %v176
    %1022 = vmatprep.subr.mxu0 0.0
    %1023 = vmatpush1.msra.mxu0 %v177
    %1024 = vmatprep.subr.mxu0 0.0
    %1025 = vmatpush1.msra.mxu0 %v178
    %1026 = vmatprep.subr.mxu0 0.0
    %1027 = vmatpush1.msra.mxu0 %v179
    %1028 = vmatprep.subr.mxu0 0.0
    %1029 = vmatpush1.msra.mxu0 %v180
    %1030 = vmatprep.subr.mxu0 0.0
    %1031 = vmatpush1.msra.mxu0 %v181
    %1032 = vmatprep.subr.mxu0 0.0
    %1033 = vmatpush1.msra.mxu0 %v182
    %1034 = vmatprep.subr.mxu0 0.0
    %1035 = vmatpush1.msra.mxu0 %v183
    %1036 = vmatprep.subr.mxu0 0.0
    %1037 = vmatpush1.msra.mxu0 %v184
    %1038 = vmatprep.subr.mxu0 0.0
    %1039 = vmatpush1.msra.mxu0 %v185
    %1040 = vmatprep.subr.mxu0 0.0
    %1041 = vmatpush1.msra.mxu0 %v186
    %1042 = vmatprep.subr.mxu0 0.0
    %1043 = vmatpush1.msra.mxu0 %v187
    %1044 = vmatprep.subr.mxu0 0.0
    %1045 = vmatpush1.msra.mxu0 %v188
    %1046 = vmatprep.mubr.f32.mxu0 %v583
    %1047 = vmatmul.mubr.f32.gmra.mrb[0].mxu0 %v575
    %v1048 = vpop.f32.mrb[0].mxu0
    %v1049 = vadd.f32 %v979, %v1048
    %v1050 = vpop.f32.mrb[0].mxu0
    %1051 = vdwg.mxu0
    %1052 = vmatprep.subr.mxu0 0.0
    %1053 = vmatpush1.msra.mxu0 %v189
    %1054 = vmatprep.subr.mxu0 0.0
    %1055 = vmatpush1.msra.mxu0 %v190
    %1056 = vmatprep.subr.mxu0 0.0
    %1057 = vmatpush1.msra.mxu0 %v191
    %1058 = vmatprep.subr.mxu0 0.0
    %1059 = vmatpush1.msra.mxu0 %v192
    %1060 = vmatprep.subr.mxu0 0.0
    %1061 = vmatpush1.msra.mxu0 %v193
    %1062 = vmatprep.subr.mxu0 0.0
    %1063 = vmatpush1.msra.mxu0 %v194
    %1064 = vmatprep.subr.mxu0 0.0
    %1065 = vmatpush1.msra.mxu0 %v195
    %1066 = vmatprep.subr.mxu0 0.0
    %1067 = vmatpush1.msra.mxu0 %v196
    %1068 = vmatprep.subr.mxu0 0.0
    %1069 = vmatpush1.msra.mxu0 %v197
    %1070 = vmatprep.subr.mxu0 0.0
    %1071 = vmatpush1.msra.mxu0 %v198
    %1072 = vmatprep.subr.mxu0 0.0
    %1073 = vmatpush1.msra.mxu0 %v199
    %1074 = vmatprep.subr.mxu0 0.0
    %1075 = vmatpush1.msra.mxu0 %v200
    %1076 = vmatprep.subr.mxu0 0.0
    %1077 = vmatpush1.msra.mxu0 %v201
    %1078 = vmatprep.subr.mxu0 0.0
    %1079 = vmatpush1.msra.mxu0 %v202
    %1080 = vmatprep.subr.mxu0 0.0
    %1081 = vmatpush1.msra.mxu0 %v203
    %1082 = vmatprep.subr.mxu0 0.0
    %1083 = vmatpush1.msra.mxu0 %v204
    %1084 = vmatprep.subr.mxu0 0.0
    %1085 = vmatpush1.msra.mxu0 %v205
    %1086 = vmatprep.subr.mxu0 0.0
    %1087 = vmatpush1.msra.mxu0 %v206
    %1088 = vmatprep.subr.mxu0 0.0
    %1089 = vmatpush1.msra.mxu0 %v207
    %1090 = vmatprep.subr.mxu0 0.0
    %1091 = vmatpush1.msra.mxu0 %v208
    %1092 = vmatprep.subr.mxu0 0.0
    %1093 = vmatpush1.msra.mxu0 %v209
    %1094 = vmatprep.subr.mxu0 0.0
    %1095 = vmatpush1.msra.mxu0 %v210
    %1096 = vmatprep.subr.mxu0 0.0
    %1097 = vmatpush1.msra.mxu0 %v211
    %1098 = vmatprep.subr.mxu0 0.0
    %1099 = vmatpush1.msra.mxu0 %v212
    %1100 = vmatprep.subr.mxu0 0.0
    %1101 = vmatpush1.msra.mxu0 %v213
    %1102 = vmatprep.subr.mxu0 0.0
    %1103 = vmatpush1.msra.mxu0 %v214
    %1104 = vmatprep.subr.mxu0 0.0
    %1105 = vmatpush1.msra.mxu0 %v215
    %1106 = vmatprep.subr.mxu0 0.0
    %1107 = vmatpush1.msra.mxu0 %v216
    %1108 = vmatprep.subr.mxu0 0.0
    %1109 = vmatpush1.msra.mxu0 %v217
    %1110 = vmatprep.subr.mxu0 0.0
    %1111 = vmatpush1.msra.mxu0 %v218
    %1112 = vmatprep.subr.mxu0 0.0
    %1113 = vmatpush1.msra.mxu0 %v219
    %1114 = vmatprep.subr.mxu0 0.0
    %1115 = vmatpush1.msra.mxu0 %v220
    %1116 = vmatprep.mubr.f32.mxu0 %v584
    %1117 = vmatmul.mubr.f32.gmra.mrb[0].mxu0 %v582
    %v1118 = vpop.f32.mrb[0].mxu0
    %v1119 = vadd.f32 %v1049, %v1118
    %v1120 = vpop.f32.mrb[0].mxu0
    %1121 = vdwg.mxu0
    %1122 = vmatprep.subr.mxu0 0.0
    %1123 = vmatpush1.msra.mxu0 %v221
    %1124 = vmatprep.subr.mxu0 0.0
    %1125 = vmatpush1.msra.mxu0 %v222
    %1126 = vmatprep.subr.mxu0 0.0
    %1127 = vmatpush1.msra.mxu0 %v223
    %1128 = vmatprep.subr.mxu0 0.0
    %1129 = vmatpush1.msra.mxu0 %v224
    %1130 = vmatprep.subr.mxu0 0.0
    %1131 = vmatpush1.msra.mxu0 %v225
    %1132 = vmatprep.subr.mxu0 0.0
    %1133 = vmatpush1.msra.mxu0 %v226
    %1134 = vmatprep.subr.mxu0 0.0
    %1135 = vmatpush1.msra.mxu0 %v227
    %1136 = vmatprep.subr.mxu0 0.0
    %1137 = vmatpush1.msra.mxu0 %v228
    %1138 = vmatprep.subr.mxu0 0.0
    %1139 = vmatpush1.msra.mxu0 %v229
    %1140 = vmatprep.subr.mxu0 0.0
    %1141 = vmatpush1.msra.mxu0 %v230
    %1142 = vmatprep.subr.mxu0 0.0
    %1143 = vmatpush1.msra.mxu0 %v231
    %1144 = vmatprep.subr.mxu0 0.0
    %1145 = vmatpush1.msra.mxu0 %v232
    %1146 = vmatprep.subr.mxu0 0.0
    %1147 = vmatpush1.msra.mxu0 %v233
    %1148 = vmatprep.subr.mxu0 0.0
    %1149 = vmatpush1.msra.mxu0 %v234
    %1150 = vmatprep.subr.mxu0 0.0
    %1151 = vmatpush1.msra.mxu0 %v235
    %1152 = vmatprep.subr.mxu0 0.0
    %1153 = vmatpush1.msra.mxu0 %v236
    %1154 = vmatprep.subr.mxu0 0.0
    %1155 = vmatpush1.msra.mxu0 %v237
    %1156 = vmatprep.subr.mxu0 0.0
    %1157 = vmatpush1.msra.mxu0 %v238
    %1158 = vmatprep.subr.mxu0 0.0
    %1159 = vmatpush1.msra.mxu0 %v239
    %1160 = vmatprep.subr.mxu0 0.0
    %1161 = vmatpush1.msra.mxu0 %v240
    %1162 = vmatprep.subr.mxu0 0.0
    %1163 = vmatpush1.msra.mxu0 %v241
    %1164 = vmatprep.subr.mxu0 0.0
    %1165 = vmatpush1.msra.mxu0 %v242
    %1166 = vmatprep.subr.mxu0 0.0
    %1167 = vmatpush1.msra.mxu0 %v243
    %1168 = vmatprep.subr.mxu0 0.0
    %1169 = vmatpush1.msra.mxu0 %v244
    %1170 = vmatprep.subr.mxu0 0.0
    %1171 = vmatpush1.msra.mxu0 %v245
    %1172 = vmatprep.subr.mxu0 0.0
    %1173 = vmatpush1.msra.mxu0 %v246
    %1174 = vmatprep.subr.mxu0 0.0
    %1175 = vmatpush1.msra.mxu0 %v247
    %1176 = vmatprep.subr.mxu0 0.0
    %1177 = vmatpush1.msra.mxu0 %v248
    %1178 = vmatprep.subr.mxu0 0.0
    %1179 = vmatpush1.msra.mxu0 %v249
    %1180 = vmatprep.subr.mxu0 0.0
    %1181 = vmatpush1.msra.mxu0 %v250
    %1182 = vmatprep.subr.mxu0 0.0
    %1183 = vmatpush1.msra.mxu0 %v251
    %1184 = vmatprep.subr.mxu0 0.0
    %1185 = vmatpush1.msra.mxu0 %v252
    %1186 = vmatprep.mubr.f32.mxu0 %v600
    %1187 = vmatmul.mubr.f32.gmra.mrb[0].mxu0 %v592
    %v1188 = vpop.f32.mrb[0].mxu0
    %v1189 = vadd.f32 %v1119, %v1188
    %v1190 = vpop.f32.mrb[0].mxu0
    %1191 = vdwg.mxu0
    %1192 = vmatprep.subr.mxu0 0.0
    %1193 = vmatpush1.msra.mxu0 %v253
    %1194 = vmatprep.subr.mxu0 0.0
    %1195 = vmatpush1.msra.mxu0 %v254
    %1196 = vmatprep.subr.mxu0 0.0
    %1197 = vmatpush1.msra.mxu0 %v255
    %1198 = vmatprep.subr.mxu0 0.0
    %1199 = vmatpush1.msra.mxu0 %v256
    %1200 = vmatprep.subr.mxu0 0.0
    %1201 = vmatpush1.msra.mxu0 %v257
    %1202 = vmatprep.subr.mxu0 0.0
    %1203 = vmatpush1.msra.mxu0 %v258
    %1204 = vmatprep.subr.mxu0 0.0
    %1205 = vmatpush1.msra.mxu0 %v259
    %1206 = vmatprep.subr.mxu0 0.0
    %1207 = vmatpush1.msra.mxu0 %v260
    %1208 = vmatprep.subr.mxu0 0.0
    %1209 = vmatpush1.msra.mxu0 %v261
    %1210 = vmatprep.subr.mxu0 0.0
    %1211 = vmatpush1.msra.mxu0 %v262
    %1212 = vmatprep.subr.mxu0 0.0
    %1213 = vmatpush1.msra.mxu0 %v263
    %1214 = vmatprep.subr.mxu0 0.0
    %1215 = vmatpush1.msra.mxu0 %v264
    %1216 = vmatprep.subr.mxu0 0.0
    %1217 = vmatpush1.msra.mxu0 %v265
    %1218 = vmatprep.subr.mxu0 0.0
    %1219 = vmatpush1.msra.mxu0 %v266
    %1220 = vmatprep.subr.mxu0 0.0
    %1221 = vmatpush1.msra.mxu0 %v267
    %1222 = vmatprep.subr.mxu0 0.0
    %1223 = vmatpush1.msra.mxu0 %v268
    %1224 = vmatprep.subr.mxu0 0.0
    %1225 = vmatpush1.msra.mxu0 %v269
    %1226 = vmatprep.subr.mxu0 0.0
    %1227 = vmatpush1.msra.mxu0 %v270
    %1228 = vmatprep.subr.mxu0 0.0
    %1229 = vmatpush1.msra.mxu0 %v271
    %1230 = vmatprep.subr.mxu0 0.0
    %1231 = vmatpush1.msra.mxu0 %v272
    %1232 = vmatprep.subr.mxu0 0.0
    %1233 = vmatpush1.msra.mxu0 %v273
    %1234 = vmatprep.subr.mxu0 0.0
    %1235 = vmatpush1.msra.mxu0 %v274
    %1236 = vmatprep.subr.mxu0 0.0
    %1237 = vmatpush1.msra.mxu0 %v275
    %1238 = vmatprep.subr.mxu0 0.0
    %1239 = vmatpush1.msra.mxu0 %v276
    %1240 = vmatprep.subr.mxu0 0.0
    %1241 = vmatpush1.msra.mxu0 %v277
    %1242 = vmatprep.subr.mxu0 0.0
    %1243 = vmatpush1.msra.mxu0 %v278
    %1244 = vmatprep.subr.mxu0 0.0
    %1245 = vmatpush1.msra.mxu0 %v279
    %1246 = vmatprep.subr.mxu0 0.0
    %1247 = vmatpush1.msra.mxu0 %v280
    %1248 = vmatprep.subr.mxu0 0.0
    %1249 = vmatpush1.msra.mxu0 %v281
    %1250 = vmatprep.subr.mxu0 0.0
    %1251 = vmatpush1.msra.mxu0 %v282
    %1252 = vmatprep.subr.mxu0 0.0
    %1253 = vmatpush1.msra.mxu0 %v283
    %1254 = vmatprep.subr.mxu0 0.0
    %1255 = vmatpush1.msra.mxu0 %v284
    %1256 = vmatprep.mubr.f32.mxu0 %v601
    %1257 = vmatmul.mubr.f32.gmra.mrb[0].mxu0 %v599
    %v1258 = vpop.f32.mrb[0].mxu0
    %v1259 = vadd.f32 %v1189, %v1258
    %v1260 = vpop.f32.mrb[0].mxu0
    %1261 = vdwg.mxu0
    %1262 = vmatprep.subr.mxu0 0.0
    %1263 = vmatpush1.msra.mxu0 %v285
    %1264 = vmatprep.subr.mxu0 0.0
    %1265 = vmatpush1.msra.mxu0 %v286
    %1266 = vmatprep.subr.mxu0 0.0
    %1267 = vmatpush1.msra.mxu0 %v287
    %1268 = vmatprep.subr.mxu0 0.0
    %1269 = vmatpush1.msra.mxu0 %v288
    %1270 = vmatprep.subr.mxu0 0.0
    %1271 = vmatpush1.msra.mxu0 %v289
    %1272 = vmatprep.subr.mxu0 0.0
    %1273 = vmatpush1.msra.mxu0 %v290
    %1274 = vmatprep.subr.mxu0 0.0
    %1275 = vmatpush1.msra.mxu0 %v291
    %1276 = vmatprep.subr.mxu0 0.0
    %1277 = vmatpush1.msra.mxu0 %v292
    %1278 = vmatprep.subr.mxu0 0.0
    %1279 = vmatpush1.msra.mxu0 %v293
    %1280 = vmatprep.subr.mxu0 0.0
    %1281 = vmatpush1.msra.mxu0 %v294
    %1282 = vmatprep.subr.mxu0 0.0
    %1283 = vmatpush1.msra.mxu0 %v295
    %1284 = vmatprep.subr.mxu0 0.0
    %1285 = vmatpush1.msra.mxu0 %v296
    %1286 = vmatprep.subr.mxu0 0.0
    %1287 = vmatpush1.msra.mxu0 %v297
    %1288 = vmatprep.subr.mxu0 0.0
    %1289 = vmatpush1.msra.mxu0 %v298
    %1290 = vmatprep.subr.mxu0 0.0
    %1291 = vmatpush1.msra.mxu0 %v299
    %1292 = vmatprep.subr.mxu0 0.0
    %1293 = vmatpush1.msra.mxu0 %v300
    %1294 = vmatprep.subr.mxu0 0.0
    %1295 = vmatpush1.msra.mxu0 %v301
    %1296 = vmatprep.subr.mxu0 0.0
    %1297 = vmatpush1.msra.mxu0 %v302
    %1298 = vmatprep.subr.mxu0 0.0
    %1299 = vmatpush1.msra.mxu0 %v303
    %1300 = vmatprep.subr.mxu0 0.0
    %1301 = vmatpush1.msra.mxu0 %v304
    %1302 = vmatprep.subr.mxu0 0.0
    %1303 = vmatpush1.msra.mxu0 %v305
    %1304 = vmatprep.subr.mxu0 0.0
    %1305 = vmatpush1.msra.mxu0 %v306
    %1306 = vmatprep.subr.mxu0 0.0
    %1307 = vmatpush1.msra.mxu0 %v307
    %1308 = vmatprep.subr.mxu0 0.0
    %1309 = vmatpush1.msra.mxu0 %v308
    %1310 = vmatprep.subr.mxu0 0.0
    %1311 = vmatpush1.msra.mxu0 %v309
    %1312 = vmatprep.subr.mxu0 0.0
    %1313 = vmatpush1.msra.mxu0 %v310
    %1314 = vmatprep.subr.mxu0 0.0
    %1315 = vmatpush1.msra.mxu0 %v311
    %1316 = vmatprep.subr.mxu0 0.0
    %1317 = vmatpush1.msra.mxu0 %v312
    %1318 = vmatprep.subr.mxu0 0.0
    %1319 = vmatpush1.msra.mxu0 %v313
    %1320 = vmatprep.subr.mxu0 0.0
    %1321 = vmatpush1.msra.mxu0 %v314
    %1322 = vmatprep.subr.mxu0 0.0
    %1323 = vmatpush1.msra.mxu0 %v315
    %1324 = vmatprep.subr.mxu0 0.0
    %1325 = vmatpush1.msra.mxu0 %v316
    %1326 = vmatprep.mubr.f32.mxu0 %v617
    %1327 = vmatmul.mubr.f32.gmra.mrb[0].mxu0 %v609
    %v1328 = vpop.f32.mrb[0].mxu0
    %v1329 = vadd.f32 %v1259, %v1328
    %v1330 = vpop.f32.mrb[0].mxu0
    %1331 = vdwg.mxu0
    %1332 = vmatprep.subr.mxu0 0.0
    %1333 = vmatpush1.msra.mxu0 %v317
    %1334 = vmatprep.subr.mxu0 0.0
    %1335 = vmatpush1.msra.mxu0 %v318
    %1336 = vmatprep.subr.mxu0 0.0
    %1337 = vmatpush1.msra.mxu0 %v319
    %1338 = vmatprep.subr.mxu0 0.0
    %1339 = vmatpush1.msra.mxu0 %v320
    %1340 = vmatprep.subr.mxu0 0.0
    %1341 = vmatpush1.msra.mxu0 %v321
    %1342 = vmatprep.subr.mxu0 0.0
    %1343 = vmatpush1.msra.mxu0 %v322
    %1344 = vmatprep.subr.mxu0 0.0
    %1345 = vmatpush1.msra.mxu0 %v323
    %1346 = vmatprep.subr.mxu0 0.0
    %1347 = vmatpush1.msra.mxu0 %v324
    %1348 = vmatprep.subr.mxu0 0.0
    %1349 = vmatpush1.msra.mxu0 %v325
    %1350 = vmatprep.subr.mxu0 0.0
    %1351 = vmatpush1.msra.mxu0 %v326
    %1352 = vmatprep.subr.mxu0 0.0
    %1353 = vmatpush1.msra.mxu0 %v327
    %1354 = vmatprep.subr.mxu0 0.0
    %1355 = vmatpush1.msra.mxu0 %v328
    %1356 = vmatprep.subr.mxu0 0.0
    %1357 = vmatpush1.msra.mxu0 %v329
    %1358 = vmatprep.subr.mxu0 0.0
    %1359 = vmatpush1.msra.mxu0 %v330
    %1360 = vmatprep.subr.mxu0 0.0
    %1361 = vmatpush1.msra.mxu0 %v331
    %1362 = vmatprep.subr.mxu0 0.0
    %1363 = vmatpush1.msra.mxu0 %v332
    %1364 = vmatprep.subr.mxu0 0.0
    %1365 = vmatpush1.msra.mxu0 %v333
    %1366 = vmatprep.subr.mxu0 0.0
    %1367 = vmatpush1.msra.mxu0 %v334
    %1368 = vmatprep.subr.mxu0 0.0
    %1369 = vmatpush1.msra.mxu0 %v335
    %1370 = vmatprep.subr.mxu0 0.0
    %1371 = vmatpush1.msra.mxu0 %v336
    %1372 = vmatprep.subr.mxu0 0.0
    %1373 = vmatpush1.msra.mxu0 %v337
    %1374 = vmatprep.subr.mxu0 0.0
    %1375 = vmatpush1.msra.mxu0 %v338
    %1376 = vmatprep.subr.mxu0 0.0
    %1377 = vmatpush1.msra.mxu0 %v339
    %1378 = vmatprep.subr.mxu0 0.0
    %1379 = vmatpush1.msra.mxu0 %v340
    %1380 = vmatprep.subr.mxu0 0.0
    %1381 = vmatpush1.msra.mxu0 %v341
    %1382 = vmatprep.subr.mxu0 0.0
    %1383 = vmatpush1.msra.mxu0 %v342
    %1384 = vmatprep.subr.mxu0 0.0
    %1385 = vmatpush1.msra.mxu0 %v343
    %1386 = vmatprep.subr.mxu0 0.0
    %1387 = vmatpush1.msra.mxu0 %v344
    %1388 = vmatprep.subr.mxu0 0.0
    %1389 = vmatpush1.msra.mxu0 %v345
    %1390 = vmatprep.subr.mxu0 0.0
    %1391 = vmatpush1.msra.mxu0 %v346
    %1392 = vmatprep.subr.mxu0 0.0
    %1393 = vmatpush1.msra.mxu0 %v347
    %1394 = vmatprep.subr.mxu0 0.0
    %1395 = vmatpush1.msra.mxu0 %v348
    %1396 = vmatprep.mubr.f32.mxu0 %v618
    %1397 = vmatmul.mubr.f32.gmra.mrb[0].mxu0 %v616
    %v1398 = vpop.f32.mrb[0].mxu0
    %v1399 = vadd.f32 %v1329, %v1398
    %v1400 = vpop.f32.mrb[0].mxu0
    %1401 = vdwg.mxu0
    %1402 = vmatprep.subr.mxu0 0.0
    %1403 = vmatpush1.msra.mxu0 %v349
    %1404 = vmatprep.subr.mxu0 0.0
    %1405 = vmatpush1.msra.mxu0 %v350
    %1406 = vmatprep.subr.mxu0 0.0
    %1407 = vmatpush1.msra.mxu0 %v351
    %1408 = vmatprep.subr.mxu0 0.0
    %1409 = vmatpush1.msra.mxu0 %v352
    %1410 = vmatprep.subr.mxu0 0.0
    %1411 = vmatpush1.msra.mxu0 %v353
    %1412 = vmatprep.subr.mxu0 0.0
    %1413 = vmatpush1.msra.mxu0 %v354
    %1414 = vmatprep.subr.mxu0 0.0
    %1415 = vmatpush1.msra.mxu0 %v355
    %1416 = vmatprep.subr.mxu0 0.0
    %1417 = vmatpush1.msra.mxu0 %v356
    %1418 = vmatprep.subr.mxu0 0.0
    %1419 = vmatpush1.msra.mxu0 %v357
    %1420 = vmatprep.subr.mxu0 0.0
    %1421 = vmatpush1.msra.mxu0 %v358
    %1422 = vmatprep.subr.mxu0 0.0
    %1423 = vmatpush1.msra.mxu0 %v359
    %1424 = vmatprep.subr.mxu0 0.0
    %1425 = vmatpush1.msra.mxu0 %v360
    %1426 = vmatprep.subr.mxu0 0.0
    %1427 = vmatpush1.msra.mxu0 %v361
    %1428 = vmatprep.subr.mxu0 0.0
    %1429 = vmatpush1.msra.mxu0 %v362
    %1430 = vmatprep.subr.mxu0 0.0
    %1431 = vmatpush1.msra.mxu0 %v363
    %1432 = vmatprep.subr.mxu0 0.0
    %1433 = vmatpush1.msra.mxu0 %v364
    %1434 = vmatprep.subr.mxu0 0.0
    %1435 = vmatpush1.msra.mxu0 %v365
    %1436 = vmatprep.subr.mxu0 0.0
    %1437 = vmatpush1.msra.mxu0 %v366
    %1438 = vmatprep.subr.mxu0 0.0
    %1439 = vmatpush1.msra.mxu0 %v367
    %1440 = vmatprep.subr.mxu0 0.0
    %1441 = vmatpush1.msra.mxu0 %v368
    %1442 = vmatprep.subr.mxu0 0.0
    %1443 = vmatpush1.msra.mxu0 %v369
    %1444 = vmatprep.subr.mxu0 0.0
    %1445 = vmatpush1.msra.mxu0 %v370
    %1446 = vmatprep.subr.mxu0 0.0
    %1447 = vmatpush1.msra.mxu0 %v371
    %1448 = vmatprep.subr.mxu0 0.0
    %1449 = vmatpush1.msra.mxu0 %v372
    %1450 = vmatprep.subr.mxu0 0.0
    %1451 = vmatpush1.msra.mxu0 %v373
    %1452 = vmatprep.subr.mxu0 0.0
    %1453 = vmatpush1.msra.mxu0 %v374
    %1454 = vmatprep.subr.mxu0 0.0
    %1455 = vmatpush1.msra.mxu0 %v375
    %1456 = vmatprep.subr.mxu0 0.0
    %1457 = vmatpush1.msra.mxu0 %v376
    %1458 = vmatprep.subr.mxu0 0.0
    %1459 = vmatpush1.msra.mxu0 %v377
    %1460 = vmatprep.subr.mxu0 0.0
    %1461 = vmatpush1.msra.mxu0 %v378
    %1462 = vmatprep.subr.mxu0 0.0
    %1463 = vmatpush1.msra.mxu0 %v379
    %1464 = vmatprep.subr.mxu0 0.0
    %1465 = vmatpush1.msra.mxu0 %v380
    %1466 = vmatprep.mubr.f32.mxu0 %v634
    %1467 = vmatmul.mubr.f32.gmra.mrb[0].mxu0 %v626
    %v1468 = vpop.f32.mrb[0].mxu0
    %v1469 = vadd.f32 %v1399, %v1468
    %v1470 = vpop.f32.mrb[0].mxu0
    %1471 = vdwg.mxu0
    %1472 = vmatprep.subr.mxu0 0.0
    %1473 = vmatpush1.msra.mxu0 %v381
    %1474 = vmatprep.subr.mxu0 0.0
    %1475 = vmatpush1.msra.mxu0 %v382
    %1476 = vmatprep.subr.mxu0 0.0
    %1477 = vmatpush1.msra.mxu0 %v383
    %1478 = vmatprep.subr.mxu0 0.0
    %1479 = vmatpush1.msra.mxu0 %v384
    %1480 = vmatprep.subr.mxu0 0.0
    %1481 = vmatpush1.msra.mxu0 %v385
    %1482 = vmatprep.subr.mxu0 0.0
    %1483 = vmatpush1.msra.mxu0 %v386
    %1484 = vmatprep.subr.mxu0 0.0
    %1485 = vmatpush1.msra.mxu0 %v387
    %1486 = vmatprep.subr.mxu0 0.0
    %1487 = vmatpush1.msra.mxu0 %v388
    %1488 = vmatprep.subr.mxu0 0.0
    %1489 = vmatpush1.msra.mxu0 %v389
    %1490 = vmatprep.subr.mxu0 0.0
    %1491 = vmatpush1.msra.mxu0 %v390
    %1492 = vmatprep.subr.mxu0 0.0
    %1493 = vmatpush1.msra.mxu0 %v391
    %1494 = vmatprep.subr.mxu0 0.0
    %1495 = vmatpush1.msra.mxu0 %v392
    %1496 = vmatprep.subr.mxu0 0.0
    %1497 = vmatpush1.msra.mxu0 %v393
    %1498 = vmatprep.subr.mxu0 0.0
    %1499 = vmatpush1.msra.mxu0 %v394
    %1500 = vmatprep.subr.mxu0 0.0
    %1501 = vmatpush1.msra.mxu0 %v395
    %1502 = vmatprep.subr.mxu0 0.0
    %1503 = vmatpush1.msra.mxu0 %v396
    %1504 = vmatprep.subr.mxu0 0.0
    %1505 = vmatpush1.msra.mxu0 %v397
    %1506 = vmatprep.subr.mxu0 0.0
    %1507 = vmatpush1.msra.mxu0 %v398
    %1508 = vmatprep.subr.mxu0 0.0
    %1509 = vmatpush1.msra.mxu0 %v399
    %1510 = vmatprep.subr.mxu0 0.0
    %1511 = vmatpush1.msra.mxu0 %v400
    %1512 = vmatprep.subr.mxu0 0.0
    %1513 = vmatpush1.msra.mxu0 %v401
    %1514 = vmatprep.subr.mxu0 0.0
    %1515 = vmatpush1.msra.mxu0 %v402
    %1516 = vmatprep.subr.mxu0 0.0
    %1517 = vmatpush1.msra.mxu0 %v403
    %1518 = vmatprep.subr.mxu0 0.0
    %1519 = vmatpush1.msra.mxu0 %v404
    %1520 = vmatprep.subr.mxu0 0.0
    %1521 = vmatpush1.msra.mxu0 %v405
    %1522 = vmatprep.subr.mxu0 0.0
    %1523 = vmatpush1.msra.mxu0 %v406
    %1524 = vmatprep.subr.mxu0 0.0
    %1525 = vmatpush1.msra.mxu0 %v407
    %1526 = vmatprep.subr.mxu0 0.0
    %1527 = vmatpush1.msra.mxu0 %v408
    %1528 = vmatprep.subr.mxu0 0.0
    %1529 = vmatpush1.msra.mxu0 %v409
    %1530 = vmatprep.subr.mxu0 0.0
    %1531 = vmatpush1.msra.mxu0 %v410
    %1532 = vmatprep.subr.mxu0 0.0
    %1533 = vmatpush1.msra.mxu0 %v411
    %1534 = vmatprep.subr.mxu0 0.0
    %1535 = vmatpush1.msra.mxu0 %v412
    %1536 = vmatprep.mubr.f32.mxu0 %v635
    %1537 = vmatmul.mubr.f32.gmra.mrb[0].mxu0 %v633
    %v1538 = vpop.f32.mrb[0].mxu0
    %v1539 = vadd.f32 %v1469, %v1538
    %v1540 = vpop.f32.mrb[0].mxu0
    %1541 = vdwg.mxu0
    %1542 = vmatprep.subr.mxu0 0.0
    %1543 = vmatpush1.msra.mxu0 %v413
    %1544 = vmatprep.subr.mxu0 0.0
    %1545 = vmatpush1.msra.mxu0 %v414
    %1546 = vmatprep.subr.mxu0 0.0
    %1547 = vmatpush1.msra.mxu0 %v415
    %1548 = vmatprep.subr.mxu0 0.0
    %1549 = vmatpush1.msra.mxu0 %v416
    %1550 = vmatprep.subr.mxu0 0.0
    %1551 = vmatpush1.msra.mxu0 %v417
    %1552 = vmatprep.subr.mxu0 0.0
    %1553 = vmatpush1.msra.mxu0 %v418
    %1554 = vmatprep.subr.mxu0 0.0
    %1555 = vmatpush1.msra.mxu0 %v419
    %1556 = vmatprep.subr.mxu0 0.0
    %1557 = vmatpush1.msra.mxu0 %v420
    %1558 = vmatprep.subr.mxu0 0.0
    %1559 = vmatpush1.msra.mxu0 %v421
    %1560 = vmatprep.subr.mxu0 0.0
    %1561 = vmatpush1.msra.mxu0 %v422
    %1562 = vmatprep.subr.mxu0 0.0
    %1563 = vmatpush1.msra.mxu0 %v423
    %1564 = vmatprep.subr.mxu0 0.0
    %1565 = vmatpush1.msra.mxu0 %v424
    %1566 = vmatprep.subr.mxu0 0.0
    %1567 = vmatpush1.msra.mxu0 %v425
    %1568 = vmatprep.subr.mxu0 0.0
    %1569 = vmatpush1.msra.mxu0 %v426
    %1570 = vmatprep.subr.mxu0 0.0
    %1571 = vmatpush1.msra.mxu0 %v427
    %1572 = vmatprep.subr.mxu0 0.0
    %1573 = vmatpush1.msra.mxu0 %v428
    %1574 = vmatprep.subr.mxu0 0.0
    %1575 = vmatpush1.msra.mxu0 %v429
    %1576 = vmatprep.subr.mxu0 0.0
    %1577 = vmatpush1.msra.mxu0 %v430
    %1578 = vmatprep.subr.mxu0 0.0
    %1579 = vmatpush1.msra.mxu0 %v431
    %1580 = vmatprep.subr.mxu0 0.0
    %1581 = vmatpush1.msra.mxu0 %v432
    %1582 = vmatprep.subr.mxu0 0.0
    %1583 = vmatpush1.msra.mxu0 %v433
    %1584 = vmatprep.subr.mxu0 0.0
    %1585 = vmatpush1.msra.mxu0 %v434
    %1586 = vmatprep.subr.mxu0 0.0
    %1587 = vmatpush1.msra.mxu0 %v435
    %1588 = vmatprep.subr.mxu0 0.0
    %1589 = vmatpush1.msra.mxu0 %v436
    %1590 = vmatprep.subr.mxu0 0.0
    %1591 = vmatpush1.msra.mxu0 %v437
    %1592 = vmatprep.subr.mxu0 0.0
    %1593 = vmatpush1.msra.mxu0 %v438
    %1594 = vmatprep.subr.mxu0 0.0
    %1595 = vmatpush1.msra.mxu0 %v439
    %1596 = vmatprep.subr.mxu0 0.0
    %1597 = vmatpush1.msra.mxu0 %v440
    %1598 = vmatprep.subr.mxu0 0.0
    %1599 = vmatpush1.msra.mxu0 %v441
    %1600 = vmatprep.subr.mxu0 0.0
    %1601 = vmatpush1.msra.mxu0 %v442
    %1602 = vmatprep.subr.mxu0 0.0
    %1603 = vmatpush1.msra.mxu0 %v443
    %1604 = vmatprep.subr.mxu0 0.0
    %1605 = vmatpush1.msra.mxu0 %v444
    %1606 = vmatprep.mubr.f32.mxu0 %v651
    %1607 = vmatmul.mubr.f32.gmra.mrb[0].mxu0 %v643
    %v1608 = vpop.f32.mrb[0].mxu0
    %v1609 = vadd.f32 %v1539, %v1608
    %v1610 = vpop.f32.mrb[0].mxu0
    %1611 = vdwg.mxu0
    %1612 = vmatprep.subr.mxu0 0.0
    %1613 = vmatpush1.msra.mxu0 %v445
    %1614 = vmatprep.subr.mxu0 0.0
    %1615 = vmatpush1.msra.mxu0 %v446
    %1616 = vmatprep.subr.mxu0 0.0
    %1617 = vmatpush1.msra.mxu0 %v447
    %1618 = vmatprep.subr.mxu0 0.0
    %1619 = vmatpush1.msra.mxu0 %v448
    %1620 = vmatprep.subr.mxu0 0.0
    %1621 = vmatpush1.msra.mxu0 %v449
    %1622 = vmatprep.subr.mxu0 0.0
    %1623 = vmatpush1.msra.mxu0 %v450
    %1624 = vmatprep.subr.mxu0 0.0
    %1625 = vmatpush1.msra.mxu0 %v451
    %1626 = vmatprep.subr.mxu0 0.0
    %1627 = vmatpush1.msra.mxu0 %v452
    %1628 = vmatprep.subr.mxu0 0.0
    %1629 = vmatpush1.msra.mxu0 %v453
    %1630 = vmatprep.subr.mxu0 0.0
    %1631 = vmatpush1.msra.mxu0 %v454
    %1632 = vmatprep.subr.mxu0 0.0
    %1633 = vmatpush1.msra.mxu0 %v455
    %1634 = vmatprep.subr.mxu0 0.0
    %1635 = vmatpush1.msra.mxu0 %v456
    %1636 = vmatprep.subr.mxu0 0.0
    %1637 = vmatpush1.msra.mxu0 %v457
    %1638 = vmatprep.subr.mxu0 0.0
    %1639 = vmatpush1.msra.mxu0 %v458
    %1640 = vmatprep.subr.mxu0 0.0
    %1641 = vmatpush1.msra.mxu0 %v459
    %1642 = vmatprep.subr.mxu0 0.0
    %1643 = vmatpush1.msra.mxu0 %v460
    %1644 = vmatprep.subr.mxu0 0.0
    %1645 = vmatpush1.msra.mxu0 %v461
    %1646 = vmatprep.subr.mxu0 0.0
    %1647 = vmatpush1.msra.mxu0 %v462
    %1648 = vmatprep.subr.mxu0 0.0
    %1649 = vmatpush1.msra.mxu0 %v463
    %1650 = vmatprep.subr.mxu0 0.0
    %1651 = vmatpush1.msra.mxu0 %v464
    %1652 = vmatprep.subr.mxu0 0.0
    %1653 = vmatpush1.msra.mxu0 %v465
    %1654 = vmatprep.subr.mxu0 0.0
    %1655 = vmatpush1.msra.mxu0 %v466
    %1656 = vmatprep.subr.mxu0 0.0
    %1657 = vmatpush1.msra.mxu0 %v467
    %1658 = vmatprep.subr.mxu0 0.0
    %1659 = vmatpush1.msra.mxu0 %v468
    %1660 = vmatprep.subr.mxu0 0.0
    %1661 = vmatpush1.msra.mxu0 %v469
    %1662 = vmatprep.subr.mxu0 0.0
    %1663 = vmatpush1.msra.mxu0 %v470
    %1664 = vmatprep.subr.mxu0 0.0
    %1665 = vmatpush1.msra.mxu0 %v471
    %1666 = vmatprep.subr.mxu0 0.0
    %1667 = vmatpush1.msra.mxu0 %v472
    %1668 = vmatprep.subr.mxu0 0.0
    %1669 = vmatpush1.msra.mxu0 %v473
    %1670 = vmatprep.subr.mxu0 0.0
    %1671 = vmatpush1.msra.mxu0 %v474
    %1672 = vmatprep.subr.mxu0 0.0
    %1673 = vmatpush1.msra.mxu0 %v475
    %1674 = vmatprep.subr.mxu0 0.0
    %1675 = vmatpush1.msra.mxu0 %v476
    %1676 = vmatprep.mubr.f32.mxu0 %v652
    %1677 = vmatmul.mubr.f32.gmra.mrb[0].mxu0 %v650
    %v1678 = vpop.f32.mrb[0].mxu0
    %v1679 = vadd.f32 %v1609, %v1678
    %v1680 = vpop.f32.mrb[0].mxu0
    %1681 = vdwg.mxu0
    %1682 = vmatprep.subr.mxu0 0.0
    %1683 = vmatpush1.msra.mxu0 %v477
    %1684 = vmatprep.subr.mxu0 0.0
    %1685 = vmatpush1.msra.mxu0 %v478
    %1686 = vmatprep.subr.mxu0 0.0
    %1687 = vmatpush1.msra.mxu0 %v479
    %1688 = vmatprep.subr.mxu0 0.0
    %1689 = vmatpush1.msra.mxu0 %v480
    %1690 = vmatprep.subr.mxu0 0.0
    %1691 = vmatpush1.msra.mxu0 %v481
    %1692 = vmatprep.subr.mxu0 0.0
    %1693 = vmatpush1.msra.mxu0 %v482
    %1694 = vmatprep.subr.mxu0 0.0
    %1695 = vmatpush1.msra.mxu0 %v483
    %1696 = vmatprep.subr.mxu0 0.0
    %1697 = vmatpush1.msra.mxu0 %v484
    %1698 = vmatprep.subr.mxu0 0.0
    %1699 = vmatpush1.msra.mxu0 %v485
    %1700 = vmatprep.subr.mxu0 0.0
    %1701 = vmatpush1.msra.mxu0 %v486
    %1702 = vmatprep.subr.mxu0 0.0
    %1703 = vmatpush1.msra.mxu0 %v487
    %1704 = vmatprep.subr.mxu0 0.0
    %1705 = vmatpush1.msra.mxu0 %v488
    %1706 = vmatprep.subr.mxu0 0.0
    %1707 = vmatpush1.msra.mxu0 %v489
    %1708 = vmatprep.subr.mxu0 0.0
    %1709 = vmatpush1.msra.mxu0 %v490
    %1710 = vmatprep.subr.mxu0 0.0
    %1711 = vmatpush1.msra.mxu0 %v491
    %1712 = vmatprep.subr.mxu0 0.0
    %1713 = vmatpush1.msra.mxu0 %v492
    %1714 = vmatprep.subr.mxu0 0.0
    %1715 = vmatpush1.msra.mxu0 %v493
    %1716 = vmatprep.subr.mxu0 0.0
    %1717 = vmatpush1.msra.mxu0 %v494
    %1718 = vmatprep.subr.mxu0 0.0
    %1719 = vmatpush1.msra.mxu0 %v495
    %1720 = vmatprep.subr.mxu0 0.0
    %1721 = vmatpush1.msra.mxu0 %v496
    %1722 = vmatprep.subr.mxu0 0.0
    %1723 = vmatpush1.msra.mxu0 %v497
    %1724 = vmatprep.subr.mxu0 0.0
    %1725 = vmatpush1.msra.mxu0 %v498
    %1726 = vmatprep.subr.mxu0 0.0
    %1727 = vmatpush1.msra.mxu0 %v499
    %1728 = vmatprep.subr.mxu0 0.0
    %1729 = vmatpush1.msra.mxu0 %v500
    %1730 = vmatprep.subr.mxu0 0.0
    %1731 = vmatpush1.msra.mxu0 %v501
    %1732 = vmatprep.subr.mxu0 0.0
    %1733 = vmatpush1.msra.mxu0 %v502
    %1734 = vmatprep.subr.mxu0 0.0
    %1735 = vmatpush1.msra.mxu0 %v503
    %1736 = vmatprep.subr.mxu0 0.0
    %1737 = vmatpush1.msra.mxu0 %v504
    %1738 = vmatprep.subr.mxu0 0.0
    %1739 = vmatpush1.msra.mxu0 %v505
    %1740 = vmatprep.subr.mxu0 0.0
    %1741 = vmatpush1.msra.mxu0 %v506
    %1742 = vmatprep.subr.mxu0 0.0
    %1743 = vmatpush1.msra.mxu0 %v507
    %1744 = vmatprep.subr.mxu0 0.0
    %1745 = vmatpush1.msra.mxu0 %v508
    %1746 = vmatprep.mubr.f32.mxu0 %v668
    %1747 = vmatmul.mubr.f32.gmra.mrb[0].mxu0 %v660
    %v1748 = vpop.f32.mrb[0].mxu0
    %v1749 = vadd.f32 %v1679, %v1748
    %v1750 = vpop.f32.mrb[0].mxu0
    %1751 = vdwg.mxu0
    %1752 = vmatprep.subr.mxu0 0.0
    %1753 = vmatpush1.msra.mxu0 %v509
    %1754 = vmatprep.subr.mxu0 0.0
    %1755 = vmatpush1.msra.mxu0 %v510
    %1756 = vmatprep.subr.mxu0 0.0
    %1757 = vmatpush1.msra.mxu0 %v511
    %1758 = vmatprep.subr.mxu0 0.0
    %1759 = vmatpush1.msra.mxu0 %v512
    %1760 = vmatprep.subr.mxu0 0.0
    %1761 = vmatpush1.msra.mxu0 %v513
    %1762 = vmatprep.subr.mxu0 0.0
    %1763 = vmatpush1.msra.mxu0 %v514
    %1764 = vmatprep.subr.mxu0 0.0
    %1765 = vmatpush1.msra.mxu0 %v515
    %1766 = vmatprep.subr.mxu0 0.0
    %1767 = vmatpush1.msra.mxu0 %v516
    %1768 = vmatprep.subr.mxu0 0.0
    %1769 = vmatpush1.msra.mxu0 %v517
    %1770 = vmatprep.subr.mxu0 0.0
    %1771 = vmatpush1.msra.mxu0 %v518
    %1772 = vmatprep.subr.mxu0 0.0
    %1773 = vmatpush1.msra.mxu0 0.0
    %1774 = vmatprep.subr.mxu0 0.0
    %1775 = vmatpush1.msra.mxu0 0.0
    %1776 = vmatprep.subr.mxu0 0.0
    %1777 = vmatpush1.msra.mxu0 0.0
    %1778 = vmatprep.subr.mxu0 0.0
    %1779 = vmatpush1.msra.mxu0 0.0
    %1780 = vmatprep.subr.mxu0 0.0
    %1781 = vmatpush1.msra.mxu0 0.0
    %1782 = vmatprep.subr.mxu0 0.0
    %1783 = vmatpush1.msra.mxu0 0.0
    %1784 = vmatprep.subr.mxu0 0.0
    %1785 = vmatpush1.msra.mxu0 0.0
    %1786 = vmatprep.subr.mxu0 0.0
    %1787 = vmatpush1.msra.mxu0 0.0
    %1788 = vmatprep.subr.mxu0 0.0
    %1789 = vmatpush1.msra.mxu0 0.0
    %1790 = vmatprep.subr.mxu0 0.0
    %1791 = vmatpush1.msra.mxu0 0.0
    %1792 = vmatprep.subr.mxu0 0.0
    %1793 = vmatpush1.msra.mxu0 0.0
    %1794 = vmatprep.subr.mxu0 0.0
    %1795 = vmatpush1.msra.mxu0 0.0
    %1796 = vmatprep.subr.mxu0 0.0
    %1797 = vmatpush1.msra.mxu0 0.0
    %1798 = vmatprep.subr.mxu0 0.0
    %1799 = vmatpush1.msra.mxu0 0.0
    %1800 = vmatprep.subr.mxu0 0.0
    %1801 = vmatpush1.msra.mxu0 0.0
    %1802 = vmatprep.subr.mxu0 0.0
    %1803 = vmatpush1.msra.mxu0 0.0
    %1804 = vmatprep.subr.mxu0 0.0
    %1805 = vmatpush1.msra.mxu0 0.0
    %1806 = vmatprep.subr.mxu0 0.0
    %1807 = vmatpush1.msra.mxu0 0.0
    %1808 = vmatprep.subr.mxu0 0.0
    %1809 = vmatpush1.msra.mxu0 0.0
    %1810 = vmatprep.subr.mxu0 0.0
    %1811 = vmatpush1.msra.mxu0 0.0
    %1812 = vmatprep.subr.mxu0 0.0
    %1813 = vmatpush1.msra.mxu0 0.0
    %1814 = vmatprep.subr.mxu0 0.0
    %1815 = vmatpush1.msra.mxu0 0.0
    %1816 = vmatprep.mubr.f32.mxu0 0.0
    %1817 = vmatmul.mubr.f32.gmra.mrb[0].mxu0 %v700
    %v1818 = vpop.f32.mrb[0].mxu0
    %v1819 = vadd.f32 %v1749, %v1818
    %v1820 = vpop.f32.mrb[0].mxu0
    %1821 = vdwg.mxu0
    %v1822 = vld [vmem:[%s3] sm:$0xff]
    %v1823 = vld [vmem:[%s3 + $0x8] sm:$0xff]
    %v1824 = vld [vmem:[%s3 + $0x10] sm:$0xff]
    %v1825 = vld [vmem:[%s3 + $0x18] sm:$0xff]
    %v1826 = vld [vmem:[%s3 + $0x20] sm:$0xff]
    %v1827 = vld [vmem:[%s3 + $0x28] sm:$0xff]
    %v1828 = vld [vmem:[%s3 + $0x30] sm:$0xff]
    %v1829 = vld [vmem:[%s3 + $0x38] sm:$0xff]
    %v1830 = vld [vmem:[%s4] sm:$0x1]
    %v1832 = vlaneseq
    %v1833 = vshrl.u32 %v1832, 7
    %v1834 = vsub.s32 0, %v1833
    %v1835 = vrot.slane %v1830, %v1834
    %vm1837 = vcmask 523264
    %v1839 = vsel %vm1837, %v1819, 0
    %1841 = vmatprep.subr.mxu0 0.0
    %1842 = vmatpush1.msra.mxu0 %v1822
    %1843 = vmatprep.subr.mxu0 0.0
    %1844 = vmatpush1.msra.mxu0 %v1823
    %1845 = vmatprep.subr.mxu0 0.0
    %1846 = vmatpush1.msra.mxu0 %v1824
    %1847 = vmatprep.subr.mxu0 0.0
    %1848 = vmatpush1.msra.mxu0 %v1825
    %1849 = vmatprep.subr.mxu0 0.0
    %1850 = vmatpush1.msra.mxu0 %v1826
    %1851 = vmatprep.subr.mxu0 0.0
    %1852 = vmatpush1.msra.mxu0 %v1827
    %1853 = vmatprep.subr.mxu0 0.0
    %1854 = vmatpush1.msra.mxu0 %v1828
    %1855 = vmatprep.subr.mxu0 0.0
    %1856 = vmatpush1.msra.mxu0 %v1829
    %1857 = vmatprep.subr.mxu0 0.0
    %1858 = vmatpush1.msra.mxu0 0.0
    %1859 = vmatprep.subr.mxu0 0.0
    %1860 = vmatpush1.msra.mxu0 0.0
    %1861 = vmatprep.subr.mxu0 0.0
    %1862 = vmatpush1.msra.mxu0 0.0
    %1863 = vmatprep.subr.mxu0 0.0
    %1864 = vmatpush1.msra.mxu0 0.0
    %1865 = vmatprep.subr.mxu0 0.0
    %1866 = vmatpush1.msra.mxu0 0.0
    %1867 = vmatprep.subr.mxu0 0.0
    %1868 = vmatpush1.msra.mxu0 0.0
    %1869 = vmatprep.subr.mxu0 0.0
    %1870 = vmatpush1.msra.mxu0 0.0
    %1871 = vmatprep.subr.mxu0 0.0
    %1872 = vmatpush1.msra.mxu0 0.0
    %1873 = vmatprep.subr.mxu0 0.0
    %1874 = vmatpush1.msra.mxu0 0.0
    %1875 = vmatprep.subr.mxu0 0.0
    %1876 = vmatpush1.msra.mxu0 0.0
    %1877 = vmatprep.subr.mxu0 0.0
    %1878 = vmatpush1.msra.mxu0 0.0
    %1879 = vmatprep.subr.mxu0 0.0
    %1880 = vmatpush1.msra.mxu0 0.0
    %1881 = vmatprep.subr.mxu0 0.0
    %1882 = vmatpush1.msra.mxu0 0.0
    %1883 = vmatprep.subr.mxu0 0.0
    %1884 = vmatpush1.msra.mxu0 0.0
    %1885 = vmatprep.subr.mxu0 0.0
    %1886 = vmatpush1.msra.mxu0 0.0
    %1887 = vmatprep.subr.mxu0 0.0
    %1888 = vmatpush1.msra.mxu0 0.0
    %1889 = vmatprep.subr.mxu0 0.0
    %1890 = vmatpush1.msra.mxu0 0.0
    %1891 = vmatprep.subr.mxu0 0.0
    %1892 = vmatpush1.msra.mxu0 0.0
    %1893 = vmatprep.subr.mxu0 0.0
    %1894 = vmatpush1.msra.mxu0 0.0
    %1895 = vmatprep.subr.mxu0 0.0
    %1896 = vmatpush1.msra.mxu0 0.0
    %1897 = vmatprep.subr.mxu0 0.0
    %1898 = vmatpush1.msra.mxu0 0.0
    %1899 = vmatprep.subr.mxu0 0.0
    %1900 = vmatpush1.msra.mxu0 0.0
    %1901 = vmatprep.subr.mxu0 0.0
    %1902 = vmatpush1.msra.mxu0 0.0
    %1903 = vmatprep.subr.mxu0 0.0
    %1904 = vmatpush1.msra.mxu0 0.0
    %1905 = vmatprep.mubr.f32.mxu0 0.0
    %1906 = vmatmul.mubr.f32.gmra.mrb[0].mxu0 %v1839
    %v1907 = vpop.f32.mrb[0].mxu0
    %v1908 = vadd.f32 %v1835, %v1907
    %v1909 = vpop.f32.mrb[0].mxu0
    %1910 = vdwg.mxu0
    %vm1911 = vcmask 25600
    %1912 = vst.msk [vmem:[#allocation2] sm:$0x3] %vm1911, %v1908
    // Predicated region
    $region22: #{tiny_conv_forward.3} parent=1 // pred_check
      _
    $region23: #{tiny_conv_forward.3} parent=1 // pred_check_branch
      %1914 = sbr.rel (0) target = $region25
    $region24: #{tiny_conv_forward.3} parent=1 // pred_region
      %s1916 = ssub.s32 32, 32
      %1917 = vsyncadd [#allocation3], %s1916
      %s1919 = sshll.u32 [#allocation2], 4
      %s1920 = int_to_ptr.vmem [resolvable:$true] %s1919
      %1922 = dma.vmem_to_hbm [thread:$0]  %s1920, 32, %s5, [#allocation3]
    $region25: #{tiny_conv_forward.3} parent=1 // pred_fallthru
      _
    // Predicated region
    $region26: #{tiny_conv_forward.3} parent=1 // pred_check
      _
    $region27: #{tiny_conv_forward.3} parent=1 // pred_check_branch
      %1924 = sbr.rel (0) target = $region29
    $region28: #{tiny_conv_forward.3} parent=1 // pred_region
      %1925 = dma.done [#allocation3], 32
    $region29: #{tiny_conv_forward.3} parent=1 // pred_fallthru
      _
    %1926 = vsyncpa [#allocation3], 1

// kernel: tiny_conv_forward.2
$region0: #{tiny_conv_forward.2}
  #allocation0 [shape = 'u32[]', space=smem, size = 0x4, offset = 0x4, fixed_abs, tag = 'smem constant byte address 0x4 - core index']
  #allocation1 [shape = 'u32[144,128]{1,0:T(1,128)}', space=vmem, size = 0x12000, scoped, tag = 'internal scratch']
  #allocation2 [shape = 'f32[424,160]{1,0:T(8,128)}', space=vmem, size = 0x6a000, scoped, tag = 'scratch operand']
  %s0 = inlined_call_operand.vmem [shape: f32[424,9], index: 0, kind: input, shape index: {}]
  %s1 = inlined_call_operand.vmem [shape: f32[9,160], index: 1, kind: input, shape index: {}]
  %s2 = inlined_call_operand.vmem [shape: f32[1,160], index: 2, kind: input, shape index: {}]
  %s3 = inlined_call_operand.vmem [shape: f32[1,160], index: 3, kind: input, shape index: {}]
  %s4 = inlined_call_operand.vmem [shape: f32[1,160], index: 4, kind: input, shape index: {}]
  %s5 = inlined_call_operand.vmem [shape: f32[9,160,20], index: 5, kind: input, shape index: {}]
  %s6 = inlined_call_operand.vmem [shape: f32[1,20], index: 6, kind: input, shape index: {}]
  %s7 = inlined_call_operand.vmem [shape: f32[1,20], index: 7, kind: input, shape index: {}]
  %s8 = inlined_call_operand.vmem [shape: f32[1,20], index: 8, kind: input, shape index: {}]
  %s9 = inlined_call_operand.vmem [shape: f32[392,20], index: 9, kind: output, shape index: {}]
  %s10 = sld [smem:[#allocation0]]
  $region46: #{tiny_conv_forward.2} parent=0
    _
  %s12 = ssub.s32 1, %s10
  %s13 = scalar_select 0, %s12, %s10
  // Predicated region
  $region2: #{tiny_conv_forward.2} parent=0 // pred_check
    _
  $region3: #{tiny_conv_forward.2} parent=0 // pred_check_branch
    %15 = sbr.rel (0) target = $region5
  $region4: #{tiny_conv_forward.2} parent=0 // pred_region
    _
  $region5: #{tiny_conv_forward.2} parent=0 // pred_fallthru
    _
  // Predicated region
  $region6: #{tiny_conv_forward.2} parent=0 // pred_check
    _
  $region7: #{tiny_conv_forward.2} parent=0 // pred_check_branch
    %17 = sbr.rel (0) target = $region9
  $region8: #{tiny_conv_forward.2} parent=0 // pred_region
    _
  $region9: #{tiny_conv_forward.2} parent=0 // pred_fallthru
    _
  // Predicated region
  $region10: #{tiny_conv_forward.2} parent=0 // pred_check
    _
  $region11: #{tiny_conv_forward.2} parent=0 // pred_check_branch
    %19 = sbr.rel (0) target = $region13
  $region12: #{tiny_conv_forward.2} parent=0 // pred_region
    _
  $region13: #{tiny_conv_forward.2} parent=0 // pred_fallthru
    _
  // Predicated region
  $region14: #{tiny_conv_forward.2} parent=0 // pred_check
    _
  $region15: #{tiny_conv_forward.2} parent=0 // pred_check_branch
    %21 = sbr.rel (0) target = $region17
  $region16: #{tiny_conv_forward.2} parent=0 // pred_region
    _
  $region17: #{tiny_conv_forward.2} parent=0 // pred_fallthru
    _
  // Predicated region
  $region18: #{tiny_conv_forward.2} parent=0 // pred_check
    _
  $region19: #{tiny_conv_forward.2} parent=0 // pred_check_branch
    %23 = sbr.rel (0) target = $region21
  $region20: #{tiny_conv_forward.2} parent=0 // pred_region
    _
  $region21: #{tiny_conv_forward.2} parent=0 // pred_fallthru
    _
  // Predicated region
  $region22: #{tiny_conv_forward.2} parent=0 // pred_check
    _
  $region23: #{tiny_conv_forward.2} parent=0 // pred_check_branch
    %25 = sbr.rel (0) target = $region25
  $region24: #{tiny_conv_forward.2} parent=0 // pred_region
    _
  $region25: #{tiny_conv_forward.2} parent=0 // pred_fallthru
    _
  // Predicated region
  $region26: #{tiny_conv_forward.2} parent=0 // pred_check
    _
  $region27: #{tiny_conv_forward.2} parent=0 // pred_check_branch
    %27 = sbr.rel (0) target = $region29
  $region28: #{tiny_conv_forward.2} parent=0 // pred_region
    _
  $region29: #{tiny_conv_forward.2} parent=0 // pred_fallthru
    _
  // Predicated region
  $region30: #{tiny_conv_forward.2} parent=0 // pred_check
    _
  $region31: #{tiny_conv_forward.2} parent=0 // pred_check_branch
    %29 = sbr.rel (0) target = $region33
  $region32: #{tiny_conv_forward.2} parent=0 // pred_region
    _
  $region33: #{tiny_conv_forward.2} parent=0 // pred_fallthru
    _
  // Predicated region
  $region34: #{tiny_conv_forward.2} parent=0 // pred_check
    _
  $region35: #{tiny_conv_forward.2} parent=0 // pred_check_branch
    %31 = sbr.rel (0) target = $region37
  $region36: #{tiny_conv_forward.2} parent=0 // pred_region
    _
  $region37: #{tiny_conv_forward.2} parent=0 // pred_fallthru
    _
  %v32 = vld [vmem:[%s0] sm:$0xff]
  %v33 = vld [vmem:[%s0 + $0x8] sm:$0xff]
  %v34 = vld [vmem:[%s0 + $0x10] sm:$0xff]
  %v35 = vld [vmem:[%s0 + $0x18] sm:$0xff]
  %v36 = vld [vmem:[%s0 + $0x20] sm:$0xff]
  %v37 = vld [vmem:[%s0 + $0x28] sm:$0xff]
  %v38 = vld [vmem:[%s0 + $0x30] sm:$0xff]
  %v39 = vld [vmem:[%s0 + $0x38] sm:$0xff]
  %v40 = vld [vmem:[%s0 + $0x40] sm:$0xff]
  %v41 = vld [vmem:[%s0 + $0x48] sm:$0xff]
  %v42 = vld [vmem:[%s0 + $0x50] sm:$0xff]
  %v43 = vld [vmem:[%s0 + $0x58] sm:$0xff]
  %v44 = vld [vmem:[%s0 + $0x60] sm:$0xff]
  %v45 = vld [vmem:[%s0 + $0x68] sm:$0xff]
  %v46 = vld [vmem:[%s0 + $0x70] sm:$0xff]
  %v47 = vld [vmem:[%s0 + $0x78] sm:$0xff]
  %v48 = vld [vmem:[%s0 + $0x80] sm:$0xff]
  %v49 = vld [vmem:[%s0 + $0x88] sm:$0xff]
  %v50 = vld [vmem:[%s0 + $0x90] sm:$0xff]
  %v51 = vld [vmem:[%s0 + $0x98] sm:$0xff]
  %v52 = vld [vmem:[%s0 + $0xa0] sm:$0xff]
  %v53 = vld [vmem:[%s0 + $0xa8] sm:$0xff]
  %v54 = vld [vmem:[%s0 + $0xb0] sm:$0xff]
  %v55 = vld [vmem:[%s0 + $0xb8] sm:$0xff]
  %v56 = vld [vmem:[%s0 + $0xc0] sm:$0xff]
  %v57 = vld [vmem:[%s0 + $0xc8] sm:$0xff]
  %v58 = vld [vmem:[%s0 + $0xd0] sm:$0xff]
  %v59 = vld [vmem:[%s0 + $0xd8] sm:$0xff]
  %v60 = vld [vmem:[%s0 + $0xe0] sm:$0xff]
  %v61 = vld [vmem:[%s0 + $0xe8] sm:$0xff]
  %v62 = vld [vmem:[%s0 + $0xf0] sm:$0xff]
  %v63 = vld [vmem:[%s0 + $0xf8] sm:$0xff]
  %v64 = vld [vmem:[%s0 + $0x100] sm:$0xff]
  %v65 = vld [vmem:[%s0 + $0x108] sm:$0xff]
  %v66 = vld [vmem:[%s0 + $0x110] sm:$0xff]
  %v67 = vld [vmem:[%s0 + $0x118] sm:$0xff]
  %v68 = vld [vmem:[%s0 + $0x120] sm:$0xff]
  %v69 = vld [vmem:[%s0 + $0x128] sm:$0xff]
  %v70 = vld [vmem:[%s0 + $0x130] sm:$0xff]
  %v71 = vld [vmem:[%s0 + $0x138] sm:$0xff]
  %v72 = vld [vmem:[%s0 + $0x140] sm:$0xff]
  %v73 = vld [vmem:[%s0 + $0x148] sm:$0xff]
  %v74 = vld [vmem:[%s0 + $0x150] sm:$0xff]
  %v75 = vld [vmem:[%s0 + $0x158] sm:$0xff]
  %v76 = vld [vmem:[%s0 + $0x160] sm:$0xff]
  %v77 = vld [vmem:[%s0 + $0x168] sm:$0xff]
  %v78 = vld [vmem:[%s0 + $0x170] sm:$0xff]
  %v79 = vld [vmem:[%s0 + $0x178] sm:$0xff]
  %v80 = vld [vmem:[%s0 + $0x180] sm:$0xff]
  %v81 = vld [vmem:[%s0 + $0x188] sm:$0xff]
  %v82 = vld [vmem:[%s0 + $0x190] sm:$0xff]
  %v83 = vld [vmem:[%s0 + $0x198] sm:$0xff]
  %v84 = vld [vmem:[%s0 + $0x1a0] sm:$0xff]
  %v85 = vld [vmem:[%s1] sm:$0xff]
  %v86 = vld [vmem:[%s1 + $0x8] sm:$0xff]
  %v87 = vld [vmem:[%s1 + $0x10] sm:$0x1]
  %v88 = vld [vmem:[%s1 + $0x18] sm:$0x1]
  %v89 = vld [vmem:[%s2] sm:$0x3]
  %v91 = vlaneseq
  %v92 = vshrl.u32 %v91, 7
  %v93 = vsub.s32 0, %v92
  %v94 = vrot.slane %v89, %v93
  %v95 = vlaneseq
  %v96 = vshrl.u32 %v95, 7
  %v97 = vsub.s32 1, %v96
  %v98 = vrot.slane %v89, %v97
  %vm101 = vcmask 72704
  %v103 = vsel %vm101, %v32, 0
  %v106 = vsel %vm101, %v33, 0
  %v109 = vsel %vm101, %v34, 0
  %v112 = vsel %vm101, %v35, 0
  %v115 = vsel %vm101, %v36, 0
  %v118 = vsel %vm101, %v37, 0
  %v121 = vsel %vm101, %v38, 0
  %v124 = vsel %vm101, %v39, 0
  %v127 = vsel %vm101, %v40, 0
  %v130 = vsel %vm101, %v41, 0
  %v133 = vsel %vm101, %v42, 0
  %v136 = vsel %vm101, %v43, 0
  %v139 = vsel %vm101, %v44, 0
  %v142 = vsel %vm101, %v45, 0
  %v145 = vsel %vm101, %v46, 0
  %v148 = vsel %vm101, %v47, 0
  %v151 = vsel %vm101, %v48, 0
  %v154 = vsel %vm101, %v49, 0
  %v157 = vsel %vm101, %v50, 0
  %v160 = vsel %vm101, %v51, 0
  %v163 = vsel %vm101, %v52, 0
  %v166 = vsel %vm101, %v53, 0
  %v169 = vsel %vm101, %v54, 0
  %v172 = vsel %vm101, %v55, 0
  %v175 = vsel %vm101, %v56, 0
  %v178 = vsel %vm101, %v57, 0
  %v181 = vsel %vm101, %v58, 0
  %v184 = vsel %vm101, %v59, 0
  %v187 = vsel %vm101, %v60, 0
  %v190 = vsel %vm101, %v61, 0
  %v193 = vsel %vm101, %v62, 0
  %v196 = vsel %vm101, %v63, 0
  %v199 = vsel %vm101, %v64, 0
  %v202 = vsel %vm101, %v65, 0
  %v205 = vsel %vm101, %v66, 0
  %v208 = vsel %vm101, %v67, 0
  %v211 = vsel %vm101, %v68, 0
  %v214 = vsel %vm101, %v69, 0
  %v217 = vsel %vm101, %v70, 0
  %v220 = vsel %vm101, %v71, 0
  %v223 = vsel %vm101, %v72, 0
  %v226 = vsel %vm101, %v73, 0
  %v229 = vsel %vm101, %v74, 0
  %v232 = vsel %vm101, %v75, 0
  %v235 = vsel %vm101, %v76, 0
  %v238 = vsel %vm101, %v77, 0
  %v241 = vsel %vm101, %v78, 0
  %v244 = vsel %vm101, %v79, 0
  %v247 = vsel %vm101, %v80, 0
  %v250 = vsel %vm101, %v81, 0
  %v253 = vsel %vm101, %v82, 0
  %v256 = vsel %vm101, %v83, 0
  %v259 = vsel %vm101, %v84, 0
  %vm261 = vcmask 1040384
  %v263 = vsel %vm261, %v87, 0
  %v266 = vsel %vm261, %v88, 0
  %268 = vmatprep.subr.mxu0 %v86
  %269 = vmatpush1.msra.mxu0 %v85
  %270 = vmatprep.subr.mxu0 %v266
  %271 = vmatpush1.msra.mxu0 %v263
  %272 = vmatprep.subr.mxu0 0.0
  %273 = vmatpush1.msra.mxu0 0.0
  %274 = vmatprep.subr.mxu0 0.0
  %275 = vmatpush1.msra.mxu0 0.0
  %276 = vmatprep.subr.mxu0 0.0
  %277 = vmatpush1.msra.mxu0 0.0
  %278 = vmatprep.subr.mxu0 0.0
  %279 = vmatpush1.msra.mxu0 0.0
  %280 = vmatprep.subr.mxu0 0.0
  %281 = vmatpush1.msra.mxu0 0.0
  %282 = vmatprep.subr.mxu0 0.0
  %283 = vmatpush1.msra.mxu0 0.0
  %284 = vmatprep.subr.mxu0 0.0
  %285 = vmatpush1.msra.mxu0 0.0
  %286 = vmatprep.subr.mxu0 0.0
  %287 = vmatpush1.msra.mxu0 0.0
  %288 = vmatprep.subr.mxu0 0.0
  %289 = vmatpush1.msra.mxu0 0.0
  %290 = vmatprep.subr.mxu0 0.0
  %291 = vmatpush1.msra.mxu0 0.0
  %292 = vmatprep.subr.mxu0 0.0
  %293 = vmatpush1.msra.mxu0 0.0
  %294 = vmatprep.subr.mxu0 0.0
  %295 = vmatpush1.msra.mxu0 0.0
  %296 = vmatprep.subr.mxu0 0.0
  %297 = vmatpush1.msra.mxu0 0.0
  %298 = vmatprep.subr.mxu0 0.0
  %299 = vmatpush1.msra.mxu0 0.0
  %300 = vmatprep.subr.mxu0 0.0
  %301 = vmatpush1.msra.mxu0 0.0
  %302 = vmatprep.subr.mxu0 0.0
  %303 = vmatpush1.msra.mxu0 0.0
  %304 = vmatprep.subr.mxu0 0.0
  %305 = vmatpush1.msra.mxu0 0.0
  %306 = vmatprep.subr.mxu0 0.0
  %307 = vmatpush1.msra.mxu0 0.0
  %308 = vmatprep.subr.mxu0 0.0
  %309 = vmatpush1.msra.mxu0 0.0
  %310 = vmatprep.subr.mxu0 0.0
  %311 = vmatpush1.msra.mxu0 0.0
  %312 = vmatprep.subr.mxu0 0.0
  %313 = vmatpush1.msra.mxu0 0.0
  %314 = vmatprep.subr.mxu0 0.0
  %315 = vmatpush1.msra.mxu0 0.0
  %316 = vmatprep.subr.mxu0 0.0
  %317 = vmatpush1.msra.mxu0 0.0
  %318 = vmatprep.subr.mxu0 0.0
  %319 = vmatpush1.msra.mxu0 0.0
  %320 = vmatprep.subr.mxu0 0.0
  %321 = vmatpush1.msra.mxu0 0.0
  %322 = vmatprep.subr.mxu0 0.0
  %323 = vmatpush1.msra.mxu0 0.0
  %324 = vmatprep.subr.mxu0 0.0
  %325 = vmatpush1.msra.mxu0 0.0
  %326 = vmatprep.subr.mxu0 0.0
  %327 = vmatpush1.msra.mxu0 0.0
  %328 = vmatprep.subr.mxu0 0.0
  %329 = vmatpush1.msra.mxu0 0.0
  %330 = vmatprep.subr.mxu0 0.0
  %331 = vmatpush1.msra.mxu0 0.0
  %332 = vmatprep.mubr.f32.mxu0 0.0
  %333 = vmatmul.mubr.f32.gmra.mrb[0].mxu0 %v103
  %v334 = vpop.f32.mrb[0].mxu0
  %v335 = vadd.f32 %v94, %v334
  %v336 = vpop.f32.mrb[0].mxu0
  %v337 = vadd.f32 %v98, %v336
  %338 = vmatprep.mubr.f32.mxu0 0.0
  %339 = vmatmul.mubr.f32.gmra.mrb[0].mxu0 %v106
  %v340 = vpop.f32.mrb[0].mxu0
  %v341 = vadd.f32 %v94, %v340
  %v342 = vpop.f32.mrb[0].mxu0
  %v343 = vadd.f32 %v98, %v342
  %344 = vmatprep.mubr.f32.mxu0 0.0
  %345 = vmatmul.mubr.f32.gmra.mrb[0].mxu0 %v109
  %v346 = vpop.f32.mrb[0].mxu0
  %v347 = vadd.f32 %v94, %v346
  %v348 = vpop.f32.mrb[0].mxu0
  %v349 = vadd.f32 %v98, %v348
  %350 = vmatprep.mubr.f32.mxu0 0.0
  %351 = vmatmul.mubr.f32.gmra.mrb[0].mxu0 %v112
  %v352 = vpop.f32.mrb[0].mxu0
  %v353 = vadd.f32 %v94, %v352
  %v354 = vpop.f32.mrb[0].mxu0
  %v355 = vadd.f32 %v98, %v354
  %356 = vmatprep.mubr.f32.mxu0 0.0
  %357 = vmatmul.mubr.f32.gmra.mrb[0].mxu0 %v115
  %v358 = vpop.f32.mrb[0].mxu0
  %v359 = vadd.f32 %v94, %v358
  %v360 = vpop.f32.mrb[0].mxu0
  %v361 = vadd.f32 %v98, %v360
  %362 = vmatprep.mubr.f32.mxu0 0.0
  %363 = vmatmul.mubr.f32.gmra.mrb[0].mxu0 %v118
  %v364 = vpop.f32.mrb[0].mxu0
  %v365 = vadd.f32 %v94, %v364
  %v366 = vpop.f32.mrb[0].mxu0
  %v367 = vadd.f32 %v98, %v366
  %368 = vmatprep.mubr.f32.mxu0 0.0
  %369 = vmatmul.mubr.f32.gmra.mrb[0].mxu0 %v121
  %v370 = vpop.f32.mrb[0].mxu0
  %v371 = vadd.f32 %v94, %v370
  %v372 = vpop.f32.mrb[0].mxu0
  %v373 = vadd.f32 %v98, %v372
  %374 = vmatprep.mubr.f32.mxu0 0.0
  %375 = vmatmul.mubr.f32.gmra.mrb[0].mxu0 %v124
  %v376 = vpop.f32.mrb[0].mxu0
  %v377 = vadd.f32 %v94, %v376
  %v378 = vpop.f32.mrb[0].mxu0
  %v379 = vadd.f32 %v98, %v378
  %380 = vmatprep.mubr.f32.mxu0 0.0
  %381 = vmatmul.mubr.f32.gmra.mrb[0].mxu0 %v127
  %v382 = vpop.f32.mrb[0].mxu0
  %v383 = vadd.f32 %v94, %v382
  %v384 = vpop.f32.mrb[0].mxu0
  %v385 = vadd.f32 %v98, %v384
  %386 = vmatprep.mubr.f32.mxu0 0.0
  %387 = vmatmul.mubr.f32.gmra.mrb[0].mxu0 %v130
  %v388 = vpop.f32.mrb[0].mxu0
  %v389 = vadd.f32 %v94, %v388
  %v390 = vpop.f32.mrb[0].mxu0
  %v391 = vadd.f32 %v98, %v390
  %392 = vmatprep.mubr.f32.mxu0 0.0
  %393 = vmatmul.mubr.f32.gmra.mrb[0].mxu0 %v133
  %v394 = vpop.f32.mrb[0].mxu0
  %v395 = vadd.f32 %v94, %v394
  %v396 = vpop.f32.mrb[0].mxu0
  %v397 = vadd.f32 %v98, %v396
  %398 = vmatprep.mubr.f32.mxu0 0.0
  %399 = vmatmul.mubr.f32.gmra.mrb[0].mxu0 %v136
  %v400 = vpop.f32.mrb[0].mxu0
  %v401 = vadd.f32 %v94, %v400
  %v402 = vpop.f32.mrb[0].mxu0
  %v403 = vadd.f32 %v98, %v402
  %404 = vmatprep.mubr.f32.mxu0 0.0
  %405 = vmatmul.mubr.f32.gmra.mrb[0].mxu0 %v139
  %v406 = vpop.f32.mrb[0].mxu0
  %v407 = vadd.f32 %v94, %v406
  %v408 = vpop.f32.mrb[0].mxu0
  %v409 = vadd.f32 %v98, %v408
  %410 = vmatprep.mubr.f32.mxu0 0.0
  %411 = vmatmul.mubr.f32.gmra.mrb[0].mxu0 %v142
  %v412 = vpop.f32.mrb[0].mxu0
  %v413 = vadd.f32 %v94, %v412
  %v414 = vpop.f32.mrb[0].mxu0
  %v415 = vadd.f32 %v98, %v414
  %416 = vmatprep.mubr.f32.mxu0 0.0
  %417 = vmatmul.mubr.f32.gmra.mrb[0].mxu0 %v145
  %v418 = vpop.f32.mrb[0].mxu0
  %v419 = vadd.f32 %v94, %v418
  %v420 = vpop.f32.mrb[0].mxu0
  %v421 = vadd.f32 %v98, %v420
  %422 = vmatprep.mubr.f32.mxu0 0.0
  %423 = vmatmul.mubr.f32.gmra.mrb[0].mxu0 %v148
  %v424 = vpop.f32.mrb[0].mxu0
  %v425 = vadd.f32 %v94, %v424
  %v426 = vpop.f32.mrb[0].mxu0
  %v427 = vadd.f32 %v98, %v426
  %428 = vmatprep.mubr.f32.mxu0 0.0
  %429 = vmatmul.mubr.f32.gmra.mrb[0].mxu0 %v151
  %v430 = vpop.f32.mrb[0].mxu0
  %v431 = vadd.f32 %v94, %v430
  %v432 = vpop.f32.mrb[0].mxu0
  %v433 = vadd.f32 %v98, %v432
  %434 = vmatprep.mubr.f32.mxu0 0.0
  %435 = vmatmul.mubr.f32.gmra.mrb[0].mxu0 %v154
  %v436 = vpop.f32.mrb[0].mxu0
  %v437 = vadd.f32 %v94, %v436
  %v438 = vpop.f32.mrb[0].mxu0
  %v439 = vadd.f32 %v98, %v438
  %440 = vmatprep.mubr.f32.mxu0 0.0
  %441 = vmatmul.mubr.f32.gmra.mrb[0].mxu0 %v157
  %v442 = vpop.f32.mrb[0].mxu0
  %v443 = vadd.f32 %v94, %v442
  %v444 = vpop.f32.mrb[0].mxu0
  %v445 = vadd.f32 %v98, %v444
  %446 = vmatprep.mubr.f32.mxu0 0.0
  %447 = vmatmul.mubr.f32.gmra.mrb[0].mxu0 %v160
  %v448 = vpop.f32.mrb[0].mxu0
  %v449 = vadd.f32 %v94, %v448
  %v450 = vpop.f32.mrb[0].mxu0
  %v451 = vadd.f32 %v98, %v450
  %452 = vmatprep.mubr.f32.mxu0 0.0
  %453 = vmatmul.mubr.f32.gmra.mrb[0].mxu0 %v163
  %v454 = vpop.f32.mrb[0].mxu0
  %v455 = vadd.f32 %v94, %v454
  %v456 = vpop.f32.mrb[0].mxu0
  %v457 = vadd.f32 %v98, %v456
  %458 = vmatprep.mubr.f32.mxu0 0.0
  %459 = vmatmul.mubr.f32.gmra.mrb[0].mxu0 %v166
  %v460 = vpop.f32.mrb[0].mxu0
  %v461 = vadd.f32 %v94, %v460
  %v462 = vpop.f32.mrb[0].mxu0
  %v463 = vadd.f32 %v98, %v462
  %464 = vmatprep.mubr.f32.mxu0 0.0
  %465 = vmatmul.mubr.f32.gmra.mrb[0].mxu0 %v169
  %v466 = vpop.f32.mrb[0].mxu0
  %v467 = vadd.f32 %v94, %v466
  %v468 = vpop.f32.mrb[0].mxu0
  %v469 = vadd.f32 %v98, %v468
  %470 = vmatprep.mubr.f32.mxu0 0.0
  %471 = vmatmul.mubr.f32.gmra.mrb[0].mxu0 %v172
  %v472 = vpop.f32.mrb[0].mxu0
  %v473 = vadd.f32 %v94, %v472
  %v474 = vpop.f32.mrb[0].mxu0
  %v475 = vadd.f32 %v98, %v474
  %476 = vmatprep.mubr.f32.mxu0 0.0
  %477 = vmatmul.mubr.f32.gmra.mrb[0].mxu0 %v175
  %v478 = vpop.f32.mrb[0].mxu0
  %v479 = vadd.f32 %v94, %v478
  %v480 = vpop.f32.mrb[0].mxu0
  %v481 = vadd.f32 %v98, %v480
  %482 = vmatprep.mubr.f32.mxu0 0.0
  %483 = vmatmul.mubr.f32.gmra.mrb[0].mxu0 %v178
  %v484 = vpop.f32.mrb[0].mxu0
  %v485 = vadd.f32 %v94, %v484
  %v486 = vpop.f32.mrb[0].mxu0
  %v487 = vadd.f32 %v98, %v486
  %488 = vmatprep.mubr.f32.mxu0 0.0
  %489 = vmatmul.mubr.f32.gmra.mrb[0].mxu0 %v181
  %v490 = vpop.f32.mrb[0].mxu0
  %v491 = vadd.f32 %v94, %v490
  %v492 = vpop.f32.mrb[0].mxu0
  %v493 = vadd.f32 %v98, %v492
  %494 = vmatprep.mubr.f32.mxu0 0.0
  %495 = vmatmul.mubr.f32.gmra.mrb[0].mxu0 %v184
  %v496 = vpop.f32.mrb[0].mxu0
  %v497 = vadd.f32 %v94, %v496
  %v498 = vpop.f32.mrb[0].mxu0
  %v499 = vadd.f32 %v98, %v498
  %500 = vmatprep.mubr.f32.mxu0 0.0
  %501 = vmatmul.mubr.f32.gmra.mrb[0].mxu0 %v187
  %v502 = vpop.f32.mrb[0].mxu0
  %v503 = vadd.f32 %v94, %v502
  %v504 = vpop.f32.mrb[0].mxu0
  %v505 = vadd.f32 %v98, %v504
  %506 = vmatprep.mubr.f32.mxu0 0.0
  %507 = vmatmul.mubr.f32.gmra.mrb[0].mxu0 %v190
  %v508 = vpop.f32.mrb[0].mxu0
  %v509 = vadd.f32 %v94, %v508
  %v510 = vpop.f32.mrb[0].mxu0
  %v511 = vadd.f32 %v98, %v510
  %512 = vmatprep.mubr.f32.mxu0 0.0
  %513 = vmatmul.mubr.f32.gmra.mrb[0].mxu0 %v193
  %v514 = vpop.f32.mrb[0].mxu0
  %v515 = vadd.f32 %v94, %v514
  %v516 = vpop.f32.mrb[0].mxu0
  %v517 = vadd.f32 %v98, %v516
  %518 = vmatprep.mubr.f32.mxu0 0.0
  %519 = vmatmul.mubr.f32.gmra.mrb[0].mxu0 %v196
  %v520 = vpop.f32.mrb[0].mxu0
  %v521 = vadd.f32 %v94, %v520
  %v522 = vpop.f32.mrb[0].mxu0
  %v523 = vadd.f32 %v98, %v522
  %524 = vmatprep.mubr.f32.mxu0 0.0
  %525 = vmatmul.mubr.f32.gmra.mrb[0].mxu0 %v199
  %v526 = vpop.f32.mrb[0].mxu0
  %v527 = vadd.f32 %v94, %v526
  %v528 = vpop.f32.mrb[0].mxu0
  %v529 = vadd.f32 %v98, %v528
  %530 = vmatprep.mubr.f32.mxu0 0.0
  %531 = vmatmul.mubr.f32.gmra.mrb[0].mxu0 %v202
  %v532 = vpop.f32.mrb[0].mxu0
  %v533 = vadd.f32 %v94, %v532
  %v534 = vpop.f32.mrb[0].mxu0
  %v535 = vadd.f32 %v98, %v534
  %536 = vmatprep.mubr.f32.mxu0 0.0
  %537 = vmatmul.mubr.f32.gmra.mrb[0].mxu0 %v205
  %v538 = vpop.f32.mrb[0].mxu0
  %v539 = vadd.f32 %v94, %v538
  %v540 = vpop.f32.mrb[0].mxu0
  %v541 = vadd.f32 %v98, %v540
  %542 = vmatprep.mubr.f32.mxu0 0.0
  %543 = vmatmul.mubr.f32.gmra.mrb[0].mxu0 %v208
  %v544 = vpop.f32.mrb[0].mxu0
  %v545 = vadd.f32 %v94, %v544
  %v546 = vpop.f32.mrb[0].mxu0
  %v547 = vadd.f32 %v98, %v546
  %548 = vmatprep.mubr.f32.mxu0 0.0
  %549 = vmatmul.mubr.f32.gmra.mrb[0].mxu0 %v211
  %v550 = vpop.f32.mrb[0].mxu0
  %v551 = vadd.f32 %v94, %v550
  %v552 = vpop.f32.mrb[0].mxu0
  %v553 = vadd.f32 %v98, %v552
  %554 = vmatprep.mubr.f32.mxu0 0.0
  %555 = vmatmul.mubr.f32.gmra.mrb[0].mxu0 %v214
  %v556 = vpop.f32.mrb[0].mxu0
  %v557 = vadd.f32 %v94, %v556
  %v558 = vpop.f32.mrb[0].mxu0
  %v559 = vadd.f32 %v98, %v558
  %560 = vmatprep.mubr.f32.mxu0 0.0
  %561 = vmatmul.mubr.f32.gmra.mrb[0].mxu0 %v217
  %v562 = vpop.f32.mrb[0].mxu0
  %v563 = vadd.f32 %v94, %v562
  %v564 = vpop.f32.mrb[0].mxu0
  %v565 = vadd.f32 %v98, %v564
  %566 = vmatprep.mubr.f32.mxu0 0.0
  %567 = vmatmul.mubr.f32.gmra.mrb[0].mxu0 %v220
  %v568 = vpop.f32.mrb[0].mxu0
  %v569 = vadd.f32 %v94, %v568
  %v570 = vpop.f32.mrb[0].mxu0
  %v571 = vadd.f32 %v98, %v570
  %572 = vmatprep.mubr.f32.mxu0 0.0
  %573 = vmatmul.mubr.f32.gmra.mrb[0].mxu0 %v223
  %v574 = vpop.f32.mrb[0].mxu0
  %v575 = vadd.f32 %v94, %v574
  %v576 = vpop.f32.mrb[0].mxu0
  %v577 = vadd.f32 %v98, %v576
  %578 = vmatprep.mubr.f32.mxu0 0.0
  %579 = vmatmul.mubr.f32.gmra.mrb[0].mxu0 %v226
  %v580 = vpop.f32.mrb[0].mxu0
  %v581 = vadd.f32 %v94, %v580
  %v582 = vpop.f32.mrb[0].mxu0
  %v583 = vadd.f32 %v98, %v582
  %584 = vmatprep.mubr.f32.mxu0 0.0
  %585 = vmatmul.mubr.f32.gmra.mrb[0].mxu0 %v229
  %v586 = vpop.f32.mrb[0].mxu0
  %v587 = vadd.f32 %v94, %v586
  %v588 = vpop.f32.mrb[0].mxu0
  %v589 = vadd.f32 %v98, %v588
  %590 = vmatprep.mubr.f32.mxu0 0.0
  %591 = vmatmul.mubr.f32.gmra.mrb[0].mxu0 %v232
  %v592 = vpop.f32.mrb[0].mxu0
  %v593 = vadd.f32 %v94, %v592
  %v594 = vpop.f32.mrb[0].mxu0
  %v595 = vadd.f32 %v98, %v594
  %596 = vmatprep.mubr.f32.mxu0 0.0
  %597 = vmatmul.mubr.f32.gmra.mrb[0].mxu0 %v235
  %v598 = vpop.f32.mrb[0].mxu0
  %v599 = vadd.f32 %v94, %v598
  %v600 = vpop.f32.mrb[0].mxu0
  %v601 = vadd.f32 %v98, %v600
  %602 = vmatprep.mubr.f32.mxu0 0.0
  %603 = vmatmul.mubr.f32.gmra.mrb[0].mxu0 %v238
  %v604 = vpop.f32.mrb[0].mxu0
  %v605 = vadd.f32 %v94, %v604
  %v606 = vpop.f32.mrb[0].mxu0
  %v607 = vadd.f32 %v98, %v606
  %608 = vmatprep.mubr.f32.mxu0 0.0
  %609 = vmatmul.mubr.f32.gmra.mrb[0].mxu0 %v241
  %v610 = vpop.f32.mrb[0].mxu0
  %v611 = vadd.f32 %v94, %v610
  %v612 = vpop.f32.mrb[0].mxu0
  %v613 = vadd.f32 %v98, %v612
  %614 = vmatprep.mubr.f32.mxu0 0.0
  %615 = vmatmul.mubr.f32.gmra.mrb[0].mxu0 %v244
  %v616 = vpop.f32.mrb[0].mxu0
  %v617 = vadd.f32 %v94, %v616
  %v618 = vpop.f32.mrb[0].mxu0
  %v619 = vadd.f32 %v98, %v618
  %620 = vmatprep.mubr.f32.mxu0 0.0
  %621 = vmatmul.mubr.f32.gmra.mrb[0].mxu0 %v247
  %v622 = vpop.f32.mrb[0].mxu0
  %v623 = vadd.f32 %v94, %v622
  %v624 = vpop.f32.mrb[0].mxu0
  %v625 = vadd.f32 %v98, %v624
  %626 = vmatprep.mubr.f32.mxu0 0.0
  %627 = vmatmul.mubr.f32.gmra.mrb[0].mxu0 %v250
  %v628 = vpop.f32.mrb[0].mxu0
  %v629 = vadd.f32 %v94, %v628
  %v630 = vpop.f32.mrb[0].mxu0
  %v631 = vadd.f32 %v98, %v630
  %632 = vmatprep.mubr.f32.mxu0 0.0
  %633 = vmatmul.mubr.f32.gmra.mrb[0].mxu0 %v253
  %v634 = vpop.f32.mrb[0].mxu0
  %v635 = vadd.f32 %v94, %v634
  %v636 = vpop.f32.mrb[0].mxu0
  %v637 = vadd.f32 %v98, %v636
  %638 = vmatprep.mubr.f32.mxu0 0.0
  %639 = vmatmul.mubr.f32.gmra.mrb[0].mxu0 %v256
  %v640 = vpop.f32.mrb[0].mxu0
  %v641 = vadd.f32 %v94, %v640
  %v642 = vpop.f32.mrb[0].mxu0
  %v643 = vadd.f32 %v98, %v642
  %644 = vmatprep.mubr.f32.mxu0 0.0
  %645 = vmatmul.mubr.f32.gmra.mrb[0].mxu0 %v259
  %v646 = vpop.f32.mrb[0].mxu0
  %v647 = vadd.f32 %v94, %v646
  %v648 = vpop.f32.mrb[0].mxu0
  %v649 = vadd.f32 %v98, %v648
  %650 = vdwg.mxu0
  %v651 = vmax.f32 %v335, 0.0
  %v652 = vmax.f32 %v337, 0.0
  %v653 = vmax.f32 %v341, 0.0
  %v654 = vmax.f32 %v343, 0.0
  %v655 = vmax.f32 %v347, 0.0
  %v656 = vmax.f32 %v349, 0.0
  %v657 = vmax.f32 %v353, 0.0
  %v658 = vmax.f32 %v355, 0.0
  %v659 = vmax.f32 %v359, 0.0
  %v660 = vmax.f32 %v361, 0.0
  %v661 = vmax.f32 %v365, 0.0
  %v662 = vmax.f32 %v367, 0.0
  %v663 = vmax.f32 %v371, 0.0
  %v664 = vmax.f32 %v373, 0.0
  %v665 = vmax.f32 %v377, 0.0
  %v666 = vmax.f32 %v379, 0.0
  %v667 = vmax.f32 %v383, 0.0
  %v668 = vmax.f32 %v385, 0.0
  %v669 = vmax.f32 %v389, 0.0
  %v670 = vmax.f32 %v391, 0.0
  %v671 = vmax.f32 %v395, 0.0
  %v672 = vmax.f32 %v397, 0.0
  %v673 = vmax.f32 %v401, 0.0
  %v674 = vmax.f32 %v403, 0.0
  %v675 = vmax.f32 %v407, 0.0
  %v676 = vmax.f32 %v409, 0.0
  %v677 = vmax.f32 %v413, 0.0
  %v678 = vmax.f32 %v415, 0.0
  %v679 = vmax.f32 %v419, 0.0
  %v680 = vmax.f32 %v421, 0.0
  %v681 = vmax.f32 %v425, 0.0
  %v682 = vmax.f32 %v427, 0.0
  %v683 = vmax.f32 %v431, 0.0
  %v684 = vmax.f32 %v433, 0.0
  %v685 = vmax.f32 %v437, 0.0
  %v686 = vmax.f32 %v439, 0.0
  %v687 = vmax.f32 %v443, 0.0
  %v688 = vmax.f32 %v445, 0.0
  %v689 = vmax.f32 %v449, 0.0
  %v690 = vmax.f32 %v451, 0.0
  %v691 = vmax.f32 %v455, 0.0
  %v692 = vmax.f32 %v457, 0.0
  %v693 = vmax.f32 %v461, 0.0
  %v694 = vmax.f32 %v463, 0.0
  %v695 = vmax.f32 %v467, 0.0
  %v696 = vmax.f32 %v469, 0.0
  %v697 = vmax.f32 %v473, 0.0
  %v698 = vmax.f32 %v475, 0.0
  %v699 = vmax.f32 %v479, 0.0
  %v700 = vmax.f32 %v481, 0.0
  %v701 = vmax.f32 %v485, 0.0
  %v702 = vmax.f32 %v487, 0.0
  %v703 = vmax.f32 %v491, 0.0
  %v704 = vmax.f32 %v493, 0.0
  %v705 = vmax.f32 %v497, 0.0
  %v706 = vmax.f32 %v499, 0.0
  %v707 = vmax.f32 %v503, 0.0
  %v708 = vmax.f32 %v505, 0.0
  %v709 = vmax.f32 %v509, 0.0
  %v710 = vmax.f32 %v511, 0.0
  %v711 = vmax.f32 %v515, 0.0
  %v712 = vmax.f32 %v517, 0.0
  %v713 = vmax.f32 %v521, 0.0
  %v714 = vmax.f32 %v523, 0.0
  %v715 = vmax.f32 %v527, 0.0
  %v716 = vmax.f32 %v529, 0.0
  %v717 = vmax.f32 %v533, 0.0
  %v718 = vmax.f32 %v535, 0.0
  %v719 = vmax.f32 %v539, 0.0
  %v720 = vmax.f32 %v541, 0.0
  %v721 = vmax.f32 %v545, 0.0
  %v722 = vmax.f32 %v547, 0.0
  %v723 = vmax.f32 %v551, 0.0
  %v724 = vmax.f32 %v553, 0.0
  %v725 = vmax.f32 %v557, 0.0
  %v726 = vmax.f32 %v559, 0.0
  %v727 = vmax.f32 %v563, 0.0
  %v728 = vmax.f32 %v565, 0.0
  %v729 = vmax.f32 %v569, 0.0
  %v730 = vmax.f32 %v571, 0.0
  %v731 = vmax.f32 %v575, 0.0
  %v732 = vmax.f32 %v577, 0.0
  %v733 = vmax.f32 %v581, 0.0
  %v734 = vmax.f32 %v583, 0.0
  %v735 = vmax.f32 %v587, 0.0
  %v736 = vmax.f32 %v589, 0.0
  %v737 = vmax.f32 %v593, 0.0
  %v738 = vmax.f32 %v595, 0.0
  %v739 = vmax.f32 %v599, 0.0
  %v740 = vmax.f32 %v601, 0.0
  %v741 = vmax.f32 %v605, 0.0
  %v742 = vmax.f32 %v607, 0.0
  %v743 = vmax.f32 %v611, 0.0
  %v744 = vmax.f32 %v613, 0.0
  %v745 = vmax.f32 %v617, 0.0
  %v746 = vmax.f32 %v619, 0.0
  %v747 = vmax.f32 %v623, 0.0
  %v748 = vmax.f32 %v625, 0.0
  %v749 = vmax.f32 %v629, 0.0
  %v750 = vmax.f32 %v631, 0.0
  %v751 = vmax.f32 %v635, 0.0
  %v752 = vmax.f32 %v637, 0.0
  %v753 = vmax.f32 %v641, 0.0
  %v754 = vmax.f32 %v643, 0.0
  %v755 = vmax.f32 %v647, 0.0
  %v756 = vmax.f32 %v649, 0.0
  %v757 = vld [vmem:[%s3] sm:$0x3]
  %v759 = vlaneseq
  %v760 = vshrl.u32 %v759, 7
  %v761 = vsub.s32 0, %v760
  %v762 = vrot.slane %v757, %v761
  %v763 = vlaneseq
  %v764 = vshrl.u32 %v763, 7
  %v765 = vsub.s32 1, %v764
  %v766 = vrot.slane %v757, %v765
  %v769 = vmul.f32 %v651, %v762
  %v770 = vmul.f32 %v652, %v766
  %v771 = vmul.f32 %v653, %v762
  %v772 = vmul.f32 %v654, %v766
  %v773 = vmul.f32 %v655, %v762
  %v774 = vmul.f32 %v656, %v766
  %v775 = vmul.f32 %v657, %v762
  %v776 = vmul.f32 %v658, %v766
  %v777 = vmul.f32 %v659, %v762
  %v778 = vmul.f32 %v660, %v766
  %v779 = vmul.f32 %v661, %v762
  %v780 = vmul.f32 %v662, %v766
  %v781 = vmul.f32 %v663, %v762
  %v782 = vmul.f32 %v664, %v766
  %v783 = vmul.f32 %v665, %v762
  %v784 = vmul.f32 %v666, %v766
  %v785 = vmul.f32 %v667, %v762
  %v786 = vmul.f32 %v668, %v766
  %v787 = vmul.f32 %v669, %v762
  %v788 = vmul.f32 %v670, %v766
  %v789 = vmul.f32 %v671, %v762
  %v790 = vmul.f32 %v672, %v766
  %v791 = vmul.f32 %v673, %v762
  %v792 = vmul.f32 %v674, %v766
  %v793 = vmul.f32 %v675, %v762
  %v794 = vmul.f32 %v676, %v766
  %v795 = vmul.f32 %v677, %v762
  %v796 = vmul.f32 %v678, %v766
  %v797 = vmul.f32 %v679, %v762
  %v798 = vmul.f32 %v680, %v766
  %v799 = vmul.f32 %v681, %v762
  %v800 = vmul.f32 %v682, %v766
  %v801 = vmul.f32 %v683, %v762
  %v802 = vmul.f32 %v684, %v766
  %v803 = vmul.f32 %v685, %v762
  %v804 = vmul.f32 %v686, %v766
  %v805 = vmul.f32 %v687, %v762
  %v806 = vmul.f32 %v688, %v766
  %v807 = vmul.f32 %v689, %v762
  %v808 = vmul.f32 %v690, %v766
  %v809 = vmul.f32 %v691, %v762
  %v810 = vmul.f32 %v692, %v766
  %v811 = vmul.f32 %v693, %v762
  %v812 = vmul.f32 %v694, %v766
  %v813 = vmul.f32 %v695, %v762
  %v814 = vmul.f32 %v696, %v766
  %v815 = vmul.f32 %v697, %v762
  %v816 = vmul.f32 %v698, %v766
  %v817 = vmul.f32 %v699, %v762
  %v818 = vmul.f32 %v700, %v766
  %v819 = vmul.f32 %v701, %v762
  %v820 = vmul.f32 %v702, %v766
  %v821 = vmul.f32 %v703, %v762
  %v822 = vmul.f32 %v704, %v766
  %v823 = vmul.f32 %v705, %v762
  %v824 = vmul.f32 %v706, %v766
  %v825 = vmul.f32 %v707, %v762
  %v826 = vmul.f32 %v708, %v766
  %v827 = vmul.f32 %v709, %v762
  %v828 = vmul.f32 %v710, %v766
  %v829 = vmul.f32 %v711, %v762
  %v830 = vmul.f32 %v712, %v766
  %v831 = vmul.f32 %v713, %v762
  %v832 = vmul.f32 %v714, %v766
  %v833 = vmul.f32 %v715, %v762
  %v834 = vmul.f32 %v716, %v766
  %v835 = vmul.f32 %v717, %v762
  %v836 = vmul.f32 %v718, %v766
  %v837 = vmul.f32 %v719, %v762
  %v838 = vmul.f32 %v720, %v766
  %v839 = vmul.f32 %v721, %v762
  %v840 = vmul.f32 %v722, %v766
  %v841 = vmul.f32 %v723, %v762
  %v842 = vmul.f32 %v724, %v766
  %v843 = vmul.f32 %v725, %v762
  %v844 = vmul.f32 %v726, %v766
  %v845 = vmul.f32 %v727, %v762
  %v846 = vmul.f32 %v728, %v766
  %v847 = vmul.f32 %v729, %v762
  %v848 = vmul.f32 %v730, %v766
  %v849 = vmul.f32 %v731, %v762
  %v850 = vmul.f32 %v732, %v766
  %v851 = vmul.f32 %v733, %v762
  %v852 = vmul.f32 %v734, %v766
  %v853 = vmul.f32 %v735, %v762
  %v854 = vmul.f32 %v736, %v766
  %v855 = vmul.f32 %v737, %v762
  %v856 = vmul.f32 %v738, %v766
  %v857 = vmul.f32 %v739, %v762
  %v858 = vmul.f32 %v740, %v766
  %v859 = vmul.f32 %v741, %v762
  %v860 = vmul.f32 %v742, %v766
  %v861 = vmul.f32 %v743, %v762
  %v862 = vmul.f32 %v744, %v766
  %v863 = vmul.f32 %v745, %v762
  %v864 = vmul.f32 %v746, %v766
  %v865 = vmul.f32 %v747, %v762
  %v866 = vmul.f32 %v748, %v766
  %v867 = vmul.f32 %v749, %v762
  %v868 = vmul.f32 %v750, %v766
  %v869 = vmul.f32 %v751, %v762
  %v870 = vmul.f32 %v752, %v766
  %v871 = vmul.f32 %v753, %v762
  %v872 = vmul.f32 %v754, %v766
  %v873 = vmul.f32 %v755, %v762
  %v874 = vmul.f32 %v756, %v766
  %v875 = vld [vmem:[%s4] sm:$0x3]
  %v877 = vlaneseq
  %v878 = vshrl.u32 %v877, 7
  %v879 = vsub.s32 0, %v878
  %v880 = vrot.slane %v875, %v879
  %v881 = vlaneseq
  %v882 = vshrl.u32 %v881, 7
  %v883 = vsub.s32 1, %v882
  %v884 = vrot.slane %v875, %v883
  %v887 = vadd.f32 %v769, %v880
  %v888 = vadd.f32 %v770, %v884
  %v889 = vadd.f32 %v771, %v880
  %v890 = vadd.f32 %v772, %v884
  %v891 = vadd.f32 %v773, %v880
  %v892 = vadd.f32 %v774, %v884
  %v893 = vadd.f32 %v775, %v880
  %v894 = vadd.f32 %v776, %v884
  %v895 = vadd.f32 %v777, %v880
  %v896 = vadd.f32 %v778, %v884
  %v897 = vadd.f32 %v779, %v880
  %v898 = vadd.f32 %v780, %v884
  %v899 = vadd.f32 %v781, %v880
  %v900 = vadd.f32 %v782, %v884
  %v901 = vadd.f32 %v783, %v880
  %v902 = vadd.f32 %v784, %v884
  %v903 = vadd.f32 %v785, %v880
  %v904 = vadd.f32 %v786, %v884
  %v905 = vadd.f32 %v787, %v880
  %v906 = vadd.f32 %v788, %v884
  %v907 = vadd.f32 %v789, %v880
  %v908 = vadd.f32 %v790, %v884
  %v909 = vadd.f32 %v791, %v880
  %v910 = vadd.f32 %v792, %v884
  %v911 = vadd.f32 %v793, %v880
  %v912 = vadd.f32 %v794, %v884
  %v913 = vadd.f32 %v795, %v880
  %v914 = vadd.f32 %v796, %v884
  %v915 = vadd.f32 %v797, %v880
  %v916 = vadd.f32 %v798, %v884
  %v917 = vadd.f32 %v799, %v880
  %v918 = vadd.f32 %v800, %v884
  %v919 = vadd.f32 %v801, %v880
  %v920 = vadd.f32 %v802, %v884
  %v921 = vadd.f32 %v803, %v880
  %v922 = vadd.f32 %v804, %v884
  %v923 = vadd.f32 %v805, %v880
  %v924 = vadd.f32 %v806, %v884
  %v925 = vadd.f32 %v807, %v880
  %v926 = vadd.f32 %v808, %v884
  %v927 = vadd.f32 %v809, %v880
  %v928 = vadd.f32 %v810, %v884
  %v929 = vadd.f32 %v811, %v880
  %v930 = vadd.f32 %v812, %v884
  %v931 = vadd.f32 %v813, %v880
  %v932 = vadd.f32 %v814, %v884
  %v933 = vadd.f32 %v815, %v880
  %v934 = vadd.f32 %v816, %v884
  %v935 = vadd.f32 %v817, %v880
  %v936 = vadd.f32 %v818, %v884
  %v937 = vadd.f32 %v819, %v880
  %v938 = vadd.f32 %v820, %v884
  %v939 = vadd.f32 %v821, %v880
  %v940 = vadd.f32 %v822, %v884
  %v941 = vadd.f32 %v823, %v880
  %v942 = vadd.f32 %v824, %v884
  %v943 = vadd.f32 %v825, %v880
  %v944 = vadd.f32 %v826, %v884
  %v945 = vadd.f32 %v827, %v880
  %v946 = vadd.f32 %v828, %v884
  %v947 = vadd.f32 %v829, %v880
  %v948 = vadd.f32 %v830, %v884
  %v949 = vadd.f32 %v831, %v880
  %v950 = vadd.f32 %v832, %v884
  %v951 = vadd.f32 %v833, %v880
  %v952 = vadd.f32 %v834, %v884
  %v953 = vadd.f32 %v835, %v880
  %v954 = vadd.f32 %v836, %v884
  %v955 = vadd.f32 %v837, %v880
  %v956 = vadd.f32 %v838, %v884
  %v957 = vadd.f32 %v839, %v880
  %v958 = vadd.f32 %v840, %v884
  %v959 = vadd.f32 %v841, %v880
  %v960 = vadd.f32 %v842, %v884
  %v961 = vadd.f32 %v843, %v880
  %v962 = vadd.f32 %v844, %v884
  %v963 = vadd.f32 %v845, %v880
  %v964 = vadd.f32 %v846, %v884
  %v965 = vadd.f32 %v847, %v880
  %v966 = vadd.f32 %v848, %v884
  %v967 = vadd.f32 %v849, %v880
  %v968 = vadd.f32 %v850, %v884
  %v969 = vadd.f32 %v851, %v880
  %v970 = vadd.f32 %v852, %v884
  %v971 = vadd.f32 %v853, %v880
  %v972 = vadd.f32 %v854, %v884
  %v973 = vadd.f32 %v855, %v880
  %v974 = vadd.f32 %v856, %v884
  %v975 = vadd.f32 %v857, %v880
  %v976 = vadd.f32 %v858, %v884
  %v977 = vadd.f32 %v859, %v880
  %v978 = vadd.f32 %v860, %v884
  %v979 = vadd.f32 %v861, %v880
  %v980 = vadd.f32 %v862, %v884
  %v981 = vadd.f32 %v863, %v880
  %v982 = vadd.f32 %v864, %v884
  %v983 = vadd.f32 %v865, %v880
  %v984 = vadd.f32 %v866, %v884
  %v985 = vadd.f32 %v867, %v880
  %v986 = vadd.f32 %v868, %v884
  %v987 = vadd.f32 %v869, %v880
  %v988 = vadd.f32 %v870, %v884
  %v989 = vadd.f32 %v871, %v880
  %v990 = vadd.f32 %v872, %v884
  %v991 = vadd.f32 %v873, %v880
  %v992 = vadd.f32 %v874, %v884
  %993 = vst [vmem:[#allocation2] sm:$0xff] %v887
  %vm994 = vcmask 261120
  %995 = vst.msk [vmem:[#allocation2 + $0x8] sm:$0xff] %vm994, %v888
  %996 = vst [vmem:[#allocation2 + $0x10] sm:$0xff] %v889
  %997 = vst.msk [vmem:[#allocation2 + $0x18] sm:$0xff] %vm994, %v890
  %998 = vst [vmem:[#allocation2 + $0x20] sm:$0xff] %v891
  %999 = vst.msk [vmem:[#allocation2 + $0x28] sm:$0xff] %vm994, %v892
  %1000 = vst [vmem:[#allocation2 + $0x30] sm:$0xff] %v893
  %1001 = vst.msk [vmem:[#allocation2 + $0x38] sm:$0xff] %vm994, %v894
  %1002 = vst [vmem:[#allocation2 + $0x40] sm:$0xff] %v895
  %1003 = vst.msk [vmem:[#allocation2 + $0x48] sm:$0xff] %vm994, %v896
  %1004 = vst [vmem:[#allocation2 + $0x50] sm:$0xff] %v897
  %1005 = vst.msk [vmem:[#allocation2 + $0x58] sm:$0xff] %vm994, %v898
  %1006 = vst [vmem:[#allocation2 + $0x60] sm:$0xff] %v899
  %1007 = vst.msk [vmem:[#allocation2 + $0x68] sm:$0xff] %vm994, %v900
  %1008 = vst [vmem:[#allocation2 + $0x70] sm:$0xff] %v901
  %1009 = vst.msk [vmem:[#allocation2 + $0x78] sm:$0xff] %vm994, %v902
  %1010 = vst [vmem:[#allocation2 + $0x80] sm:$0xff] %v903
  %1011 = vst.msk [vmem:[#allocation2 + $0x88] sm:$0xff] %vm994, %v904
  %1012 = vst [vmem:[#allocation2 + $0x90] sm:$0xff] %v905
  %1013 = vst.msk [vmem:[#allocation2 + $0x98] sm:$0xff] %vm994, %v906
  %1014 = vst [vmem:[#allocation2 + $0xa0] sm:$0xff] %v907
  %1015 = vst.msk [vmem:[#allocation2 + $0xa8] sm:$0xff] %vm994, %v908
  %1016 = vst [vmem:[#allocation2 + $0xb0] sm:$0xff] %v909
  %1017 = vst.msk [vmem:[#allocation2 + $0xb8] sm:$0xff] %vm994, %v910
  %1018 = vst [vmem:[#allocation2 + $0xc0] sm:$0xff] %v911
  %1019 = vst.msk [vmem:[#allocation2 + $0xc8] sm:$0xff] %vm994, %v912
  %1020 = vst [vmem:[#allocation2 + $0xd0] sm:$0xff] %v913
  %1021 = vst.msk [vmem:[#allocation2 + $0xd8] sm:$0xff] %vm994, %v914
  %1022 = vst [vmem:[#allocation2 + $0xe0] sm:$0xff] %v915
  %1023 = vst.msk [vmem:[#allocation2 + $0xe8] sm:$0xff] %vm994, %v916
  %1024 = vst [vmem:[#allocation2 + $0xf0] sm:$0xff] %v917
  %1025 = vst.msk [vmem:[#allocation2 + $0xf8] sm:$0xff] %vm994, %v918
  %1026 = vst [vmem:[#allocation2 + $0x100] sm:$0xff] %v919
  %1027 = vst.msk [vmem:[#allocation2 + $0x108] sm:$0xff] %vm994, %v920
  %1028 = vst [vmem:[#allocation2 + $0x110] sm:$0xff] %v921
  %1029 = vst.msk [vmem:[#allocation2 + $0x118] sm:$0xff] %vm994, %v922
  %1030 = vst [vmem:[#allocation2 + $0x120] sm:$0xff] %v923
  %1031 = vst.msk [vmem:[#allocation2 + $0x128] sm:$0xff] %vm994, %v924
  %1032 = vst [vmem:[#allocation2 + $0x130] sm:$0xff] %v925
  %1033 = vst.msk [vmem:[#allocation2 + $0x138] sm:$0xff] %vm994, %v926
  %1034 = vst [vmem:[#allocation2 + $0x140] sm:$0xff] %v927
  %1035 = vst.msk [vmem:[#allocation2 + $0x148] sm:$0xff] %vm994, %v928
  %1036 = vst [vmem:[#allocation2 + $0x150] sm:$0xff] %v929
  %1037 = vst.msk [vmem:[#allocation2 + $0x158] sm:$0xff] %vm994, %v930
  %1038 = vst [vmem:[#allocation2 + $0x160] sm:$0xff] %v931
  %1039 = vst.msk [vmem:[#allocation2 + $0x168] sm:$0xff] %vm994, %v932
  %1040 = vst [vmem:[#allocation2 + $0x170] sm:$0xff] %v933
  %1041 = vst.msk [vmem:[#allocation2 + $0x178] sm:$0xff] %vm994, %v934
  %1042 = vst [vmem:[#allocation2 + $0x180] sm:$0xff] %v935
  %1043 = vst.msk [vmem:[#allocation2 + $0x188] sm:$0xff] %vm994, %v936
  %1044 = vst [vmem:[#allocation2 + $0x190] sm:$0xff] %v937
  %1045 = vst.msk [vmem:[#allocation2 + $0x198] sm:$0xff] %vm994, %v938
  %1046 = vst [vmem:[#allocation2 + $0x1a0] sm:$0xff] %v939
  %1047 = vst.msk [vmem:[#allocation2 + $0x1a8] sm:$0xff] %vm994, %v940
  %1048 = vst [vmem:[#allocation2 + $0x1b0] sm:$0xff] %v941
  %1049 = vst.msk [vmem:[#allocation2 + $0x1b8] sm:$0xff] %vm994, %v942
  %1050 = vst [vmem:[#allocation2 + $0x1c0] sm:$0xff] %v943
  %1051 = vst.msk [vmem:[#allocation2 + $0x1c8] sm:$0xff] %vm994, %v944
  %1052 = vst [vmem:[#allocation2 + $0x1d0] sm:$0xff] %v945
  %1053 = vst.msk [vmem:[#allocation2 + $0x1d8] sm:$0xff] %vm994, %v946
  %1054 = vst [vmem:[#allocation2 + $0x1e0] sm:$0xff] %v947
  %1055 = vst.msk [vmem:[#allocation2 + $0x1e8] sm:$0xff] %vm994, %v948
  %1056 = vst [vmem:[#allocation2 + $0x1f0] sm:$0xff] %v949
  %1057 = vst.msk [vmem:[#allocation2 + $0x1f8] sm:$0xff] %vm994, %v950
  %1058 = vst [vmem:[#allocation2 + $0x200] sm:$0xff] %v951
  %1059 = vst.msk [vmem:[#allocation2 + $0x208] sm:$0xff] %vm994, %v952
  %1060 = vst [vmem:[#allocation2 + $0x210] sm:$0xff] %v953
  %1061 = vst.msk [vmem:[#allocation2 + $0x218] sm:$0xff] %vm994, %v954
  %1062 = vst [vmem:[#allocation2 + $0x220] sm:$0xff] %v955
  %1063 = vst.msk [vmem:[#allocation2 + $0x228] sm:$0xff] %vm994, %v956
  %1064 = vst [vmem:[#allocation2 + $0x230] sm:$0xff] %v957
  %1065 = vst.msk [vmem:[#allocation2 + $0x238] sm:$0xff] %vm994, %v958
  %1066 = vst [vmem:[#allocation2 + $0x240] sm:$0xff] %v959
  %1067 = vst.msk [vmem:[#allocation2 + $0x248] sm:$0xff] %vm994, %v960
  %1068 = vst [vmem:[#allocation2 + $0x250] sm:$0xff] %v961
  %1069 = vst.msk [vmem:[#allocation2 + $0x258] sm:$0xff] %vm994, %v962
  %1070 = vst [vmem:[#allocation2 + $0x260] sm:$0xff] %v963
  %1071 = vst.msk [vmem:[#allocation2 + $0x268] sm:$0xff] %vm994, %v964
  %1072 = vst [vmem:[#allocation2 + $0x270] sm:$0xff] %v965
  %1073 = vst.msk [vmem:[#allocation2 + $0x278] sm:$0xff] %vm994, %v966
  %1074 = vst [vmem:[#allocation2 + $0x280] sm:$0xff] %v967
  %1075 = vst.msk [vmem:[#allocation2 + $0x288] sm:$0xff] %vm994, %v968
  %1076 = vst [vmem:[#allocation2 + $0x290] sm:$0xff] %v969
  %1077 = vst.msk [vmem:[#allocation2 + $0x298] sm:$0xff] %vm994, %v970
  %1078 = vst [vmem:[#allocation2 + $0x2a0] sm:$0xff] %v971
  %1079 = vst.msk [vmem:[#allocation2 + $0x2a8] sm:$0xff] %vm994, %v972
  %1080 = vst [vmem:[#allocation2 + $0x2b0] sm:$0xff] %v973
  %1081 = vst.msk [vmem:[#allocation2 + $0x2b8] sm:$0xff] %vm994, %v974
  %1082 = vst [vmem:[#allocation2 + $0x2c0] sm:$0xff] %v975
  %1083 = vst.msk [vmem:[#allocation2 + $0x2c8] sm:$0xff] %vm994, %v976
  %1084 = vst [vmem:[#allocation2 + $0x2d0] sm:$0xff] %v977
  %1085 = vst.msk [vmem:[#allocation2 + $0x2d8] sm:$0xff] %vm994, %v978
  %1086 = vst [vmem:[#allocation2 + $0x2e0] sm:$0xff] %v979
  %1087 = vst.msk [vmem:[#allocation2 + $0x2e8] sm:$0xff] %vm994, %v980
  %1088 = vst [vmem:[#allocation2 + $0x2f0] sm:$0xff] %v981
  %1089 = vst.msk [vmem:[#allocation2 + $0x2f8] sm:$0xff] %vm994, %v982
  %1090 = vst [vmem:[#allocation2 + $0x300] sm:$0xff] %v983
  %1091 = vst.msk [vmem:[#allocation2 + $0x308] sm:$0xff] %vm994, %v984
  %1092 = vst [vmem:[#allocation2 + $0x310] sm:$0xff] %v985
  %1093 = vst.msk [vmem:[#allocation2 + $0x318] sm:$0xff] %vm994, %v986
  %1094 = vst [vmem:[#allocation2 + $0x320] sm:$0xff] %v987
  %1095 = vst.msk [vmem:[#allocation2 + $0x328] sm:$0xff] %vm994, %v988
  %1096 = vst [vmem:[#allocation2 + $0x330] sm:$0xff] %v989
  %1097 = vst.msk [vmem:[#allocation2 + $0x338] sm:$0xff] %vm994, %v990
  %1098 = vst [vmem:[#allocation2 + $0x340] sm:$0xff] %v991
  %1099 = vst.msk [vmem:[#allocation2 + $0x348] sm:$0xff] %vm994, %v992
  %v1100 = vld [vmem:[#allocation2] sm:$0xff]
  %v1101 = vld [vmem:[#allocation2 + $0x8] sm:$0xff]
  %v1102 = vld [vmem:[#allocation2 + $0x10] sm:$0xff]
  %v1103 = vld [vmem:[#allocation2 + $0x18] sm:$0xff]
  %v1104 = vld [vmem:[#allocation2 + $0x20] sm:$0xff]
  %v1105 = vld [vmem:[#allocation2 + $0x28] sm:$0xff]
  %v1106 = vld [vmem:[#allocation2 + $0x30] sm:$0xff]
  %v1107 = vld [vmem:[#allocation2 + $0x38] sm:$0xff]
  %v1108 = vld [vmem:[#allocation2 + $0x40] sm:$0xff]
  %v1109 = vld [vmem:[#allocation2 + $0x48] sm:$0xff]
  %v1110 = vld [vmem:[#allocation2 + $0x50] sm:$0xff]
  %v1111 = vld [vmem:[#allocation2 + $0x58] sm:$0xff]
  %v1112 = vld [vmem:[#allocation2 + $0x60] sm:$0xff]
  %v1113 = vld [vmem:[#allocation2 + $0x68] sm:$0xff]
  %v1114 = vld [vmem:[#allocation2 + $0x70] sm:$0xff]
  %v1115 = vld [vmem:[#allocation2 + $0x78] sm:$0xff]
  %v1116 = vld [vmem:[#allocation2 + $0x80] sm:$0xff]
  %v1117 = vld [vmem:[#allocation2 + $0x88] sm:$0xff]
  %v1118 = vld [vmem:[#allocation2 + $0x90] sm:$0xff]
  %v1119 = vld [vmem:[#allocation2 + $0x98] sm:$0xff]
  %v1120 = vld [vmem:[#allocation2 + $0xa0] sm:$0xff]
  %v1121 = vld [vmem:[#allocation2 + $0xa8] sm:$0xff]
  %v1122 = vld [vmem:[#allocation2 + $0xb0] sm:$0xff]
  %v1123 = vld [vmem:[#allocation2 + $0xb8] sm:$0xff]
  %v1124 = vld [vmem:[#allocation2 + $0xc0] sm:$0xff]
  %v1125 = vld [vmem:[#allocation2 + $0xc8] sm:$0xff]
  %v1126 = vld [vmem:[#allocation2 + $0xd0] sm:$0xff]
  %v1127 = vld [vmem:[#allocation2 + $0xd8] sm:$0xff]
  %v1128 = vld [vmem:[#allocation2 + $0xe0] sm:$0xff]
  %v1129 = vld [vmem:[#allocation2 + $0xe8] sm:$0xff]
  %v1130 = vld [vmem:[#allocation2 + $0xf0] sm:$0xff]
  %v1131 = vld [vmem:[#allocation2 + $0xf8] sm:$0xff]
  %v1132 = vld [vmem:[#allocation2 + $0x100] sm:$0xff]
  %v1133 = vld [vmem:[#allocation2 + $0x108] sm:$0xff]
  %v1134 = vld [vmem:[#allocation2 + $0x110] sm:$0xff]
  %v1135 = vld [vmem:[#allocation2 + $0x118] sm:$0xff]
  %v1136 = vld [vmem:[#allocation2 + $0x120] sm:$0xff]
  %v1137 = vld [vmem:[#allocation2 + $0x128] sm:$0xff]
  %v1138 = vld [vmem:[#allocation2 + $0x130] sm:$0xff]
  %v1139 = vld [vmem:[#allocation2 + $0x138] sm:$0xff]
  %v1140 = vld [vmem:[#allocation2 + $0x140] sm:$0xff]
  %v1141 = vld [vmem:[#allocation2 + $0x148] sm:$0xff]
  %v1142 = vld [vmem:[#allocation2 + $0x150] sm:$0xff]
  %v1143 = vld [vmem:[#allocation2 + $0x158] sm:$0xff]
  %v1144 = vld [vmem:[#allocation2 + $0x160] sm:$0xff]
  %v1145 = vld [vmem:[#allocation2 + $0x168] sm:$0xff]
  %v1146 = vld [vmem:[#allocation2 + $0x170] sm:$0xff]
  %v1147 = vld [vmem:[#allocation2 + $0x178] sm:$0xff]
  %v1148 = vld [vmem:[#allocation2 + $0x180] sm:$0xff]
  %v1149 = vld [vmem:[#allocation2 + $0x188] sm:$0xff]
  %v1150 = vld [vmem:[#allocation2 + $0x190] sm:$0xff]
  %v1151 = vld [vmem:[#allocation2 + $0x198] sm:$0xff]
  %v1152 = vld [vmem:[#allocation2 + $0x1a0] sm:$0xff]
  %v1153 = vld [vmem:[#allocation2 + $0x1a8] sm:$0xff]
  %v1154 = vld [vmem:[#allocation2 + $0x1b0] sm:$0xff]
  %v1155 = vld [vmem:[#allocation2 + $0x1b8] sm:$0xff]
  %v1156 = vld [vmem:[#allocation2 + $0x1c0] sm:$0xff]
  %v1157 = vld [vmem:[#allocation2 + $0x1c8] sm:$0xff]
  %v1158 = vld [vmem:[#allocation2 + $0x1d0] sm:$0xff]
  %v1159 = vld [vmem:[#allocation2 + $0x1d8] sm:$0xff]
  %v1160 = vld [vmem:[#allocation2 + $0x1e0] sm:$0xff]
  %v1161 = vld [vmem:[#allocation2 + $0x1e8] sm:$0xff]
  %v1162 = vld [vmem:[#allocation2 + $0x1f0] sm:$0xff]
  %v1163 = vld [vmem:[#allocation2 + $0x1f8] sm:$0xff]
  %v1164 = vld [vmem:[#allocation2 + $0x200] sm:$0xff]
  %v1165 = vld [vmem:[#allocation2 + $0x208] sm:$0xff]
  %v1166 = vld [vmem:[#allocation2 + $0x210] sm:$0xff]
  %v1167 = vld [vmem:[#allocation2 + $0x218] sm:$0xff]
  %v1168 = vld [vmem:[#allocation2 + $0x220] sm:$0xff]
  %v1169 = vld [vmem:[#allocation2 + $0x228] sm:$0xff]
  %v1170 = vld [vmem:[#allocation2 + $0x230] sm:$0xff]
  %v1171 = vld [vmem:[#allocation2 + $0x238] sm:$0xff]
  %v1172 = vld [vmem:[#allocation2 + $0x240] sm:$0xff]
  %v1173 = vld [vmem:[#allocation2 + $0x248] sm:$0xff]
  %v1174 = vld [vmem:[#allocation2 + $0x250] sm:$0xff]
  %v1175 = vld [vmem:[#allocation2 + $0x258] sm:$0xff]
  %v1176 = vld [vmem:[#allocation2 + $0x260] sm:$0xff]
  %v1177 = vld [vmem:[#allocation2 + $0x268] sm:$0xff]
  %v1178 = vld [vmem:[#allocation2 + $0x270] sm:$0xff]
  %v1179 = vld [vmem:[#allocation2 + $0x278] sm:$0xff]
  %v1180 = vld [vmem:[#allocation2 + $0x280] sm:$0xff]
  %v1181 = vld [vmem:[#allocation2 + $0x288] sm:$0xff]
  %v1182 = vld [vmem:[#allocation2 + $0x290] sm:$0xff]
  %v1183 = vld [vmem:[#allocation2 + $0x298] sm:$0xff]
  %v1184 = vld [vmem:[#allocation2 + $0x2a0] sm:$0xff]
  %v1185 = vld [vmem:[#allocation2 + $0x2a8] sm:$0xff]
  %v1186 = vld [vmem:[#allocation2 + $0x2b0] sm:$0xff]
  %v1187 = vld [vmem:[#allocation2 + $0x2b8] sm:$0xff]
  %v1188 = vld [vmem:[#allocation2 + $0x2c0] sm:$0xff]
  %v1189 = vld [vmem:[#allocation2 + $0x2c8] sm:$0xff]
  %v1190 = vld [vmem:[#allocation2 + $0x2d0] sm:$0xff]
  %v1191 = vld [vmem:[#allocation2 + $0x2d8] sm:$0xff]
  %v1192 = vld [vmem:[#allocation2 + $0x2e0] sm:$0xff]
  %v1193 = vld [vmem:[#allocation2 + $0x2e8] sm:$0xff]
  %v1194 = vld [vmem:[#allocation2 + $0x2f0] sm:$0xff]
  %v1195 = vld [vmem:[#allocation2 + $0x2f8] sm:$0xff]
  %v1196 = vld [vmem:[#allocation2 + $0x300] sm:$0xff]
  %v1197 = vld [vmem:[#allocation2 + $0x308] sm:$0xff]
  %v1198 = vld [vmem:[%s5] sm:$0xff]
  %v1199 = vld [vmem:[%s5 + $0x8] sm:$0xff]
  %v1200 = vld [vmem:[%s5 + $0x10] sm:$0xff]
  %v1201 = vld [vmem:[%s5 + $0x18] sm:$0xff]
  %v1202 = vld [vmem:[%s5 + $0x20] sm:$0xff]
  %v1203 = vld [vmem:[%s5 + $0x28] sm:$0xff]
  %v1204 = vld [vmem:[%s5 + $0x30] sm:$0xff]
  %v1205 = vld [vmem:[%s5 + $0x38] sm:$0xff]
  %v1206 = vld [vmem:[%s5 + $0x40] sm:$0xff]
  %v1207 = vld [vmem:[%s5 + $0x48] sm:$0xff]
  %v1208 = vld [vmem:[%s5 + $0x50] sm:$0xff]
  %v1209 = vld [vmem:[%s5 + $0x58] sm:$0xff]
  %v1210 = vld [vmem:[%s5 + $0x60] sm:$0xff]
  %v1211 = vld [vmem:[%s5 + $0x68] sm:$0xff]
  %v1212 = vld [vmem:[%s5 + $0x70] sm:$0xff]
  %v1213 = vld [vmem:[%s5 + $0x78] sm:$0xff]
  %v1214 = vld [vmem:[%s5 + $0x80] sm:$0xff]
  %v1215 = vld [vmem:[%s5 + $0x88] sm:$0xff]
  %v1216 = vld [vmem:[%s5 + $0x90] sm:$0xff]
  %v1217 = vld [vmem:[%s5 + $0x98] sm:$0xff]
  %v1218 = vld [vmem:[#allocation2] sm:$0xfe]
  %v1219 = vld [vmem:[#allocation2 + $0x8] sm:$0xfe]
  %v1220 = vld [vmem:[#allocation2 + $0x310] sm:$0x1]
  %v1221 = vld [vmem:[#allocation2 + $0x318] sm:$0x1]
  %s1222 = scalar_lea.vmem %s5, 160
  %v1223 = vld [vmem:[%s1222] sm:$0xff]
  %v1224 = vld [vmem:[%s1222 + $0x8] sm:$0xff]
  %v1225 = vld [vmem:[%s1222 + $0x10] sm:$0xff]
  %v1226 = vld [vmem:[%s1222 + $0x18] sm:$0xff]
  %v1227 = vld [vmem:[%s1222 + $0x20] sm:$0xff]
  %v1228 = vld [vmem:[%s1222 + $0x28] sm:$0xff]
  %v1229 = vld [vmem:[%s1222 + $0x30] sm:$0xff]
  %v1230 = vld [vmem:[%s1222 + $0x38] sm:$0xff]
  %v1231 = vld [vmem:[%s1222 + $0x40] sm:$0xff]
  %v1232 = vld [vmem:[%s1222 + $0x48] sm:$0xff]
  %v1233 = vld [vmem:[%s1222 + $0x50] sm:$0xff]
  %v1234 = vld [vmem:[%s1222 + $0x58] sm:$0xff]
  %v1235 = vld [vmem:[%s1222 + $0x60] sm:$0xff]
  %v1236 = vld [vmem:[%s1222 + $0x68] sm:$0xff]
  %v1237 = vld [vmem:[%s1222 + $0x70] sm:$0xff]
  %v1238 = vld [vmem:[%s1222 + $0x78] sm:$0xff]
  %v1239 = vld [vmem:[%s1222 + $0x80] sm:$0xff]
  %v1240 = vld [vmem:[%s1222 + $0x88] sm:$0xff]
  %v1241 = vld [vmem:[%s1222 + $0x90] sm:$0xff]
  %v1242 = vld [vmem:[%s1222 + $0x98] sm:$0xff]
  %vm1343 = vcmask 1046528
  %v1344 = vrot.slane %v1218, 1
  %v1345 = vrot.slane %v1102, 1
  %v1346 = vsel %vm1343, %v1344, %v1345
  %v1347 = vrot.slane %v1219, 1
  %v1348 = vrot.slane %v1103, 1
  %v1349 = vsel %vm1343, %v1347, %v1348
  %v1350 = vrot.slane %v1104, 1
  %v1351 = vsel %vm1343, %v1345, %v1350
  %v1352 = vrot.slane %v1105, 1
  %v1353 = vsel %vm1343, %v1348, %v1352
  %v1354 = vrot.slane %v1106, 1
  %v1355 = vsel %vm1343, %v1350, %v1354
  %v1356 = vrot.slane %v1107, 1
  %v1357 = vsel %vm1343, %v1352, %v1356
  %v1358 = vrot.slane %v1108, 1
  %v1359 = vsel %vm1343, %v1354, %v1358
  %v1360 = vrot.slane %v1109, 1
  %v1361 = vsel %vm1343, %v1356, %v1360
  %v1362 = vrot.slane %v1110, 1
  %v1363 = vsel %vm1343, %v1358, %v1362
  %v1364 = vrot.slane %v1111, 1
  %v1365 = vsel %vm1343, %v1360, %v1364
  %v1366 = vrot.slane %v1112, 1
  %v1367 = vsel %vm1343, %v1362, %v1366
  %v1368 = vrot.slane %v1113, 1
  %v1369 = vsel %vm1343, %v1364, %v1368
  %v1370 = vrot.slane %v1114, 1
  %v1371 = vsel %vm1343, %v1366, %v1370
  %v1372 = vrot.slane %v1115, 1
  %v1373 = vsel %vm1343, %v1368, %v1372
  %v1374 = vrot.slane %v1116, 1
  %v1375 = vsel %vm1343, %v1370, %v1374
  %v1376 = vrot.slane %v1117, 1
  %v1377 = vsel %vm1343, %v1372, %v1376
  %v1378 = vrot.slane %v1118, 1
  %v1379 = vsel %vm1343, %v1374, %v1378
  %v1380 = vrot.slane %v1119, 1
  %v1381 = vsel %vm1343, %v1376, %v1380
  %v1382 = vrot.slane %v1120, 1
  %v1383 = vsel %vm1343, %v1378, %v1382
  %v1384 = vrot.slane %v1121, 1
  %v1385 = vsel %vm1343, %v1380, %v1384
  %v1386 = vrot.slane %v1122, 1
  %v1387 = vsel %vm1343, %v1382, %v1386
  %v1388 = vrot.slane %v1123, 1
  %v1389 = vsel %vm1343, %v1384, %v1388
  %v1390 = vrot.slane %v1124, 1
  %v1391 = vsel %vm1343, %v1386, %v1390
  %v1392 = vrot.slane %v1125, 1
  %v1393 = vsel %vm1343, %v1388, %v1392
  %v1394 = vrot.slane %v1126, 1
  %v1395 = vsel %vm1343, %v1390, %v1394
  %v1396 = vrot.slane %v1127, 1
  %v1397 = vsel %vm1343, %v1392, %v1396
  %v1398 = vrot.slane %v1128, 1
  %v1399 = vsel %vm1343, %v1394, %v1398
  %v1400 = vrot.slane %v1129, 1
  %v1401 = vsel %vm1343, %v1396, %v1400
  %v1402 = vrot.slane %v1130, 1
  %v1403 = vsel %vm1343, %v1398, %v1402
  %v1404 = vrot.slane %v1131, 1
  %v1405 = vsel %vm1343, %v1400, %v1404
  %v1406 = vrot.slane %v1132, 1
  %v1407 = vsel %vm1343, %v1402, %v1406
  %v1408 = vrot.slane %v1133, 1
  %v1409 = vsel %vm1343, %v1404, %v1408
  %v1410 = vrot.slane %v1134, 1
  %v1411 = vsel %vm1343, %v1406, %v1410
  %v1412 = vrot.slane %v1135, 1
  %v1413 = vsel %vm1343, %v1408, %v1412
  %v1414 = vrot.slane %v1136, 1
  %v1415 = vsel %vm1343, %v1410, %v1414
  %v1416 = vrot.slane %v1137, 1
  %v1417 = vsel %vm1343, %v1412, %v1416
  %v1418 = vrot.slane %v1138, 1
  %v1419 = vsel %vm1343, %v1414, %v1418
  %v1420 = vrot.slane %v1139, 1
  %v1421 = vsel %vm1343, %v1416, %v1420
  %v1422 = vrot.slane %v1140, 1
  %v1423 = vsel %vm1343, %v1418, %v1422
  %v1424 = vrot.slane %v1141, 1
  %v1425 = vsel %vm1343, %v1420, %v1424
  %v1426 = vrot.slane %v1142, 1
  %v1427 = vsel %vm1343, %v1422, %v1426
  %v1428 = vrot.slane %v1143, 1
  %v1429 = vsel %vm1343, %v1424, %v1428
  %v1430 = vrot.slane %v1144, 1
  %v1431 = vsel %vm1343, %v1426, %v1430
  %v1432 = vrot.slane %v1145, 1
  %v1433 = vsel %vm1343, %v1428, %v1432
  %v1434 = vrot.slane %v1146, 1
  %v1435 = vsel %vm1343, %v1430, %v1434
  %v1436 = vrot.slane %v1147, 1
  %v1437 = vsel %vm1343, %v1432, %v1436
  %v1438 = vrot.slane %v1148, 1
  %v1439 = vsel %vm1343, %v1434, %v1438
  %v1440 = vrot.slane %v1149, 1
  %v1441 = vsel %vm1343, %v1436, %v1440
  %v1442 = vrot.slane %v1150, 1
  %v1443 = vsel %vm1343, %v1438, %v1442
  %v1444 = vrot.slane %v1151, 1
  %v1445 = vsel %vm1343, %v1440, %v1444
  %v1446 = vrot.slane %v1152, 1
  %v1447 = vsel %vm1343, %v1442, %v1446
  %v1448 = vrot.slane %v1153, 1
  %v1449 = vsel %vm1343, %v1444, %v1448
  %v1450 = vrot.slane %v1154, 1
  %v1451 = vsel %vm1343, %v1446, %v1450
  %v1452 = vrot.slane %v1155, 1
  %v1453 = vsel %vm1343, %v1448, %v1452
  %v1454 = vrot.slane %v1156, 1
  %v1455 = vsel %vm1343, %v1450, %v1454
  %v1456 = vrot.slane %v1157, 1
  %v1457 = vsel %vm1343, %v1452, %v1456
  %v1458 = vrot.slane %v1158, 1
  %v1459 = vsel %vm1343, %v1454, %v1458
  %v1460 = vrot.slane %v1159, 1
  %v1461 = vsel %vm1343, %v1456, %v1460
  %v1462 = vrot.slane %v1160, 1
  %v1463 = vsel %vm1343, %v1458, %v1462
  %v1464 = vrot.slane %v1161, 1
  %v1465 = vsel %vm1343, %v1460, %v1464
  %v1466 = vrot.slane %v1162, 1
  %v1467 = vsel %vm1343, %v1462, %v1466
  %v1468 = vrot.slane %v1163, 1
  %v1469 = vsel %vm1343, %v1464, %v1468
  %v1470 = vrot.slane %v1164, 1
  %v1471 = vsel %vm1343, %v1466, %v1470
  %v1472 = vrot.slane %v1165, 1
  %v1473 = vsel %vm1343, %v1468, %v1472
  %v1474 = vrot.slane %v1166, 1
  %v1475 = vsel %vm1343, %v1470, %v1474
  %v1476 = vrot.slane %v1167, 1
  %v1477 = vsel %vm1343, %v1472, %v1476
  %v1478 = vrot.slane %v1168, 1
  %v1479 = vsel %vm1343, %v1474, %v1478
  %v1480 = vrot.slane %v1169, 1
  %v1481 = vsel %vm1343, %v1476, %v1480
  %v1482 = vrot.slane %v1170, 1
  %v1483 = vsel %vm1343, %v1478, %v1482
  %v1484 = vrot.slane %v1171, 1
  %v1485 = vsel %vm1343, %v1480, %v1484
  %v1486 = vrot.slane %v1172, 1
  %v1487 = vsel %vm1343, %v1482, %v1486
  %v1488 = vrot.slane %v1173, 1
  %v1489 = vsel %vm1343, %v1484, %v1488
  %v1490 = vrot.slane %v1174, 1
  %v1491 = vsel %vm1343, %v1486, %v1490
  %v1492 = vrot.slane %v1175, 1
  %v1493 = vsel %vm1343, %v1488, %v1492
  %v1494 = vrot.slane %v1176, 1
  %v1495 = vsel %vm1343, %v1490, %v1494
  %v1496 = vrot.slane %v1177, 1
  %v1497 = vsel %vm1343, %v1492, %v1496
  %v1498 = vrot.slane %v1178, 1
  %v1499 = vsel %vm1343, %v1494, %v1498
  %v1500 = vrot.slane %v1179, 1
  %v1501 = vsel %vm1343, %v1496, %v1500
  %v1502 = vrot.slane %v1180, 1
  %v1503 = vsel %vm1343, %v1498, %v1502
  %v1504 = vrot.slane %v1181, 1
  %v1505 = vsel %vm1343, %v1500, %v1504
  %v1506 = vrot.slane %v1182, 1
  %v1507 = vsel %vm1343, %v1502, %v1506
  %v1508 = vrot.slane %v1183, 1
  %v1509 = vsel %vm1343, %v1504, %v1508
  %v1510 = vrot.slane %v1184, 1
  %v1511 = vsel %vm1343, %v1506, %v1510
  %v1512 = vrot.slane %v1185, 1
  %v1513 = vsel %vm1343, %v1508, %v1512
  %v1514 = vrot.slane %v1186, 1
  %v1515 = vsel %vm1343, %v1510, %v1514
  %v1516 = vrot.slane %v1187, 1
  %v1517 = vsel %vm1343, %v1512, %v1516
  %v1518 = vrot.slane %v1188, 1
  %v1519 = vsel %vm1343, %v1514, %v1518
  %v1520 = vrot.slane %v1189, 1
  %v1521 = vsel %vm1343, %v1516, %v1520
  %v1522 = vrot.slane %v1190, 1
  %v1523 = vsel %vm1343, %v1518, %v1522
  %v1524 = vrot.slane %v1191, 1
  %v1525 = vsel %vm1343, %v1520, %v1524
  %v1526 = vrot.slane %v1192, 1
  %v1527 = vsel %vm1343, %v1522, %v1526
  %v1528 = vrot.slane %v1193, 1
  %v1529 = vsel %vm1343, %v1524, %v1528
  %v1530 = vrot.slane %v1194, 1
  %v1531 = vsel %vm1343, %v1526, %v1530
  %v1532 = vrot.slane %v1195, 1
  %v1533 = vsel %vm1343, %v1528, %v1532
  %v1534 = vrot.slane %v1196, 1
  %v1535 = vsel %vm1343, %v1530, %v1534
  %v1536 = vrot.slane %v1197, 1
  %v1537 = vsel %vm1343, %v1532, %v1536
  %v1538 = vrot.slane %v1220, 1
  %v1539 = vsel %vm1343, %v1534, %v1538
  %v1540 = vrot.slane %v1221, 1
  %v1541 = vsel %vm1343, %v1536, %v1540
  %v1591 = vsel %vm994, %v1349, 0
  %v1593 = vsel %vm994, %v1353, 0
  %v1595 = vsel %vm994, %v1357, 0
  %v1597 = vsel %vm994, %v1361, 0
  %v1599 = vsel %vm994, %v1365, 0
  %v1601 = vsel %vm994, %v1369, 0
  %v1603 = vsel %vm994, %v1373, 0
  %v1605 = vsel %vm994, %v1377, 0
  %v1607 = vsel %vm994, %v1381, 0
  %v1609 = vsel %vm994, %v1385, 0
  %v1611 = vsel %vm994, %v1389, 0
  %v1613 = vsel %vm994, %v1393, 0
  %v1615 = vsel %vm994, %v1397, 0
  %v1617 = vsel %vm994, %v1401, 0
  %v1619 = vsel %vm994, %v1405, 0
  %v1621 = vsel %vm994, %v1409, 0
  %v1623 = vsel %vm994, %v1413, 0
  %v1625 = vsel %vm994, %v1417, 0
  %v1627 = vsel %vm994, %v1421, 0
  %v1629 = vsel %vm994, %v1425, 0
  %v1631 = vsel %vm994, %v1429, 0
  %v1633 = vsel %vm994, %v1433, 0
  %v1635 = vsel %vm994, %v1437, 0
  %v1637 = vsel %vm994, %v1441, 0
  %v1639 = vsel %vm994, %v1445, 0
  %v1641 = vsel %vm994, %v1449, 0
  %v1643 = vsel %vm994, %v1453, 0
  %v1645 = vsel %vm994, %v1457, 0
  %v1647 = vsel %vm994, %v1461, 0
  %v1649 = vsel %vm994, %v1465, 0
  %v1651 = vsel %vm994, %v1469, 0
  %v1653 = vsel %vm994, %v1473, 0
  %v1655 = vsel %vm994, %v1477, 0
  %v1657 = vsel %vm994, %v1481, 0
  %v1659 = vsel %vm994, %v1485, 0
  %v1661 = vsel %vm994, %v1489, 0
  %v1663 = vsel %vm994, %v1493, 0
  %v1665 = vsel %vm994, %v1497, 0
  %v1667 = vsel %vm994, %v1501, 0
  %v1669 = vsel %vm994, %v1505, 0
  %v1671 = vsel %vm994, %v1509, 0
  %v1673 = vsel %vm994, %v1513, 0
  %v1675 = vsel %vm994, %v1517, 0
  %v1677 = vsel %vm994, %v1521, 0
  %v1679 = vsel %vm994, %v1525, 0
  %v1681 = vsel %vm994, %v1529, 0
  %v1683 = vsel %vm994, %v1533, 0
  %v1685 = vsel %vm994, %v1537, 0
  %v1687 = vsel %vm994, %v1541, 0
  %1689 = vmatprep.subr.mxu0 0.0
  %1690 = vmatpush1.msra.mxu0 %v1223
  %1691 = vmatprep.subr.mxu0 0.0
  %1692 = vmatpush1.msra.mxu0 %v1224
  %1693 = vmatprep.subr.mxu0 0.0
  %1694 = vmatpush1.msra.mxu0 %v1225
  %1695 = vmatprep.subr.mxu0 0.0
  %1696 = vmatpush1.msra.mxu0 %v1226
  %1697 = vmatprep.subr.mxu0 0.0
  %1698 = vmatpush1.msra.mxu0 %v1227
  %1699 = vmatprep.subr.mxu0 0.0
  %1700 = vmatpush1.msra.mxu0 %v1228
  %1701 = vmatprep.subr.mxu0 0.0
  %1702 = vmatpush1.msra.mxu0 %v1229
  %1703 = vmatprep.subr.mxu0 0.0
  %1704 = vmatpush1.msra.mxu0 %v1230
  %1705 = vmatprep.subr.mxu0 0.0
  %1706 = vmatpush1.msra.mxu0 %v1231
  %1707 = vmatprep.subr.mxu0 0.0
  %1708 = vmatpush1.msra.mxu0 %v1232
  %1709 = vmatprep.subr.mxu0 0.0
  %1710 = vmatpush1.msra.mxu0 %v1233
  %1711 = vmatprep.subr.mxu0 0.0
  %1712 = vmatpush1.msra.mxu0 %v1234
  %1713 = vmatprep.subr.mxu0 0.0
  %1714 = vmatpush1.msra.mxu0 %v1235
  %1715 = vmatprep.subr.mxu0 0.0
  %1716 = vmatpush1.msra.mxu0 %v1236
  %1717 = vmatprep.subr.mxu0 0.0
  %1718 = vmatpush1.msra.mxu0 %v1237
  %1719 = vmatprep.subr.mxu0 0.0
  %1720 = vmatpush1.msra.mxu0 %v1238
  %1721 = vmatprep.subr.mxu0 0.0
  %1722 = vmatpush1.msra.mxu0 %v1239
  %1723 = vmatprep.subr.mxu0 0.0
  %1724 = vmatpush1.msra.mxu0 %v1240
  %1725 = vmatprep.subr.mxu0 0.0
  %1726 = vmatpush1.msra.mxu0 %v1241
  %1727 = vmatprep.subr.mxu0 0.0
  %1728 = vmatpush1.msra.mxu0 %v1242
  %1729 = vmatprep.subr.mxu0 0.0
  %1730 = vmatpush1.msra.mxu0 0.0
  %1731 = vmatprep.subr.mxu0 0.0
  %1732 = vmatpush1.msra.mxu0 0.0
  %1733 = vmatprep.subr.mxu0 0.0
  %1734 = vmatpush1.msra.mxu0 0.0
  %1735 = vmatprep.subr.mxu0 0.0
  %1736 = vmatpush1.msra.mxu0 0.0
  %1737 = vmatprep.subr.mxu0 0.0
  %1738 = vmatpush1.msra.mxu0 0.0
  %1739 = vmatprep.subr.mxu0 0.0
  %1740 = vmatpush1.msra.mxu0 0.0
  %1741 = vmatprep.subr.mxu0 0.0
  %1742 = vmatpush1.msra.mxu0 0.0
  %1743 = vmatprep.subr.mxu0 0.0
  %1744 = vmatpush1.msra.mxu0 0.0
  %1745 = vmatprep.subr.mxu0 0.0
  %1746 = vmatpush1.msra.mxu0 0.0
  %1747 = vmatprep.subr.mxu0 0.0
  %1748 = vmatpush1.msra.mxu0 0.0
  %1749 = vmatprep.subr.mxu0 0.0
  %1750 = vmatpush1.msra.mxu0 0.0
  %1751 = vmatprep.subr.mxu0 0.0
  %1752 = vmatpush1.msra.mxu0 0.0
  %1753 = vmatprep.mubr.f32.mxu0 %v1591
  %1754 = vmatmul.mubr.f32.gmra.mrb[0].mxu0 %v1346
  %v1755 = vpop.f32.mrb[0].mxu0
  %v1756 = vadd.f32 0.0, %v1755
  %v1757 = vpop.f32.mrb[0].mxu0
  %1758 = vmatprep.mubr.f32.mxu0 %v1593
  %1759 = vmatmul.mubr.f32.gmra.mrb[0].mxu0 %v1351
  %v1760 = vpop.f32.mrb[0].mxu0
  %v1761 = vadd.f32 0.0, %v1760
  %v1762 = vpop.f32.mrb[0].mxu0
  %1763 = vmatprep.mubr.f32.mxu0 %v1595
  %1764 = vmatmul.mubr.f32.gmra.mrb[0].mxu0 %v1355
  %v1765 = vpop.f32.mrb[0].mxu0
  %v1766 = vadd.f32 0.0, %v1765
  %v1767 = vpop.f32.mrb[0].mxu0
  %1768 = vmatprep.mubr.f32.mxu0 %v1597
  %1769 = vmatmul.mubr.f32.gmra.mrb[0].mxu0 %v1359
  %v1770 = vpop.f32.mrb[0].mxu0
  %v1771 = vadd.f32 0.0, %v1770
  %v1772 = vpop.f32.mrb[0].mxu0
  %1773 = vmatprep.mubr.f32.mxu0 %v1599
  %1774 = vmatmul.mubr.f32.gmra.mrb[0].mxu0 %v1363
  %v1775 = vpop.f32.mrb[0].mxu0
  %v1776 = vadd.f32 0.0, %v1775
  %v1777 = vpop.f32.mrb[0].mxu0
  %1778 = vmatprep.mubr.f32.mxu0 %v1601
  %1779 = vmatmul.mubr.f32.gmra.mrb[0].mxu0 %v1367
  %v1780 = vpop.f32.mrb[0].mxu0
  %v1781 = vadd.f32 0.0, %v1780
  %v1782 = vpop.f32.mrb[0].mxu0
  %1783 = vmatprep.mubr.f32.mxu0 %v1603
  %1784 = vmatmul.mubr.f32.gmra.mrb[0].mxu0 %v1371
  %v1785 = vpop.f32.mrb[0].mxu0
  %v1786 = vadd.f32 0.0, %v1785
  %v1787 = vpop.f32.mrb[0].mxu0
  %1788 = vmatprep.mubr.f32.mxu0 %v1605
  %1789 = vmatmul.mubr.f32.gmra.mrb[0].mxu0 %v1375
  %v1790 = vpop.f32.mrb[0].mxu0
  %v1791 = vadd.f32 0.0, %v1790
  %v1792 = vpop.f32.mrb[0].mxu0
  %1793 = vmatprep.mubr.f32.mxu0 %v1607
  %1794 = vmatmul.mubr.f32.gmra.mrb[0].mxu0 %v1379
  %v1795 = vpop.f32.mrb[0].mxu0
  %v1796 = vadd.f32 0.0, %v1795
  %v1797 = vpop.f32.mrb[0].mxu0
  %1798 = vmatprep.mubr.f32.mxu0 %v1609
  %1799 = vmatmul.mubr.f32.gmra.mrb[0].mxu0 %v1383
  %v1800 = vpop.f32.mrb[0].mxu0
  %v1801 = vadd.f32 0.0, %v1800
  %v1802 = vpop.f32.mrb[0].mxu0
  %1803 = vmatprep.mubr.f32.mxu0 %v1611
  %1804 = vmatmul.mubr.f32.gmra.mrb[0].mxu0 %v1387
  %v1805 = vpop.f32.mrb[0].mxu0
  %v1806 = vadd.f32 0.0, %v1805
  %v1807 = vpop.f32.mrb[0].mxu0
  %1808 = vmatprep.mubr.f32.mxu0 %v1613
  %1809 = vmatmul.mubr.f32.gmra.mrb[0].mxu0 %v1391
  %v1810 = vpop.f32.mrb[0].mxu0
  %v1811 = vadd.f32 0.0, %v1810
  %v1812 = vpop.f32.mrb[0].mxu0
  %1813 = vmatprep.mubr.f32.mxu0 %v1615
  %1814 = vmatmul.mubr.f32.gmra.mrb[0].mxu0 %v1395
  %v1815 = vpop.f32.mrb[0].mxu0
  %v1816 = vadd.f32 0.0, %v1815
  %v1817 = vpop.f32.mrb[0].mxu0
  %1818 = vmatprep.mubr.f32.mxu0 %v1617
  %1819 = vmatmul.mubr.f32.gmra.mrb[0].mxu0 %v1399
  %v1820 = vpop.f32.mrb[0].mxu0
  %v1821 = vadd.f32 0.0, %v1820
  %v1822 = vpop.f32.mrb[0].mxu0
  %1823 = vmatprep.mubr.f32.mxu0 %v1619
  %1824 = vmatmul.mubr.f32.gmra.mrb[0].mxu0 %v1403
  %v1825 = vpop.f32.mrb[0].mxu0
  %v1826 = vadd.f32 0.0, %v1825
  %v1827 = vpop.f32.mrb[0].mxu0
  %1828 = vmatprep.mubr.f32.mxu0 %v1621
  %1829 = vmatmul.mubr.f32.gmra.mrb[0].mxu0 %v1407
  %v1830 = vpop.f32.mrb[0].mxu0
  %v1831 = vadd.f32 0.0, %v1830
  %v1832 = vpop.f32.mrb[0].mxu0
  %1833 = vmatprep.mubr.f32.mxu0 %v1623
  %1834 = vmatmul.mubr.f32.gmra.mrb[0].mxu0 %v1411
  %v1835 = vpop.f32.mrb[0].mxu0
  %v1836 = vadd.f32 0.0, %v1835
  %v1837 = vpop.f32.mrb[0].mxu0
  %1838 = vmatprep.mubr.f32.mxu0 %v1625
  %1839 = vmatmul.mubr.f32.gmra.mrb[0].mxu0 %v1415
  %v1840 = vpop.f32.mrb[0].mxu0
  %v1841 = vadd.f32 0.0, %v1840
  %v1842 = vpop.f32.mrb[0].mxu0
  %1843 = vmatprep.mubr.f32.mxu0 %v1627
  %1844 = vmatmul.mubr.f32.gmra.mrb[0].mxu0 %v1419
  %v1845 = vpop.f32.mrb[0].mxu0
  %v1846 = vadd.f32 0.0, %v1845
  %v1847 = vpop.f32.mrb[0].mxu0
  %1848 = vmatprep.mubr.f32.mxu0 %v1629
  %1849 = vmatmul.mubr.f32.gmra.mrb[0].mxu0 %v1423
  %v1850 = vpop.f32.mrb[0].mxu0
  %v1851 = vadd.f32 0.0, %v1850
  %v1852 = vpop.f32.mrb[0].mxu0
  %1853 = vmatprep.mubr.f32.mxu0 %v1631
  %1854 = vmatmul.mubr.f32.gmra.mrb[0].mxu0 %v1427
  %v1855 = vpop.f32.mrb[0].mxu0
  %v1856 = vadd.f32 0.0, %v1855
  %v1857 = vpop.f32.mrb[0].mxu0
  %1858 = vmatprep.mubr.f32.mxu0 %v1633
  %1859 = vmatmul.mubr.f32.gmra.mrb[0].mxu0 %v1431
  %v1860 = vpop.f32.mrb[0].mxu0
  %v1861 = vadd.f32 0.0, %v1860
  %v1862 = vpop.f32.mrb[0].mxu0
  %1863 = vmatprep.mubr.f32.mxu0 %v1635
  %1864 = vmatmul.mubr.f32.gmra.mrb[0].mxu0 %v1435
  %v1865 = vpop.f32.mrb[0].mxu0
  %v1866 = vadd.f32 0.0, %v1865
  %v1867 = vpop.f32.mrb[0].mxu0
  %1868 = vmatprep.mubr.f32.mxu0 %v1637
  %1869 = vmatmul.mubr.f32.gmra.mrb[0].mxu0 %v1439
  %v1870 = vpop.f32.mrb[0].mxu0
  %v1871 = vadd.f32 0.0, %v1870
  %v1872 = vpop.f32.mrb[0].mxu0
  %1873 = vmatprep.mubr.f32.mxu0 %v1639
  %1874 = vmatmul.mubr.f32.gmra.mrb[0].mxu0 %v1443
  %v1875 = vpop.f32.mrb[0].mxu0
  %v1876 = vadd.f32 0.0, %v1875
  %v1877 = vpop.f32.mrb[0].mxu0
  %1878 = vmatprep.mubr.f32.mxu0 %v1641
  %1879 = vmatmul.mubr.f32.gmra.mrb[0].mxu0 %v1447
  %v1880 = vpop.f32.mrb[0].mxu0
  %v1881 = vadd.f32 0.0, %v1880
  %v1882 = vpop.f32.mrb[0].mxu0
  %1883 = vmatprep.mubr.f32.mxu0 %v1643
  %1884 = vmatmul.mubr.f32.gmra.mrb[0].mxu0 %v1451
  %v1885 = vpop.f32.mrb[0].mxu0
  %v1886 = vadd.f32 0.0, %v1885
  %v1887 = vpop.f32.mrb[0].mxu0
  %1888 = vmatprep.mubr.f32.mxu0 %v1645
  %1889 = vmatmul.mubr.f32.gmra.mrb[0].mxu0 %v1455
  %v1890 = vpop.f32.mrb[0].mxu0
  %v1891 = vadd.f32 0.0, %v1890
  %v1892 = vpop.f32.mrb[0].mxu0
  %1893 = vmatprep.mubr.f32.mxu0 %v1647
  %1894 = vmatmul.mubr.f32.gmra.mrb[0].mxu0 %v1459
  %v1895 = vpop.f32.mrb[0].mxu0
  %v1896 = vadd.f32 0.0, %v1895
  %v1897 = vpop.f32.mrb[0].mxu0
  %1898 = vmatprep.mubr.f32.mxu0 %v1649
  %1899 = vmatmul.mubr.f32.gmra.mrb[0].mxu0 %v1463
  %v1900 = vpop.f32.mrb[0].mxu0
  %v1901 = vadd.f32 0.0, %v1900
  %v1902 = vpop.f32.mrb[0].mxu0
  %1903 = vmatprep.mubr.f32.mxu0 %v1651
  %1904 = vmatmul.mubr.f32.gmra.mrb[0].mxu0 %v1467
  %v1905 = vpop.f32.mrb[0].mxu0
  %v1906 = vadd.f32 0.0, %v1905
  %v1907 = vpop.f32.mrb[0].mxu0
  %1908 = vmatprep.mubr.f32.mxu0 %v1653
  %1909 = vmatmul.mubr.f32.gmra.mrb[0].mxu0 %v1471
  %v1910 = vpop.f32.mrb[0].mxu0
  %v1911 = vadd.f32 0.0, %v1910
  %v1912 = vpop.f32.mrb[0].mxu0
  %1913 = vmatprep.mubr.f32.mxu0 %v1655
  %1914 = vmatmul.mubr.f32.gmra.mrb[0].mxu0 %v1475
  %v1915 = vpop.f32.mrb[0].mxu0
  %v1916 = vadd.f32 0.0, %v1915
  %v1917 = vpop.f32.mrb[0].mxu0
  %1918 = vmatprep.mubr.f32.mxu0 %v1657
  %1919 = vmatmul.mubr.f32.gmra.mrb[0].mxu0 %v1479
  %v1920 = vpop.f32.mrb[0].mxu0
  %v1921 = vadd.f32 0.0, %v1920
  %v1922 = vpop.f32.mrb[0].mxu0
  %1923 = vmatprep.mubr.f32.mxu0 %v1659
  %1924 = vmatmul.mubr.f32.gmra.mrb[0].mxu0 %v1483
  %v1925 = vpop.f32.mrb[0].mxu0
  %v1926 = vadd.f32 0.0, %v1925
  %v1927 = vpop.f32.mrb[0].mxu0
  %1928 = vmatprep.mubr.f32.mxu0 %v1661
  %1929 = vmatmul.mubr.f32.gmra.mrb[0].mxu0 %v1487
  %v1930 = vpop.f32.mrb[0].mxu0
  %v1931 = vadd.f32 0.0, %v1930
  %v1932 = vpop.f32.mrb[0].mxu0
  %1933 = vmatprep.mubr.f32.mxu0 %v1663
  %1934 = vmatmul.mubr.f32.gmra.mrb[0].mxu0 %v1491
  %v1935 = vpop.f32.mrb[0].mxu0
  %v1936 = vadd.f32 0.0, %v1935
  %v1937 = vpop.f32.mrb[0].mxu0
  %1938 = vmatprep.mubr.f32.mxu0 %v1665
  %1939 = vmatmul.mubr.f32.gmra.mrb[0].mxu0 %v1495
  %v1940 = vpop.f32.mrb[0].mxu0
  %v1941 = vadd.f32 0.0, %v1940
  %v1942 = vpop.f32.mrb[0].mxu0
  %1943 = vmatprep.mubr.f32.mxu0 %v1667
  %1944 = vmatmul.mubr.f32.gmra.mrb[0].mxu0 %v1499
  %v1945 = vpop.f32.mrb[0].mxu0
  %v1946 = vadd.f32 0.0, %v1945
  %v1947 = vpop.f32.mrb[0].mxu0
  %1948 = vmatprep.mubr.f32.mxu0 %v1669
  %1949 = vmatmul.mubr.f32.gmra.mrb[0].mxu0 %v1503
  %v1950 = vpop.f32.mrb[0].mxu0
  %v1951 = vadd.f32 0.0, %v1950
  %v1952 = vpop.f32.mrb[0].mxu0
  %1953 = vmatprep.mubr.f32.mxu0 %v1671
  %1954 = vmatmul.mubr.f32.gmra.mrb[0].mxu0 %v1507
  %v1955 = vpop.f32.mrb[0].mxu0
  %v1956 = vadd.f32 0.0, %v1955
  %v1957 = vpop.f32.mrb[0].mxu0
  %1958 = vmatprep.mubr.f32.mxu0 %v1673
  %1959 = vmatmul.mubr.f32.gmra.mrb[0].mxu0 %v1511
  %v1960 = vpop.f32.mrb[0].mxu0
  %v1961 = vadd.f32 0.0, %v1960
  %v1962 = vpop.f32.mrb[0].mxu0
  %1963 = vmatprep.mubr.f32.mxu0 %v1675
  %1964 = vmatmul.mubr.f32.gmra.mrb[0].mxu0 %v1515
  %v1965 = vpop.f32.mrb[0].mxu0
  %v1966 = vadd.f32 0.0, %v1965
  %v1967 = vpop.f32.mrb[0].mxu0
  %1968 = vmatprep.mubr.f32.mxu0 %v1677
  %1969 = vmatmul.mubr.f32.gmra.mrb[0].mxu0 %v1519
  %v1970 = vpop.f32.mrb[0].mxu0
  %v1971 = vadd.f32 0.0, %v1970
  %v1972 = vpop.f32.mrb[0].mxu0
  %1973 = vmatprep.mubr.f32.mxu0 %v1679
  %1974 = vmatmul.mubr.f32.gmra.mrb[0].mxu0 %v1523
  %v1975 = vpop.f32.mrb[0].mxu0
  %v1976 = vadd.f32 0.0, %v1975
  %v1977 = vpop.f32.mrb[0].mxu0
  %1978 = vmatprep.mubr.f32.mxu0 %v1681
  %1979 = vmatmul.mubr.f32.gmra.mrb[0].mxu0 %v1527
  %v1980 = vpop.f32.mrb[0].mxu0
  %v1981 = vadd.f32 0.0, %v1980
  %v1982 = vpop.f32.mrb[0].mxu0
  %1983 = vmatprep.mubr.f32.mxu0 %v1683
  %1984 = vmatmul.mubr.f32.gmra.mrb[0].mxu0 %v1531
  %v1985 = vpop.f32.mrb[0].mxu0
  %v1986 = vadd.f32 0.0, %v1985
  %v1987 = vpop.f32.mrb[0].mxu0
  %1988 = vmatprep.mubr.f32.mxu0 %v1685
  %1989 = vmatmul.mubr.f32.gmra.mrb[0].mxu0 %v1535
  %v1990 = vpop.f32.mrb[0].mxu0
  %v1991 = vadd.f32 0.0, %v1990
  %v1992 = vpop.f32.mrb[0].mxu0
  %1993 = vmatprep.mubr.f32.mxu0 %v1687
  %1994 = vmatmul.mubr.f32.gmra.mrb[0].mxu0 %v1539
  %v1995 = vpop.f32.mrb[0].mxu0
  %v1996 = vadd.f32 0.0, %v1995
  %v1997 = vpop.f32.mrb[0].mxu0
  %1998 = vdwg.mxu0
  %v2000 = vsel %vm994, %v1101, 0
  %v2002 = vsel %vm994, %v1103, 0
  %v2004 = vsel %vm994, %v1105, 0
  %v2006 = vsel %vm994, %v1107, 0
  %v2008 = vsel %vm994, %v1109, 0
  %v2010 = vsel %vm994, %v1111, 0
  %v2012 = vsel %vm994, %v1113, 0
  %v2014 = vsel %vm994, %v1115, 0
  %v2016 = vsel %vm994, %v1117, 0
  %v2018 = vsel %vm994, %v1119, 0
  %v2020 = vsel %vm994, %v1121, 0
  %v2022 = vsel %vm994, %v1123, 0
  %v2024 = vsel %vm994, %v1125, 0
  %v2026 = vsel %vm994, %v1127, 0
  %v2028 = vsel %vm994, %v1129, 0
  %v2030 = vsel %vm994, %v1131, 0
  %v2032 = vsel %vm994, %v1133, 0
  %v2034 = vsel %vm994, %v1135, 0
  %v2036 = vsel %vm994, %v1137, 0
  %v2038 = vsel %vm994, %v1139, 0
  %v2040 = vsel %vm994, %v1141, 0
  %v2042 = vsel %vm994, %v1143, 0
  %v2044 = vsel %vm994, %v1145, 0
  %v2046 = vsel %vm994, %v1147, 0
  %v2048 = vsel %vm994, %v1149, 0
  %v2050 = vsel %vm994, %v1151, 0
  %v2052 = vsel %vm994, %v1153, 0
  %v2054 = vsel %vm994, %v1155, 0
  %v2056 = vsel %vm994, %v1157, 0
  %v2058 = vsel %vm994, %v1159, 0
  %v2060 = vsel %vm994, %v1161, 0
  %v2062 = vsel %vm994, %v1163, 0
  %v2064 = vsel %vm994, %v1165, 0
  %v2066 = vsel %vm994, %v1167, 0
  %v2068 = vsel %vm994, %v1169, 0
  %v2070 = vsel %vm994, %v1171, 0
  %v2072 = vsel %vm994, %v1173, 0
  %v2074 = vsel %vm994, %v1175, 0
  %v2076 = vsel %vm994, %v1177, 0
  %v2078 = vsel %vm994, %v1179, 0
  %v2080 = vsel %vm994, %v1181, 0
  %v2082 = vsel %vm994, %v1183, 0
  %v2084 = vsel %vm994, %v1185, 0
  %v2086 = vsel %vm994, %v1187, 0
  %v2088 = vsel %vm994, %v1189, 0
  %v2090 = vsel %vm994, %v1191, 0
  %v2092 = vsel %vm994, %v1193, 0
  %v2094 = vsel %vm994, %v1195, 0
  %v2096 = vsel %vm994, %v1197, 0
  %2098 = vmatprep.subr.mxu0 0.0
  %2099 = vmatpush1.msra.mxu0 %v1198
  %2100 = vmatprep.subr.mxu0 0.0
  %2101 = vmatpush1.msra.mxu0 %v1199
  %2102 = vmatprep.subr.mxu0 0.0
  %2103 = vmatpush1.msra.mxu0 %v1200
  %2104 = vmatprep.subr.mxu0 0.0
  %2105 = vmatpush1.msra.mxu0 %v1201
  %2106 = vmatprep.subr.mxu0 0.0
  %2107 = vmatpush1.msra.mxu0 %v1202
  %2108 = vmatprep.subr.mxu0 0.0
  %2109 = vmatpush1.msra.mxu0 %v1203
  %2110 = vmatprep.subr.mxu0 0.0
  %2111 = vmatpush1.msra.mxu0 %v1204
  %2112 = vmatprep.subr.mxu0 0.0
  %2113 = vmatpush1.msra.mxu0 %v1205
  %2114 = vmatprep.subr.mxu0 0.0
  %2115 = vmatpush1.msra.mxu0 %v1206
  %2116 = vmatprep.subr.mxu0 0.0
  %2117 = vmatpush1.msra.mxu0 %v1207
  %2118 = vmatprep.subr.mxu0 0.0
  %2119 = vmatpush1.msra.mxu0 %v1208
  %2120 = vmatprep.subr.mxu0 0.0
  %2121 = vmatpush1.msra.mxu0 %v1209
  %2122 = vmatprep.subr.mxu0 0.0
  %2123 = vmatpush1.msra.mxu0 %v1210
  %2124 = vmatprep.subr.mxu0 0.0
  %2125 = vmatpush1.msra.mxu0 %v1211
  %2126 = vmatprep.subr.mxu0 0.0
  %2127 = vmatpush1.msra.mxu0 %v1212
  %2128 = vmatprep.subr.mxu0 0.0
  %2129 = vmatpush1.msra.mxu0 %v1213
  %2130 = vmatprep.subr.mxu0 0.0
  %2131 = vmatpush1.msra.mxu0 %v1214
  %2132 = vmatprep.subr.mxu0 0.0
  %2133 = vmatpush1.msra.mxu0 %v1215
  %2134 = vmatprep.subr.mxu0 0.0
  %2135 = vmatpush1.msra.mxu0 %v1216
  %2136 = vmatprep.subr.mxu0 0.0
  %2137 = vmatpush1.msra.mxu0 %v1217
  %2138 = vmatprep.subr.mxu0 0.0
  %2139 = vmatpush1.msra.mxu0 0.0
  %2140 = vmatprep.subr.mxu0 0.0
  %2141 = vmatpush1.msra.mxu0 0.0
  %2142 = vmatprep.subr.mxu0 0.0
  %2143 = vmatpush1.msra.mxu0 0.0
  %2144 = vmatprep.subr.mxu0 0.0
  %2145 = vmatpush1.msra.mxu0 0.0
  %2146 = vmatprep.subr.mxu0 0.0
  %2147 = vmatpush1.msra.mxu0 0.0
  %2148 = vmatprep.subr.mxu0 0.0
  %2149 = vmatpush1.msra.mxu0 0.0
  %2150 = vmatprep.subr.mxu0 0.0
  %2151 = vmatpush1.msra.mxu0 0.0
  %2152 = vmatprep.subr.mxu0 0.0
  %2153 = vmatpush1.msra.mxu0 0.0
  %2154 = vmatprep.subr.mxu0 0.0
  %2155 = vmatpush1.msra.mxu0 0.0
  %2156 = vmatprep.subr.mxu0 0.0
  %2157 = vmatpush1.msra.mxu0 0.0
  %2158 = vmatprep.subr.mxu0 0.0
  %2159 = vmatpush1.msra.mxu0 0.0
  %2160 = vmatprep.subr.mxu0 0.0
  %2161 = vmatpush1.msra.mxu0 0.0
  %2162 = vmatprep.mubr.f32.mxu0 %v2000
  %2163 = vmatmul.mubr.f32.gmra.mrb[0].mxu0 %v1100
  %v2164 = vpop.f32.mrb[0].mxu0
  %v2165 = vadd.f32 %v1756, %v2164
  %v2166 = vpop.f32.mrb[0].mxu0
  %2167 = vmatprep.mubr.f32.mxu0 %v2002
  %2168 = vmatmul.mubr.f32.gmra.mrb[0].mxu0 %v1102
  %v2169 = vpop.f32.mrb[0].mxu0
  %v2170 = vadd.f32 %v1761, %v2169
  %v2171 = vpop.f32.mrb[0].mxu0
  %2172 = vmatprep.mubr.f32.mxu0 %v2004
  %2173 = vmatmul.mubr.f32.gmra.mrb[0].mxu0 %v1104
  %v2174 = vpop.f32.mrb[0].mxu0
  %v2175 = vadd.f32 %v1766, %v2174
  %v2176 = vpop.f32.mrb[0].mxu0
  %2177 = vmatprep.mubr.f32.mxu0 %v2006
  %2178 = vmatmul.mubr.f32.gmra.mrb[0].mxu0 %v1106
  %v2179 = vpop.f32.mrb[0].mxu0
  %v2180 = vadd.f32 %v1771, %v2179
  %v2181 = vpop.f32.mrb[0].mxu0
  %2182 = vmatprep.mubr.f32.mxu0 %v2008
  %2183 = vmatmul.mubr.f32.gmra.mrb[0].mxu0 %v1108
  %v2184 = vpop.f32.mrb[0].mxu0
  %v2185 = vadd.f32 %v1776, %v2184
  %v2186 = vpop.f32.mrb[0].mxu0
  %2187 = vmatprep.mubr.f32.mxu0 %v2010
  %2188 = vmatmul.mubr.f32.gmra.mrb[0].mxu0 %v1110
  %v2189 = vpop.f32.mrb[0].mxu0
  %v2190 = vadd.f32 %v1781, %v2189
  %v2191 = vpop.f32.mrb[0].mxu0
  %2192 = vmatprep.mubr.f32.mxu0 %v2012
  %2193 = vmatmul.mubr.f32.gmra.mrb[0].mxu0 %v1112
  %v2194 = vpop.f32.mrb[0].mxu0
  %v2195 = vadd.f32 %v1786, %v2194
  %v2196 = vpop.f32.mrb[0].mxu0
  %2197 = vmatprep.mubr.f32.mxu0 %v2014
  %2198 = vmatmul.mubr.f32.gmra.mrb[0].mxu0 %v1114
  %v2199 = vpop.f32.mrb[0].mxu0
  %v2200 = vadd.f32 %v1791, %v2199
  %v2201 = vpop.f32.mrb[0].mxu0
  %2202 = vmatprep.mubr.f32.mxu0 %v2016
  %2203 = vmatmul.mubr.f32.gmra.mrb[0].mxu0 %v1116
  %v2204 = vpop.f32.mrb[0].mxu0
  %v2205 = vadd.f32 %v1796, %v2204
  %v2206 = vpop.f32.mrb[0].mxu0
  %2207 = vmatprep.mubr.f32.mxu0 %v2018
  %2208 = vmatmul.mubr.f32.gmra.mrb[0].mxu0 %v1118
  %v2209 = vpop.f32.mrb[0].mxu0
  %v2210 = vadd.f32 %v1801, %v2209
  %v2211 = vpop.f32.mrb[0].mxu0
  %2212 = vmatprep.mubr.f32.mxu0 %v2020
  %2213 = vmatmul.mubr.f32.gmra.mrb[0].mxu0 %v1120
  %v2214 = vpop.f32.mrb[0].mxu0
  %v2215 = vadd.f32 %v1806, %v2214
  %v2216 = vpop.f32.mrb[0].mxu0
  %2217 = vmatprep.mubr.f32.mxu0 %v2022
  %2218 = vmatmul.mubr.f32.gmra.mrb[0].mxu0 %v1122
  %v2219 = vpop.f32.mrb[0].mxu0
  %v2220 = vadd.f32 %v1811, %v2219
  %v2221 = vpop.f32.mrb[0].mxu0
  %2222 = vmatprep.mubr.f32.mxu0 %v2024
  %2223 = vmatmul.mubr.f32.gmra.mrb[0].mxu0 %v1124
  %v2224 = vpop.f32.mrb[0].mxu0
  %v2225 = vadd.f32 %v1816, %v2224
  %v2226 = vpop.f32.mrb[0].mxu0
  %2227 = vmatprep.mubr.f32.mxu0 %v2026
  %2228 = vmatmul.mubr.f32.gmra.mrb[0].mxu0 %v1126
  %v2229 = vpop.f32.mrb[0].mxu0
  %v2230 = vadd.f32 %v1821, %v2229
  %v2231 = vpop.f32.mrb[0].mxu0
  %2232 = vmatprep.mubr.f32.mxu0 %v2028
  %2233 = vmatmul.mubr.f32.gmra.mrb[0].mxu0 %v1128
  %v2234 = vpop.f32.mrb[0].mxu0
  %v2235 = vadd.f32 %v1826, %v2234
  %v2236 = vpop.f32.mrb[0].mxu0
  %2237 = vmatprep.mubr.f32.mxu0 %v2030
  %2238 = vmatmul.mubr.f32.gmra.mrb[0].mxu0 %v1130
  %v2239 = vpop.f32.mrb[0].mxu0
  %v2240 = vadd.f32 %v1831, %v2239
  %v2241 = vpop.f32.mrb[0].mxu0
  %2242 = vmatprep.mubr.f32.mxu0 %v2032
  %2243 = vmatmul.mubr.f32.gmra.mrb[0].mxu0 %v1132
  %v2244 = vpop.f32.mrb[0].mxu0
  %v2245 = vadd.f32 %v1836, %v2244
  %v2246 = vpop.f32.mrb[0].mxu0
  %2247 = vmatprep.mubr.f32.mxu0 %v2034
  %2248 = vmatmul.mubr.f32.gmra.mrb[0].mxu0 %v1134
  %v2249 = vpop.f32.mrb[0].mxu0
  %v2250 = vadd.f32 %v1841, %v2249
  %v2251 = vpop.f32.mrb[0].mxu0
  %2252 = vmatprep.mubr.f32.mxu0 %v2036
  %2253 = vmatmul.mubr.f32.gmra.mrb[0].mxu0 %v1136
  %v2254 = vpop.f32.mrb[0].mxu0
  %v2255 = vadd.f32 %v1846, %v2254
  %v2256 = vpop.f32.mrb[0].mxu0
  %2257 = vmatprep.mubr.f32.mxu0 %v2038
  %2258 = vmatmul.mubr.f32.gmra.mrb[0].mxu0 %v1138
  %v2259 = vpop.f32.mrb[0].mxu0
  %v2260 = vadd.f32 %v1851, %v2259
  %v2261 = vpop.f32.mrb[0].mxu0
  %2262 = vmatprep.mubr.f32.mxu0 %v2040
  %2263 = vmatmul.mubr.f32.gmra.mrb[0].mxu0 %v1140
  %v2264 = vpop.f32.mrb[0].mxu0
  %v2265 = vadd.f32 %v1856, %v2264
  %v2266 = vpop.f32.mrb[0].mxu0
  %2267 = vmatprep.mubr.f32.mxu0 %v2042
  %2268 = vmatmul.mubr.f32.gmra.mrb[0].mxu0 %v1142
  %v2269 = vpop.f32.mrb[0].mxu0
  %v2270 = vadd.f32 %v1861, %v2269
  %v2271 = vpop.f32.mrb[0].mxu0
  %2272 = vmatprep.mubr.f32.mxu0 %v2044
  %2273 = vmatmul.mubr.f32.gmra.mrb[0].mxu0 %v1144
  %v2274 = vpop.f32.mrb[0].mxu0
  %v2275 = vadd.f32 %v1866, %v2274
  %v2276 = vpop.f32.mrb[0].mxu0
  %2277 = vmatprep.mubr.f32.mxu0 %v2046
  %2278 = vmatmul.mubr.f32.gmra.mrb[0].mxu0 %v1146
  %v2279 = vpop.f32.mrb[0].mxu0
  %v2280 = vadd.f32 %v1871, %v2279
  %v2281 = vpop.f32.mrb[0].mxu0
  %2282 = vmatprep.mubr.f32.mxu0 %v2048
  %2283 = vmatmul.mubr.f32.gmra.mrb[0].mxu0 %v1148
  %v2284 = vpop.f32.mrb[0].mxu0
  %v2285 = vadd.f32 %v1876, %v2284
  %v2286 = vpop.f32.mrb[0].mxu0
  %2287 = vmatprep.mubr.f32.mxu0 %v2050
  %2288 = vmatmul.mubr.f32.gmra.mrb[0].mxu0 %v1150
  %v2289 = vpop.f32.mrb[0].mxu0
  %v2290 = vadd.f32 %v1881, %v2289
  %v2291 = vpop.f32.mrb[0].mxu0
  %2292 = vmatprep.mubr.f32.mxu0 %v2052
  %2293 = vmatmul.mubr.f32.gmra.mrb[0].mxu0 %v1152
  %v2294 = vpop.f32.mrb[0].mxu0
  %v2295 = vadd.f32 %v1886, %v2294
  %v2296 = vpop.f32.mrb[0].mxu0
  %2297 = vmatprep.mubr.f32.mxu0 %v2054
  %2298 = vmatmul.mubr.f32.gmra.mrb[0].mxu0 %v1154
  %v2299 = vpop.f32.mrb[0].mxu0
  %v2300 = vadd.f32 %v1891, %v2299
  %v2301 = vpop.f32.mrb[0].mxu0
  %2302 = vmatprep.mubr.f32.mxu0 %v2056
  %2303 = vmatmul.mubr.f32.gmra.mrb[0].mxu0 %v1156
  %v2304 = vpop.f32.mrb[0].mxu0
  %v2305 = vadd.f32 %v1896, %v2304
  %v2306 = vpop.f32.mrb[0].mxu0
  %2307 = vmatprep.mubr.f32.mxu0 %v2058
  %2308 = vmatmul.mubr.f32.gmra.mrb[0].mxu0 %v1158
  %v2309 = vpop.f32.mrb[0].mxu0
  %v2310 = vadd.f32 %v1901, %v2309
  %v2311 = vpop.f32.mrb[0].mxu0
  %2312 = vmatprep.mubr.f32.mxu0 %v2060
  %2313 = vmatmul.mubr.f32.gmra.mrb[0].mxu0 %v1160
  %v2314 = vpop.f32.mrb[0].mxu0
  %v2315 = vadd.f32 %v1906, %v2314
  %v2316 = vpop.f32.mrb[0].mxu0
  %2317 = vmatprep.mubr.f32.mxu0 %v2062
  %2318 = vmatmul.mubr.f32.gmra.mrb[0].mxu0 %v1162
  %v2319 = vpop.f32.mrb[0].mxu0
  %v2320 = vadd.f32 %v1911, %v2319
  %v2321 = vpop.f32.mrb[0].mxu0
  %2322 = vmatprep.mubr.f32.mxu0 %v2064
  %2323 = vmatmul.mubr.f32.gmra.mrb[0].mxu0 %v1164
  %v2324 = vpop.f32.mrb[0].mxu0
  %v2325 = vadd.f32 %v1916, %v2324
  %v2326 = vpop.f32.mrb[0].mxu0
  %2327 = vmatprep.mubr.f32.mxu0 %v2066
  %2328 = vmatmul.mubr.f32.gmra.mrb[0].mxu0 %v1166
  %v2329 = vpop.f32.mrb[0].mxu0
  %v2330 = vadd.f32 %v1921, %v2329
  %v2331 = vpop.f32.mrb[0].mxu0
  %2332 = vmatprep.mubr.f32.mxu0 %v2068
  %2333 = vmatmul.mubr.f32.gmra.mrb[0].mxu0 %v1168
  %v2334 = vpop.f32.mrb[0].mxu0
  %v2335 = vadd.f32 %v1926, %v2334
  %v2336 = vpop.f32.mrb[0].mxu0
  %2337 = vmatprep.mubr.f32.mxu0 %v2070
  %2338 = vmatmul.mubr.f32.gmra.mrb[0].mxu0 %v1170
  %v2339 = vpop.f32.mrb[0].mxu0
  %v2340 = vadd.f32 %v1931, %v2339
  %v2341 = vpop.f32.mrb[0].mxu0
  %2342 = vmatprep.mubr.f32.mxu0 %v2072
  %2343 = vmatmul.mubr.f32.gmra.mrb[0].mxu0 %v1172
  %v2344 = vpop.f32.mrb[0].mxu0
  %v2345 = vadd.f32 %v1936, %v2344
  %v2346 = vpop.f32.mrb[0].mxu0
  %2347 = vmatprep.mubr.f32.mxu0 %v2074
  %2348 = vmatmul.mubr.f32.gmra.mrb[0].mxu0 %v1174
  %v2349 = vpop.f32.mrb[0].mxu0
  %v2350 = vadd.f32 %v1941, %v2349
  %v2351 = vpop.f32.mrb[0].mxu0
  %2352 = vmatprep.mubr.f32.mxu0 %v2076
  %2353 = vmatmul.mubr.f32.gmra.mrb[0].mxu0 %v1176
  %v2354 = vpop.f32.mrb[0].mxu0
  %v2355 = vadd.f32 %v1946, %v2354
  %v2356 = vpop.f32.mrb[0].mxu0
  %2357 = vmatprep.mubr.f32.mxu0 %v2078
  %2358 = vmatmul.mubr.f32.gmra.mrb[0].mxu0 %v1178
  %v2359 = vpop.f32.mrb[0].mxu0
  %v2360 = vadd.f32 %v1951, %v2359
  %v2361 = vpop.f32.mrb[0].mxu0
  %2362 = vmatprep.mubr.f32.mxu0 %v2080
  %2363 = vmatmul.mubr.f32.gmra.mrb[0].mxu0 %v1180
  %v2364 = vpop.f32.mrb[0].mxu0
  %v2365 = vadd.f32 %v1956, %v2364
  %v2366 = vpop.f32.mrb[0].mxu0
  %2367 = vmatprep.mubr.f32.mxu0 %v2082
  %2368 = vmatmul.mubr.f32.gmra.mrb[0].mxu0 %v1182
  %v2369 = vpop.f32.mrb[0].mxu0
  %v2370 = vadd.f32 %v1961, %v2369
  %v2371 = vpop.f32.mrb[0].mxu0
  %2372 = vmatprep.mubr.f32.mxu0 %v2084
  %2373 = vmatmul.mubr.f32.gmra.mrb[0].mxu0 %v1184
  %v2374 = vpop.f32.mrb[0].mxu0
  %v2375 = vadd.f32 %v1966, %v2374
  %v2376 = vpop.f32.mrb[0].mxu0
  %2377 = vmatprep.mubr.f32.mxu0 %v2086
  %2378 = vmatmul.mubr.f32.gmra.mrb[0].mxu0 %v1186
  %v2379 = vpop.f32.mrb[0].mxu0
  %v2380 = vadd.f32 %v1971, %v2379
  %v2381 = vpop.f32.mrb[0].mxu0
  %2382 = vmatprep.mubr.f32.mxu0 %v2088
  %2383 = vmatmul.mubr.f32.gmra.mrb[0].mxu0 %v1188
  %v2384 = vpop.f32.mrb[0].mxu0
  %v2385 = vadd.f32 %v1976, %v2384
  %v2386 = vpop.f32.mrb[0].mxu0
  %2387 = vmatprep.mubr.f32.mxu0 %v2090
  %2388 = vmatmul.mubr.f32.gmra.mrb[0].mxu0 %v1190
  %v2389 = vpop.f32.mrb[0].mxu0
  %v2390 = vadd.f32 %v1981, %v2389
  %v2391 = vpop.f32.mrb[0].mxu0
  %2392 = vmatprep.mubr.f32.mxu0 %v2092
  %2393 = vmatmul.mubr.f32.gmra.mrb[0].mxu0 %v1192
  %v2394 = vpop.f32.mrb[0].mxu0
  %v2395 = vadd.f32 %v1986, %v2394
  %v2396 = vpop.f32.mrb[0].mxu0
  %2397 = vmatprep.mubr.f32.mxu0 %v2094
  %2398 = vmatmul.mubr.f32.gmra.mrb[0].mxu0 %v1194
  %v2399 = vpop.f32.mrb[0].mxu0
  %v2400 = vadd.f32 %v1991, %v2399
  %v2401 = vpop.f32.mrb[0].mxu0
  %2402 = vmatprep.mubr.f32.mxu0 %v2096
  %2403 = vmatmul.mubr.f32.gmra.mrb[0].mxu0 %v1196
  %v2404 = vpop.f32.mrb[0].mxu0
  %v2405 = vadd.f32 %v1996, %v2404
  %v2406 = vpop.f32.mrb[0].mxu0
  %2407 = vdwg.mxu0
  %v2408 = vld [vmem:[#allocation2] sm:$0xfc]
  %v2409 = vld [vmem:[#allocation2 + $0x8] sm:$0xfc]
  %v2410 = vld [vmem:[#allocation2 + $0x310] sm:$0x3]
  %v2411 = vld [vmem:[#allocation2 + $0x318] sm:$0x3]
  %s2412 = scalar_lea.vmem %s5, 320
  %v2413 = vld [vmem:[%s2412] sm:$0xff]
  %v2414 = vld [vmem:[%s2412 + $0x8] sm:$0xff]
  %v2415 = vld [vmem:[%s2412 + $0x10] sm:$0xff]
  %v2416 = vld [vmem:[%s2412 + $0x18] sm:$0xff]
  %v2417 = vld [vmem:[%s2412 + $0x20] sm:$0xff]
  %v2418 = vld [vmem:[%s2412 + $0x28] sm:$0xff]
  %v2419 = vld [vmem:[%s2412 + $0x30] sm:$0xff]
  %v2420 = vld [vmem:[%s2412 + $0x38] sm:$0xff]
  %v2421 = vld [vmem:[%s2412 + $0x40] sm:$0xff]
  %v2422 = vld [vmem:[%s2412 + $0x48] sm:$0xff]
  %v2423 = vld [vmem:[%s2412 + $0x50] sm:$0xff]
  %v2424 = vld [vmem:[%s2412 + $0x58] sm:$0xff]
  %v2425 = vld [vmem:[%s2412 + $0x60] sm:$0xff]
  %v2426 = vld [vmem:[%s2412 + $0x68] sm:$0xff]
  %v2427 = vld [vmem:[%s2412 + $0x70] sm:$0xff]
  %v2428 = vld [vmem:[%s2412 + $0x78] sm:$0xff]
  %v2429 = vld [vmem:[%s2412 + $0x80] sm:$0xff]
  %v2430 = vld [vmem:[%s2412 + $0x88] sm:$0xff]
  %v2431 = vld [vmem:[%s2412 + $0x90] sm:$0xff]
  %v2432 = vld [vmem:[%s2412 + $0x98] sm:$0xff]
  %vm2437 = vcmask 1045504
  %v2438 = vrot.slane %v2408, 2
  %v2439 = vrot.slane %v1102, 2
  %v2440 = vsel %vm2437, %v2438, %v2439
  %v2441 = vrot.slane %v2409, 2
  %v2442 = vrot.slane %v1103, 2
  %v2443 = vsel %vm2437, %v2441, %v2442
  %v2444 = vrot.slane %v1104, 2
  %v2445 = vsel %vm2437, %v2439, %v2444
  %v2446 = vrot.slane %v1105, 2
  %v2447 = vsel %vm2437, %v2442, %v2446
  %v2448 = vrot.slane %v1106, 2
  %v2449 = vsel %vm2437, %v2444, %v2448
  %v2450 = vrot.slane %v1107, 2
  %v2451 = vsel %vm2437, %v2446, %v2450
  %v2452 = vrot.slane %v1108, 2
  %v2453 = vsel %vm2437, %v2448, %v2452
  %v2454 = vrot.slane %v1109, 2
  %v2455 = vsel %vm2437, %v2450, %v2454
  %v2456 = vrot.slane %v1110, 2
  %v2457 = vsel %vm2437, %v2452, %v2456
  %v2458 = vrot.slane %v1111, 2
  %v2459 = vsel %vm2437, %v2454, %v2458
  %v2460 = vrot.slane %v1112, 2
  %v2461 = vsel %vm2437, %v2456, %v2460
  %v2462 = vrot.slane %v1113, 2
  %v2463 = vsel %vm2437, %v2458, %v2462
  %v2464 = vrot.slane %v1114, 2
  %v2465 = vsel %vm2437, %v2460, %v2464
  %v2466 = vrot.slane %v1115, 2
  %v2467 = vsel %vm2437, %v2462, %v2466
  %v2468 = vrot.slane %v1116, 2
  %v2469 = vsel %vm2437, %v2464, %v2468
  %v2470 = vrot.slane %v1117, 2
  %v2471 = vsel %vm2437, %v2466, %v2470
  %v2472 = vrot.slane %v1118, 2
  %v2473 = vsel %vm2437, %v2468, %v2472
  %v2474 = vrot.slane %v1119, 2
  %v2475 = vsel %vm2437, %v2470, %v2474
  %v2476 = vrot.slane %v1120, 2
  %v2477 = vsel %vm2437, %v2472, %v2476
  %v2478 = vrot.slane %v1121, 2
  %v2479 = vsel %vm2437, %v2474, %v2478
  %v2480 = vrot.slane %v1122, 2
  %v2481 = vsel %vm2437, %v2476, %v2480
  %v2482 = vrot.slane %v1123, 2
  %v2483 = vsel %vm2437, %v2478, %v2482
  %v2484 = vrot.slane %v1124, 2
  %v2485 = vsel %vm2437, %v2480, %v2484
  %v2486 = vrot.slane %v1125, 2
  %v2487 = vsel %vm2437, %v2482, %v2486
  %v2488 = vrot.slane %v1126, 2
  %v2489 = vsel %vm2437, %v2484, %v2488
  %v2490 = vrot.slane %v1127, 2
  %v2491 = vsel %vm2437, %v2486, %v2490
  %v2492 = vrot.slane %v1128, 2
  %v2493 = vsel %vm2437, %v2488, %v2492
  %v2494 = vrot.slane %v1129, 2
  %v2495 = vsel %vm2437, %v2490, %v2494
  %v2496 = vrot.slane %v1130, 2
  %v2497 = vsel %vm2437, %v2492, %v2496
  %v2498 = vrot.slane %v1131, 2
  %v2499 = vsel %vm2437, %v2494, %v2498
  %v2500 = vrot.slane %v1132, 2
  %v2501 = vsel %vm2437, %v2496, %v2500
  %v2502 = vrot.slane %v1133, 2
  %v2503 = vsel %vm2437, %v2498, %v2502
  %v2504 = vrot.slane %v1134, 2
  %v2505 = vsel %vm2437, %v2500, %v2504
  %v2506 = vrot.slane %v1135, 2
  %v2507 = vsel %vm2437, %v2502, %v2506
  %v2508 = vrot.slane %v1136, 2
  %v2509 = vsel %vm2437, %v2504, %v2508
  %v2510 = vrot.slane %v1137, 2
  %v2511 = vsel %vm2437, %v2506, %v2510
  %v2512 = vrot.slane %v1138, 2
  %v2513 = vsel %vm2437, %v2508, %v2512
  %v2514 = vrot.slane %v1139, 2
  %v2515 = vsel %vm2437, %v2510, %v2514
  %v2516 = vrot.slane %v1140, 2
  %v2517 = vsel %vm2437, %v2512, %v2516
  %v2518 = vrot.slane %v1141, 2
  %v2519 = vsel %vm2437, %v2514, %v2518
  %v2520 = vrot.slane %v1142, 2
  %v2521 = vsel %vm2437, %v2516, %v2520
  %v2522 = vrot.slane %v1143, 2
  %v2523 = vsel %vm2437, %v2518, %v2522
  %v2524 = vrot.slane %v1144, 2
  %v2525 = vsel %vm2437, %v2520, %v2524
  %v2526 = vrot.slane %v1145, 2
  %v2527 = vsel %vm2437, %v2522, %v2526
  %v2528 = vrot.slane %v1146, 2
  %v2529 = vsel %vm2437, %v2524, %v2528
  %v2530 = vrot.slane %v1147, 2
  %v2531 = vsel %vm2437, %v2526, %v2530
  %v2532 = vrot.slane %v1148, 2
  %v2533 = vsel %vm2437, %v2528, %v2532
  %v2534 = vrot.slane %v1149, 2
  %v2535 = vsel %vm2437, %v2530, %v2534
  %v2536 = vrot.slane %v1150, 2
  %v2537 = vsel %vm2437, %v2532, %v2536
  %v2538 = vrot.slane %v1151, 2
  %v2539 = vsel %vm2437, %v2534, %v2538
  %v2540 = vrot.slane %v1152, 2
  %v2541 = vsel %vm2437, %v2536, %v2540
  %v2542 = vrot.slane %v1153, 2
  %v2543 = vsel %vm2437, %v2538, %v2542
  %v2544 = vrot.slane %v1154, 2
  %v2545 = vsel %vm2437, %v2540, %v2544
  %v2546 = vrot.slane %v1155, 2
  %v2547 = vsel %vm2437, %v2542, %v2546
  %v2548 = vrot.slane %v1156, 2
  %v2549 = vsel %vm2437, %v2544, %v2548
  %v2550 = vrot.slane %v1157, 2
  %v2551 = vsel %vm2437, %v2546, %v2550
  %v2552 = vrot.slane %v1158, 2
  %v2553 = vsel %vm2437, %v2548, %v2552
  %v2554 = vrot.slane %v1159, 2
  %v2555 = vsel %vm2437, %v2550, %v2554
  %v2556 = vrot.slane %v1160, 2
  %v2557 = vsel %vm2437, %v2552, %v2556
  %v2558 = vrot.slane %v1161, 2
  %v2559 = vsel %vm2437, %v2554, %v2558
  %v2560 = vrot.slane %v1162, 2
  %v2561 = vsel %vm2437, %v2556, %v2560
  %v2562 = vrot.slane %v1163, 2
  %v2563 = vsel %vm2437, %v2558, %v2562
  %v2564 = vrot.slane %v1164, 2
  %v2565 = vsel %vm2437, %v2560, %v2564
  %v2566 = vrot.slane %v1165, 2
  %v2567 = vsel %vm2437, %v2562, %v2566
  %v2568 = vrot.slane %v1166, 2
  %v2569 = vsel %vm2437, %v2564, %v2568
  %v2570 = vrot.slane %v1167, 2
  %v2571 = vsel %vm2437, %v2566, %v2570
  %v2572 = vrot.slane %v1168, 2
  %v2573 = vsel %vm2437, %v2568, %v2572
  %v2574 = vrot.slane %v1169, 2
  %v2575 = vsel %vm2437, %v2570, %v2574
  %v2576 = vrot.slane %v1170, 2
  %v2577 = vsel %vm2437, %v2572, %v2576
  %v2578 = vrot.slane %v1171, 2
  %v2579 = vsel %vm2437, %v2574, %v2578
  %v2580 = vrot.slane %v1172, 2
  %v2581 = vsel %vm2437, %v2576, %v2580
  %v2582 = vrot.slane %v1173, 2
  %v2583 = vsel %vm2437, %v2578, %v2582
  %v2584 = vrot.slane %v1174, 2
  %v2585 = vsel %vm2437, %v2580, %v2584
  %v2586 = vrot.slane %v1175, 2
  %v2587 = vsel %vm2437, %v2582, %v2586
  %v2588 = vrot.slane %v1176, 2
  %v2589 = vsel %vm2437, %v2584, %v2588
  %v2590 = vrot.slane %v1177, 2
  %v2591 = vsel %vm2437, %v2586, %v2590
  %v2592 = vrot.slane %v1178, 2
  %v2593 = vsel %vm2437, %v2588, %v2592
  %v2594 = vrot.slane %v1179, 2
  %v2595 = vsel %vm2437, %v2590, %v2594
  %v2596 = vrot.slane %v1180, 2
  %v2597 = vsel %vm2437, %v2592, %v2596
  %v2598 = vrot.slane %v1181, 2
  %v2599 = vsel %vm2437, %v2594, %v2598
  %v2600 = vrot.slane %v1182, 2
  %v2601 = vsel %vm2437, %v2596, %v2600
  %v2602 = vrot.slane %v1183, 2
  %v2603 = vsel %vm2437, %v2598, %v2602
  %v2604 = vrot.slane %v1184, 2
  %v2605 = vsel %vm2437, %v2600, %v2604
  %v2606 = vrot.slane %v1185, 2
  %v2607 = vsel %vm2437, %v2602, %v2606
  %v2608 = vrot.slane %v1186, 2
  %v2609 = vsel %vm2437, %v2604, %v2608
  %v2610 = vrot.slane %v1187, 2
  %v2611 = vsel %vm2437, %v2606, %v2610
  %v2612 = vrot.slane %v1188, 2
  %v2613 = vsel %vm2437, %v2608, %v2612
  %v2614 = vrot.slane %v1189, 2
  %v2615 = vsel %vm2437, %v2610, %v2614
  %v2616 = vrot.slane %v1190, 2
  %v2617 = vsel %vm2437, %v2612, %v2616
  %v2618 = vrot.slane %v1191, 2
  %v2619 = vsel %vm2437, %v2614, %v2618
  %v2620 = vrot.slane %v1192, 2
  %v2621 = vsel %vm2437, %v2616, %v2620
  %v2622 = vrot.slane %v1193, 2
  %v2623 = vsel %vm2437, %v2618, %v2622
  %v2624 = vrot.slane %v1194, 2
  %v2625 = vsel %vm2437, %v2620, %v2624
  %v2626 = vrot.slane %v1195, 2
  %v2627 = vsel %vm2437, %v2622, %v2626
  %v2628 = vrot.slane %v1196, 2
  %v2629 = vsel %vm2437, %v2624, %v2628
  %v2630 = vrot.slane %v1197, 2
  %v2631 = vsel %vm2437, %v2626, %v2630
  %v2632 = vrot.slane %v2410, 2
  %v2633 = vsel %vm2437, %v2628, %v2632
  %v2634 = vrot.slane %v2411, 2
  %v2635 = vsel %vm2437, %v2630, %v2634
  %v2685 = vsel %vm994, %v2443, 0
  %v2687 = vsel %vm994, %v2447, 0
  %v2689 = vsel %vm994, %v2451, 0
  %v2691 = vsel %vm994, %v2455, 0
  %v2693 = vsel %vm994, %v2459, 0
  %v2695 = vsel %vm994, %v2463, 0
  %v2697 = vsel %vm994, %v2467, 0
  %v2699 = vsel %vm994, %v2471, 0
  %v2701 = vsel %vm994, %v2475, 0
  %v2703 = vsel %vm994, %v2479, 0
  %v2705 = vsel %vm994, %v2483, 0
  %v2707 = vsel %vm994, %v2487, 0
  %v2709 = vsel %vm994, %v2491, 0
  %v2711 = vsel %vm994, %v2495, 0
  %v2713 = vsel %vm994, %v2499, 0
  %v2715 = vsel %vm994, %v2503, 0
  %v2717 = vsel %vm994, %v2507, 0
  %v2719 = vsel %vm994, %v2511, 0
  %v2721 = vsel %vm994, %v2515, 0
  %v2723 = vsel %vm994, %v2519, 0
  %v2725 = vsel %vm994, %v2523, 0
  %v2727 = vsel %vm994, %v2527, 0
  %v2729 = vsel %vm994, %v2531, 0
  %v2731 = vsel %vm994, %v2535, 0
  %v2733 = vsel %vm994, %v2539, 0
  %v2735 = vsel %vm994, %v2543, 0
  %v2737 = vsel %vm994, %v2547, 0
  %v2739 = vsel %vm994, %v2551, 0
  %v2741 = vsel %vm994, %v2555, 0
  %v2743 = vsel %vm994, %v2559, 0
  %v2745 = vsel %vm994, %v2563, 0
  %v2747 = vsel %vm994, %v2567, 0
  %v2749 = vsel %vm994, %v2571, 0
  %v2751 = vsel %vm994, %v2575, 0
  %v2753 = vsel %vm994, %v2579, 0
  %v2755 = vsel %vm994, %v2583, 0
  %v2757 = vsel %vm994, %v2587, 0
  %v2759 = vsel %vm994, %v2591, 0
  %v2761 = vsel %vm994, %v2595, 0
  %v2763 = vsel %vm994, %v2599, 0
  %v2765 = vsel %vm994, %v2603, 0
  %v2767 = vsel %vm994, %v2607, 0
  %v2769 = vsel %vm994, %v2611, 0
  %v2771 = vsel %vm994, %v2615, 0
  %v2773 = vsel %vm994, %v2619, 0
  %v2775 = vsel %vm994, %v2623, 0
  %v2777 = vsel %vm994, %v2627, 0
  %v2779 = vsel %vm994, %v2631, 0
  %v2781 = vsel %vm994, %v2635, 0
  %2783 = vmatprep.subr.mxu0 0.0
  %2784 = vmatpush1.msra.mxu0 %v2413
  %2785 = vmatprep.subr.mxu0 0.0
  %2786 = vmatpush1.msra.mxu0 %v2414
  %2787 = vmatprep.subr.mxu0 0.0
  %2788 = vmatpush1.msra.mxu0 %v2415
  %2789 = vmatprep.subr.mxu0 0.0
  %2790 = vmatpush1.msra.mxu0 %v2416
  %2791 = vmatprep.subr.mxu0 0.0
  %2792 = vmatpush1.msra.mxu0 %v2417
  %2793 = vmatprep.subr.mxu0 0.0
  %2794 = vmatpush1.msra.mxu0 %v2418
  %2795 = vmatprep.subr.mxu0 0.0
  %2796 = vmatpush1.msra.mxu0 %v2419
  %2797 = vmatprep.subr.mxu0 0.0
  %2798 = vmatpush1.msra.mxu0 %v2420
  %2799 = vmatprep.subr.mxu0 0.0
  %2800 = vmatpush1.msra.mxu0 %v2421
  %2801 = vmatprep.subr.mxu0 0.0
  %2802 = vmatpush1.msra.mxu0 %v2422
  %2803 = vmatprep.subr.mxu0 0.0
  %2804 = vmatpush1.msra.mxu0 %v2423
  %2805 = vmatprep.subr.mxu0 0.0
  %2806 = vmatpush1.msra.mxu0 %v2424
  %2807 = vmatprep.subr.mxu0 0.0
  %2808 = vmatpush1.msra.mxu0 %v2425
  %2809 = vmatprep.subr.mxu0 0.0
  %2810 = vmatpush1.msra.mxu0 %v2426
  %2811 = vmatprep.subr.mxu0 0.0
  %2812 = vmatpush1.msra.mxu0 %v2427
  %2813 = vmatprep.subr.mxu0 0.0
  %2814 = vmatpush1.msra.mxu0 %v2428
  %2815 = vmatprep.subr.mxu0 0.0
  %2816 = vmatpush1.msra.mxu0 %v2429
  %2817 = vmatprep.subr.mxu0 0.0
  %2818 = vmatpush1.msra.mxu0 %v2430
  %2819 = vmatprep.subr.mxu0 0.0
  %2820 = vmatpush1.msra.mxu0 %v2431
  %2821 = vmatprep.subr.mxu0 0.0
  %2822 = vmatpush1.msra.mxu0 %v2432
  %2823 = vmatprep.subr.mxu0 0.0
  %2824 = vmatpush1.msra.mxu0 0.0
  %2825 = vmatprep.subr.mxu0 0.0
  %2826 = vmatpush1.msra.mxu0 0.0
  %2827 = vmatprep.subr.mxu0 0.0
  %2828 = vmatpush1.msra.mxu0 0.0
  %2829 = vmatprep.subr.mxu0 0.0
  %2830 = vmatpush1.msra.mxu0 0.0
  %2831 = vmatprep.subr.mxu0 0.0
  %2832 = vmatpush1.msra.mxu0 0.0
  %2833 = vmatprep.subr.mxu0 0.0
  %2834 = vmatpush1.msra.mxu0 0.0
  %2835 = vmatprep.subr.mxu0 0.0
  %2836 = vmatpush1.msra.mxu0 0.0
  %2837 = vmatprep.subr.mxu0 0.0
  %2838 = vmatpush1.msra.mxu0 0.0
  %2839 = vmatprep.subr.mxu0 0.0
  %2840 = vmatpush1.msra.mxu0 0.0
  %2841 = vmatprep.subr.mxu0 0.0
  %2842 = vmatpush1.msra.mxu0 0.0
  %2843 = vmatprep.subr.mxu0 0.0
  %2844 = vmatpush1.msra.mxu0 0.0
  %2845 = vmatprep.subr.mxu0 0.0
  %2846 = vmatpush1.msra.mxu0 0.0
  %2847 = vmatprep.mubr.f32.mxu0 %v2685
  %2848 = vmatmul.mubr.f32.gmra.mrb[0].mxu0 %v2440
  %v2849 = vpop.f32.mrb[0].mxu0
  %v2850 = vadd.f32 0.0, %v2849
  %v2851 = vpop.f32.mrb[0].mxu0
  %2852 = vmatprep.mubr.f32.mxu0 %v2687
  %2853 = vmatmul.mubr.f32.gmra.mrb[0].mxu0 %v2445
  %v2854 = vpop.f32.mrb[0].mxu0
  %v2855 = vadd.f32 0.0, %v2854
  %v2856 = vpop.f32.mrb[0].mxu0
  %2857 = vmatprep.mubr.f32.mxu0 %v2689
  %2858 = vmatmul.mubr.f32.gmra.mrb[0].mxu0 %v2449
  %v2859 = vpop.f32.mrb[0].mxu0
  %v2860 = vadd.f32 0.0, %v2859
  %v2861 = vpop.f32.mrb[0].mxu0
  %2862 = vmatprep.mubr.f32.mxu0 %v2691
  %2863 = vmatmul.mubr.f32.gmra.mrb[0].mxu0 %v2453
  %v2864 = vpop.f32.mrb[0].mxu0
  %v2865 = vadd.f32 0.0, %v2864
  %v2866 = vpop.f32.mrb[0].mxu0
  %2867 = vmatprep.mubr.f32.mxu0 %v2693
  %2868 = vmatmul.mubr.f32.gmra.mrb[0].mxu0 %v2457
  %v2869 = vpop.f32.mrb[0].mxu0
  %v2870 = vadd.f32 0.0, %v2869
  %v2871 = vpop.f32.mrb[0].mxu0
  %2872 = vmatprep.mubr.f32.mxu0 %v2695
  %2873 = vmatmul.mubr.f32.gmra.mrb[0].mxu0 %v2461
  %v2874 = vpop.f32.mrb[0].mxu0
  %v2875 = vadd.f32 0.0, %v2874
  %v2876 = vpop.f32.mrb[0].mxu0
  %2877 = vmatprep.mubr.f32.mxu0 %v2697
  %2878 = vmatmul.mubr.f32.gmra.mrb[0].mxu0 %v2465
  %v2879 = vpop.f32.mrb[0].mxu0
  %v2880 = vadd.f32 0.0, %v2879
  %v2881 = vpop.f32.mrb[0].mxu0
  %2882 = vmatprep.mubr.f32.mxu0 %v2699
  %2883 = vmatmul.mubr.f32.gmra.mrb[0].mxu0 %v2469
  %v2884 = vpop.f32.mrb[0].mxu0
  %v2885 = vadd.f32 0.0, %v2884
  %v2886 = vpop.f32.mrb[0].mxu0
  %2887 = vmatprep.mubr.f32.mxu0 %v2701
  %2888 = vmatmul.mubr.f32.gmra.mrb[0].mxu0 %v2473
  %v2889 = vpop.f32.mrb[0].mxu0
  %v2890 = vadd.f32 0.0, %v2889
  %v2891 = vpop.f32.mrb[0].mxu0
  %2892 = vmatprep.mubr.f32.mxu0 %v2703
  %2893 = vmatmul.mubr.f32.gmra.mrb[0].mxu0 %v2477
  %v2894 = vpop.f32.mrb[0].mxu0
  %v2895 = vadd.f32 0.0, %v2894
  %v2896 = vpop.f32.mrb[0].mxu0
  %2897 = vmatprep.mubr.f32.mxu0 %v2705
  %2898 = vmatmul.mubr.f32.gmra.mrb[0].mxu0 %v2481
  %v2899 = vpop.f32.mrb[0].mxu0
  %v2900 = vadd.f32 0.0, %v2899
  %v2901 = vpop.f32.mrb[0].mxu0
  %2902 = vmatprep.mubr.f32.mxu0 %v2707
  %2903 = vmatmul.mubr.f32.gmra.mrb[0].mxu0 %v2485
  %v2904 = vpop.f32.mrb[0].mxu0
  %v2905 = vadd.f32 0.0, %v2904
  %v2906 = vpop.f32.mrb[0].mxu0
  %2907 = vmatprep.mubr.f32.mxu0 %v2709
  %2908 = vmatmul.mubr.f32.gmra.mrb[0].mxu0 %v2489
  %v2909 = vpop.f32.mrb[0].mxu0
  %v2910 = vadd.f32 0.0, %v2909
  %v2911 = vpop.f32.mrb[0].mxu0
  %2912 = vmatprep.mubr.f32.mxu0 %v2711
  %2913 = vmatmul.mubr.f32.gmra.mrb[0].mxu0 %v2493
  %v2914 = vpop.f32.mrb[0].mxu0
  %v2915 = vadd.f32 0.0, %v2914
  %v2916 = vpop.f32.mrb[0].mxu0
  %2917 = vmatprep.mubr.f32.mxu0 %v2713
  %2918 = vmatmul.mubr.f32.gmra.mrb[0].mxu0 %v2497
  %v2919 = vpop.f32.mrb[0].mxu0
  %v2920 = vadd.f32 0.0, %v2919
  %v2921 = vpop.f32.mrb[0].mxu0
  %2922 = vmatprep.mubr.f32.mxu0 %v2715
  %2923 = vmatmul.mubr.f32.gmra.mrb[0].mxu0 %v2501
  %v2924 = vpop.f32.mrb[0].mxu0
  %v2925 = vadd.f32 0.0, %v2924
  %v2926 = vpop.f32.mrb[0].mxu0
  %2927 = vmatprep.mubr.f32.mxu0 %v2717
  %2928 = vmatmul.mubr.f32.gmra.mrb[0].mxu0 %v2505
  %v2929 = vpop.f32.mrb[0].mxu0
  %v2930 = vadd.f32 0.0, %v2929
  %v2931 = vpop.f32.mrb[0].mxu0
  %2932 = vmatprep.mubr.f32.mxu0 %v2719
  %2933 = vmatmul.mubr.f32.gmra.mrb[0].mxu0 %v2509
  %v2934 = vpop.f32.mrb[0].mxu0
  %v2935 = vadd.f32 0.0, %v2934
  %v2936 = vpop.f32.mrb[0].mxu0
  %2937 = vmatprep.mubr.f32.mxu0 %v2721
  %2938 = vmatmul.mubr.f32.gmra.mrb[0].mxu0 %v2513
  %v2939 = vpop.f32.mrb[0].mxu0
  %v2940 = vadd.f32 0.0, %v2939
  %v2941 = vpop.f32.mrb[0].mxu0
  %2942 = vmatprep.mubr.f32.mxu0 %v2723
  %2943 = vmatmul.mubr.f32.gmra.mrb[0].mxu0 %v2517
  %v2944 = vpop.f32.mrb[0].mxu0
  %v2945 = vadd.f32 0.0, %v2944
  %v2946 = vpop.f32.mrb[0].mxu0
  %2947 = vmatprep.mubr.f32.mxu0 %v2725
  %2948 = vmatmul.mubr.f32.gmra.mrb[0].mxu0 %v2521
  %v2949 = vpop.f32.mrb[0].mxu0
  %v2950 = vadd.f32 0.0, %v2949
  %v2951 = vpop.f32.mrb[0].mxu0
  %2952 = vmatprep.mubr.f32.mxu0 %v2727
  %2953 = vmatmul.mubr.f32.gmra.mrb[0].mxu0 %v2525
  %v2954 = vpop.f32.mrb[0].mxu0
  %v2955 = vadd.f32 0.0, %v2954
  %v2956 = vpop.f32.mrb[0].mxu0
  %2957 = vmatprep.mubr.f32.mxu0 %v2729
  %2958 = vmatmul.mubr.f32.gmra.mrb[0].mxu0 %v2529
  %v2959 = vpop.f32.mrb[0].mxu0
  %v2960 = vadd.f32 0.0, %v2959
  %v2961 = vpop.f32.mrb[0].mxu0
  %2962 = vmatprep.mubr.f32.mxu0 %v2731
  %2963 = vmatmul.mubr.f32.gmra.mrb[0].mxu0 %v2533
  %v2964 = vpop.f32.mrb[0].mxu0
  %v2965 = vadd.f32 0.0, %v2964
  %v2966 = vpop.f32.mrb[0].mxu0
  %2967 = vmatprep.mubr.f32.mxu0 %v2733
  %2968 = vmatmul.mubr.f32.gmra.mrb[0].mxu0 %v2537
  %v2969 = vpop.f32.mrb[0].mxu0
  %v2970 = vadd.f32 0.0, %v2969
  %v2971 = vpop.f32.mrb[0].mxu0
  %2972 = vmatprep.mubr.f32.mxu0 %v2735
  %2973 = vmatmul.mubr.f32.gmra.mrb[0].mxu0 %v2541
  %v2974 = vpop.f32.mrb[0].mxu0
  %v2975 = vadd.f32 0.0, %v2974
  %v2976 = vpop.f32.mrb[0].mxu0
  %2977 = vmatprep.mubr.f32.mxu0 %v2737
  %2978 = vmatmul.mubr.f32.gmra.mrb[0].mxu0 %v2545
  %v2979 = vpop.f32.mrb[0].mxu0
  %v2980 = vadd.f32 0.0, %v2979
  %v2981 = vpop.f32.mrb[0].mxu0
  %2982 = vmatprep.mubr.f32.mxu0 %v2739
  %2983 = vmatmul.mubr.f32.gmra.mrb[0].mxu0 %v2549
  %v2984 = vpop.f32.mrb[0].mxu0
  %v2985 = vadd.f32 0.0, %v2984
  %v2986 = vpop.f32.mrb[0].mxu0
  %2987 = vmatprep.mubr.f32.mxu0 %v2741
  %2988 = vmatmul.mubr.f32.gmra.mrb[0].mxu0 %v2553
  %v2989 = vpop.f32.mrb[0].mxu0
  %v2990 = vadd.f32 0.0, %v2989
  %v2991 = vpop.f32.mrb[0].mxu0
  %2992 = vmatprep.mubr.f32.mxu0 %v2743
  %2993 = vmatmul.mubr.f32.gmra.mrb[0].mxu0 %v2557
  %v2994 = vpop.f32.mrb[0].mxu0
  %v2995 = vadd.f32 0.0, %v2994
  %v2996 = vpop.f32.mrb[0].mxu0
  %2997 = vmatprep.mubr.f32.mxu0 %v2745
  %2998 = vmatmul.mubr.f32.gmra.mrb[0].mxu0 %v2561
  %v2999 = vpop.f32.mrb[0].mxu0
  %v3000 = vadd.f32 0.0, %v2999
  %v3001 = vpop.f32.mrb[0].mxu0
  %3002 = vmatprep.mubr.f32.mxu0 %v2747
  %3003 = vmatmul.mubr.f32.gmra.mrb[0].mxu0 %v2565
  %v3004 = vpop.f32.mrb[0].mxu0
  %v3005 = vadd.f32 0.0, %v3004
  %v3006 = vpop.f32.mrb[0].mxu0
  %3007 = vmatprep.mubr.f32.mxu0 %v2749
  %3008 = vmatmul.mubr.f32.gmra.mrb[0].mxu0 %v2569
  %v3009 = vpop.f32.mrb[0].mxu0
  %v3010 = vadd.f32 0.0, %v3009
  %v3011 = vpop.f32.mrb[0].mxu0
  %3012 = vmatprep.mubr.f32.mxu0 %v2751
  %3013 = vmatmul.mubr.f32.gmra.mrb[0].mxu0 %v2573
  %v3014 = vpop.f32.mrb[0].mxu0
  %v3015 = vadd.f32 0.0, %v3014
  %v3016 = vpop.f32.mrb[0].mxu0
  %3017 = vmatprep.mubr.f32.mxu0 %v2753
  %3018 = vmatmul.mubr.f32.gmra.mrb[0].mxu0 %v2577
  %v3019 = vpop.f32.mrb[0].mxu0
  %v3020 = vadd.f32 0.0, %v3019
  %v3021 = vpop.f32.mrb[0].mxu0
  %3022 = vmatprep.mubr.f32.mxu0 %v2755
  %3023 = vmatmul.mubr.f32.gmra.mrb[0].mxu0 %v2581
  %v3024 = vpop.f32.mrb[0].mxu0
  %v3025 = vadd.f32 0.0, %v3024
  %v3026 = vpop.f32.mrb[0].mxu0
  %3027 = vmatprep.mubr.f32.mxu0 %v2757
  %3028 = vmatmul.mubr.f32.gmra.mrb[0].mxu0 %v2585
  %v3029 = vpop.f32.mrb[0].mxu0
  %v3030 = vadd.f32 0.0, %v3029
  %v3031 = vpop.f32.mrb[0].mxu0
  %3032 = vmatprep.mubr.f32.mxu0 %v2759
  %3033 = vmatmul.mubr.f32.gmra.mrb[0].mxu0 %v2589
  %v3034 = vpop.f32.mrb[0].mxu0
  %v3035 = vadd.f32 0.0, %v3034
  %v3036 = vpop.f32.mrb[0].mxu0
  %3037 = vmatprep.mubr.f32.mxu0 %v2761
  %3038 = vmatmul.mubr.f32.gmra.mrb[0].mxu0 %v2593
  %v3039 = vpop.f32.mrb[0].mxu0
  %v3040 = vadd.f32 0.0, %v3039
  %v3041 = vpop.f32.mrb[0].mxu0
  %3042 = vmatprep.mubr.f32.mxu0 %v2763
  %3043 = vmatmul.mubr.f32.gmra.mrb[0].mxu0 %v2597
  %v3044 = vpop.f32.mrb[0].mxu0
  %v3045 = vadd.f32 0.0, %v3044
  %v3046 = vpop.f32.mrb[0].mxu0
  %3047 = vmatprep.mubr.f32.mxu0 %v2765
  %3048 = vmatmul.mubr.f32.gmra.mrb[0].mxu0 %v2601
  %v3049 = vpop.f32.mrb[0].mxu0
  %v3050 = vadd.f32 0.0, %v3049
  %v3051 = vpop.f32.mrb[0].mxu0
  %3052 = vmatprep.mubr.f32.mxu0 %v2767
  %3053 = vmatmul.mubr.f32.gmra.mrb[0].mxu0 %v2605
  %v3054 = vpop.f32.mrb[0].mxu0
  %v3055 = vadd.f32 0.0, %v3054
  %v3056 = vpop.f32.mrb[0].mxu0
  %3057 = vmatprep.mubr.f32.mxu0 %v2769
  %3058 = vmatmul.mubr.f32.gmra.mrb[0].mxu0 %v2609
  %v3059 = vpop.f32.mrb[0].mxu0
  %v3060 = vadd.f32 0.0, %v3059
  %v3061 = vpop.f32.mrb[0].mxu0
  %3062 = vmatprep.mubr.f32.mxu0 %v2771
  %3063 = vmatmul.mubr.f32.gmra.mrb[0].mxu0 %v2613
  %v3064 = vpop.f32.mrb[0].mxu0
  %v3065 = vadd.f32 0.0, %v3064
  %v3066 = vpop.f32.mrb[0].mxu0
  %3067 = vmatprep.mubr.f32.mxu0 %v2773
  %3068 = vmatmul.mubr.f32.gmra.mrb[0].mxu0 %v2617
  %v3069 = vpop.f32.mrb[0].mxu0
  %v3070 = vadd.f32 0.0, %v3069
  %v3071 = vpop.f32.mrb[0].mxu0
  %3072 = vmatprep.mubr.f32.mxu0 %v2775
  %3073 = vmatmul.mubr.f32.gmra.mrb[0].mxu0 %v2621
  %v3074 = vpop.f32.mrb[0].mxu0
  %v3075 = vadd.f32 0.0, %v3074
  %v3076 = vpop.f32.mrb[0].mxu0
  %3077 = vmatprep.mubr.f32.mxu0 %v2777
  %3078 = vmatmul.mubr.f32.gmra.mrb[0].mxu0 %v2625
  %v3079 = vpop.f32.mrb[0].mxu0
  %v3080 = vadd.f32 0.0, %v3079
  %v3081 = vpop.f32.mrb[0].mxu0
  %3082 = vmatprep.mubr.f32.mxu0 %v2779
  %3083 = vmatmul.mubr.f32.gmra.mrb[0].mxu0 %v2629
  %v3084 = vpop.f32.mrb[0].mxu0
  %v3085 = vadd.f32 0.0, %v3084
  %v3086 = vpop.f32.mrb[0].mxu0
  %3087 = vmatprep.mubr.f32.mxu0 %v2781
  %3088 = vmatmul.mubr.f32.gmra.mrb[0].mxu0 %v2633
  %v3089 = vpop.f32.mrb[0].mxu0
  %v3090 = vadd.f32 0.0, %v3089
  %v3091 = vpop.f32.mrb[0].mxu0
  %3092 = vdwg.mxu0
  %v3093 = vadd.f32 %v2165, %v2850
  %v3094 = vadd.f32 %v2170, %v2855
  %v3095 = vadd.f32 %v2175, %v2860
  %v3096 = vadd.f32 %v2180, %v2865
  %v3097 = vadd.f32 %v2185, %v2870
  %v3098 = vadd.f32 %v2190, %v2875
  %v3099 = vadd.f32 %v2195, %v2880
  %v3100 = vadd.f32 %v2200, %v2885
  %v3101 = vadd.f32 %v2205, %v2890
  %v3102 = vadd.f32 %v2210, %v2895
  %v3103 = vadd.f32 %v2215, %v2900
  %v3104 = vadd.f32 %v2220, %v2905
  %v3105 = vadd.f32 %v2225, %v2910
  %v3106 = vadd.f32 %v2230, %v2915
  %v3107 = vadd.f32 %v2235, %v2920
  %v3108 = vadd.f32 %v2240, %v2925
  %v3109 = vadd.f32 %v2245, %v2930
  %v3110 = vadd.f32 %v2250, %v2935
  %v3111 = vadd.f32 %v2255, %v2940
  %v3112 = vadd.f32 %v2260, %v2945
  %v3113 = vadd.f32 %v2265, %v2950
  %v3114 = vadd.f32 %v2270, %v2955
  %v3115 = vadd.f32 %v2275, %v2960
  %v3116 = vadd.f32 %v2280, %v2965
  %v3117 = vadd.f32 %v2285, %v2970
  %v3118 = vadd.f32 %v2290, %v2975
  %v3119 = vadd.f32 %v2295, %v2980
  %v3120 = vadd.f32 %v2300, %v2985
  %v3121 = vadd.f32 %v2305, %v2990
  %v3122 = vadd.f32 %v2310, %v2995
  %v3123 = vadd.f32 %v2315, %v3000
  %v3124 = vadd.f32 %v2320, %v3005
  %v3125 = vadd.f32 %v2325, %v3010
  %v3126 = vadd.f32 %v2330, %v3015
  %v3127 = vadd.f32 %v2335, %v3020
  %v3128 = vadd.f32 %v2340, %v3025
  %v3129 = vadd.f32 %v2345, %v3030
  %v3130 = vadd.f32 %v2350, %v3035
  %v3131 = vadd.f32 %v2355, %v3040
  %v3132 = vadd.f32 %v2360, %v3045
  %v3133 = vadd.f32 %v2365, %v3050
  %v3134 = vadd.f32 %v2370, %v3055
  %v3135 = vadd.f32 %v2375, %v3060
  %v3136 = vadd.f32 %v2380, %v3065
  %v3137 = vadd.f32 %v2385, %v3070
  %v3138 = vadd.f32 %v2390, %v3075
  %v3139 = vadd.f32 %v2395, %v3080
  %v3140 = vadd.f32 %v2400, %v3085
  %v3141 = vadd.f32 %v2405, %v3090
  %v3142 = vld [vmem:[#allocation2 + $0x10] sm:$0xc0]
  %v3143 = vld [vmem:[#allocation2 + $0x18] sm:$0xc0]
  %v3144 = vld [vmem:[#allocation2 + $0x20] sm:$0xff]
  %v3145 = vld [vmem:[#allocation2 + $0x28] sm:$0xff]
  %v3146 = vld [vmem:[#allocation2 + $0x30] sm:$0xff]
  %v3147 = vld [vmem:[#allocation2 + $0x38] sm:$0xff]
  %v3148 = vld [vmem:[#allocation2 + $0x40] sm:$0xff]
  %v3149 = vld [vmem:[#allocation2 + $0x48] sm:$0xff]
  %v3150 = vld [vmem:[#allocation2 + $0x50] sm:$0xff]
  %v3151 = vld [vmem:[#allocation2 + $0x58] sm:$0xff]
  %v3152 = vld [vmem:[#allocation2 + $0x60] sm:$0xff]
  %v3153 = vld [vmem:[#allocation2 + $0x68] sm:$0xff]
  %v3154 = vld [vmem:[#allocation2 + $0x70] sm:$0xff]
  %v3155 = vld [vmem:[#allocation2 + $0x78] sm:$0xff]
  %v3156 = vld [vmem:[#allocation2 + $0x80] sm:$0xff]
  %v3157 = vld [vmem:[#allocation2 + $0x88] sm:$0xff]
  %v3158 = vld [vmem:[#allocation2 + $0x90] sm:$0xff]
  %v3159 = vld [vmem:[#allocation2 + $0x98] sm:$0xff]
  %v3160 = vld [vmem:[#allocation2 + $0xa0] sm:$0xff]
  %v3161 = vld [vmem:[#allocation2 + $0xa8] sm:$0xff]
  %v3162 = vld [vmem:[#allocation2 + $0xb0] sm:$0xff]
  %v3163 = vld [vmem:[#allocation2 + $0xb8] sm:$0xff]
  %v3164 = vld [vmem:[#allocation2 + $0xc0] sm:$0xff]
  %v3165 = vld [vmem:[#allocation2 + $0xc8] sm:$0xff]
  %v3166 = vld [vmem:[#allocation2 + $0xd0] sm:$0xff]
  %v3167 = vld [vmem:[#allocation2 + $0xd8] sm:$0xff]
  %v3168 = vld [vmem:[#allocation2 + $0xe0] sm:$0xff]
  %v3169 = vld [vmem:[#allocation2 + $0xe8] sm:$0xff]
  %v3170 = vld [vmem:[#allocation2 + $0xf0] sm:$0xff]
  %v3171 = vld [vmem:[#allocation2 + $0xf8] sm:$0xff]
  %v3172 = vld [vmem:[#allocation2 + $0x100] sm:$0xff]
  %v3173 = vld [vmem:[#allocation2 + $0x108] sm:$0xff]
  %v3174 = vld [vmem:[#allocation2 + $0x110] sm:$0xff]
  %v3175 = vld [vmem:[#allocation2 + $0x118] sm:$0xff]
  %v3176 = vld [vmem:[#allocation2 + $0x120] sm:$0xff]
  %v3177 = vld [vmem:[#allocation2 + $0x128] sm:$0xff]
  %v3178 = vld [vmem:[#allocation2 + $0x130] sm:$0xff]
  %v3179 = vld [vmem:[#allocation2 + $0x138] sm:$0xff]
  %v3180 = vld [vmem:[#allocation2 + $0x140] sm:$0xff]
  %v3181 = vld [vmem:[#allocation2 + $0x148] sm:$0xff]
  %v3182 = vld [vmem:[#allocation2 + $0x150] sm:$0xff]
  %v3183 = vld [vmem:[#allocation2 + $0x158] sm:$0xff]
  %v3184 = vld [vmem:[#allocation2 + $0x160] sm:$0xff]
  %v3185 = vld [vmem:[#allocation2 + $0x168] sm:$0xff]
  %v3186 = vld [vmem:[#allocation2 + $0x170] sm:$0xff]
  %v3187 = vld [vmem:[#allocation2 + $0x178] sm:$0xff]
  %v3188 = vld [vmem:[#allocation2 + $0x180] sm:$0xff]
  %v3189 = vld [vmem:[#allocation2 + $0x188] sm:$0xff]
  %v3190 = vld [vmem:[#allocation2 + $0x190] sm:$0xff]
  %v3191 = vld [vmem:[#allocation2 + $0x198] sm:$0xff]
  %v3192 = vld [vmem:[#allocation2 + $0x1a0] sm:$0xff]
  %v3193 = vld [vmem:[#allocation2 + $0x1a8] sm:$0xff]
  %v3194 = vld [vmem:[#allocation2 + $0x1b0] sm:$0xff]
  %v3195 = vld [vmem:[#allocation2 + $0x1b8] sm:$0xff]
  %v3196 = vld [vmem:[#allocation2 + $0x1c0] sm:$0xff]
  %v3197 = vld [vmem:[#allocation2 + $0x1c8] sm:$0xff]
  %v3198 = vld [vmem:[#allocation2 + $0x1d0] sm:$0xff]
  %v3199 = vld [vmem:[#allocation2 + $0x1d8] sm:$0xff]
  %v3200 = vld [vmem:[#allocation2 + $0x1e0] sm:$0xff]
  %v3201 = vld [vmem:[#allocation2 + $0x1e8] sm:$0xff]
  %v3202 = vld [vmem:[#allocation2 + $0x1f0] sm:$0xff]
  %v3203 = vld [vmem:[#allocation2 + $0x1f8] sm:$0xff]
  %v3204 = vld [vmem:[#allocation2 + $0x200] sm:$0xff]
  %v3205 = vld [vmem:[#allocation2 + $0x208] sm:$0xff]
  %v3206 = vld [vmem:[#allocation2 + $0x210] sm:$0xff]
  %v3207 = vld [vmem:[#allocation2 + $0x218] sm:$0xff]
  %v3208 = vld [vmem:[#allocation2 + $0x220] sm:$0xff]
  %v3209 = vld [vmem:[#allocation2 + $0x228] sm:$0xff]
  %v3210 = vld [vmem:[#allocation2 + $0x230] sm:$0xff]
  %v3211 = vld [vmem:[#allocation2 + $0x238] sm:$0xff]
  %v3212 = vld [vmem:[#allocation2 + $0x240] sm:$0xff]
  %v3213 = vld [vmem:[#allocation2 + $0x248] sm:$0xff]
  %v3214 = vld [vmem:[#allocation2 + $0x250] sm:$0xff]
  %v3215 = vld [vmem:[#allocation2 + $0x258] sm:$0xff]
  %v3216 = vld [vmem:[#allocation2 + $0x260] sm:$0xff]
  %v3217 = vld [vmem:[#allocation2 + $0x268] sm:$0xff]
  %v3218 = vld [vmem:[#allocation2 + $0x270] sm:$0xff]
  %v3219 = vld [vmem:[#allocation2 + $0x278] sm:$0xff]
  %v3220 = vld [vmem:[#allocation2 + $0x280] sm:$0xff]
  %v3221 = vld [vmem:[#allocation2 + $0x288] sm:$0xff]
  %v3222 = vld [vmem:[#allocation2 + $0x290] sm:$0xff]
  %v3223 = vld [vmem:[#allocation2 + $0x298] sm:$0xff]
  %v3224 = vld [vmem:[#allocation2 + $0x2a0] sm:$0xff]
  %v3225 = vld [vmem:[#allocation2 + $0x2a8] sm:$0xff]
  %v3226 = vld [vmem:[#allocation2 + $0x2b0] sm:$0xff]
  %v3227 = vld [vmem:[#allocation2 + $0x2b8] sm:$0xff]
  %v3228 = vld [vmem:[#allocation2 + $0x2c0] sm:$0xff]
  %v3229 = vld [vmem:[#allocation2 + $0x2c8] sm:$0xff]
  %v3230 = vld [vmem:[#allocation2 + $0x2d0] sm:$0xff]
  %v3231 = vld [vmem:[#allocation2 + $0x2d8] sm:$0xff]
  %v3232 = vld [vmem:[#allocation2 + $0x2e0] sm:$0xff]
  %v3233 = vld [vmem:[#allocation2 + $0x2e8] sm:$0xff]
  %v3234 = vld [vmem:[#allocation2 + $0x2f0] sm:$0xff]
  %v3235 = vld [vmem:[#allocation2 + $0x2f8] sm:$0xff]
  %v3236 = vld [vmem:[#allocation2 + $0x300] sm:$0xff]
  %v3237 = vld [vmem:[#allocation2 + $0x308] sm:$0xff]
  %v3238 = vld [vmem:[#allocation2 + $0x310] sm:$0xff]
  %v3239 = vld [vmem:[#allocation2 + $0x318] sm:$0xff]
  %v3240 = vld [vmem:[#allocation2 + $0x320] sm:$0x3f]
  %v3241 = vld [vmem:[#allocation2 + $0x328] sm:$0x3f]
  %s3242 = scalar_lea.vmem %s5, 480
  %v3243 = vld [vmem:[%s3242] sm:$0xff]
  %v3244 = vld [vmem:[%s3242 + $0x8] sm:$0xff]
  %v3245 = vld [vmem:[%s3242 + $0x10] sm:$0xff]
  %v3246 = vld [vmem:[%s3242 + $0x18] sm:$0xff]
  %v3247 = vld [vmem:[%s3242 + $0x20] sm:$0xff]
  %v3248 = vld [vmem:[%s3242 + $0x28] sm:$0xff]
  %v3249 = vld [vmem:[%s3242 + $0x30] sm:$0xff]
  %v3250 = vld [vmem:[%s3242 + $0x38] sm:$0xff]
  %v3251 = vld [vmem:[%s3242 + $0x40] sm:$0xff]
  %v3252 = vld [vmem:[%s3242 + $0x48] sm:$0xff]
  %v3253 = vld [vmem:[%s3242 + $0x50] sm:$0xff]
  %v3254 = vld [vmem:[%s3242 + $0x58] sm:$0xff]
  %v3255 = vld [vmem:[%s3242 + $0x60] sm:$0xff]
  %v3256 = vld [vmem:[%s3242 + $0x68] sm:$0xff]
  %v3257 = vld [vmem:[%s3242 + $0x70] sm:$0xff]
  %v3258 = vld [vmem:[%s3242 + $0x78] sm:$0xff]
  %v3259 = vld [vmem:[%s3242 + $0x80] sm:$0xff]
  %v3260 = vld [vmem:[%s3242 + $0x88] sm:$0xff]
  %v3261 = vld [vmem:[%s3242 + $0x90] sm:$0xff]
  %v3262 = vld [vmem:[%s3242 + $0x98] sm:$0xff]
  %vm3363 = vcmask 1041408
  %v3364 = vrot.slane %v3142, 6
  %v3365 = vrot.slane %v3144, 6
  %v3366 = vsel %vm3363, %v3364, %v3365
  %v3367 = vrot.slane %v3143, 6
  %v3368 = vrot.slane %v3145, 6
  %v3369 = vsel %vm3363, %v3367, %v3368
  %v3370 = vrot.slane %v3146, 6
  %v3371 = vsel %vm3363, %v3365, %v3370
  %v3372 = vrot.slane %v3147, 6
  %v3373 = vsel %vm3363, %v3368, %v3372
  %v3374 = vrot.slane %v3148, 6
  %v3375 = vsel %vm3363, %v3370, %v3374
  %v3376 = vrot.slane %v3149, 6
  %v3377 = vsel %vm3363, %v3372, %v3376
  %v3378 = vrot.slane %v3150, 6
  %v3379 = vsel %vm3363, %v3374, %v3378
  %v3380 = vrot.slane %v3151, 6
  %v3381 = vsel %vm3363, %v3376, %v3380
  %v3382 = vrot.slane %v3152, 6
  %v3383 = vsel %vm3363, %v3378, %v3382
  %v3384 = vrot.slane %v3153, 6
  %v3385 = vsel %vm3363, %v3380, %v3384
  %v3386 = vrot.slane %v3154, 6
  %v3387 = vsel %vm3363, %v3382, %v3386
  %v3388 = vrot.slane %v3155, 6
  %v3389 = vsel %vm3363, %v3384, %v3388
  %v3390 = vrot.slane %v3156, 6
  %v3391 = vsel %vm3363, %v3386, %v3390
  %v3392 = vrot.slane %v3157, 6
  %v3393 = vsel %vm3363, %v3388, %v3392
  %v3394 = vrot.slane %v3158, 6
  %v3395 = vsel %vm3363, %v3390, %v3394
  %v3396 = vrot.slane %v3159, 6
  %v3397 = vsel %vm3363, %v3392, %v3396
  %v3398 = vrot.slane %v3160, 6
  %v3399 = vsel %vm3363, %v3394, %v3398
  %v3400 = vrot.slane %v3161, 6
  %v3401 = vsel %vm3363, %v3396, %v3400
  %v3402 = vrot.slane %v3162, 6
  %v3403 = vsel %vm3363, %v3398, %v3402
  %v3404 = vrot.slane %v3163, 6
  %v3405 = vsel %vm3363, %v3400, %v3404
  %v3406 = vrot.slane %v3164, 6
  %v3407 = vsel %vm3363, %v3402, %v3406
  %v3408 = vrot.slane %v3165, 6
  %v3409 = vsel %vm3363, %v3404, %v3408
  %v3410 = vrot.slane %v3166, 6
  %v3411 = vsel %vm3363, %v3406, %v3410
  %v3412 = vrot.slane %v3167, 6
  %v3413 = vsel %vm3363, %v3408, %v3412
  %v3414 = vrot.slane %v3168, 6
  %v3415 = vsel %vm3363, %v3410, %v3414
  %v3416 = vrot.slane %v3169, 6
  %v3417 = vsel %vm3363, %v3412, %v3416
  %v3418 = vrot.slane %v3170, 6
  %v3419 = vsel %vm3363, %v3414, %v3418
  %v3420 = vrot.slane %v3171, 6
  %v3421 = vsel %vm3363, %v3416, %v3420
  %v3422 = vrot.slane %v3172, 6
  %v3423 = vsel %vm3363, %v3418, %v3422
  %v3424 = vrot.slane %v3173, 6
  %v3425 = vsel %vm3363, %v3420, %v3424
  %v3426 = vrot.slane %v3174, 6
  %v3427 = vsel %vm3363, %v3422, %v3426
  %v3428 = vrot.slane %v3175, 6
  %v3429 = vsel %vm3363, %v3424, %v3428
  %v3430 = vrot.slane %v3176, 6
  %v3431 = vsel %vm3363, %v3426, %v3430
  %v3432 = vrot.slane %v3177, 6
  %v3433 = vsel %vm3363, %v3428, %v3432
  %v3434 = vrot.slane %v3178, 6
  %v3435 = vsel %vm3363, %v3430, %v3434
  %v3436 = vrot.slane %v3179, 6
  %v3437 = vsel %vm3363, %v3432, %v3436
  %v3438 = vrot.slane %v3180, 6
  %v3439 = vsel %vm3363, %v3434, %v3438
  %v3440 = vrot.slane %v3181, 6
  %v3441 = vsel %vm3363, %v3436, %v3440
  %v3442 = vrot.slane %v3182, 6
  %v3443 = vsel %vm3363, %v3438, %v3442
  %v3444 = vrot.slane %v3183, 6
  %v3445 = vsel %vm3363, %v3440, %v3444
  %v3446 = vrot.slane %v3184, 6
  %v3447 = vsel %vm3363, %v3442, %v3446
  %v3448 = vrot.slane %v3185, 6
  %v3449 = vsel %vm3363, %v3444, %v3448
  %v3450 = vrot.slane %v3186, 6
  %v3451 = vsel %vm3363, %v3446, %v3450
  %v3452 = vrot.slane %v3187, 6
  %v3453 = vsel %vm3363, %v3448, %v3452
  %v3454 = vrot.slane %v3188, 6
  %v3455 = vsel %vm3363, %v3450, %v3454
  %v3456 = vrot.slane %v3189, 6
  %v3457 = vsel %vm3363, %v3452, %v3456
  %v3458 = vrot.slane %v3190, 6
  %v3459 = vsel %vm3363, %v3454, %v3458
  %v3460 = vrot.slane %v3191, 6
  %v3461 = vsel %vm3363, %v3456, %v3460
  %v3462 = vrot.slane %v3192, 6
  %v3463 = vsel %vm3363, %v3458, %v3462
  %v3464 = vrot.slane %v3193, 6
  %v3465 = vsel %vm3363, %v3460, %v3464
  %v3466 = vrot.slane %v3194, 6
  %v3467 = vsel %vm3363, %v3462, %v3466
  %v3468 = vrot.slane %v3195, 6
  %v3469 = vsel %vm3363, %v3464, %v3468
  %v3470 = vrot.slane %v3196, 6
  %v3471 = vsel %vm3363, %v3466, %v3470
  %v3472 = vrot.slane %v3197, 6
  %v3473 = vsel %vm3363, %v3468, %v3472
  %v3474 = vrot.slane %v3198, 6
  %v3475 = vsel %vm3363, %v3470, %v3474
  %v3476 = vrot.slane %v3199, 6
  %v3477 = vsel %vm3363, %v3472, %v3476
  %v3478 = vrot.slane %v3200, 6
  %v3479 = vsel %vm3363, %v3474, %v3478
  %v3480 = vrot.slane %v3201, 6
  %v3481 = vsel %vm3363, %v3476, %v3480
  %v3482 = vrot.slane %v3202, 6
  %v3483 = vsel %vm3363, %v3478, %v3482
  %v3484 = vrot.slane %v3203, 6
  %v3485 = vsel %vm3363, %v3480, %v3484
  %v3486 = vrot.slane %v3204, 6
  %v3487 = vsel %vm3363, %v3482, %v3486
  %v3488 = vrot.slane %v3205, 6
  %v3489 = vsel %vm3363, %v3484, %v3488
  %v3490 = vrot.slane %v3206, 6
  %v3491 = vsel %vm3363, %v3486, %v3490
  %v3492 = vrot.slane %v3207, 6
  %v3493 = vsel %vm3363, %v3488, %v3492
  %v3494 = vrot.slane %v3208, 6
  %v3495 = vsel %vm3363, %v3490, %v3494
  %v3496 = vrot.slane %v3209, 6
  %v3497 = vsel %vm3363, %v3492, %v3496
  %v3498 = vrot.slane %v3210, 6
  %v3499 = vsel %vm3363, %v3494, %v3498
  %v3500 = vrot.slane %v3211, 6
  %v3501 = vsel %vm3363, %v3496, %v3500
  %v3502 = vrot.slane %v3212, 6
  %v3503 = vsel %vm3363, %v3498, %v3502
  %v3504 = vrot.slane %v3213, 6
  %v3505 = vsel %vm3363, %v3500, %v3504
  %v3506 = vrot.slane %v3214, 6
  %v3507 = vsel %vm3363, %v3502, %v3506
  %v3508 = vrot.slane %v3215, 6
  %v3509 = vsel %vm3363, %v3504, %v3508
  %v3510 = vrot.slane %v3216, 6
  %v3511 = vsel %vm3363, %v3506, %v3510
  %v3512 = vrot.slane %v3217, 6
  %v3513 = vsel %vm3363, %v3508, %v3512
  %v3514 = vrot.slane %v3218, 6
  %v3515 = vsel %vm3363, %v3510, %v3514
  %v3516 = vrot.slane %v3219, 6
  %v3517 = vsel %vm3363, %v3512, %v3516
  %v3518 = vrot.slane %v3220, 6
  %v3519 = vsel %vm3363, %v3514, %v3518
  %v3520 = vrot.slane %v3221, 6
  %v3521 = vsel %vm3363, %v3516, %v3520
  %v3522 = vrot.slane %v3222, 6
  %v3523 = vsel %vm3363, %v3518, %v3522
  %v3524 = vrot.slane %v3223, 6
  %v3525 = vsel %vm3363, %v3520, %v3524
  %v3526 = vrot.slane %v3224, 6
  %v3527 = vsel %vm3363, %v3522, %v3526
  %v3528 = vrot.slane %v3225, 6
  %v3529 = vsel %vm3363, %v3524, %v3528
  %v3530 = vrot.slane %v3226, 6
  %v3531 = vsel %vm3363, %v3526, %v3530
  %v3532 = vrot.slane %v3227, 6
  %v3533 = vsel %vm3363, %v3528, %v3532
  %v3534 = vrot.slane %v3228, 6
  %v3535 = vsel %vm3363, %v3530, %v3534
  %v3536 = vrot.slane %v3229, 6
  %v3537 = vsel %vm3363, %v3532, %v3536
  %v3538 = vrot.slane %v3230, 6
  %v3539 = vsel %vm3363, %v3534, %v3538
  %v3540 = vrot.slane %v3231, 6
  %v3541 = vsel %vm3363, %v3536, %v3540
  %v3542 = vrot.slane %v3232, 6
  %v3543 = vsel %vm3363, %v3538, %v3542
  %v3544 = vrot.slane %v3233, 6
  %v3545 = vsel %vm3363, %v3540, %v3544
  %v3546 = vrot.slane %v3234, 6
  %v3547 = vsel %vm3363, %v3542, %v3546
  %v3548 = vrot.slane %v3235, 6
  %v3549 = vsel %vm3363, %v3544, %v3548
  %v3550 = vrot.slane %v3236, 6
  %v3551 = vsel %vm3363, %v3546, %v3550
  %v3552 = vrot.slane %v3237, 6
  %v3553 = vsel %vm3363, %v3548, %v3552
  %v3554 = vrot.slane %v3238, 6
  %v3555 = vsel %vm3363, %v3550, %v3554
  %v3556 = vrot.slane %v3239, 6
  %v3557 = vsel %vm3363, %v3552, %v3556
  %v3558 = vrot.slane %v3240, 6
  %v3559 = vsel %vm3363, %v3554, %v3558
  %v3560 = vrot.slane %v3241, 6
  %v3561 = vsel %vm3363, %v3556, %v3560
  %v3611 = vsel %vm994, %v3369, 0
  %v3613 = vsel %vm994, %v3373, 0
  %v3615 = vsel %vm994, %v3377, 0
  %v3617 = vsel %vm994, %v3381, 0
  %v3619 = vsel %vm994, %v3385, 0
  %v3621 = vsel %vm994, %v3389, 0
  %v3623 = vsel %vm994, %v3393, 0
  %v3625 = vsel %vm994, %v3397, 0
  %v3627 = vsel %vm994, %v3401, 0
  %v3629 = vsel %vm994, %v3405, 0
  %v3631 = vsel %vm994, %v3409, 0
  %v3633 = vsel %vm994, %v3413, 0
  %v3635 = vsel %vm994, %v3417, 0
  %v3637 = vsel %vm994, %v3421, 0
  %v3639 = vsel %vm994, %v3425, 0
  %v3641 = vsel %vm994, %v3429, 0
  %v3643 = vsel %vm994, %v3433, 0
  %v3645 = vsel %vm994, %v3437, 0
  %v3647 = vsel %vm994, %v3441, 0
  %v3649 = vsel %vm994, %v3445, 0
  %v3651 = vsel %vm994, %v3449, 0
  %v3653 = vsel %vm994, %v3453, 0
  %v3655 = vsel %vm994, %v3457, 0
  %v3657 = vsel %vm994, %v3461, 0
  %v3659 = vsel %vm994, %v3465, 0
  %v3661 = vsel %vm994, %v3469, 0
  %v3663 = vsel %vm994, %v3473, 0
  %v3665 = vsel %vm994, %v3477, 0
  %v3667 = vsel %vm994, %v3481, 0
  %v3669 = vsel %vm994, %v3485, 0
  %v3671 = vsel %vm994, %v3489, 0
  %v3673 = vsel %vm994, %v3493, 0
  %v3675 = vsel %vm994, %v3497, 0
  %v3677 = vsel %vm994, %v3501, 0
  %v3679 = vsel %vm994, %v3505, 0
  %v3681 = vsel %vm994, %v3509, 0
  %v3683 = vsel %vm994, %v3513, 0
  %v3685 = vsel %vm994, %v3517, 0
  %v3687 = vsel %vm994, %v3521, 0
  %v3689 = vsel %vm994, %v3525, 0
  %v3691 = vsel %vm994, %v3529, 0
  %v3693 = vsel %vm994, %v3533, 0
  %v3695 = vsel %vm994, %v3537, 0
  %v3697 = vsel %vm994, %v3541, 0
  %v3699 = vsel %vm994, %v3545, 0
  %v3701 = vsel %vm994, %v3549, 0
  %v3703 = vsel %vm994, %v3553, 0
  %v3705 = vsel %vm994, %v3557, 0
  %v3707 = vsel %vm994, %v3561, 0
  %3709 = vmatprep.subr.mxu0 0.0
  %3710 = vmatpush1.msra.mxu0 %v3243
  %3711 = vmatprep.subr.mxu0 0.0
  %3712 = vmatpush1.msra.mxu0 %v3244
  %3713 = vmatprep.subr.mxu0 0.0
  %3714 = vmatpush1.msra.mxu0 %v3245
  %3715 = vmatprep.subr.mxu0 0.0
  %3716 = vmatpush1.msra.mxu0 %v3246
  %3717 = vmatprep.subr.mxu0 0.0
  %3718 = vmatpush1.msra.mxu0 %v3247
  %3719 = vmatprep.subr.mxu0 0.0
  %3720 = vmatpush1.msra.mxu0 %v3248
  %3721 = vmatprep.subr.mxu0 0.0
  %3722 = vmatpush1.msra.mxu0 %v3249
  %3723 = vmatprep.subr.mxu0 0.0
  %3724 = vmatpush1.msra.mxu0 %v3250
  %3725 = vmatprep.subr.mxu0 0.0
  %3726 = vmatpush1.msra.mxu0 %v3251
  %3727 = vmatprep.subr.mxu0 0.0
  %3728 = vmatpush1.msra.mxu0 %v3252
  %3729 = vmatprep.subr.mxu0 0.0
  %3730 = vmatpush1.msra.mxu0 %v3253
  %3731 = vmatprep.subr.mxu0 0.0
  %3732 = vmatpush1.msra.mxu0 %v3254
  %3733 = vmatprep.subr.mxu0 0.0
  %3734 = vmatpush1.msra.mxu0 %v3255
  %3735 = vmatprep.subr.mxu0 0.0
  %3736 = vmatpush1.msra.mxu0 %v3256
  %3737 = vmatprep.subr.mxu0 0.0
  %3738 = vmatpush1.msra.mxu0 %v3257
  %3739 = vmatprep.subr.mxu0 0.0
  %3740 = vmatpush1.msra.mxu0 %v3258
  %3741 = vmatprep.subr.mxu0 0.0
  %3742 = vmatpush1.msra.mxu0 %v3259
  %3743 = vmatprep.subr.mxu0 0.0
  %3744 = vmatpush1.msra.mxu0 %v3260
  %3745 = vmatprep.subr.mxu0 0.0
  %3746 = vmatpush1.msra.mxu0 %v3261
  %3747 = vmatprep.subr.mxu0 0.0
  %3748 = vmatpush1.msra.mxu0 %v3262
  %3749 = vmatprep.subr.mxu0 0.0
  %3750 = vmatpush1.msra.mxu0 0.0
  %3751 = vmatprep.subr.mxu0 0.0
  %3752 = vmatpush1.msra.mxu0 0.0
  %3753 = vmatprep.subr.mxu0 0.0
  %3754 = vmatpush1.msra.mxu0 0.0
  %3755 = vmatprep.subr.mxu0 0.0
  %3756 = vmatpush1.msra.mxu0 0.0
  %3757 = vmatprep.subr.mxu0 0.0
  %3758 = vmatpush1.msra.mxu0 0.0
  %3759 = vmatprep.subr.mxu0 0.0
  %3760 = vmatpush1.msra.mxu0 0.0
  %3761 = vmatprep.subr.mxu0 0.0
  %3762 = vmatpush1.msra.mxu0 0.0
  %3763 = vmatprep.subr.mxu0 0.0
  %3764 = vmatpush1.msra.mxu0 0.0
  %3765 = vmatprep.subr.mxu0 0.0
  %3766 = vmatpush1.msra.mxu0 0.0
  %3767 = vmatprep.subr.mxu0 0.0
  %3768 = vmatpush1.msra.mxu0 0.0
  %3769 = vmatprep.subr.mxu0 0.0
  %3770 = vmatpush1.msra.mxu0 0.0
  %3771 = vmatprep.subr.mxu0 0.0
  %3772 = vmatpush1.msra.mxu0 0.0
  %3773 = vmatprep.mubr.f32.mxu0 %v3611
  %3774 = vmatmul.mubr.f32.gmra.mrb[0].mxu0 %v3366
  %v3775 = vpop.f32.mrb[0].mxu0
  %v3776 = vadd.f32 0.0, %v3775
  %v3777 = vpop.f32.mrb[0].mxu0
  %3778 = vmatprep.mubr.f32.mxu0 %v3613
  %3779 = vmatmul.mubr.f32.gmra.mrb[0].mxu0 %v3371
  %v3780 = vpop.f32.mrb[0].mxu0
  %v3781 = vadd.f32 0.0, %v3780
  %v3782 = vpop.f32.mrb[0].mxu0
  %3783 = vmatprep.mubr.f32.mxu0 %v3615
  %3784 = vmatmul.mubr.f32.gmra.mrb[0].mxu0 %v3375
  %v3785 = vpop.f32.mrb[0].mxu0
  %v3786 = vadd.f32 0.0, %v3785
  %v3787 = vpop.f32.mrb[0].mxu0
  %3788 = vmatprep.mubr.f32.mxu0 %v3617
  %3789 = vmatmul.mubr.f32.gmra.mrb[0].mxu0 %v3379
  %v3790 = vpop.f32.mrb[0].mxu0
  %v3791 = vadd.f32 0.0, %v3790
  %v3792 = vpop.f32.mrb[0].mxu0
  %3793 = vmatprep.mubr.f32.mxu0 %v3619
  %3794 = vmatmul.mubr.f32.gmra.mrb[0].mxu0 %v3383
  %v3795 = vpop.f32.mrb[0].mxu0
  %v3796 = vadd.f32 0.0, %v3795
  %v3797 = vpop.f32.mrb[0].mxu0
  %3798 = vmatprep.mubr.f32.mxu0 %v3621
  %3799 = vmatmul.mubr.f32.gmra.mrb[0].mxu0 %v3387
  %v3800 = vpop.f32.mrb[0].mxu0
  %v3801 = vadd.f32 0.0, %v3800
  %v3802 = vpop.f32.mrb[0].mxu0
  %3803 = vmatprep.mubr.f32.mxu0 %v3623
  %3804 = vmatmul.mubr.f32.gmra.mrb[0].mxu0 %v3391
  %v3805 = vpop.f32.mrb[0].mxu0
  %v3806 = vadd.f32 0.0, %v3805
  %v3807 = vpop.f32.mrb[0].mxu0
  %3808 = vmatprep.mubr.f32.mxu0 %v3625
  %3809 = vmatmul.mubr.f32.gmra.mrb[0].mxu0 %v3395
  %v3810 = vpop.f32.mrb[0].mxu0
  %v3811 = vadd.f32 0.0, %v3810
  %v3812 = vpop.f32.mrb[0].mxu0
  %3813 = vmatprep.mubr.f32.mxu0 %v3627
  %3814 = vmatmul.mubr.f32.gmra.mrb[0].mxu0 %v3399
  %v3815 = vpop.f32.mrb[0].mxu0
  %v3816 = vadd.f32 0.0, %v3815
  %v3817 = vpop.f32.mrb[0].mxu0
  %3818 = vmatprep.mubr.f32.mxu0 %v3629
  %3819 = vmatmul.mubr.f32.gmra.mrb[0].mxu0 %v3403
  %v3820 = vpop.f32.mrb[0].mxu0
  %v3821 = vadd.f32 0.0, %v3820
  %v3822 = vpop.f32.mrb[0].mxu0
  %3823 = vmatprep.mubr.f32.mxu0 %v3631
  %3824 = vmatmul.mubr.f32.gmra.mrb[0].mxu0 %v3407
  %v3825 = vpop.f32.mrb[0].mxu0
  %v3826 = vadd.f32 0.0, %v3825
  %v3827 = vpop.f32.mrb[0].mxu0
  %3828 = vmatprep.mubr.f32.mxu0 %v3633
  %3829 = vmatmul.mubr.f32.gmra.mrb[0].mxu0 %v3411
  %v3830 = vpop.f32.mrb[0].mxu0
  %v3831 = vadd.f32 0.0, %v3830
  %v3832 = vpop.f32.mrb[0].mxu0
  %3833 = vmatprep.mubr.f32.mxu0 %v3635
  %3834 = vmatmul.mubr.f32.gmra.mrb[0].mxu0 %v3415
  %v3835 = vpop.f32.mrb[0].mxu0
  %v3836 = vadd.f32 0.0, %v3835
  %v3837 = vpop.f32.mrb[0].mxu0
  %3838 = vmatprep.mubr.f32.mxu0 %v3637
  %3839 = vmatmul.mubr.f32.gmra.mrb[0].mxu0 %v3419
  %v3840 = vpop.f32.mrb[0].mxu0
  %v3841 = vadd.f32 0.0, %v3840
  %v3842 = vpop.f32.mrb[0].mxu0
  %3843 = vmatprep.mubr.f32.mxu0 %v3639
  %3844 = vmatmul.mubr.f32.gmra.mrb[0].mxu0 %v3423
  %v3845 = vpop.f32.mrb[0].mxu0
  %v3846 = vadd.f32 0.0, %v3845
  %v3847 = vpop.f32.mrb[0].mxu0
  %3848 = vmatprep.mubr.f32.mxu0 %v3641
  %3849 = vmatmul.mubr.f32.gmra.mrb[0].mxu0 %v3427
  %v3850 = vpop.f32.mrb[0].mxu0
  %v3851 = vadd.f32 0.0, %v3850
  %v3852 = vpop.f32.mrb[0].mxu0
  %3853 = vmatprep.mubr.f32.mxu0 %v3643
  %3854 = vmatmul.mubr.f32.gmra.mrb[0].mxu0 %v3431
  %v3855 = vpop.f32.mrb[0].mxu0
  %v3856 = vadd.f32 0.0, %v3855
  %v3857 = vpop.f32.mrb[0].mxu0
  %3858 = vmatprep.mubr.f32.mxu0 %v3645
  %3859 = vmatmul.mubr.f32.gmra.mrb[0].mxu0 %v3435
  %v3860 = vpop.f32.mrb[0].mxu0
  %v3861 = vadd.f32 0.0, %v3860
  %v3862 = vpop.f32.mrb[0].mxu0
  %3863 = vmatprep.mubr.f32.mxu0 %v3647
  %3864 = vmatmul.mubr.f32.gmra.mrb[0].mxu0 %v3439
  %v3865 = vpop.f32.mrb[0].mxu0
  %v3866 = vadd.f32 0.0, %v3865
  %v3867 = vpop.f32.mrb[0].mxu0
  %3868 = vmatprep.mubr.f32.mxu0 %v3649
  %3869 = vmatmul.mubr.f32.gmra.mrb[0].mxu0 %v3443
  %v3870 = vpop.f32.mrb[0].mxu0
  %v3871 = vadd.f32 0.0, %v3870
  %v3872 = vpop.f32.mrb[0].mxu0
  %3873 = vmatprep.mubr.f32.mxu0 %v3651
  %3874 = vmatmul.mubr.f32.gmra.mrb[0].mxu0 %v3447
  %v3875 = vpop.f32.mrb[0].mxu0
  %v3876 = vadd.f32 0.0, %v3875
  %v3877 = vpop.f32.mrb[0].mxu0
  %3878 = vmatprep.mubr.f32.mxu0 %v3653
  %3879 = vmatmul.mubr.f32.gmra.mrb[0].mxu0 %v3451
  %v3880 = vpop.f32.mrb[0].mxu0
  %v3881 = vadd.f32 0.0, %v3880
  %v3882 = vpop.f32.mrb[0].mxu0
  %3883 = vmatprep.mubr.f32.mxu0 %v3655
  %3884 = vmatmul.mubr.f32.gmra.mrb[0].mxu0 %v3455
  %v3885 = vpop.f32.mrb[0].mxu0
  %v3886 = vadd.f32 0.0, %v3885
  %v3887 = vpop.f32.mrb[0].mxu0
  %3888 = vmatprep.mubr.f32.mxu0 %v3657
  %3889 = vmatmul.mubr.f32.gmra.mrb[0].mxu0 %v3459
  %v3890 = vpop.f32.mrb[0].mxu0
  %v3891 = vadd.f32 0.0, %v3890
  %v3892 = vpop.f32.mrb[0].mxu0
  %3893 = vmatprep.mubr.f32.mxu0 %v3659
  %3894 = vmatmul.mubr.f32.gmra.mrb[0].mxu0 %v3463
  %v3895 = vpop.f32.mrb[0].mxu0
  %v3896 = vadd.f32 0.0, %v3895
  %v3897 = vpop.f32.mrb[0].mxu0
  %3898 = vmatprep.mubr.f32.mxu0 %v3661
  %3899 = vmatmul.mubr.f32.gmra.mrb[0].mxu0 %v3467
  %v3900 = vpop.f32.mrb[0].mxu0
  %v3901 = vadd.f32 0.0, %v3900
  %v3902 = vpop.f32.mrb[0].mxu0
  %3903 = vmatprep.mubr.f32.mxu0 %v3663
  %3904 = vmatmul.mubr.f32.gmra.mrb[0].mxu0 %v3471
  %v3905 = vpop.f32.mrb[0].mxu0
  %v3906 = vadd.f32 0.0, %v3905
  %v3907 = vpop.f32.mrb[0].mxu0
  %3908 = vmatprep.mubr.f32.mxu0 %v3665
  %3909 = vmatmul.mubr.f32.gmra.mrb[0].mxu0 %v3475
  %v3910 = vpop.f32.mrb[0].mxu0
  %v3911 = vadd.f32 0.0, %v3910
  %v3912 = vpop.f32.mrb[0].mxu0
  %3913 = vmatprep.mubr.f32.mxu0 %v3667
  %3914 = vmatmul.mubr.f32.gmra.mrb[0].mxu0 %v3479
  %v3915 = vpop.f32.mrb[0].mxu0
  %v3916 = vadd.f32 0.0, %v3915
  %v3917 = vpop.f32.mrb[0].mxu0
  %3918 = vmatprep.mubr.f32.mxu0 %v3669
  %3919 = vmatmul.mubr.f32.gmra.mrb[0].mxu0 %v3483
  %v3920 = vpop.f32.mrb[0].mxu0
  %v3921 = vadd.f32 0.0, %v3920
  %v3922 = vpop.f32.mrb[0].mxu0
  %3923 = vmatprep.mubr.f32.mxu0 %v3671
  %3924 = vmatmul.mubr.f32.gmra.mrb[0].mxu0 %v3487
  %v3925 = vpop.f32.mrb[0].mxu0
  %v3926 = vadd.f32 0.0, %v3925
  %v3927 = vpop.f32.mrb[0].mxu0
  %3928 = vmatprep.mubr.f32.mxu0 %v3673
  %3929 = vmatmul.mubr.f32.gmra.mrb[0].mxu0 %v3491
  %v3930 = vpop.f32.mrb[0].mxu0
  %v3931 = vadd.f32 0.0, %v3930
  %v3932 = vpop.f32.mrb[0].mxu0
  %3933 = vmatprep.mubr.f32.mxu0 %v3675
  %3934 = vmatmul.mubr.f32.gmra.mrb[0].mxu0 %v3495
  %v3935 = vpop.f32.mrb[0].mxu0
  %v3936 = vadd.f32 0.0, %v3935
  %v3937 = vpop.f32.mrb[0].mxu0
  %3938 = vmatprep.mubr.f32.mxu0 %v3677
  %3939 = vmatmul.mubr.f32.gmra.mrb[0].mxu0 %v3499
  %v3940 = vpop.f32.mrb[0].mxu0
  %v3941 = vadd.f32 0.0, %v3940
  %v3942 = vpop.f32.mrb[0].mxu0
  %3943 = vmatprep.mubr.f32.mxu0 %v3679
  %3944 = vmatmul.mubr.f32.gmra.mrb[0].mxu0 %v3503
  %v3945 = vpop.f32.mrb[0].mxu0
  %v3946 = vadd.f32 0.0, %v3945
  %v3947 = vpop.f32.mrb[0].mxu0
  %3948 = vmatprep.mubr.f32.mxu0 %v3681
  %3949 = vmatmul.mubr.f32.gmra.mrb[0].mxu0 %v3507
  %v3950 = vpop.f32.mrb[0].mxu0
  %v3951 = vadd.f32 0.0, %v3950
  %v3952 = vpop.f32.mrb[0].mxu0
  %3953 = vmatprep.mubr.f32.mxu0 %v3683
  %3954 = vmatmul.mubr.f32.gmra.mrb[0].mxu0 %v3511
  %v3955 = vpop.f32.mrb[0].mxu0
  %v3956 = vadd.f32 0.0, %v3955
  %v3957 = vpop.f32.mrb[0].mxu0
  %3958 = vmatprep.mubr.f32.mxu0 %v3685
  %3959 = vmatmul.mubr.f32.gmra.mrb[0].mxu0 %v3515
  %v3960 = vpop.f32.mrb[0].mxu0
  %v3961 = vadd.f32 0.0, %v3960
  %v3962 = vpop.f32.mrb[0].mxu0
  %3963 = vmatprep.mubr.f32.mxu0 %v3687
  %3964 = vmatmul.mubr.f32.gmra.mrb[0].mxu0 %v3519
  %v3965 = vpop.f32.mrb[0].mxu0
  %v3966 = vadd.f32 0.0, %v3965
  %v3967 = vpop.f32.mrb[0].mxu0
  %3968 = vmatprep.mubr.f32.mxu0 %v3689
  %3969 = vmatmul.mubr.f32.gmra.mrb[0].mxu0 %v3523
  %v3970 = vpop.f32.mrb[0].mxu0
  %v3971 = vadd.f32 0.0, %v3970
  %v3972 = vpop.f32.mrb[0].mxu0
  %3973 = vmatprep.mubr.f32.mxu0 %v3691
  %3974 = vmatmul.mubr.f32.gmra.mrb[0].mxu0 %v3527
  %v3975 = vpop.f32.mrb[0].mxu0
  %v3976 = vadd.f32 0.0, %v3975
  %v3977 = vpop.f32.mrb[0].mxu0
  %3978 = vmatprep.mubr.f32.mxu0 %v3693
  %3979 = vmatmul.mubr.f32.gmra.mrb[0].mxu0 %v3531
  %v3980 = vpop.f32.mrb[0].mxu0
  %v3981 = vadd.f32 0.0, %v3980
  %v3982 = vpop.f32.mrb[0].mxu0
  %3983 = vmatprep.mubr.f32.mxu0 %v3695
  %3984 = vmatmul.mubr.f32.gmra.mrb[0].mxu0 %v3535
  %v3985 = vpop.f32.mrb[0].mxu0
  %v3986 = vadd.f32 0.0, %v3985
  %v3987 = vpop.f32.mrb[0].mxu0
  %3988 = vmatprep.mubr.f32.mxu0 %v3697
  %3989 = vmatmul.mubr.f32.gmra.mrb[0].mxu0 %v3539
  %v3990 = vpop.f32.mrb[0].mxu0
  %v3991 = vadd.f32 0.0, %v3990
  %v3992 = vpop.f32.mrb[0].mxu0
  %3993 = vmatprep.mubr.f32.mxu0 %v3699
  %3994 = vmatmul.mubr.f32.gmra.mrb[0].mxu0 %v3543
  %v3995 = vpop.f32.mrb[0].mxu0
  %v3996 = vadd.f32 0.0, %v3995
  %v3997 = vpop.f32.mrb[0].mxu0
  %3998 = vmatprep.mubr.f32.mxu0 %v3701
  %3999 = vmatmul.mubr.f32.gmra.mrb[0].mxu0 %v3547
  %v4000 = vpop.f32.mrb[0].mxu0
  %v4001 = vadd.f32 0.0, %v4000
  %v4002 = vpop.f32.mrb[0].mxu0
  %4003 = vmatprep.mubr.f32.mxu0 %v3703
  %4004 = vmatmul.mubr.f32.gmra.mrb[0].mxu0 %v3551
  %v4005 = vpop.f32.mrb[0].mxu0
  %v4006 = vadd.f32 0.0, %v4005
  %v4007 = vpop.f32.mrb[0].mxu0
  %4008 = vmatprep.mubr.f32.mxu0 %v3705
  %4009 = vmatmul.mubr.f32.gmra.mrb[0].mxu0 %v3555
  %v4010 = vpop.f32.mrb[0].mxu0
  %v4011 = vadd.f32 0.0, %v4010
  %v4012 = vpop.f32.mrb[0].mxu0
  %4013 = vmatprep.mubr.f32.mxu0 %v3707
  %4014 = vmatmul.mubr.f32.gmra.mrb[0].mxu0 %v3559
  %v4015 = vpop.f32.mrb[0].mxu0
  %v4016 = vadd.f32 0.0, %v4015
  %v4017 = vpop.f32.mrb[0].mxu0
  %4018 = vdwg.mxu0
  %v4019 = vadd.f32 %v3093, %v3776
  %v4020 = vadd.f32 %v3094, %v3781
  %v4021 = vadd.f32 %v3095, %v3786
  %v4022 = vadd.f32 %v3096, %v3791
  %v4023 = vadd.f32 %v3097, %v3796
  %v4024 = vadd.f32 %v3098, %v3801
  %v4025 = vadd.f32 %v3099, %v3806
  %v4026 = vadd.f32 %v3100, %v3811
  %v4027 = vadd.f32 %v3101, %v3816
  %v4028 = vadd.f32 %v3102, %v3821
  %v4029 = vadd.f32 %v3103, %v3826
  %v4030 = vadd.f32 %v3104, %v3831
  %v4031 = vadd.f32 %v3105, %v3836
  %v4032 = vadd.f32 %v3106, %v3841
  %v4033 = vadd.f32 %v3107, %v3846
  %v4034 = vadd.f32 %v3108, %v3851
  %v4035 = vadd.f32 %v3109, %v3856
  %v4036 = vadd.f32 %v3110, %v3861
  %v4037 = vadd.f32 %v3111, %v3866
  %v4038 = vadd.f32 %v3112, %v3871
  %v4039 = vadd.f32 %v3113, %v3876
  %v4040 = vadd.f32 %v3114, %v3881
  %v4041 = vadd.f32 %v3115, %v3886
  %v4042 = vadd.f32 %v3116, %v3891
  %v4043 = vadd.f32 %v3117, %v3896
  %v4044 = vadd.f32 %v3118, %v3901
  %v4045 = vadd.f32 %v3119, %v3906
  %v4046 = vadd.f32 %v3120, %v3911
  %v4047 = vadd.f32 %v3121, %v3916
  %v4048 = vadd.f32 %v3122, %v3921
  %v4049 = vadd.f32 %v3123, %v3926
  %v4050 = vadd.f32 %v3124, %v3931
  %v4051 = vadd.f32 %v3125, %v3936
  %v4052 = vadd.f32 %v3126, %v3941
  %v4053 = vadd.f32 %v3127, %v3946
  %v4054 = vadd.f32 %v3128, %v3951
  %v4055 = vadd.f32 %v3129, %v3956
  %v4056 = vadd.f32 %v3130, %v3961
  %v4057 = vadd.f32 %v3131, %v3966
  %v4058 = vadd.f32 %v3132, %v3971
  %v4059 = vadd.f32 %v3133, %v3976
  %v4060 = vadd.f32 %v3134, %v3981
  %v4061 = vadd.f32 %v3135, %v3986
  %v4062 = vadd.f32 %v3136, %v3991
  %v4063 = vadd.f32 %v3137, %v3996
  %v4064 = vadd.f32 %v3138, %v4001
  %v4065 = vadd.f32 %v3139, %v4006
  %v4066 = vadd.f32 %v3140, %v4011
  %v4067 = vadd.f32 %v3141, %v4016
  %v4068 = vld [vmem:[#allocation2 + $0x10] sm:$0x80]
  %v4069 = vld [vmem:[#allocation2 + $0x18] sm:$0x80]
  %v4070 = vld [vmem:[#allocation2 + $0x320] sm:$0x7f]
  %v4071 = vld [vmem:[#allocation2 + $0x328] sm:$0x7f]
  %s4072 = scalar_lea.vmem %s5, 640
  %v4073 = vld [vmem:[%s4072] sm:$0xff]
  %v4074 = vld [vmem:[%s4072 + $0x8] sm:$0xff]
  %v4075 = vld [vmem:[%s4072 + $0x10] sm:$0xff]
  %v4076 = vld [vmem:[%s4072 + $0x18] sm:$0xff]
  %v4077 = vld [vmem:[%s4072 + $0x20] sm:$0xff]
  %v4078 = vld [vmem:[%s4072 + $0x28] sm:$0xff]
  %v4079 = vld [vmem:[%s4072 + $0x30] sm:$0xff]
  %v4080 = vld [vmem:[%s4072 + $0x38] sm:$0xff]
  %v4081 = vld [vmem:[%s4072 + $0x40] sm:$0xff]
  %v4082 = vld [vmem:[%s4072 + $0x48] sm:$0xff]
  %v4083 = vld [vmem:[%s4072 + $0x50] sm:$0xff]
  %v4084 = vld [vmem:[%s4072 + $0x58] sm:$0xff]
  %v4085 = vld [vmem:[%s4072 + $0x60] sm:$0xff]
  %v4086 = vld [vmem:[%s4072 + $0x68] sm:$0xff]
  %v4087 = vld [vmem:[%s4072 + $0x70] sm:$0xff]
  %v4088 = vld [vmem:[%s4072 + $0x78] sm:$0xff]
  %v4089 = vld [vmem:[%s4072 + $0x80] sm:$0xff]
  %v4090 = vld [vmem:[%s4072 + $0x88] sm:$0xff]
  %v4091 = vld [vmem:[%s4072 + $0x90] sm:$0xff]
  %v4092 = vld [vmem:[%s4072 + $0x98] sm:$0xff]
  %v4097 = vrot.slane %v4068, 7
  %v4098 = vrot.slane %v3144, 7
  %v4099 = vsel %vm261, %v4097, %v4098
  %v4100 = vrot.slane %v4069, 7
  %v4101 = vrot.slane %v3145, 7
  %v4102 = vsel %vm261, %v4100, %v4101
  %v4103 = vrot.slane %v3146, 7
  %v4104 = vsel %vm261, %v4098, %v4103
  %v4105 = vrot.slane %v3147, 7
  %v4106 = vsel %vm261, %v4101, %v4105
  %v4107 = vrot.slane %v3148, 7
  %v4108 = vsel %vm261, %v4103, %v4107
  %v4109 = vrot.slane %v3149, 7
  %v4110 = vsel %vm261, %v4105, %v4109
  %v4111 = vrot.slane %v3150, 7
  %v4112 = vsel %vm261, %v4107, %v4111
  %v4113 = vrot.slane %v3151, 7
  %v4114 = vsel %vm261, %v4109, %v4113
  %v4115 = vrot.slane %v3152, 7
  %v4116 = vsel %vm261, %v4111, %v4115
  %v4117 = vrot.slane %v3153, 7
  %v4118 = vsel %vm261, %v4113, %v4117
  %v4119 = vrot.slane %v3154, 7
  %v4120 = vsel %vm261, %v4115, %v4119
  %v4121 = vrot.slane %v3155, 7
  %v4122 = vsel %vm261, %v4117, %v4121
  %v4123 = vrot.slane %v3156, 7
  %v4124 = vsel %vm261, %v4119, %v4123
  %v4125 = vrot.slane %v3157, 7
  %v4126 = vsel %vm261, %v4121, %v4125
  %v4127 = vrot.slane %v3158, 7
  %v4128 = vsel %vm261, %v4123, %v4127
  %v4129 = vrot.slane %v3159, 7
  %v4130 = vsel %vm261, %v4125, %v4129
  %v4131 = vrot.slane %v3160, 7
  %v4132 = vsel %vm261, %v4127, %v4131
  %v4133 = vrot.slane %v3161, 7
  %v4134 = vsel %vm261, %v4129, %v4133
  %v4135 = vrot.slane %v3162, 7
  %v4136 = vsel %vm261, %v4131, %v4135
  %v4137 = vrot.slane %v3163, 7
  %v4138 = vsel %vm261, %v4133, %v4137
  %v4139 = vrot.slane %v3164, 7
  %v4140 = vsel %vm261, %v4135, %v4139
  %v4141 = vrot.slane %v3165, 7
  %v4142 = vsel %vm261, %v4137, %v4141
  %v4143 = vrot.slane %v3166, 7
  %v4144 = vsel %vm261, %v4139, %v4143
  %v4145 = vrot.slane %v3167, 7
  %v4146 = vsel %vm261, %v4141, %v4145
  %v4147 = vrot.slane %v3168, 7
  %v4148 = vsel %vm261, %v4143, %v4147
  %v4149 = vrot.slane %v3169, 7
  %v4150 = vsel %vm261, %v4145, %v4149
  %v4151 = vrot.slane %v3170, 7
  %v4152 = vsel %vm261, %v4147, %v4151
  %v4153 = vrot.slane %v3171, 7
  %v4154 = vsel %vm261, %v4149, %v4153
  %v4155 = vrot.slane %v3172, 7
  %v4156 = vsel %vm261, %v4151, %v4155
  %v4157 = vrot.slane %v3173, 7
  %v4158 = vsel %vm261, %v4153, %v4157
  %v4159 = vrot.slane %v3174, 7
  %v4160 = vsel %vm261, %v4155, %v4159
  %v4161 = vrot.slane %v3175, 7
  %v4162 = vsel %vm261, %v4157, %v4161
  %v4163 = vrot.slane %v3176, 7
  %v4164 = vsel %vm261, %v4159, %v4163
  %v4165 = vrot.slane %v3177, 7
  %v4166 = vsel %vm261, %v4161, %v4165
  %v4167 = vrot.slane %v3178, 7
  %v4168 = vsel %vm261, %v4163, %v4167
  %v4169 = vrot.slane %v3179, 7
  %v4170 = vsel %vm261, %v4165, %v4169
  %v4171 = vrot.slane %v3180, 7
  %v4172 = vsel %vm261, %v4167, %v4171
  %v4173 = vrot.slane %v3181, 7
  %v4174 = vsel %vm261, %v4169, %v4173
  %v4175 = vrot.slane %v3182, 7
  %v4176 = vsel %vm261, %v4171, %v4175
  %v4177 = vrot.slane %v3183, 7
  %v4178 = vsel %vm261, %v4173, %v4177
  %v4179 = vrot.slane %v3184, 7
  %v4180 = vsel %vm261, %v4175, %v4179
  %v4181 = vrot.slane %v3185, 7
  %v4182 = vsel %vm261, %v4177, %v4181
  %v4183 = vrot.slane %v3186, 7
  %v4184 = vsel %vm261, %v4179, %v4183
  %v4185 = vrot.slane %v3187, 7
  %v4186 = vsel %vm261, %v4181, %v4185
  %v4187 = vrot.slane %v3188, 7
  %v4188 = vsel %vm261, %v4183, %v4187
  %v4189 = vrot.slane %v3189, 7
  %v4190 = vsel %vm261, %v4185, %v4189
  %v4191 = vrot.slane %v3190, 7
  %v4192 = vsel %vm261, %v4187, %v4191
  %v4193 = vrot.slane %v3191, 7
  %v4194 = vsel %vm261, %v4189, %v4193
  %v4195 = vrot.slane %v3192, 7
  %v4196 = vsel %vm261, %v4191, %v4195
  %v4197 = vrot.slane %v3193, 7
  %v4198 = vsel %vm261, %v4193, %v4197
  %v4199 = vrot.slane %v3194, 7
  %v4200 = vsel %vm261, %v4195, %v4199
  %v4201 = vrot.slane %v3195, 7
  %v4202 = vsel %vm261, %v4197, %v4201
  %v4203 = vrot.slane %v3196, 7
  %v4204 = vsel %vm261, %v4199, %v4203
  %v4205 = vrot.slane %v3197, 7
  %v4206 = vsel %vm261, %v4201, %v4205
  %v4207 = vrot.slane %v3198, 7
  %v4208 = vsel %vm261, %v4203, %v4207
  %v4209 = vrot.slane %v3199, 7
  %v4210 = vsel %vm261, %v4205, %v4209
  %v4211 = vrot.slane %v3200, 7
  %v4212 = vsel %vm261, %v4207, %v4211
  %v4213 = vrot.slane %v3201, 7
  %v4214 = vsel %vm261, %v4209, %v4213
  %v4215 = vrot.slane %v3202, 7
  %v4216 = vsel %vm261, %v4211, %v4215
  %v4217 = vrot.slane %v3203, 7
  %v4218 = vsel %vm261, %v4213, %v4217
  %v4219 = vrot.slane %v3204, 7
  %v4220 = vsel %vm261, %v4215, %v4219
  %v4221 = vrot.slane %v3205, 7
  %v4222 = vsel %vm261, %v4217, %v4221
  %v4223 = vrot.slane %v3206, 7
  %v4224 = vsel %vm261, %v4219, %v4223
  %v4225 = vrot.slane %v3207, 7
  %v4226 = vsel %vm261, %v4221, %v4225
  %v4227 = vrot.slane %v3208, 7
  %v4228 = vsel %vm261, %v4223, %v4227
  %v4229 = vrot.slane %v3209, 7
  %v4230 = vsel %vm261, %v4225, %v4229
  %v4231 = vrot.slane %v3210, 7
  %v4232 = vsel %vm261, %v4227, %v4231
  %v4233 = vrot.slane %v3211, 7
  %v4234 = vsel %vm261, %v4229, %v4233
  %v4235 = vrot.slane %v3212, 7
  %v4236 = vsel %vm261, %v4231, %v4235
  %v4237 = vrot.slane %v3213, 7
  %v4238 = vsel %vm261, %v4233, %v4237
  %v4239 = vrot.slane %v3214, 7
  %v4240 = vsel %vm261, %v4235, %v4239
  %v4241 = vrot.slane %v3215, 7
  %v4242 = vsel %vm261, %v4237, %v4241
  %v4243 = vrot.slane %v3216, 7
  %v4244 = vsel %vm261, %v4239, %v4243
  %v4245 = vrot.slane %v3217, 7
  %v4246 = vsel %vm261, %v4241, %v4245
  %v4247 = vrot.slane %v3218, 7
  %v4248 = vsel %vm261, %v4243, %v4247
  %v4249 = vrot.slane %v3219, 7
  %v4250 = vsel %vm261, %v4245, %v4249
  %v4251 = vrot.slane %v3220, 7
  %v4252 = vsel %vm261, %v4247, %v4251
  %v4253 = vrot.slane %v3221, 7
  %v4254 = vsel %vm261, %v4249, %v4253
  %v4255 = vrot.slane %v3222, 7
  %v4256 = vsel %vm261, %v4251, %v4255
  %v4257 = vrot.slane %v3223, 7
  %v4258 = vsel %vm261, %v4253, %v4257
  %v4259 = vrot.slane %v3224, 7
  %v4260 = vsel %vm261, %v4255, %v4259
  %v4261 = vrot.slane %v3225, 7
  %v4262 = vsel %vm261, %v4257, %v4261
  %v4263 = vrot.slane %v3226, 7
  %v4264 = vsel %vm261, %v4259, %v4263
  %v4265 = vrot.slane %v3227, 7
  %v4266 = vsel %vm261, %v4261, %v4265
  %v4267 = vrot.slane %v3228, 7
  %v4268 = vsel %vm261, %v4263, %v4267
  %v4269 = vrot.slane %v3229, 7
  %v4270 = vsel %vm261, %v4265, %v4269
  %v4271 = vrot.slane %v3230, 7
  %v4272 = vsel %vm261, %v4267, %v4271
  %v4273 = vrot.slane %v3231, 7
  %v4274 = vsel %vm261, %v4269, %v4273
  %v4275 = vrot.slane %v3232, 7
  %v4276 = vsel %vm261, %v4271, %v4275
  %v4277 = vrot.slane %v3233, 7
  %v4278 = vsel %vm261, %v4273, %v4277
  %v4279 = vrot.slane %v3234, 7
  %v4280 = vsel %vm261, %v4275, %v4279
  %v4281 = vrot.slane %v3235, 7
  %v4282 = vsel %vm261, %v4277, %v4281
  %v4283 = vrot.slane %v3236, 7
  %v4284 = vsel %vm261, %v4279, %v4283
  %v4285 = vrot.slane %v3237, 7
  %v4286 = vsel %vm261, %v4281, %v4285
  %v4287 = vrot.slane %v3238, 7
  %v4288 = vsel %vm261, %v4283, %v4287
  %v4289 = vrot.slane %v3239, 7
  %v4290 = vsel %vm261, %v4285, %v4289
  %v4291 = vrot.slane %v4070, 7
  %v4292 = vsel %vm261, %v4287, %v4291
  %v4293 = vrot.slane %v4071, 7
  %v4294 = vsel %vm261, %v4289, %v4293
  %v4344 = vsel %vm994, %v4102, 0
  %v4346 = vsel %vm994, %v4106, 0
  %v4348 = vsel %vm994, %v4110, 0
  %v4350 = vsel %vm994, %v4114, 0
  %v4352 = vsel %vm994, %v4118, 0
  %v4354 = vsel %vm994, %v4122, 0
  %v4356 = vsel %vm994, %v4126, 0
  %v4358 = vsel %vm994, %v4130, 0
  %v4360 = vsel %vm994, %v4134, 0
  %v4362 = vsel %vm994, %v4138, 0
  %v4364 = vsel %vm994, %v4142, 0
  %v4366 = vsel %vm994, %v4146, 0
  %v4368 = vsel %vm994, %v4150, 0
  %v4370 = vsel %vm994, %v4154, 0
  %v4372 = vsel %vm994, %v4158, 0
  %v4374 = vsel %vm994, %v4162, 0
  %v4376 = vsel %vm994, %v4166, 0
  %v4378 = vsel %vm994, %v4170, 0
  %v4380 = vsel %vm994, %v4174, 0
  %v4382 = vsel %vm994, %v4178, 0
  %v4384 = vsel %vm994, %v4182, 0
  %v4386 = vsel %vm994, %v4186, 0
  %v4388 = vsel %vm994, %v4190, 0
  %v4390 = vsel %vm994, %v4194, 0
  %v4392 = vsel %vm994, %v4198, 0
  %v4394 = vsel %vm994, %v4202, 0
  %v4396 = vsel %vm994, %v4206, 0
  %v4398 = vsel %vm994, %v4210, 0
  %v4400 = vsel %vm994, %v4214, 0
  %v4402 = vsel %vm994, %v4218, 0
  %v4404 = vsel %vm994, %v4222, 0
  %v4406 = vsel %vm994, %v4226, 0
  %v4408 = vsel %vm994, %v4230, 0
  %v4410 = vsel %vm994, %v4234, 0
  %v4412 = vsel %vm994, %v4238, 0
  %v4414 = vsel %vm994, %v4242, 0
  %v4416 = vsel %vm994, %v4246, 0
  %v4418 = vsel %vm994, %v4250, 0
  %v4420 = vsel %vm994, %v4254, 0
  %v4422 = vsel %vm994, %v4258, 0
  %v4424 = vsel %vm994, %v4262, 0
  %v4426 = vsel %vm994, %v4266, 0
  %v4428 = vsel %vm994, %v4270, 0
  %v4430 = vsel %vm994, %v4274, 0
  %v4432 = vsel %vm994, %v4278, 0
  %v4434 = vsel %vm994, %v4282, 0
  %v4436 = vsel %vm994, %v4286, 0
  %v4438 = vsel %vm994, %v4290, 0
  %v4440 = vsel %vm994, %v4294, 0
  %4442 = vmatprep.subr.mxu0 0.0
  %4443 = vmatpush1.msra.mxu0 %v4073
  %4444 = vmatprep.subr.mxu0 0.0
  %4445 = vmatpush1.msra.mxu0 %v4074
  %4446 = vmatprep.subr.mxu0 0.0
  %4447 = vmatpush1.msra.mxu0 %v4075
  %4448 = vmatprep.subr.mxu0 0.0
  %4449 = vmatpush1.msra.mxu0 %v4076
  %4450 = vmatprep.subr.mxu0 0.0
  %4451 = vmatpush1.msra.mxu0 %v4077
  %4452 = vmatprep.subr.mxu0 0.0
  %4453 = vmatpush1.msra.mxu0 %v4078
  %4454 = vmatprep.subr.mxu0 0.0
  %4455 = vmatpush1.msra.mxu0 %v4079
  %4456 = vmatprep.subr.mxu0 0.0
  %4457 = vmatpush1.msra.mxu0 %v4080
  %4458 = vmatprep.subr.mxu0 0.0
  %4459 = vmatpush1.msra.mxu0 %v4081
  %4460 = vmatprep.subr.mxu0 0.0
  %4461 = vmatpush1.msra.mxu0 %v4082
  %4462 = vmatprep.subr.mxu0 0.0
  %4463 = vmatpush1.msra.mxu0 %v4083
  %4464 = vmatprep.subr.mxu0 0.0
  %4465 = vmatpush1.msra.mxu0 %v4084
  %4466 = vmatprep.subr.mxu0 0.0
  %4467 = vmatpush1.msra.mxu0 %v4085
  %4468 = vmatprep.subr.mxu0 0.0
  %4469 = vmatpush1.msra.mxu0 %v4086
  %4470 = vmatprep.subr.mxu0 0.0
  %4471 = vmatpush1.msra.mxu0 %v4087
  %4472 = vmatprep.subr.mxu0 0.0
  %4473 = vmatpush1.msra.mxu0 %v4088
  %4474 = vmatprep.subr.mxu0 0.0
  %4475 = vmatpush1.msra.mxu0 %v4089
  %4476 = vmatprep.subr.mxu0 0.0
  %4477 = vmatpush1.msra.mxu0 %v4090
  %4478 = vmatprep.subr.mxu0 0.0
  %4479 = vmatpush1.msra.mxu0 %v4091
  %4480 = vmatprep.subr.mxu0 0.0
  %4481 = vmatpush1.msra.mxu0 %v4092
  %4482 = vmatprep.subr.mxu0 0.0
  %4483 = vmatpush1.msra.mxu0 0.0
  %4484 = vmatprep.subr.mxu0 0.0
  %4485 = vmatpush1.msra.mxu0 0.0
  %4486 = vmatprep.subr.mxu0 0.0
  %4487 = vmatpush1.msra.mxu0 0.0
  %4488 = vmatprep.subr.mxu0 0.0
  %4489 = vmatpush1.msra.mxu0 0.0
  %4490 = vmatprep.subr.mxu0 0.0
  %4491 = vmatpush1.msra.mxu0 0.0
  %4492 = vmatprep.subr.mxu0 0.0
  %4493 = vmatpush1.msra.mxu0 0.0
  %4494 = vmatprep.subr.mxu0 0.0
  %4495 = vmatpush1.msra.mxu0 0.0
  %4496 = vmatprep.subr.mxu0 0.0
  %4497 = vmatpush1.msra.mxu0 0.0
  %4498 = vmatprep.subr.mxu0 0.0
  %4499 = vmatpush1.msra.mxu0 0.0
  %4500 = vmatprep.subr.mxu0 0.0
  %4501 = vmatpush1.msra.mxu0 0.0
  %4502 = vmatprep.subr.mxu0 0.0
  %4503 = vmatpush1.msra.mxu0 0.0
  %4504 = vmatprep.subr.mxu0 0.0
  %4505 = vmatpush1.msra.mxu0 0.0
  %4506 = vmatprep.mubr.f32.mxu0 %v4344
  %4507 = vmatmul.mubr.f32.gmra.mrb[0].mxu0 %v4099
  %v4508 = vpop.f32.mrb[0].mxu0
  %v4509 = vadd.f32 0.0, %v4508
  %v4510 = vpop.f32.mrb[0].mxu0
  %4511 = vmatprep.mubr.f32.mxu0 %v4346
  %4512 = vmatmul.mubr.f32.gmra.mrb[0].mxu0 %v4104
  %v4513 = vpop.f32.mrb[0].mxu0
  %v4514 = vadd.f32 0.0, %v4513
  %v4515 = vpop.f32.mrb[0].mxu0
  %4516 = vmatprep.mubr.f32.mxu0 %v4348
  %4517 = vmatmul.mubr.f32.gmra.mrb[0].mxu0 %v4108
  %v4518 = vpop.f32.mrb[0].mxu0
  %v4519 = vadd.f32 0.0, %v4518
  %v4520 = vpop.f32.mrb[0].mxu0
  %4521 = vmatprep.mubr.f32.mxu0 %v4350
  %4522 = vmatmul.mubr.f32.gmra.mrb[0].mxu0 %v4112
  %v4523 = vpop.f32.mrb[0].mxu0
  %v4524 = vadd.f32 0.0, %v4523
  %v4525 = vpop.f32.mrb[0].mxu0
  %4526 = vmatprep.mubr.f32.mxu0 %v4352
  %4527 = vmatmul.mubr.f32.gmra.mrb[0].mxu0 %v4116
  %v4528 = vpop.f32.mrb[0].mxu0
  %v4529 = vadd.f32 0.0, %v4528
  %v4530 = vpop.f32.mrb[0].mxu0
  %4531 = vmatprep.mubr.f32.mxu0 %v4354
  %4532 = vmatmul.mubr.f32.gmra.mrb[0].mxu0 %v4120
  %v4533 = vpop.f32.mrb[0].mxu0
  %v4534 = vadd.f32 0.0, %v4533
  %v4535 = vpop.f32.mrb[0].mxu0
  %4536 = vmatprep.mubr.f32.mxu0 %v4356
  %4537 = vmatmul.mubr.f32.gmra.mrb[0].mxu0 %v4124
  %v4538 = vpop.f32.mrb[0].mxu0
  %v4539 = vadd.f32 0.0, %v4538
  %v4540 = vpop.f32.mrb[0].mxu0
  %4541 = vmatprep.mubr.f32.mxu0 %v4358
  %4542 = vmatmul.mubr.f32.gmra.mrb[0].mxu0 %v4128
  %v4543 = vpop.f32.mrb[0].mxu0
  %v4544 = vadd.f32 0.0, %v4543
  %v4545 = vpop.f32.mrb[0].mxu0
  %4546 = vmatprep.mubr.f32.mxu0 %v4360
  %4547 = vmatmul.mubr.f32.gmra.mrb[0].mxu0 %v4132
  %v4548 = vpop.f32.mrb[0].mxu0
  %v4549 = vadd.f32 0.0, %v4548
  %v4550 = vpop.f32.mrb[0].mxu0
  %4551 = vmatprep.mubr.f32.mxu0 %v4362
  %4552 = vmatmul.mubr.f32.gmra.mrb[0].mxu0 %v4136
  %v4553 = vpop.f32.mrb[0].mxu0
  %v4554 = vadd.f32 0.0, %v4553
  %v4555 = vpop.f32.mrb[0].mxu0
  %4556 = vmatprep.mubr.f32.mxu0 %v4364
  %4557 = vmatmul.mubr.f32.gmra.mrb[0].mxu0 %v4140
  %v4558 = vpop.f32.mrb[0].mxu0
  %v4559 = vadd.f32 0.0, %v4558
  %v4560 = vpop.f32.mrb[0].mxu0
  %4561 = vmatprep.mubr.f32.mxu0 %v4366
  %4562 = vmatmul.mubr.f32.gmra.mrb[0].mxu0 %v4144
  %v4563 = vpop.f32.mrb[0].mxu0
  %v4564 = vadd.f32 0.0, %v4563
  %v4565 = vpop.f32.mrb[0].mxu0
  %4566 = vmatprep.mubr.f32.mxu0 %v4368
  %4567 = vmatmul.mubr.f32.gmra.mrb[0].mxu0 %v4148
  %v4568 = vpop.f32.mrb[0].mxu0
  %v4569 = vadd.f32 0.0, %v4568
  %v4570 = vpop.f32.mrb[0].mxu0
  %4571 = vmatprep.mubr.f32.mxu0 %v4370
  %4572 = vmatmul.mubr.f32.gmra.mrb[0].mxu0 %v4152
  %v4573 = vpop.f32.mrb[0].mxu0
  %v4574 = vadd.f32 0.0, %v4573
  %v4575 = vpop.f32.mrb[0].mxu0
  %4576 = vmatprep.mubr.f32.mxu0 %v4372
  %4577 = vmatmul.mubr.f32.gmra.mrb[0].mxu0 %v4156
  %v4578 = vpop.f32.mrb[0].mxu0
  %v4579 = vadd.f32 0.0, %v4578
  %v4580 = vpop.f32.mrb[0].mxu0
  %4581 = vmatprep.mubr.f32.mxu0 %v4374
  %4582 = vmatmul.mubr.f32.gmra.mrb[0].mxu0 %v4160
  %v4583 = vpop.f32.mrb[0].mxu0
  %v4584 = vadd.f32 0.0, %v4583
  %v4585 = vpop.f32.mrb[0].mxu0
  %4586 = vmatprep.mubr.f32.mxu0 %v4376
  %4587 = vmatmul.mubr.f32.gmra.mrb[0].mxu0 %v4164
  %v4588 = vpop.f32.mrb[0].mxu0
  %v4589 = vadd.f32 0.0, %v4588
  %v4590 = vpop.f32.mrb[0].mxu0
  %4591 = vmatprep.mubr.f32.mxu0 %v4378
  %4592 = vmatmul.mubr.f32.gmra.mrb[0].mxu0 %v4168
  %v4593 = vpop.f32.mrb[0].mxu0
  %v4594 = vadd.f32 0.0, %v4593
  %v4595 = vpop.f32.mrb[0].mxu0
  %4596 = vmatprep.mubr.f32.mxu0 %v4380
  %4597 = vmatmul.mubr.f32.gmra.mrb[0].mxu0 %v4172
  %v4598 = vpop.f32.mrb[0].mxu0
  %v4599 = vadd.f32 0.0, %v4598
  %v4600 = vpop.f32.mrb[0].mxu0
  %4601 = vmatprep.mubr.f32.mxu0 %v4382
  %4602 = vmatmul.mubr.f32.gmra.mrb[0].mxu0 %v4176
  %v4603 = vpop.f32.mrb[0].mxu0
  %v4604 = vadd.f32 0.0, %v4603
  %v4605 = vpop.f32.mrb[0].mxu0
  %4606 = vmatprep.mubr.f32.mxu0 %v4384
  %4607 = vmatmul.mubr.f32.gmra.mrb[0].mxu0 %v4180
  %v4608 = vpop.f32.mrb[0].mxu0
  %v4609 = vadd.f32 0.0, %v4608
  %v4610 = vpop.f32.mrb[0].mxu0
  %4611 = vmatprep.mubr.f32.mxu0 %v4386
  %4612 = vmatmul.mubr.f32.gmra.mrb[0].mxu0 %v4184
  %v4613 = vpop.f32.mrb[0].mxu0
  %v4614 = vadd.f32 0.0, %v4613
  %v4615 = vpop.f32.mrb[0].mxu0
  %4616 = vmatprep.mubr.f32.mxu0 %v4388
  %4617 = vmatmul.mubr.f32.gmra.mrb[0].mxu0 %v4188
  %v4618 = vpop.f32.mrb[0].mxu0
  %v4619 = vadd.f32 0.0, %v4618
  %v4620 = vpop.f32.mrb[0].mxu0
  %4621 = vmatprep.mubr.f32.mxu0 %v4390
  %4622 = vmatmul.mubr.f32.gmra.mrb[0].mxu0 %v4192
  %v4623 = vpop.f32.mrb[0].mxu0
  %v4624 = vadd.f32 0.0, %v4623
  %v4625 = vpop.f32.mrb[0].mxu0
  %4626 = vmatprep.mubr.f32.mxu0 %v4392
  %4627 = vmatmul.mubr.f32.gmra.mrb[0].mxu0 %v4196
  %v4628 = vpop.f32.mrb[0].mxu0
  %v4629 = vadd.f32 0.0, %v4628
  %v4630 = vpop.f32.mrb[0].mxu0
  %4631 = vmatprep.mubr.f32.mxu0 %v4394
  %4632 = vmatmul.mubr.f32.gmra.mrb[0].mxu0 %v4200
  %v4633 = vpop.f32.mrb[0].mxu0
  %v4634 = vadd.f32 0.0, %v4633
  %v4635 = vpop.f32.mrb[0].mxu0
  %4636 = vmatprep.mubr.f32.mxu0 %v4396
  %4637 = vmatmul.mubr.f32.gmra.mrb[0].mxu0 %v4204
  %v4638 = vpop.f32.mrb[0].mxu0
  %v4639 = vadd.f32 0.0, %v4638
  %v4640 = vpop.f32.mrb[0].mxu0
  %4641 = vmatprep.mubr.f32.mxu0 %v4398
  %4642 = vmatmul.mubr.f32.gmra.mrb[0].mxu0 %v4208
  %v4643 = vpop.f32.mrb[0].mxu0
  %v4644 = vadd.f32 0.0, %v4643
  %v4645 = vpop.f32.mrb[0].mxu0
  %4646 = vmatprep.mubr.f32.mxu0 %v4400
  %4647 = vmatmul.mubr.f32.gmra.mrb[0].mxu0 %v4212
  %v4648 = vpop.f32.mrb[0].mxu0
  %v4649 = vadd.f32 0.0, %v4648
  %v4650 = vpop.f32.mrb[0].mxu0
  %4651 = vmatprep.mubr.f32.mxu0 %v4402
  %4652 = vmatmul.mubr.f32.gmra.mrb[0].mxu0 %v4216
  %v4653 = vpop.f32.mrb[0].mxu0
  %v4654 = vadd.f32 0.0, %v4653
  %v4655 = vpop.f32.mrb[0].mxu0
  %4656 = vmatprep.mubr.f32.mxu0 %v4404
  %4657 = vmatmul.mubr.f32.gmra.mrb[0].mxu0 %v4220
  %v4658 = vpop.f32.mrb[0].mxu0
  %v4659 = vadd.f32 0.0, %v4658
  %v4660 = vpop.f32.mrb[0].mxu0
  %4661 = vmatprep.mubr.f32.mxu0 %v4406
  %4662 = vmatmul.mubr.f32.gmra.mrb[0].mxu0 %v4224
  %v4663 = vpop.f32.mrb[0].mxu0
  %v4664 = vadd.f32 0.0, %v4663
  %v4665 = vpop.f32.mrb[0].mxu0
  %4666 = vmatprep.mubr.f32.mxu0 %v4408
  %4667 = vmatmul.mubr.f32.gmra.mrb[0].mxu0 %v4228
  %v4668 = vpop.f32.mrb[0].mxu0
  %v4669 = vadd.f32 0.0, %v4668
  %v4670 = vpop.f32.mrb[0].mxu0
  %4671 = vmatprep.mubr.f32.mxu0 %v4410
  %4672 = vmatmul.mubr.f32.gmra.mrb[0].mxu0 %v4232
  %v4673 = vpop.f32.mrb[0].mxu0
  %v4674 = vadd.f32 0.0, %v4673
  %v4675 = vpop.f32.mrb[0].mxu0
  %4676 = vmatprep.mubr.f32.mxu0 %v4412
  %4677 = vmatmul.mubr.f32.gmra.mrb[0].mxu0 %v4236
  %v4678 = vpop.f32.mrb[0].mxu0
  %v4679 = vadd.f32 0.0, %v4678
  %v4680 = vpop.f32.mrb[0].mxu0
  %4681 = vmatprep.mubr.f32.mxu0 %v4414
  %4682 = vmatmul.mubr.f32.gmra.mrb[0].mxu0 %v4240
  %v4683 = vpop.f32.mrb[0].mxu0
  %v4684 = vadd.f32 0.0, %v4683
  %v4685 = vpop.f32.mrb[0].mxu0
  %4686 = vmatprep.mubr.f32.mxu0 %v4416
  %4687 = vmatmul.mubr.f32.gmra.mrb[0].mxu0 %v4244
  %v4688 = vpop.f32.mrb[0].mxu0
  %v4689 = vadd.f32 0.0, %v4688
  %v4690 = vpop.f32.mrb[0].mxu0
  %4691 = vmatprep.mubr.f32.mxu0 %v4418
  %4692 = vmatmul.mubr.f32.gmra.mrb[0].mxu0 %v4248
  %v4693 = vpop.f32.mrb[0].mxu0
  %v4694 = vadd.f32 0.0, %v4693
  %v4695 = vpop.f32.mrb[0].mxu0
  %4696 = vmatprep.mubr.f32.mxu0 %v4420
  %4697 = vmatmul.mubr.f32.gmra.mrb[0].mxu0 %v4252
  %v4698 = vpop.f32.mrb[0].mxu0
  %v4699 = vadd.f32 0.0, %v4698
  %v4700 = vpop.f32.mrb[0].mxu0
  %4701 = vmatprep.mubr.f32.mxu0 %v4422
  %4702 = vmatmul.mubr.f32.gmra.mrb[0].mxu0 %v4256
  %v4703 = vpop.f32.mrb[0].mxu0
  %v4704 = vadd.f32 0.0, %v4703
  %v4705 = vpop.f32.mrb[0].mxu0
  %4706 = vmatprep.mubr.f32.mxu0 %v4424
  %4707 = vmatmul.mubr.f32.gmra.mrb[0].mxu0 %v4260
  %v4708 = vpop.f32.mrb[0].mxu0
  %v4709 = vadd.f32 0.0, %v4708
  %v4710 = vpop.f32.mrb[0].mxu0
  %4711 = vmatprep.mubr.f32.mxu0 %v4426
  %4712 = vmatmul.mubr.f32.gmra.mrb[0].mxu0 %v4264
  %v4713 = vpop.f32.mrb[0].mxu0
  %v4714 = vadd.f32 0.0, %v4713
  %v4715 = vpop.f32.mrb[0].mxu0
  %4716 = vmatprep.mubr.f32.mxu0 %v4428
  %4717 = vmatmul.mubr.f32.gmra.mrb[0].mxu0 %v4268
  %v4718 = vpop.f32.mrb[0].mxu0
  %v4719 = vadd.f32 0.0, %v4718
  %v4720 = vpop.f32.mrb[0].mxu0
  %4721 = vmatprep.mubr.f32.mxu0 %v4430
  %4722 = vmatmul.mubr.f32.gmra.mrb[0].mxu0 %v4272
  %v4723 = vpop.f32.mrb[0].mxu0
  %v4724 = vadd.f32 0.0, %v4723
  %v4725 = vpop.f32.mrb[0].mxu0
  %4726 = vmatprep.mubr.f32.mxu0 %v4432
  %4727 = vmatmul.mubr.f32.gmra.mrb[0].mxu0 %v4276
  %v4728 = vpop.f32.mrb[0].mxu0
  %v4729 = vadd.f32 0.0, %v4728
  %v4730 = vpop.f32.mrb[0].mxu0
  %4731 = vmatprep.mubr.f32.mxu0 %v4434
  %4732 = vmatmul.mubr.f32.gmra.mrb[0].mxu0 %v4280
  %v4733 = vpop.f32.mrb[0].mxu0
  %v4734 = vadd.f32 0.0, %v4733
  %v4735 = vpop.f32.mrb[0].mxu0
  %4736 = vmatprep.mubr.f32.mxu0 %v4436
  %4737 = vmatmul.mubr.f32.gmra.mrb[0].mxu0 %v4284
  %v4738 = vpop.f32.mrb[0].mxu0
  %v4739 = vadd.f32 0.0, %v4738
  %v4740 = vpop.f32.mrb[0].mxu0
  %4741 = vmatprep.mubr.f32.mxu0 %v4438
  %4742 = vmatmul.mubr.f32.gmra.mrb[0].mxu0 %v4288
  %v4743 = vpop.f32.mrb[0].mxu0
  %v4744 = vadd.f32 0.0, %v4743
  %v4745 = vpop.f32.mrb[0].mxu0
  %4746 = vmatprep.mubr.f32.mxu0 %v4440
  %4747 = vmatmul.mubr.f32.gmra.mrb[0].mxu0 %v4292
  %v4748 = vpop.f32.mrb[0].mxu0
  %v4749 = vadd.f32 0.0, %v4748
  %v4750 = vpop.f32.mrb[0].mxu0
  %4751 = vdwg.mxu0
  %v4752 = vadd.f32 %v4019, %v4509
  %v4753 = vadd.f32 %v4020, %v4514
  %v4754 = vadd.f32 %v4021, %v4519
  %v4755 = vadd.f32 %v4022, %v4524
  %v4756 = vadd.f32 %v4023, %v4529
  %v4757 = vadd.f32 %v4024, %v4534
  %v4758 = vadd.f32 %v4025, %v4539
  %v4759 = vadd.f32 %v4026, %v4544
  %v4760 = vadd.f32 %v4027, %v4549
  %v4761 = vadd.f32 %v4028, %v4554
  %v4762 = vadd.f32 %v4029, %v4559
  %v4763 = vadd.f32 %v4030, %v4564
  %v4764 = vadd.f32 %v4031, %v4569
  %v4765 = vadd.f32 %v4032, %v4574
  %v4766 = vadd.f32 %v4033, %v4579
  %v4767 = vadd.f32 %v4034, %v4584
  %v4768 = vadd.f32 %v4035, %v4589
  %v4769 = vadd.f32 %v4036, %v4594
  %v4770 = vadd.f32 %v4037, %v4599
  %v4771 = vadd.f32 %v4038, %v4604
  %v4772 = vadd.f32 %v4039, %v4609
  %v4773 = vadd.f32 %v4040, %v4614
  %v4774 = vadd.f32 %v4041, %v4619
  %v4775 = vadd.f32 %v4042, %v4624
  %v4776 = vadd.f32 %v4043, %v4629
  %v4777 = vadd.f32 %v4044, %v4634
  %v4778 = vadd.f32 %v4045, %v4639
  %v4779 = vadd.f32 %v4046, %v4644
  %v4780 = vadd.f32 %v4047, %v4649
  %v4781 = vadd.f32 %v4048, %v4654
  %v4782 = vadd.f32 %v4049, %v4659
  %v4783 = vadd.f32 %v4050, %v4664
  %v4784 = vadd.f32 %v4051, %v4669
  %v4785 = vadd.f32 %v4052, %v4674
  %v4786 = vadd.f32 %v4053, %v4679
  %v4787 = vadd.f32 %v4054, %v4684
  %v4788 = vadd.f32 %v4055, %v4689
  %v4789 = vadd.f32 %v4056, %v4694
  %v4790 = vadd.f32 %v4057, %v4699
  %v4791 = vadd.f32 %v4058, %v4704
  %v4792 = vadd.f32 %v4059, %v4709
  %v4793 = vadd.f32 %v4060, %v4714
  %v4794 = vadd.f32 %v4061, %v4719
  %v4795 = vadd.f32 %v4062, %v4724
  %v4796 = vadd.f32 %v4063, %v4729
  %v4797 = vadd.f32 %v4064, %v4734
  %v4798 = vadd.f32 %v4065, %v4739
  %v4799 = vadd.f32 %v4066, %v4744
  %v4800 = vadd.f32 %v4067, %v4749
  %v4801 = vld [vmem:[#allocation2 + $0x320] sm:$0xff]
  %v4802 = vld [vmem:[#allocation2 + $0x328] sm:$0xff]
  %s4803 = scalar_lea.vmem %s5, 800
  %v4804 = vld [vmem:[%s4803] sm:$0xff]
  %v4805 = vld [vmem:[%s4803 + $0x8] sm:$0xff]
  %v4806 = vld [vmem:[%s4803 + $0x10] sm:$0xff]
  %v4807 = vld [vmem:[%s4803 + $0x18] sm:$0xff]
  %v4808 = vld [vmem:[%s4803 + $0x20] sm:$0xff]
  %v4809 = vld [vmem:[%s4803 + $0x28] sm:$0xff]
  %v4810 = vld [vmem:[%s4803 + $0x30] sm:$0xff]
  %v4811 = vld [vmem:[%s4803 + $0x38] sm:$0xff]
  %v4812 = vld [vmem:[%s4803 + $0x40] sm:$0xff]
  %v4813 = vld [vmem:[%s4803 + $0x48] sm:$0xff]
  %v4814 = vld [vmem:[%s4803 + $0x50] sm:$0xff]
  %v4815 = vld [vmem:[%s4803 + $0x58] sm:$0xff]
  %v4816 = vld [vmem:[%s4803 + $0x60] sm:$0xff]
  %v4817 = vld [vmem:[%s4803 + $0x68] sm:$0xff]
  %v4818 = vld [vmem:[%s4803 + $0x70] sm:$0xff]
  %v4819 = vld [vmem:[%s4803 + $0x78] sm:$0xff]
  %v4820 = vld [vmem:[%s4803 + $0x80] sm:$0xff]
  %v4821 = vld [vmem:[%s4803 + $0x88] sm:$0xff]
  %v4822 = vld [vmem:[%s4803 + $0x90] sm:$0xff]
  %v4823 = vld [vmem:[%s4803 + $0x98] sm:$0xff]
  %v4824 = vsel %vm994, %v3145, 0
  %v4826 = vsel %vm994, %v3147, 0
  %v4828 = vsel %vm994, %v3149, 0
  %v4830 = vsel %vm994, %v3151, 0
  %v4832 = vsel %vm994, %v3153, 0
  %v4834 = vsel %vm994, %v3155, 0
  %v4836 = vsel %vm994, %v3157, 0
  %v4838 = vsel %vm994, %v3159, 0
  %v4840 = vsel %vm994, %v3161, 0
  %v4842 = vsel %vm994, %v3163, 0
  %v4844 = vsel %vm994, %v3165, 0
  %v4846 = vsel %vm994, %v3167, 0
  %v4848 = vsel %vm994, %v3169, 0
  %v4850 = vsel %vm994, %v3171, 0
  %v4852 = vsel %vm994, %v3173, 0
  %v4854 = vsel %vm994, %v3175, 0
  %v4856 = vsel %vm994, %v3177, 0
  %v4858 = vsel %vm994, %v3179, 0
  %v4860 = vsel %vm994, %v3181, 0
  %v4862 = vsel %vm994, %v3183, 0
  %v4864 = vsel %vm994, %v3185, 0
  %v4866 = vsel %vm994, %v3187, 0
  %v4868 = vsel %vm994, %v3189, 0
  %v4870 = vsel %vm994, %v3191, 0
  %v4872 = vsel %vm994, %v3193, 0
  %v4874 = vsel %vm994, %v3195, 0
  %v4876 = vsel %vm994, %v3197, 0
  %v4878 = vsel %vm994, %v3199, 0
  %v4880 = vsel %vm994, %v3201, 0
  %v4882 = vsel %vm994, %v3203, 0
  %v4884 = vsel %vm994, %v3205, 0
  %v4886 = vsel %vm994, %v3207, 0
  %v4888 = vsel %vm994, %v3209, 0
  %v4890 = vsel %vm994, %v3211, 0
  %v4892 = vsel %vm994, %v3213, 0
  %v4894 = vsel %vm994, %v3215, 0
  %v4896 = vsel %vm994, %v3217, 0
  %v4898 = vsel %vm994, %v3219, 0
  %v4900 = vsel %vm994, %v3221, 0
  %v4902 = vsel %vm994, %v3223, 0
  %v4904 = vsel %vm994, %v3225, 0
  %v4906 = vsel %vm994, %v3227, 0
  %v4908 = vsel %vm994, %v3229, 0
  %v4910 = vsel %vm994, %v3231, 0
  %v4912 = vsel %vm994, %v3233, 0
  %v4914 = vsel %vm994, %v3235, 0
  %v4916 = vsel %vm994, %v3237, 0
  %v4918 = vsel %vm994, %v3239, 0
  %v4921 = vsel %vm994, %v4802, 0
  %4923 = vmatprep.subr.mxu0 0.0
  %4924 = vmatpush1.msra.mxu0 %v4804
  %4925 = vmatprep.subr.mxu0 0.0
  %4926 = vmatpush1.msra.mxu0 %v4805
  %4927 = vmatprep.subr.mxu0 0.0
  %4928 = vmatpush1.msra.mxu0 %v4806
  %4929 = vmatprep.subr.mxu0 0.0
  %4930 = vmatpush1.msra.mxu0 %v4807
  %4931 = vmatprep.subr.mxu0 0.0
  %4932 = vmatpush1.msra.mxu0 %v4808
  %4933 = vmatprep.subr.mxu0 0.0
  %4934 = vmatpush1.msra.mxu0 %v4809
  %4935 = vmatprep.subr.mxu0 0.0
  %4936 = vmatpush1.msra.mxu0 %v4810
  %4937 = vmatprep.subr.mxu0 0.0
  %4938 = vmatpush1.msra.mxu0 %v4811
  %4939 = vmatprep.subr.mxu0 0.0
  %4940 = vmatpush1.msra.mxu0 %v4812
  %4941 = vmatprep.subr.mxu0 0.0
  %4942 = vmatpush1.msra.mxu0 %v4813
  %4943 = vmatprep.subr.mxu0 0.0
  %4944 = vmatpush1.msra.mxu0 %v4814
  %4945 = vmatprep.subr.mxu0 0.0
  %4946 = vmatpush1.msra.mxu0 %v4815
  %4947 = vmatprep.subr.mxu0 0.0
  %4948 = vmatpush1.msra.mxu0 %v4816
  %4949 = vmatprep.subr.mxu0 0.0
  %4950 = vmatpush1.msra.mxu0 %v4817
  %4951 = vmatprep.subr.mxu0 0.0
  %4952 = vmatpush1.msra.mxu0 %v4818
  %4953 = vmatprep.subr.mxu0 0.0
  %4954 = vmatpush1.msra.mxu0 %v4819
  %4955 = vmatprep.subr.mxu0 0.0
  %4956 = vmatpush1.msra.mxu0 %v4820
  %4957 = vmatprep.subr.mxu0 0.0
  %4958 = vmatpush1.msra.mxu0 %v4821
  %4959 = vmatprep.subr.mxu0 0.0
  %4960 = vmatpush1.msra.mxu0 %v4822
  %4961 = vmatprep.subr.mxu0 0.0
  %4962 = vmatpush1.msra.mxu0 %v4823
  %4963 = vmatprep.subr.mxu0 0.0
  %4964 = vmatpush1.msra.mxu0 0.0
  %4965 = vmatprep.subr.mxu0 0.0
  %4966 = vmatpush1.msra.mxu0 0.0
  %4967 = vmatprep.subr.mxu0 0.0
  %4968 = vmatpush1.msra.mxu0 0.0
  %4969 = vmatprep.subr.mxu0 0.0
  %4970 = vmatpush1.msra.mxu0 0.0
  %4971 = vmatprep.subr.mxu0 0.0
  %4972 = vmatpush1.msra.mxu0 0.0
  %4973 = vmatprep.subr.mxu0 0.0
  %4974 = vmatpush1.msra.mxu0 0.0
  %4975 = vmatprep.subr.mxu0 0.0
  %4976 = vmatpush1.msra.mxu0 0.0
  %4977 = vmatprep.subr.mxu0 0.0
  %4978 = vmatpush1.msra.mxu0 0.0
  %4979 = vmatprep.subr.mxu0 0.0
  %4980 = vmatpush1.msra.mxu0 0.0
  %4981 = vmatprep.subr.mxu0 0.0
  %4982 = vmatpush1.msra.mxu0 0.0
  %4983 = vmatprep.subr.mxu0 0.0
  %4984 = vmatpush1.msra.mxu0 0.0
  %4985 = vmatprep.subr.mxu0 0.0
  %4986 = vmatpush1.msra.mxu0 0.0
  %4987 = vmatprep.mubr.f32.mxu0 %v4824
  %4988 = vmatmul.mubr.f32.gmra.mrb[0].mxu0 %v3144
  %v4989 = vpop.f32.mrb[0].mxu0
  %v4990 = vadd.f32 0.0, %v4989
  %v4991 = vpop.f32.mrb[0].mxu0
  %4992 = vmatprep.mubr.f32.mxu0 %v4826
  %4993 = vmatmul.mubr.f32.gmra.mrb[0].mxu0 %v3146
  %v4994 = vpop.f32.mrb[0].mxu0
  %v4995 = vadd.f32 0.0, %v4994
  %v4996 = vpop.f32.mrb[0].mxu0
  %4997 = vmatprep.mubr.f32.mxu0 %v4828
  %4998 = vmatmul.mubr.f32.gmra.mrb[0].mxu0 %v3148
  %v4999 = vpop.f32.mrb[0].mxu0
  %v5000 = vadd.f32 0.0, %v4999
  %v5001 = vpop.f32.mrb[0].mxu0
  %5002 = vmatprep.mubr.f32.mxu0 %v4830
  %5003 = vmatmul.mubr.f32.gmra.mrb[0].mxu0 %v3150
  %v5004 = vpop.f32.mrb[0].mxu0
  %v5005 = vadd.f32 0.0, %v5004
  %v5006 = vpop.f32.mrb[0].mxu0
  %5007 = vmatprep.mubr.f32.mxu0 %v4832
  %5008 = vmatmul.mubr.f32.gmra.mrb[0].mxu0 %v3152
  %v5009 = vpop.f32.mrb[0].mxu0
  %v5010 = vadd.f32 0.0, %v5009
  %v5011 = vpop.f32.mrb[0].mxu0
  %5012 = vmatprep.mubr.f32.mxu0 %v4834
  %5013 = vmatmul.mubr.f32.gmra.mrb[0].mxu0 %v3154
  %v5014 = vpop.f32.mrb[0].mxu0
  %v5015 = vadd.f32 0.0, %v5014
  %v5016 = vpop.f32.mrb[0].mxu0
  %5017 = vmatprep.mubr.f32.mxu0 %v4836
  %5018 = vmatmul.mubr.f32.gmra.mrb[0].mxu0 %v3156
  %v5019 = vpop.f32.mrb[0].mxu0
  %v5020 = vadd.f32 0.0, %v5019
  %v5021 = vpop.f32.mrb[0].mxu0
  %5022 = vmatprep.mubr.f32.mxu0 %v4838
  %5023 = vmatmul.mubr.f32.gmra.mrb[0].mxu0 %v3158
  %v5024 = vpop.f32.mrb[0].mxu0
  %v5025 = vadd.f32 0.0, %v5024
  %v5026 = vpop.f32.mrb[0].mxu0
  %5027 = vmatprep.mubr.f32.mxu0 %v4840
  %5028 = vmatmul.mubr.f32.gmra.mrb[0].mxu0 %v3160
  %v5029 = vpop.f32.mrb[0].mxu0
  %v5030 = vadd.f32 0.0, %v5029
  %v5031 = vpop.f32.mrb[0].mxu0
  %5032 = vmatprep.mubr.f32.mxu0 %v4842
  %5033 = vmatmul.mubr.f32.gmra.mrb[0].mxu0 %v3162
  %v5034 = vpop.f32.mrb[0].mxu0
  %v5035 = vadd.f32 0.0, %v5034
  %v5036 = vpop.f32.mrb[0].mxu0
  %5037 = vmatprep.mubr.f32.mxu0 %v4844
  %5038 = vmatmul.mubr.f32.gmra.mrb[0].mxu0 %v3164
  %v5039 = vpop.f32.mrb[0].mxu0
  %v5040 = vadd.f32 0.0, %v5039
  %v5041 = vpop.f32.mrb[0].mxu0
  %5042 = vmatprep.mubr.f32.mxu0 %v4846
  %5043 = vmatmul.mubr.f32.gmra.mrb[0].mxu0 %v3166
  %v5044 = vpop.f32.mrb[0].mxu0
  %v5045 = vadd.f32 0.0, %v5044
  %v5046 = vpop.f32.mrb[0].mxu0
  %5047 = vmatprep.mubr.f32.mxu0 %v4848
  %5048 = vmatmul.mubr.f32.gmra.mrb[0].mxu0 %v3168
  %v5049 = vpop.f32.mrb[0].mxu0
  %v5050 = vadd.f32 0.0, %v5049
  %v5051 = vpop.f32.mrb[0].mxu0
  %5052 = vmatprep.mubr.f32.mxu0 %v4850
  %5053 = vmatmul.mubr.f32.gmra.mrb[0].mxu0 %v3170
  %v5054 = vpop.f32.mrb[0].mxu0
  %v5055 = vadd.f32 0.0, %v5054
  %v5056 = vpop.f32.mrb[0].mxu0
  %5057 = vmatprep.mubr.f32.mxu0 %v4852
  %5058 = vmatmul.mubr.f32.gmra.mrb[0].mxu0 %v3172
  %v5059 = vpop.f32.mrb[0].mxu0
  %v5060 = vadd.f32 0.0, %v5059
  %v5061 = vpop.f32.mrb[0].mxu0
  %5062 = vmatprep.mubr.f32.mxu0 %v4854
  %5063 = vmatmul.mubr.f32.gmra.mrb[0].mxu0 %v3174
  %v5064 = vpop.f32.mrb[0].mxu0
  %v5065 = vadd.f32 0.0, %v5064
  %v5066 = vpop.f32.mrb[0].mxu0
  %5067 = vmatprep.mubr.f32.mxu0 %v4856
  %5068 = vmatmul.mubr.f32.gmra.mrb[0].mxu0 %v3176
  %v5069 = vpop.f32.mrb[0].mxu0
  %v5070 = vadd.f32 0.0, %v5069
  %v5071 = vpop.f32.mrb[0].mxu0
  %5072 = vmatprep.mubr.f32.mxu0 %v4858
  %5073 = vmatmul.mubr.f32.gmra.mrb[0].mxu0 %v3178
  %v5074 = vpop.f32.mrb[0].mxu0
  %v5075 = vadd.f32 0.0, %v5074
  %v5076 = vpop.f32.mrb[0].mxu0
  %5077 = vmatprep.mubr.f32.mxu0 %v4860
  %5078 = vmatmul.mubr.f32.gmra.mrb[0].mxu0 %v3180
  %v5079 = vpop.f32.mrb[0].mxu0
  %v5080 = vadd.f32 0.0, %v5079
  %v5081 = vpop.f32.mrb[0].mxu0
  %5082 = vmatprep.mubr.f32.mxu0 %v4862
  %5083 = vmatmul.mubr.f32.gmra.mrb[0].mxu0 %v3182
  %v5084 = vpop.f32.mrb[0].mxu0
  %v5085 = vadd.f32 0.0, %v5084
  %v5086 = vpop.f32.mrb[0].mxu0
  %5087 = vmatprep.mubr.f32.mxu0 %v4864
  %5088 = vmatmul.mubr.f32.gmra.mrb[0].mxu0 %v3184
  %v5089 = vpop.f32.mrb[0].mxu0
  %v5090 = vadd.f32 0.0, %v5089
  %v5091 = vpop.f32.mrb[0].mxu0
  %5092 = vmatprep.mubr.f32.mxu0 %v4866
  %5093 = vmatmul.mubr.f32.gmra.mrb[0].mxu0 %v3186
  %v5094 = vpop.f32.mrb[0].mxu0
  %v5095 = vadd.f32 0.0, %v5094
  %v5096 = vpop.f32.mrb[0].mxu0
  %5097 = vmatprep.mubr.f32.mxu0 %v4868
  %5098 = vmatmul.mubr.f32.gmra.mrb[0].mxu0 %v3188
  %v5099 = vpop.f32.mrb[0].mxu0
  %v5100 = vadd.f32 0.0, %v5099
  %v5101 = vpop.f32.mrb[0].mxu0
  %5102 = vmatprep.mubr.f32.mxu0 %v4870
  %5103 = vmatmul.mubr.f32.gmra.mrb[0].mxu0 %v3190
  %v5104 = vpop.f32.mrb[0].mxu0
  %v5105 = vadd.f32 0.0, %v5104
  %v5106 = vpop.f32.mrb[0].mxu0
  %5107 = vmatprep.mubr.f32.mxu0 %v4872
  %5108 = vmatmul.mubr.f32.gmra.mrb[0].mxu0 %v3192
  %v5109 = vpop.f32.mrb[0].mxu0
  %v5110 = vadd.f32 0.0, %v5109
  %v5111 = vpop.f32.mrb[0].mxu0
  %5112 = vmatprep.mubr.f32.mxu0 %v4874
  %5113 = vmatmul.mubr.f32.gmra.mrb[0].mxu0 %v3194
  %v5114 = vpop.f32.mrb[0].mxu0
  %v5115 = vadd.f32 0.0, %v5114
  %v5116 = vpop.f32.mrb[0].mxu0
  %5117 = vmatprep.mubr.f32.mxu0 %v4876
  %5118 = vmatmul.mubr.f32.gmra.mrb[0].mxu0 %v3196
  %v5119 = vpop.f32.mrb[0].mxu0
  %v5120 = vadd.f32 0.0, %v5119
  %v5121 = vpop.f32.mrb[0].mxu0
  %5122 = vmatprep.mubr.f32.mxu0 %v4878
  %5123 = vmatmul.mubr.f32.gmra.mrb[0].mxu0 %v3198
  %v5124 = vpop.f32.mrb[0].mxu0
  %v5125 = vadd.f32 0.0, %v5124
  %v5126 = vpop.f32.mrb[0].mxu0
  %5127 = vmatprep.mubr.f32.mxu0 %v4880
  %5128 = vmatmul.mubr.f32.gmra.mrb[0].mxu0 %v3200
  %v5129 = vpop.f32.mrb[0].mxu0
  %v5130 = vadd.f32 0.0, %v5129
  %v5131 = vpop.f32.mrb[0].mxu0
  %5132 = vmatprep.mubr.f32.mxu0 %v4882
  %5133 = vmatmul.mubr.f32.gmra.mrb[0].mxu0 %v3202
  %v5134 = vpop.f32.mrb[0].mxu0
  %v5135 = vadd.f32 0.0, %v5134
  %v5136 = vpop.f32.mrb[0].mxu0
  %5137 = vmatprep.mubr.f32.mxu0 %v4884
  %5138 = vmatmul.mubr.f32.gmra.mrb[0].mxu0 %v3204
  %v5139 = vpop.f32.mrb[0].mxu0
  %v5140 = vadd.f32 0.0, %v5139
  %v5141 = vpop.f32.mrb[0].mxu0
  %5142 = vmatprep.mubr.f32.mxu0 %v4886
  %5143 = vmatmul.mubr.f32.gmra.mrb[0].mxu0 %v3206
  %v5144 = vpop.f32.mrb[0].mxu0
  %v5145 = vadd.f32 0.0, %v5144
  %v5146 = vpop.f32.mrb[0].mxu0
  %5147 = vmatprep.mubr.f32.mxu0 %v4888
  %5148 = vmatmul.mubr.f32.gmra.mrb[0].mxu0 %v3208
  %v5149 = vpop.f32.mrb[0].mxu0
  %v5150 = vadd.f32 0.0, %v5149
  %v5151 = vpop.f32.mrb[0].mxu0
  %5152 = vmatprep.mubr.f32.mxu0 %v4890
  %5153 = vmatmul.mubr.f32.gmra.mrb[0].mxu0 %v3210
  %v5154 = vpop.f32.mrb[0].mxu0
  %v5155 = vadd.f32 0.0, %v5154
  %v5156 = vpop.f32.mrb[0].mxu0
  %5157 = vmatprep.mubr.f32.mxu0 %v4892
  %5158 = vmatmul.mubr.f32.gmra.mrb[0].mxu0 %v3212
  %v5159 = vpop.f32.mrb[0].mxu0
  %v5160 = vadd.f32 0.0, %v5159
  %v5161 = vpop.f32.mrb[0].mxu0
  %5162 = vmatprep.mubr.f32.mxu0 %v4894
  %5163 = vmatmul.mubr.f32.gmra.mrb[0].mxu0 %v3214
  %v5164 = vpop.f32.mrb[0].mxu0
  %v5165 = vadd.f32 0.0, %v5164
  %v5166 = vpop.f32.mrb[0].mxu0
  %5167 = vmatprep.mubr.f32.mxu0 %v4896
  %5168 = vmatmul.mubr.f32.gmra.mrb[0].mxu0 %v3216
  %v5169 = vpop.f32.mrb[0].mxu0
  %v5170 = vadd.f32 0.0, %v5169
  %v5171 = vpop.f32.mrb[0].mxu0
  %5172 = vmatprep.mubr.f32.mxu0 %v4898
  %5173 = vmatmul.mubr.f32.gmra.mrb[0].mxu0 %v3218
  %v5174 = vpop.f32.mrb[0].mxu0
  %v5175 = vadd.f32 0.0, %v5174
  %v5176 = vpop.f32.mrb[0].mxu0
  %5177 = vmatprep.mubr.f32.mxu0 %v4900
  %5178 = vmatmul.mubr.f32.gmra.mrb[0].mxu0 %v3220
  %v5179 = vpop.f32.mrb[0].mxu0
  %v5180 = vadd.f32 0.0, %v5179
  %v5181 = vpop.f32.mrb[0].mxu0
  %5182 = vmatprep.mubr.f32.mxu0 %v4902
  %5183 = vmatmul.mubr.f32.gmra.mrb[0].mxu0 %v3222
  %v5184 = vpop.f32.mrb[0].mxu0
  %v5185 = vadd.f32 0.0, %v5184
  %v5186 = vpop.f32.mrb[0].mxu0
  %5187 = vmatprep.mubr.f32.mxu0 %v4904
  %5188 = vmatmul.mubr.f32.gmra.mrb[0].mxu0 %v3224
  %v5189 = vpop.f32.mrb[0].mxu0
  %v5190 = vadd.f32 0.0, %v5189
  %v5191 = vpop.f32.mrb[0].mxu0
  %5192 = vmatprep.mubr.f32.mxu0 %v4906
  %5193 = vmatmul.mubr.f32.gmra.mrb[0].mxu0 %v3226
  %v5194 = vpop.f32.mrb[0].mxu0
  %v5195 = vadd.f32 0.0, %v5194
  %v5196 = vpop.f32.mrb[0].mxu0
  %5197 = vmatprep.mubr.f32.mxu0 %v4908
  %5198 = vmatmul.mubr.f32.gmra.mrb[0].mxu0 %v3228
  %v5199 = vpop.f32.mrb[0].mxu0
  %v5200 = vadd.f32 0.0, %v5199
  %v5201 = vpop.f32.mrb[0].mxu0
  %5202 = vmatprep.mubr.f32.mxu0 %v4910
  %5203 = vmatmul.mubr.f32.gmra.mrb[0].mxu0 %v3230
  %v5204 = vpop.f32.mrb[0].mxu0
  %v5205 = vadd.f32 0.0, %v5204
  %v5206 = vpop.f32.mrb[0].mxu0
  %5207 = vmatprep.mubr.f32.mxu0 %v4912
  %5208 = vmatmul.mubr.f32.gmra.mrb[0].mxu0 %v3232
  %v5209 = vpop.f32.mrb[0].mxu0
  %v5210 = vadd.f32 0.0, %v5209
  %v5211 = vpop.f32.mrb[0].mxu0
  %5212 = vmatprep.mubr.f32.mxu0 %v4914
  %5213 = vmatmul.mubr.f32.gmra.mrb[0].mxu0 %v3234
  %v5214 = vpop.f32.mrb[0].mxu0
  %v5215 = vadd.f32 0.0, %v5214
  %v5216 = vpop.f32.mrb[0].mxu0
  %5217 = vmatprep.mubr.f32.mxu0 %v4916
  %5218 = vmatmul.mubr.f32.gmra.mrb[0].mxu0 %v3236
  %v5219 = vpop.f32.mrb[0].mxu0
  %v5220 = vadd.f32 0.0, %v5219
  %v5221 = vpop.f32.mrb[0].mxu0
  %5222 = vmatprep.mubr.f32.mxu0 %v4918
  %5223 = vmatmul.mubr.f32.gmra.mrb[0].mxu0 %v3238
  %v5224 = vpop.f32.mrb[0].mxu0
  %v5225 = vadd.f32 0.0, %v5224
  %v5226 = vpop.f32.mrb[0].mxu0
  %5227 = vmatprep.mubr.f32.mxu0 %v4921
  %5228 = vmatmul.mubr.f32.gmra.mrb[0].mxu0 %v4801
  %v5229 = vpop.f32.mrb[0].mxu0
  %v5230 = vadd.f32 0.0, %v5229
  %v5231 = vpop.f32.mrb[0].mxu0
  %5232 = vdwg.mxu0
  %v5233 = vadd.f32 %v4752, %v4990
  %v5234 = vadd.f32 %v4753, %v4995
  %v5235 = vadd.f32 %v4754, %v5000
  %v5236 = vadd.f32 %v4755, %v5005
  %v5237 = vadd.f32 %v4756, %v5010
  %v5238 = vadd.f32 %v4757, %v5015
  %v5239 = vadd.f32 %v4758, %v5020
  %v5240 = vadd.f32 %v4759, %v5025
  %v5241 = vadd.f32 %v4760, %v5030
  %v5242 = vadd.f32 %v4761, %v5035
  %v5243 = vadd.f32 %v4762, %v5040
  %v5244 = vadd.f32 %v4763, %v5045
  %v5245 = vadd.f32 %v4764, %v5050
  %v5246 = vadd.f32 %v4765, %v5055
  %v5247 = vadd.f32 %v4766, %v5060
  %v5248 = vadd.f32 %v4767, %v5065
  %v5249 = vadd.f32 %v4768, %v5070
  %v5250 = vadd.f32 %v4769, %v5075
  %v5251 = vadd.f32 %v4770, %v5080
  %v5252 = vadd.f32 %v4771, %v5085
  %v5253 = vadd.f32 %v4772, %v5090
  %v5254 = vadd.f32 %v4773, %v5095
  %v5255 = vadd.f32 %v4774, %v5100
  %v5256 = vadd.f32 %v4775, %v5105
  %v5257 = vadd.f32 %v4776, %v5110
  %v5258 = vadd.f32 %v4777, %v5115
  %v5259 = vadd.f32 %v4778, %v5120
  %v5260 = vadd.f32 %v4779, %v5125
  %v5261 = vadd.f32 %v4780, %v5130
  %v5262 = vadd.f32 %v4781, %v5135
  %v5263 = vadd.f32 %v4782, %v5140
  %v5264 = vadd.f32 %v4783, %v5145
  %v5265 = vadd.f32 %v4784, %v5150
  %v5266 = vadd.f32 %v4785, %v5155
  %v5267 = vadd.f32 %v4786, %v5160
  %v5268 = vadd.f32 %v4787, %v5165
  %v5269 = vadd.f32 %v4788, %v5170
  %v5270 = vadd.f32 %v4789, %v5175
  %v5271 = vadd.f32 %v4790, %v5180
  %v5272 = vadd.f32 %v4791, %v5185
  %v5273 = vadd.f32 %v4792, %v5190
  %v5274 = vadd.f32 %v4793, %v5195
  %v5275 = vadd.f32 %v4794, %v5200
  %v5276 = vadd.f32 %v4795, %v5205
  %v5277 = vadd.f32 %v4796, %v5210
  %v5278 = vadd.f32 %v4797, %v5215
  %v5279 = vadd.f32 %v4798, %v5220
  %v5280 = vadd.f32 %v4799, %v5225
  %v5281 = vadd.f32 %v4800, %v5230
  %v5282 = vld [vmem:[#allocation2 + $0x30] sm:$0xf0]
  %v5283 = vld [vmem:[#allocation2 + $0x38] sm:$0xf0]
  %v5284 = vld [vmem:[#allocation2 + $0x40] sm:$0xff]
  %v5285 = vld [vmem:[#allocation2 + $0x48] sm:$0xff]
  %v5286 = vld [vmem:[#allocation2 + $0x50] sm:$0xff]
  %v5287 = vld [vmem:[#allocation2 + $0x58] sm:$0xff]
  %v5288 = vld [vmem:[#allocation2 + $0x60] sm:$0xff]
  %v5289 = vld [vmem:[#allocation2 + $0x68] sm:$0xff]
  %v5290 = vld [vmem:[#allocation2 + $0x70] sm:$0xff]
  %v5291 = vld [vmem:[#allocation2 + $0x78] sm:$0xff]
  %v5292 = vld [vmem:[#allocation2 + $0x80] sm:$0xff]
  %v5293 = vld [vmem:[#allocation2 + $0x88] sm:$0xff]
  %v5294 = vld [vmem:[#allocation2 + $0x90] sm:$0xff]
  %v5295 = vld [vmem:[#allocation2 + $0x98] sm:$0xff]
  %v5296 = vld [vmem:[#allocation2 + $0xa0] sm:$0xff]
  %v5297 = vld [vmem:[#allocation2 + $0xa8] sm:$0xff]
  %v5298 = vld [vmem:[#allocation2 + $0xb0] sm:$0xff]
  %v5299 = vld [vmem:[#allocation2 + $0xb8] sm:$0xff]
  %v5300 = vld [vmem:[#allocation2 + $0xc0] sm:$0xff]
  %v5301 = vld [vmem:[#allocation2 + $0xc8] sm:$0xff]
  %v5302 = vld [vmem:[#allocation2 + $0xd0] sm:$0xff]
  %v5303 = vld [vmem:[#allocation2 + $0xd8] sm:$0xff]
  %v5304 = vld [vmem:[#allocation2 + $0xe0] sm:$0xff]
  %v5305 = vld [vmem:[#allocation2 + $0xe8] sm:$0xff]
  %v5306 = vld [vmem:[#allocation2 + $0xf0] sm:$0xff]
  %v5307 = vld [vmem:[#allocation2 + $0xf8] sm:$0xff]
  %v5308 = vld [vmem:[#allocation2 + $0x100] sm:$0xff]
  %v5309 = vld [vmem:[#allocation2 + $0x108] sm:$0xff]
  %v5310 = vld [vmem:[#allocation2 + $0x110] sm:$0xff]
  %v5311 = vld [vmem:[#allocation2 + $0x118] sm:$0xff]
  %v5312 = vld [vmem:[#allocation2 + $0x120] sm:$0xff]
  %v5313 = vld [vmem:[#allocation2 + $0x128] sm:$0xff]
  %v5314 = vld [vmem:[#allocation2 + $0x130] sm:$0xff]
  %v5315 = vld [vmem:[#allocation2 + $0x138] sm:$0xff]
  %v5316 = vld [vmem:[#allocation2 + $0x140] sm:$0xff]
  %v5317 = vld [vmem:[#allocation2 + $0x148] sm:$0xff]
  %v5318 = vld [vmem:[#allocation2 + $0x150] sm:$0xff]
  %v5319 = vld [vmem:[#allocation2 + $0x158] sm:$0xff]
  %v5320 = vld [vmem:[#allocation2 + $0x160] sm:$0xff]
  %v5321 = vld [vmem:[#allocation2 + $0x168] sm:$0xff]
  %v5322 = vld [vmem:[#allocation2 + $0x170] sm:$0xff]
  %v5323 = vld [vmem:[#allocation2 + $0x178] sm:$0xff]
  %v5324 = vld [vmem:[#allocation2 + $0x180] sm:$0xff]
  %v5325 = vld [vmem:[#allocation2 + $0x188] sm:$0xff]
  %v5326 = vld [vmem:[#allocation2 + $0x190] sm:$0xff]
  %v5327 = vld [vmem:[#allocation2 + $0x198] sm:$0xff]
  %v5328 = vld [vmem:[#allocation2 + $0x1a0] sm:$0xff]
  %v5329 = vld [vmem:[#allocation2 + $0x1a8] sm:$0xff]
  %v5330 = vld [vmem:[#allocation2 + $0x1b0] sm:$0xff]
  %v5331 = vld [vmem:[#allocation2 + $0x1b8] sm:$0xff]
  %v5332 = vld [vmem:[#allocation2 + $0x1c0] sm:$0xff]
  %v5333 = vld [vmem:[#allocation2 + $0x1c8] sm:$0xff]
  %v5334 = vld [vmem:[#allocation2 + $0x1d0] sm:$0xff]
  %v5335 = vld [vmem:[#allocation2 + $0x1d8] sm:$0xff]
  %v5336 = vld [vmem:[#allocation2 + $0x1e0] sm:$0xff]
  %v5337 = vld [vmem:[#allocation2 + $0x1e8] sm:$0xff]
  %v5338 = vld [vmem:[#allocation2 + $0x1f0] sm:$0xff]
  %v5339 = vld [vmem:[#allocation2 + $0x1f8] sm:$0xff]
  %v5340 = vld [vmem:[#allocation2 + $0x200] sm:$0xff]
  %v5341 = vld [vmem:[#allocation2 + $0x208] sm:$0xff]
  %v5342 = vld [vmem:[#allocation2 + $0x210] sm:$0xff]
  %v5343 = vld [vmem:[#allocation2 + $0x218] sm:$0xff]
  %v5344 = vld [vmem:[#allocation2 + $0x220] sm:$0xff]
  %v5345 = vld [vmem:[#allocation2 + $0x228] sm:$0xff]
  %v5346 = vld [vmem:[#allocation2 + $0x230] sm:$0xff]
  %v5347 = vld [vmem:[#allocation2 + $0x238] sm:$0xff]
  %v5348 = vld [vmem:[#allocation2 + $0x240] sm:$0xff]
  %v5349 = vld [vmem:[#allocation2 + $0x248] sm:$0xff]
  %v5350 = vld [vmem:[#allocation2 + $0x250] sm:$0xff]
  %v5351 = vld [vmem:[#allocation2 + $0x258] sm:$0xff]
  %v5352 = vld [vmem:[#allocation2 + $0x260] sm:$0xff]
  %v5353 = vld [vmem:[#allocation2 + $0x268] sm:$0xff]
  %v5354 = vld [vmem:[#allocation2 + $0x270] sm:$0xff]
  %v5355 = vld [vmem:[#allocation2 + $0x278] sm:$0xff]
  %v5356 = vld [vmem:[#allocation2 + $0x280] sm:$0xff]
  %v5357 = vld [vmem:[#allocation2 + $0x288] sm:$0xff]
  %v5358 = vld [vmem:[#allocation2 + $0x290] sm:$0xff]
  %v5359 = vld [vmem:[#allocation2 + $0x298] sm:$0xff]
  %v5360 = vld [vmem:[#allocation2 + $0x2a0] sm:$0xff]
  %v5361 = vld [vmem:[#allocation2 + $0x2a8] sm:$0xff]
  %v5362 = vld [vmem:[#allocation2 + $0x2b0] sm:$0xff]
  %v5363 = vld [vmem:[#allocation2 + $0x2b8] sm:$0xff]
  %v5364 = vld [vmem:[#allocation2 + $0x2c0] sm:$0xff]
  %v5365 = vld [vmem:[#allocation2 + $0x2c8] sm:$0xff]
  %v5366 = vld [vmem:[#allocation2 + $0x2d0] sm:$0xff]
  %v5367 = vld [vmem:[#allocation2 + $0x2d8] sm:$0xff]
  %v5368 = vld [vmem:[#allocation2 + $0x2e0] sm:$0xff]
  %v5369 = vld [vmem:[#allocation2 + $0x2e8] sm:$0xff]
  %v5370 = vld [vmem:[#allocation2 + $0x2f0] sm:$0xff]
  %v5371 = vld [vmem:[#allocation2 + $0x2f8] sm:$0xff]
  %v5372 = vld [vmem:[#allocation2 + $0x300] sm:$0xff]
  %v5373 = vld [vmem:[#allocation2 + $0x308] sm:$0xff]
  %v5374 = vld [vmem:[#allocation2 + $0x310] sm:$0xff]
  %v5375 = vld [vmem:[#allocation2 + $0x318] sm:$0xff]
  %v5376 = vld [vmem:[#allocation2 + $0x320] sm:$0xff]
  %v5377 = vld [vmem:[#allocation2 + $0x328] sm:$0xff]
  %v5378 = vld [vmem:[#allocation2 + $0x330] sm:$0xff]
  %v5379 = vld [vmem:[#allocation2 + $0x338] sm:$0xff]
  %v5380 = vld [vmem:[#allocation2 + $0x340] sm:$0xf]
  %v5381 = vld [vmem:[#allocation2 + $0x348] sm:$0xf]
  %s5382 = scalar_lea.vmem %s5, 960
  %v5383 = vld [vmem:[%s5382] sm:$0xff]
  %v5384 = vld [vmem:[%s5382 + $0x8] sm:$0xff]
  %v5385 = vld [vmem:[%s5382 + $0x10] sm:$0xff]
  %v5386 = vld [vmem:[%s5382 + $0x18] sm:$0xff]
  %v5387 = vld [vmem:[%s5382 + $0x20] sm:$0xff]
  %v5388 = vld [vmem:[%s5382 + $0x28] sm:$0xff]
  %v5389 = vld [vmem:[%s5382 + $0x30] sm:$0xff]
  %v5390 = vld [vmem:[%s5382 + $0x38] sm:$0xff]
  %v5391 = vld [vmem:[%s5382 + $0x40] sm:$0xff]
  %v5392 = vld [vmem:[%s5382 + $0x48] sm:$0xff]
  %v5393 = vld [vmem:[%s5382 + $0x50] sm:$0xff]
  %v5394 = vld [vmem:[%s5382 + $0x58] sm:$0xff]
  %v5395 = vld [vmem:[%s5382 + $0x60] sm:$0xff]
  %v5396 = vld [vmem:[%s5382 + $0x68] sm:$0xff]
  %v5397 = vld [vmem:[%s5382 + $0x70] sm:$0xff]
  %v5398 = vld [vmem:[%s5382 + $0x78] sm:$0xff]
  %v5399 = vld [vmem:[%s5382 + $0x80] sm:$0xff]
  %v5400 = vld [vmem:[%s5382 + $0x88] sm:$0xff]
  %v5401 = vld [vmem:[%s5382 + $0x90] sm:$0xff]
  %v5402 = vld [vmem:[%s5382 + $0x98] sm:$0xff]
  %vm5503 = vcmask 1043456
  %v5504 = vrot.slane %v5282, 4
  %v5505 = vrot.slane %v5284, 4
  %v5506 = vsel %vm5503, %v5504, %v5505
  %v5507 = vrot.slane %v5283, 4
  %v5508 = vrot.slane %v5285, 4
  %v5509 = vsel %vm5503, %v5507, %v5508
  %v5510 = vrot.slane %v5286, 4
  %v5511 = vsel %vm5503, %v5505, %v5510
  %v5512 = vrot.slane %v5287, 4
  %v5513 = vsel %vm5503, %v5508, %v5512
  %v5514 = vrot.slane %v5288, 4
  %v5515 = vsel %vm5503, %v5510, %v5514
  %v5516 = vrot.slane %v5289, 4
  %v5517 = vsel %vm5503, %v5512, %v5516
  %v5518 = vrot.slane %v5290, 4
  %v5519 = vsel %vm5503, %v5514, %v5518
  %v5520 = vrot.slane %v5291, 4
  %v5521 = vsel %vm5503, %v5516, %v5520
  %v5522 = vrot.slane %v5292, 4
  %v5523 = vsel %vm5503, %v5518, %v5522
  %v5524 = vrot.slane %v5293, 4
  %v5525 = vsel %vm5503, %v5520, %v5524
  %v5526 = vrot.slane %v5294, 4
  %v5527 = vsel %vm5503, %v5522, %v5526
  %v5528 = vrot.slane %v5295, 4
  %v5529 = vsel %vm5503, %v5524, %v5528
  %v5530 = vrot.slane %v5296, 4
  %v5531 = vsel %vm5503, %v5526, %v5530
  %v5532 = vrot.slane %v5297, 4
  %v5533 = vsel %vm5503, %v5528, %v5532
  %v5534 = vrot.slane %v5298, 4
  %v5535 = vsel %vm5503, %v5530, %v5534
  %v5536 = vrot.slane %v5299, 4
  %v5537 = vsel %vm5503, %v5532, %v5536
  %v5538 = vrot.slane %v5300, 4
  %v5539 = vsel %vm5503, %v5534, %v5538
  %v5540 = vrot.slane %v5301, 4
  %v5541 = vsel %vm5503, %v5536, %v5540
  %v5542 = vrot.slane %v5302, 4
  %v5543 = vsel %vm5503, %v5538, %v5542
  %v5544 = vrot.slane %v5303, 4
  %v5545 = vsel %vm5503, %v5540, %v5544
  %v5546 = vrot.slane %v5304, 4
  %v5547 = vsel %vm5503, %v5542, %v5546
  %v5548 = vrot.slane %v5305, 4
  %v5549 = vsel %vm5503, %v5544, %v5548
  %v5550 = vrot.slane %v5306, 4
  %v5551 = vsel %vm5503, %v5546, %v5550
  %v5552 = vrot.slane %v5307, 4
  %v5553 = vsel %vm5503, %v5548, %v5552
  %v5554 = vrot.slane %v5308, 4
  %v5555 = vsel %vm5503, %v5550, %v5554
  %v5556 = vrot.slane %v5309, 4
  %v5557 = vsel %vm5503, %v5552, %v5556
  %v5558 = vrot.slane %v5310, 4
  %v5559 = vsel %vm5503, %v5554, %v5558
  %v5560 = vrot.slane %v5311, 4
  %v5561 = vsel %vm5503, %v5556, %v5560
  %v5562 = vrot.slane %v5312, 4
  %v5563 = vsel %vm5503, %v5558, %v5562
  %v5564 = vrot.slane %v5313, 4
  %v5565 = vsel %vm5503, %v5560, %v5564
  %v5566 = vrot.slane %v5314, 4
  %v5567 = vsel %vm5503, %v5562, %v5566
  %v5568 = vrot.slane %v5315, 4
  %v5569 = vsel %vm5503, %v5564, %v5568
  %v5570 = vrot.slane %v5316, 4
  %v5571 = vsel %vm5503, %v5566, %v5570
  %v5572 = vrot.slane %v5317, 4
  %v5573 = vsel %vm5503, %v5568, %v5572
  %v5574 = vrot.slane %v5318, 4
  %v5575 = vsel %vm5503, %v5570, %v5574
  %v5576 = vrot.slane %v5319, 4
  %v5577 = vsel %vm5503, %v5572, %v5576
  %v5578 = vrot.slane %v5320, 4
  %v5579 = vsel %vm5503, %v5574, %v5578
  %v5580 = vrot.slane %v5321, 4
  %v5581 = vsel %vm5503, %v5576, %v5580
  %v5582 = vrot.slane %v5322, 4
  %v5583 = vsel %vm5503, %v5578, %v5582
  %v5584 = vrot.slane %v5323, 4
  %v5585 = vsel %vm5503, %v5580, %v5584
  %v5586 = vrot.slane %v5324, 4
  %v5587 = vsel %vm5503, %v5582, %v5586
  %v5588 = vrot.slane %v5325, 4
  %v5589 = vsel %vm5503, %v5584, %v5588
  %v5590 = vrot.slane %v5326, 4
  %v5591 = vsel %vm5503, %v5586, %v5590
  %v5592 = vrot.slane %v5327, 4
  %v5593 = vsel %vm5503, %v5588, %v5592
  %v5594 = vrot.slane %v5328, 4
  %v5595 = vsel %vm5503, %v5590, %v5594
  %v5596 = vrot.slane %v5329, 4
  %v5597 = vsel %vm5503, %v5592, %v5596
  %v5598 = vrot.slane %v5330, 4
  %v5599 = vsel %vm5503, %v5594, %v5598
  %v5600 = vrot.slane %v5331, 4
  %v5601 = vsel %vm5503, %v5596, %v5600
  %v5602 = vrot.slane %v5332, 4
  %v5603 = vsel %vm5503, %v5598, %v5602
  %v5604 = vrot.slane %v5333, 4
  %v5605 = vsel %vm5503, %v5600, %v5604
  %v5606 = vrot.slane %v5334, 4
  %v5607 = vsel %vm5503, %v5602, %v5606
  %v5608 = vrot.slane %v5335, 4
  %v5609 = vsel %vm5503, %v5604, %v5608
  %v5610 = vrot.slane %v5336, 4
  %v5611 = vsel %vm5503, %v5606, %v5610
  %v5612 = vrot.slane %v5337, 4
  %v5613 = vsel %vm5503, %v5608, %v5612
  %v5614 = vrot.slane %v5338, 4
  %v5615 = vsel %vm5503, %v5610, %v5614
  %v5616 = vrot.slane %v5339, 4
  %v5617 = vsel %vm5503, %v5612, %v5616
  %v5618 = vrot.slane %v5340, 4
  %v5619 = vsel %vm5503, %v5614, %v5618
  %v5620 = vrot.slane %v5341, 4
  %v5621 = vsel %vm5503, %v5616, %v5620
  %v5622 = vrot.slane %v5342, 4
  %v5623 = vsel %vm5503, %v5618, %v5622
  %v5624 = vrot.slane %v5343, 4
  %v5625 = vsel %vm5503, %v5620, %v5624
  %v5626 = vrot.slane %v5344, 4
  %v5627 = vsel %vm5503, %v5622, %v5626
  %v5628 = vrot.slane %v5345, 4
  %v5629 = vsel %vm5503, %v5624, %v5628
  %v5630 = vrot.slane %v5346, 4
  %v5631 = vsel %vm5503, %v5626, %v5630
  %v5632 = vrot.slane %v5347, 4
  %v5633 = vsel %vm5503, %v5628, %v5632
  %v5634 = vrot.slane %v5348, 4
  %v5635 = vsel %vm5503, %v5630, %v5634
  %v5636 = vrot.slane %v5349, 4
  %v5637 = vsel %vm5503, %v5632, %v5636
  %v5638 = vrot.slane %v5350, 4
  %v5639 = vsel %vm5503, %v5634, %v5638
  %v5640 = vrot.slane %v5351, 4
  %v5641 = vsel %vm5503, %v5636, %v5640
  %v5642 = vrot.slane %v5352, 4
  %v5643 = vsel %vm5503, %v5638, %v5642
  %v5644 = vrot.slane %v5353, 4
  %v5645 = vsel %vm5503, %v5640, %v5644
  %v5646 = vrot.slane %v5354, 4
  %v5647 = vsel %vm5503, %v5642, %v5646
  %v5648 = vrot.slane %v5355, 4
  %v5649 = vsel %vm5503, %v5644, %v5648
  %v5650 = vrot.slane %v5356, 4
  %v5651 = vsel %vm5503, %v5646, %v5650
  %v5652 = vrot.slane %v5357, 4
  %v5653 = vsel %vm5503, %v5648, %v5652
  %v5654 = vrot.slane %v5358, 4
  %v5655 = vsel %vm5503, %v5650, %v5654
  %v5656 = vrot.slane %v5359, 4
  %v5657 = vsel %vm5503, %v5652, %v5656
  %v5658 = vrot.slane %v5360, 4
  %v5659 = vsel %vm5503, %v5654, %v5658
  %v5660 = vrot.slane %v5361, 4
  %v5661 = vsel %vm5503, %v5656, %v5660
  %v5662 = vrot.slane %v5362, 4
  %v5663 = vsel %vm5503, %v5658, %v5662
  %v5664 = vrot.slane %v5363, 4
  %v5665 = vsel %vm5503, %v5660, %v5664
  %v5666 = vrot.slane %v5364, 4
  %v5667 = vsel %vm5503, %v5662, %v5666
  %v5668 = vrot.slane %v5365, 4
  %v5669 = vsel %vm5503, %v5664, %v5668
  %v5670 = vrot.slane %v5366, 4
  %v5671 = vsel %vm5503, %v5666, %v5670
  %v5672 = vrot.slane %v5367, 4
  %v5673 = vsel %vm5503, %v5668, %v5672
  %v5674 = vrot.slane %v5368, 4
  %v5675 = vsel %vm5503, %v5670, %v5674
  %v5676 = vrot.slane %v5369, 4
  %v5677 = vsel %vm5503, %v5672, %v5676
  %v5678 = vrot.slane %v5370, 4
  %v5679 = vsel %vm5503, %v5674, %v5678
  %v5680 = vrot.slane %v5371, 4
  %v5681 = vsel %vm5503, %v5676, %v5680
  %v5682 = vrot.slane %v5372, 4
  %v5683 = vsel %vm5503, %v5678, %v5682
  %v5684 = vrot.slane %v5373, 4
  %v5685 = vsel %vm5503, %v5680, %v5684
  %v5686 = vrot.slane %v5374, 4
  %v5687 = vsel %vm5503, %v5682, %v5686
  %v5688 = vrot.slane %v5375, 4
  %v5689 = vsel %vm5503, %v5684, %v5688
  %v5690 = vrot.slane %v5376, 4
  %v5691 = vsel %vm5503, %v5686, %v5690
  %v5692 = vrot.slane %v5377, 4
  %v5693 = vsel %vm5503, %v5688, %v5692
  %v5694 = vrot.slane %v5378, 4
  %v5695 = vsel %vm5503, %v5690, %v5694
  %v5696 = vrot.slane %v5379, 4
  %v5697 = vsel %vm5503, %v5692, %v5696
  %v5698 = vrot.slane %v5380, 4
  %v5699 = vsel %vm5503, %v5694, %v5698
  %v5700 = vrot.slane %v5381, 4
  %v5701 = vsel %vm5503, %v5696, %v5700
  %v5751 = vsel %vm994, %v5509, 0
  %v5753 = vsel %vm994, %v5513, 0
  %v5755 = vsel %vm994, %v5517, 0
  %v5757 = vsel %vm994, %v5521, 0
  %v5759 = vsel %vm994, %v5525, 0
  %v5761 = vsel %vm994, %v5529, 0
  %v5763 = vsel %vm994, %v5533, 0
  %v5765 = vsel %vm994, %v5537, 0
  %v5767 = vsel %vm994, %v5541, 0
  %v5769 = vsel %vm994, %v5545, 0
  %v5771 = vsel %vm994, %v5549, 0
  %v5773 = vsel %vm994, %v5553, 0
  %v5775 = vsel %vm994, %v5557, 0
  %v5777 = vsel %vm994, %v5561, 0
  %v5779 = vsel %vm994, %v5565, 0
  %v5781 = vsel %vm994, %v5569, 0
  %v5783 = vsel %vm994, %v5573, 0
  %v5785 = vsel %vm994, %v5577, 0
  %v5787 = vsel %vm994, %v5581, 0
  %v5789 = vsel %vm994, %v5585, 0
  %v5791 = vsel %vm994, %v5589, 0
  %v5793 = vsel %vm994, %v5593, 0
  %v5795 = vsel %vm994, %v5597, 0
  %v5797 = vsel %vm994, %v5601, 0
  %v5799 = vsel %vm994, %v5605, 0
  %v5801 = vsel %vm994, %v5609, 0
  %v5803 = vsel %vm994, %v5613, 0
  %v5805 = vsel %vm994, %v5617, 0
  %v5807 = vsel %vm994, %v5621, 0
  %v5809 = vsel %vm994, %v5625, 0
  %v5811 = vsel %vm994, %v5629, 0
  %v5813 = vsel %vm994, %v5633, 0
  %v5815 = vsel %vm994, %v5637, 0
  %v5817 = vsel %vm994, %v5641, 0
  %v5819 = vsel %vm994, %v5645, 0
  %v5821 = vsel %vm994, %v5649, 0
  %v5823 = vsel %vm994, %v5653, 0
  %v5825 = vsel %vm994, %v5657, 0
  %v5827 = vsel %vm994, %v5661, 0
  %v5829 = vsel %vm994, %v5665, 0
  %v5831 = vsel %vm994, %v5669, 0
  %v5833 = vsel %vm994, %v5673, 0
  %v5835 = vsel %vm994, %v5677, 0
  %v5837 = vsel %vm994, %v5681, 0
  %v5839 = vsel %vm994, %v5685, 0
  %v5841 = vsel %vm994, %v5689, 0
  %v5843 = vsel %vm994, %v5693, 0
  %v5845 = vsel %vm994, %v5697, 0
  %v5847 = vsel %vm994, %v5701, 0
  %5849 = vmatprep.subr.mxu0 0.0
  %5850 = vmatpush1.msra.mxu0 %v5383
  %5851 = vmatprep.subr.mxu0 0.0
  %5852 = vmatpush1.msra.mxu0 %v5384
  %5853 = vmatprep.subr.mxu0 0.0
  %5854 = vmatpush1.msra.mxu0 %v5385
  %5855 = vmatprep.subr.mxu0 0.0
  %5856 = vmatpush1.msra.mxu0 %v5386
  %5857 = vmatprep.subr.mxu0 0.0
  %5858 = vmatpush1.msra.mxu0 %v5387
  %5859 = vmatprep.subr.mxu0 0.0
  %5860 = vmatpush1.msra.mxu0 %v5388
  %5861 = vmatprep.subr.mxu0 0.0
  %5862 = vmatpush1.msra.mxu0 %v5389
  %5863 = vmatprep.subr.mxu0 0.0
  %5864 = vmatpush1.msra.mxu0 %v5390
  %5865 = vmatprep.subr.mxu0 0.0
  %5866 = vmatpush1.msra.mxu0 %v5391
  %5867 = vmatprep.subr.mxu0 0.0
  %5868 = vmatpush1.msra.mxu0 %v5392
  %5869 = vmatprep.subr.mxu0 0.0
  %5870 = vmatpush1.msra.mxu0 %v5393
  %5871 = vmatprep.subr.mxu0 0.0
  %5872 = vmatpush1.msra.mxu0 %v5394
  %5873 = vmatprep.subr.mxu0 0.0
  %5874 = vmatpush1.msra.mxu0 %v5395
  %5875 = vmatprep.subr.mxu0 0.0
  %5876 = vmatpush1.msra.mxu0 %v5396
  %5877 = vmatprep.subr.mxu0 0.0
  %5878 = vmatpush1.msra.mxu0 %v5397
  %5879 = vmatprep.subr.mxu0 0.0
  %5880 = vmatpush1.msra.mxu0 %v5398
  %5881 = vmatprep.subr.mxu0 0.0
  %5882 = vmatpush1.msra.mxu0 %v5399
  %5883 = vmatprep.subr.mxu0 0.0
  %5884 = vmatpush1.msra.mxu0 %v5400
  %5885 = vmatprep.subr.mxu0 0.0
  %5886 = vmatpush1.msra.mxu0 %v5401
  %5887 = vmatprep.subr.mxu0 0.0
  %5888 = vmatpush1.msra.mxu0 %v5402
  %5889 = vmatprep.subr.mxu0 0.0
  %5890 = vmatpush1.msra.mxu0 0.0
  %5891 = vmatprep.subr.mxu0 0.0
  %5892 = vmatpush1.msra.mxu0 0.0
  %5893 = vmatprep.subr.mxu0 0.0
  %5894 = vmatpush1.msra.mxu0 0.0
  %5895 = vmatprep.subr.mxu0 0.0
  %5896 = vmatpush1.msra.mxu0 0.0
  %5897 = vmatprep.subr.mxu0 0.0
  %5898 = vmatpush1.msra.mxu0 0.0
  %5899 = vmatprep.subr.mxu0 0.0
  %5900 = vmatpush1.msra.mxu0 0.0
  %5901 = vmatprep.subr.mxu0 0.0
  %5902 = vmatpush1.msra.mxu0 0.0
  %5903 = vmatprep.subr.mxu0 0.0
  %5904 = vmatpush1.msra.mxu0 0.0
  %5905 = vmatprep.subr.mxu0 0.0
  %5906 = vmatpush1.msra.mxu0 0.0
  %5907 = vmatprep.subr.mxu0 0.0
  %5908 = vmatpush1.msra.mxu0 0.0
  %5909 = vmatprep.subr.mxu0 0.0
  %5910 = vmatpush1.msra.mxu0 0.0
  %5911 = vmatprep.subr.mxu0 0.0
  %5912 = vmatpush1.msra.mxu0 0.0
  %5913 = vmatprep.mubr.f32.mxu0 %v5751
  %5914 = vmatmul.mubr.f32.gmra.mrb[0].mxu0 %v5506
  %v5915 = vpop.f32.mrb[0].mxu0
  %v5916 = vadd.f32 0.0, %v5915
  %v5917 = vpop.f32.mrb[0].mxu0
  %5918 = vmatprep.mubr.f32.mxu0 %v5753
  %5919 = vmatmul.mubr.f32.gmra.mrb[0].mxu0 %v5511
  %v5920 = vpop.f32.mrb[0].mxu0
  %v5921 = vadd.f32 0.0, %v5920
  %v5922 = vpop.f32.mrb[0].mxu0
  %5923 = vmatprep.mubr.f32.mxu0 %v5755
  %5924 = vmatmul.mubr.f32.gmra.mrb[0].mxu0 %v5515
  %v5925 = vpop.f32.mrb[0].mxu0
  %v5926 = vadd.f32 0.0, %v5925
  %v5927 = vpop.f32.mrb[0].mxu0
  %5928 = vmatprep.mubr.f32.mxu0 %v5757
  %5929 = vmatmul.mubr.f32.gmra.mrb[0].mxu0 %v5519
  %v5930 = vpop.f32.mrb[0].mxu0
  %v5931 = vadd.f32 0.0, %v5930
  %v5932 = vpop.f32.mrb[0].mxu0
  %5933 = vmatprep.mubr.f32.mxu0 %v5759
  %5934 = vmatmul.mubr.f32.gmra.mrb[0].mxu0 %v5523
  %v5935 = vpop.f32.mrb[0].mxu0
  %v5936 = vadd.f32 0.0, %v5935
  %v5937 = vpop.f32.mrb[0].mxu0
  %5938 = vmatprep.mubr.f32.mxu0 %v5761
  %5939 = vmatmul.mubr.f32.gmra.mrb[0].mxu0 %v5527
  %v5940 = vpop.f32.mrb[0].mxu0
  %v5941 = vadd.f32 0.0, %v5940
  %v5942 = vpop.f32.mrb[0].mxu0
  %5943 = vmatprep.mubr.f32.mxu0 %v5763
  %5944 = vmatmul.mubr.f32.gmra.mrb[0].mxu0 %v5531
  %v5945 = vpop.f32.mrb[0].mxu0
  %v5946 = vadd.f32 0.0, %v5945
  %v5947 = vpop.f32.mrb[0].mxu0
  %5948 = vmatprep.mubr.f32.mxu0 %v5765
  %5949 = vmatmul.mubr.f32.gmra.mrb[0].mxu0 %v5535
  %v5950 = vpop.f32.mrb[0].mxu0
  %v5951 = vadd.f32 0.0, %v5950
  %v5952 = vpop.f32.mrb[0].mxu0
  %5953 = vmatprep.mubr.f32.mxu0 %v5767
  %5954 = vmatmul.mubr.f32.gmra.mrb[0].mxu0 %v5539
  %v5955 = vpop.f32.mrb[0].mxu0
  %v5956 = vadd.f32 0.0, %v5955
  %v5957 = vpop.f32.mrb[0].mxu0
  %5958 = vmatprep.mubr.f32.mxu0 %v5769
  %5959 = vmatmul.mubr.f32.gmra.mrb[0].mxu0 %v5543
  %v5960 = vpop.f32.mrb[0].mxu0
  %v5961 = vadd.f32 0.0, %v5960
  %v5962 = vpop.f32.mrb[0].mxu0
  %5963 = vmatprep.mubr.f32.mxu0 %v5771
  %5964 = vmatmul.mubr.f32.gmra.mrb[0].mxu0 %v5547
  %v5965 = vpop.f32.mrb[0].mxu0
  %v5966 = vadd.f32 0.0, %v5965
  %v5967 = vpop.f32.mrb[0].mxu0
  %5968 = vmatprep.mubr.f32.mxu0 %v5773
  %5969 = vmatmul.mubr.f32.gmra.mrb[0].mxu0 %v5551
  %v5970 = vpop.f32.mrb[0].mxu0
  %v5971 = vadd.f32 0.0, %v5970
  %v5972 = vpop.f32.mrb[0].mxu0
  %5973 = vmatprep.mubr.f32.mxu0 %v5775
  %5974 = vmatmul.mubr.f32.gmra.mrb[0].mxu0 %v5555
  %v5975 = vpop.f32.mrb[0].mxu0
  %v5976 = vadd.f32 0.0, %v5975
  %v5977 = vpop.f32.mrb[0].mxu0
  %5978 = vmatprep.mubr.f32.mxu0 %v5777
  %5979 = vmatmul.mubr.f32.gmra.mrb[0].mxu0 %v5559
  %v5980 = vpop.f32.mrb[0].mxu0
  %v5981 = vadd.f32 0.0, %v5980
  %v5982 = vpop.f32.mrb[0].mxu0
  %5983 = vmatprep.mubr.f32.mxu0 %v5779
  %5984 = vmatmul.mubr.f32.gmra.mrb[0].mxu0 %v5563
  %v5985 = vpop.f32.mrb[0].mxu0
  %v5986 = vadd.f32 0.0, %v5985
  %v5987 = vpop.f32.mrb[0].mxu0
  %5988 = vmatprep.mubr.f32.mxu0 %v5781
  %5989 = vmatmul.mubr.f32.gmra.mrb[0].mxu0 %v5567
  %v5990 = vpop.f32.mrb[0].mxu0
  %v5991 = vadd.f32 0.0, %v5990
  %v5992 = vpop.f32.mrb[0].mxu0
  %5993 = vmatprep.mubr.f32.mxu0 %v5783
  %5994 = vmatmul.mubr.f32.gmra.mrb[0].mxu0 %v5571
  %v5995 = vpop.f32.mrb[0].mxu0
  %v5996 = vadd.f32 0.0, %v5995
  %v5997 = vpop.f32.mrb[0].mxu0
  %5998 = vmatprep.mubr.f32.mxu0 %v5785
  %5999 = vmatmul.mubr.f32.gmra.mrb[0].mxu0 %v5575
  %v6000 = vpop.f32.mrb[0].mxu0
  %v6001 = vadd.f32 0.0, %v6000
  %v6002 = vpop.f32.mrb[0].mxu0
  %6003 = vmatprep.mubr.f32.mxu0 %v5787
  %6004 = vmatmul.mubr.f32.gmra.mrb[0].mxu0 %v5579
  %v6005 = vpop.f32.mrb[0].mxu0
  %v6006 = vadd.f32 0.0, %v6005
  %v6007 = vpop.f32.mrb[0].mxu0
  %6008 = vmatprep.mubr.f32.mxu0 %v5789
  %6009 = vmatmul.mubr.f32.gmra.mrb[0].mxu0 %v5583
  %v6010 = vpop.f32.mrb[0].mxu0
  %v6011 = vadd.f32 0.0, %v6010
  %v6012 = vpop.f32.mrb[0].mxu0
  %6013 = vmatprep.mubr.f32.mxu0 %v5791
  %6014 = vmatmul.mubr.f32.gmra.mrb[0].mxu0 %v5587
  %v6015 = vpop.f32.mrb[0].mxu0
  %v6016 = vadd.f32 0.0, %v6015
  %v6017 = vpop.f32.mrb[0].mxu0
  %6018 = vmatprep.mubr.f32.mxu0 %v5793
  %6019 = vmatmul.mubr.f32.gmra.mrb[0].mxu0 %v5591
  %v6020 = vpop.f32.mrb[0].mxu0
  %v6021 = vadd.f32 0.0, %v6020
  %v6022 = vpop.f32.mrb[0].mxu0
  %6023 = vmatprep.mubr.f32.mxu0 %v5795
  %6024 = vmatmul.mubr.f32.gmra.mrb[0].mxu0 %v5595
  %v6025 = vpop.f32.mrb[0].mxu0
  %v6026 = vadd.f32 0.0, %v6025
  %v6027 = vpop.f32.mrb[0].mxu0
  %6028 = vmatprep.mubr.f32.mxu0 %v5797
  %6029 = vmatmul.mubr.f32.gmra.mrb[0].mxu0 %v5599
  %v6030 = vpop.f32.mrb[0].mxu0
  %v6031 = vadd.f32 0.0, %v6030
  %v6032 = vpop.f32.mrb[0].mxu0
  %6033 = vmatprep.mubr.f32.mxu0 %v5799
  %6034 = vmatmul.mubr.f32.gmra.mrb[0].mxu0 %v5603
  %v6035 = vpop.f32.mrb[0].mxu0
  %v6036 = vadd.f32 0.0, %v6035
  %v6037 = vpop.f32.mrb[0].mxu0
  %6038 = vmatprep.mubr.f32.mxu0 %v5801
  %6039 = vmatmul.mubr.f32.gmra.mrb[0].mxu0 %v5607
  %v6040 = vpop.f32.mrb[0].mxu0
  %v6041 = vadd.f32 0.0, %v6040
  %v6042 = vpop.f32.mrb[0].mxu0
  %6043 = vmatprep.mubr.f32.mxu0 %v5803
  %6044 = vmatmul.mubr.f32.gmra.mrb[0].mxu0 %v5611
  %v6045 = vpop.f32.mrb[0].mxu0
  %v6046 = vadd.f32 0.0, %v6045
  %v6047 = vpop.f32.mrb[0].mxu0
  %6048 = vmatprep.mubr.f32.mxu0 %v5805
  %6049 = vmatmul.mubr.f32.gmra.mrb[0].mxu0 %v5615
  %v6050 = vpop.f32.mrb[0].mxu0
  %v6051 = vadd.f32 0.0, %v6050
  %v6052 = vpop.f32.mrb[0].mxu0
  %6053 = vmatprep.mubr.f32.mxu0 %v5807
  %6054 = vmatmul.mubr.f32.gmra.mrb[0].mxu0 %v5619
  %v6055 = vpop.f32.mrb[0].mxu0
  %v6056 = vadd.f32 0.0, %v6055
  %v6057 = vpop.f32.mrb[0].mxu0
  %6058 = vmatprep.mubr.f32.mxu0 %v5809
  %6059 = vmatmul.mubr.f32.gmra.mrb[0].mxu0 %v5623
  %v6060 = vpop.f32.mrb[0].mxu0
  %v6061 = vadd.f32 0.0, %v6060
  %v6062 = vpop.f32.mrb[0].mxu0
  %6063 = vmatprep.mubr.f32.mxu0 %v5811
  %6064 = vmatmul.mubr.f32.gmra.mrb[0].mxu0 %v5627
  %v6065 = vpop.f32.mrb[0].mxu0
  %v6066 = vadd.f32 0.0, %v6065
  %v6067 = vpop.f32.mrb[0].mxu0
  %6068 = vmatprep.mubr.f32.mxu0 %v5813
  %6069 = vmatmul.mubr.f32.gmra.mrb[0].mxu0 %v5631
  %v6070 = vpop.f32.mrb[0].mxu0
  %v6071 = vadd.f32 0.0, %v6070
  %v6072 = vpop.f32.mrb[0].mxu0
  %6073 = vmatprep.mubr.f32.mxu0 %v5815
  %6074 = vmatmul.mubr.f32.gmra.mrb[0].mxu0 %v5635
  %v6075 = vpop.f32.mrb[0].mxu0
  %v6076 = vadd.f32 0.0, %v6075
  %v6077 = vpop.f32.mrb[0].mxu0
  %6078 = vmatprep.mubr.f32.mxu0 %v5817
  %6079 = vmatmul.mubr.f32.gmra.mrb[0].mxu0 %v5639
  %v6080 = vpop.f32.mrb[0].mxu0
  %v6081 = vadd.f32 0.0, %v6080
  %v6082 = vpop.f32.mrb[0].mxu0
  %6083 = vmatprep.mubr.f32.mxu0 %v5819
  %6084 = vmatmul.mubr.f32.gmra.mrb[0].mxu0 %v5643
  %v6085 = vpop.f32.mrb[0].mxu0
  %v6086 = vadd.f32 0.0, %v6085
  %v6087 = vpop.f32.mrb[0].mxu0
  %6088 = vmatprep.mubr.f32.mxu0 %v5821
  %6089 = vmatmul.mubr.f32.gmra.mrb[0].mxu0 %v5647
  %v6090 = vpop.f32.mrb[0].mxu0
  %v6091 = vadd.f32 0.0, %v6090
  %v6092 = vpop.f32.mrb[0].mxu0
  %6093 = vmatprep.mubr.f32.mxu0 %v5823
  %6094 = vmatmul.mubr.f32.gmra.mrb[0].mxu0 %v5651
  %v6095 = vpop.f32.mrb[0].mxu0
  %v6096 = vadd.f32 0.0, %v6095
  %v6097 = vpop.f32.mrb[0].mxu0
  %6098 = vmatprep.mubr.f32.mxu0 %v5825
  %6099 = vmatmul.mubr.f32.gmra.mrb[0].mxu0 %v5655
  %v6100 = vpop.f32.mrb[0].mxu0
  %v6101 = vadd.f32 0.0, %v6100
  %v6102 = vpop.f32.mrb[0].mxu0
  %6103 = vmatprep.mubr.f32.mxu0 %v5827
  %6104 = vmatmul.mubr.f32.gmra.mrb[0].mxu0 %v5659
  %v6105 = vpop.f32.mrb[0].mxu0
  %v6106 = vadd.f32 0.0, %v6105
  %v6107 = vpop.f32.mrb[0].mxu0
  %6108 = vmatprep.mubr.f32.mxu0 %v5829
  %6109 = vmatmul.mubr.f32.gmra.mrb[0].mxu0 %v5663
  %v6110 = vpop.f32.mrb[0].mxu0
  %v6111 = vadd.f32 0.0, %v6110
  %v6112 = vpop.f32.mrb[0].mxu0
  %6113 = vmatprep.mubr.f32.mxu0 %v5831
  %6114 = vmatmul.mubr.f32.gmra.mrb[0].mxu0 %v5667
  %v6115 = vpop.f32.mrb[0].mxu0
  %v6116 = vadd.f32 0.0, %v6115
  %v6117 = vpop.f32.mrb[0].mxu0
  %6118 = vmatprep.mubr.f32.mxu0 %v5833
  %6119 = vmatmul.mubr.f32.gmra.mrb[0].mxu0 %v5671
  %v6120 = vpop.f32.mrb[0].mxu0
  %v6121 = vadd.f32 0.0, %v6120
  %v6122 = vpop.f32.mrb[0].mxu0
  %6123 = vmatprep.mubr.f32.mxu0 %v5835
  %6124 = vmatmul.mubr.f32.gmra.mrb[0].mxu0 %v5675
  %v6125 = vpop.f32.mrb[0].mxu0
  %v6126 = vadd.f32 0.0, %v6125
  %v6127 = vpop.f32.mrb[0].mxu0
  %6128 = vmatprep.mubr.f32.mxu0 %v5837
  %6129 = vmatmul.mubr.f32.gmra.mrb[0].mxu0 %v5679
  %v6130 = vpop.f32.mrb[0].mxu0
  %v6131 = vadd.f32 0.0, %v6130
  %v6132 = vpop.f32.mrb[0].mxu0
  %6133 = vmatprep.mubr.f32.mxu0 %v5839
  %6134 = vmatmul.mubr.f32.gmra.mrb[0].mxu0 %v5683
  %v6135 = vpop.f32.mrb[0].mxu0
  %v6136 = vadd.f32 0.0, %v6135
  %v6137 = vpop.f32.mrb[0].mxu0
  %6138 = vmatprep.mubr.f32.mxu0 %v5841
  %6139 = vmatmul.mubr.f32.gmra.mrb[0].mxu0 %v5687
  %v6140 = vpop.f32.mrb[0].mxu0
  %v6141 = vadd.f32 0.0, %v6140
  %v6142 = vpop.f32.mrb[0].mxu0
  %6143 = vmatprep.mubr.f32.mxu0 %v5843
  %6144 = vmatmul.mubr.f32.gmra.mrb[0].mxu0 %v5691
  %v6145 = vpop.f32.mrb[0].mxu0
  %v6146 = vadd.f32 0.0, %v6145
  %v6147 = vpop.f32.mrb[0].mxu0
  %6148 = vmatprep.mubr.f32.mxu0 %v5845
  %6149 = vmatmul.mubr.f32.gmra.mrb[0].mxu0 %v5695
  %v6150 = vpop.f32.mrb[0].mxu0
  %v6151 = vadd.f32 0.0, %v6150
  %v6152 = vpop.f32.mrb[0].mxu0
  %6153 = vmatprep.mubr.f32.mxu0 %v5847
  %6154 = vmatmul.mubr.f32.gmra.mrb[0].mxu0 %v5699
  %v6155 = vpop.f32.mrb[0].mxu0
  %v6156 = vadd.f32 0.0, %v6155
  %v6157 = vpop.f32.mrb[0].mxu0
  %6158 = vdwg.mxu0
  %v6159 = vadd.f32 %v5233, %v5916
  %v6160 = vadd.f32 %v5234, %v5921
  %v6161 = vadd.f32 %v5235, %v5926
  %v6162 = vadd.f32 %v5236, %v5931
  %v6163 = vadd.f32 %v5237, %v5936
  %v6164 = vadd.f32 %v5238, %v5941
  %v6165 = vadd.f32 %v5239, %v5946
  %v6166 = vadd.f32 %v5240, %v5951
  %v6167 = vadd.f32 %v5241, %v5956
  %v6168 = vadd.f32 %v5242, %v5961
  %v6169 = vadd.f32 %v5243, %v5966
  %v6170 = vadd.f32 %v5244, %v5971
  %v6171 = vadd.f32 %v5245, %v5976
  %v6172 = vadd.f32 %v5246, %v5981
  %v6173 = vadd.f32 %v5247, %v5986
  %v6174 = vadd.f32 %v5248, %v5991
  %v6175 = vadd.f32 %v5249, %v5996
  %v6176 = vadd.f32 %v5250, %v6001
  %v6177 = vadd.f32 %v5251, %v6006
  %v6178 = vadd.f32 %v5252, %v6011
  %v6179 = vadd.f32 %v5253, %v6016
  %v6180 = vadd.f32 %v5254, %v6021
  %v6181 = vadd.f32 %v5255, %v6026
  %v6182 = vadd.f32 %v5256, %v6031
  %v6183 = vadd.f32 %v5257, %v6036
  %v6184 = vadd.f32 %v5258, %v6041
  %v6185 = vadd.f32 %v5259, %v6046
  %v6186 = vadd.f32 %v5260, %v6051
  %v6187 = vadd.f32 %v5261, %v6056
  %v6188 = vadd.f32 %v5262, %v6061
  %v6189 = vadd.f32 %v5263, %v6066
  %v6190 = vadd.f32 %v5264, %v6071
  %v6191 = vadd.f32 %v5265, %v6076
  %v6192 = vadd.f32 %v5266, %v6081
  %v6193 = vadd.f32 %v5267, %v6086
  %v6194 = vadd.f32 %v5268, %v6091
  %v6195 = vadd.f32 %v5269, %v6096
  %v6196 = vadd.f32 %v5270, %v6101
  %v6197 = vadd.f32 %v5271, %v6106
  %v6198 = vadd.f32 %v5272, %v6111
  %v6199 = vadd.f32 %v5273, %v6116
  %v6200 = vadd.f32 %v5274, %v6121
  %v6201 = vadd.f32 %v5275, %v6126
  %v6202 = vadd.f32 %v5276, %v6131
  %v6203 = vadd.f32 %v5277, %v6136
  %v6204 = vadd.f32 %v5278, %v6141
  %v6205 = vadd.f32 %v5279, %v6146
  %v6206 = vadd.f32 %v5280, %v6151
  %v6207 = vadd.f32 %v5281, %v6156
  %v6208 = vld [vmem:[#allocation2 + $0x30] sm:$0xe0]
  %v6209 = vld [vmem:[#allocation2 + $0x38] sm:$0xe0]
  %v6210 = vld [vmem:[#allocation2 + $0x340] sm:$0x1f]
  %v6211 = vld [vmem:[#allocation2 + $0x348] sm:$0x1f]
  %s6212 = scalar_lea.vmem %s5, 1120
  %v6213 = vld [vmem:[%s6212] sm:$0xff]
  %v6214 = vld [vmem:[%s6212 + $0x8] sm:$0xff]
  %v6215 = vld [vmem:[%s6212 + $0x10] sm:$0xff]
  %v6216 = vld [vmem:[%s6212 + $0x18] sm:$0xff]
  %v6217 = vld [vmem:[%s6212 + $0x20] sm:$0xff]
  %v6218 = vld [vmem:[%s6212 + $0x28] sm:$0xff]
  %v6219 = vld [vmem:[%s6212 + $0x30] sm:$0xff]
  %v6220 = vld [vmem:[%s6212 + $0x38] sm:$0xff]
  %v6221 = vld [vmem:[%s6212 + $0x40] sm:$0xff]
  %v6222 = vld [vmem:[%s6212 + $0x48] sm:$0xff]
  %v6223 = vld [vmem:[%s6212 + $0x50] sm:$0xff]
  %v6224 = vld [vmem:[%s6212 + $0x58] sm:$0xff]
  %v6225 = vld [vmem:[%s6212 + $0x60] sm:$0xff]
  %v6226 = vld [vmem:[%s6212 + $0x68] sm:$0xff]
  %v6227 = vld [vmem:[%s6212 + $0x70] sm:$0xff]
  %v6228 = vld [vmem:[%s6212 + $0x78] sm:$0xff]
  %v6229 = vld [vmem:[%s6212 + $0x80] sm:$0xff]
  %v6230 = vld [vmem:[%s6212 + $0x88] sm:$0xff]
  %v6231 = vld [vmem:[%s6212 + $0x90] sm:$0xff]
  %v6232 = vld [vmem:[%s6212 + $0x98] sm:$0xff]
  %vm6237 = vcmask 1042432
  %v6238 = vrot.slane %v6208, 5
  %v6239 = vrot.slane %v5284, 5
  %v6240 = vsel %vm6237, %v6238, %v6239
  %v6241 = vrot.slane %v6209, 5
  %v6242 = vrot.slane %v5285, 5
  %v6243 = vsel %vm6237, %v6241, %v6242
  %v6244 = vrot.slane %v5286, 5
  %v6245 = vsel %vm6237, %v6239, %v6244
  %v6246 = vrot.slane %v5287, 5
  %v6247 = vsel %vm6237, %v6242, %v6246
  %v6248 = vrot.slane %v5288, 5
  %v6249 = vsel %vm6237, %v6244, %v6248
  %v6250 = vrot.slane %v5289, 5
  %v6251 = vsel %vm6237, %v6246, %v6250
  %v6252 = vrot.slane %v5290, 5
  %v6253 = vsel %vm6237, %v6248, %v6252
  %v6254 = vrot.slane %v5291, 5
  %v6255 = vsel %vm6237, %v6250, %v6254
  %v6256 = vrot.slane %v5292, 5
  %v6257 = vsel %vm6237, %v6252, %v6256
  %v6258 = vrot.slane %v5293, 5
  %v6259 = vsel %vm6237, %v6254, %v6258
  %v6260 = vrot.slane %v5294, 5
  %v6261 = vsel %vm6237, %v6256, %v6260
  %v6262 = vrot.slane %v5295, 5
  %v6263 = vsel %vm6237, %v6258, %v6262
  %v6264 = vrot.slane %v5296, 5
  %v6265 = vsel %vm6237, %v6260, %v6264
  %v6266 = vrot.slane %v5297, 5
  %v6267 = vsel %vm6237, %v6262, %v6266
  %v6268 = vrot.slane %v5298, 5
  %v6269 = vsel %vm6237, %v6264, %v6268
  %v6270 = vrot.slane %v5299, 5
  %v6271 = vsel %vm6237, %v6266, %v6270
  %v6272 = vrot.slane %v5300, 5
  %v6273 = vsel %vm6237, %v6268, %v6272
  %v6274 = vrot.slane %v5301, 5
  %v6275 = vsel %vm6237, %v6270, %v6274
  %v6276 = vrot.slane %v5302, 5
  %v6277 = vsel %vm6237, %v6272, %v6276
  %v6278 = vrot.slane %v5303, 5
  %v6279 = vsel %vm6237, %v6274, %v6278
  %v6280 = vrot.slane %v5304, 5
  %v6281 = vsel %vm6237, %v6276, %v6280
  %v6282 = vrot.slane %v5305, 5
  %v6283 = vsel %vm6237, %v6278, %v6282
  %v6284 = vrot.slane %v5306, 5
  %v6285 = vsel %vm6237, %v6280, %v6284
  %v6286 = vrot.slane %v5307, 5
  %v6287 = vsel %vm6237, %v6282, %v6286
  %v6288 = vrot.slane %v5308, 5
  %v6289 = vsel %vm6237, %v6284, %v6288
  %v6290 = vrot.slane %v5309, 5
  %v6291 = vsel %vm6237, %v6286, %v6290
  %v6292 = vrot.slane %v5310, 5
  %v6293 = vsel %vm6237, %v6288, %v6292
  %v6294 = vrot.slane %v5311, 5
  %v6295 = vsel %vm6237, %v6290, %v6294
  %v6296 = vrot.slane %v5312, 5
  %v6297 = vsel %vm6237, %v6292, %v6296
  %v6298 = vrot.slane %v5313, 5
  %v6299 = vsel %vm6237, %v6294, %v6298
  %v6300 = vrot.slane %v5314, 5
  %v6301 = vsel %vm6237, %v6296, %v6300
  %v6302 = vrot.slane %v5315, 5
  %v6303 = vsel %vm6237, %v6298, %v6302
  %v6304 = vrot.slane %v5316, 5
  %v6305 = vsel %vm6237, %v6300, %v6304
  %v6306 = vrot.slane %v5317, 5
  %v6307 = vsel %vm6237, %v6302, %v6306
  %v6308 = vrot.slane %v5318, 5
  %v6309 = vsel %vm6237, %v6304, %v6308
  %v6310 = vrot.slane %v5319, 5
  %v6311 = vsel %vm6237, %v6306, %v6310
  %v6312 = vrot.slane %v5320, 5
  %v6313 = vsel %vm6237, %v6308, %v6312
  %v6314 = vrot.slane %v5321, 5
  %v6315 = vsel %vm6237, %v6310, %v6314
  %v6316 = vrot.slane %v5322, 5
  %v6317 = vsel %vm6237, %v6312, %v6316
  %v6318 = vrot.slane %v5323, 5
  %v6319 = vsel %vm6237, %v6314, %v6318
  %v6320 = vrot.slane %v5324, 5
  %v6321 = vsel %vm6237, %v6316, %v6320
  %v6322 = vrot.slane %v5325, 5
  %v6323 = vsel %vm6237, %v6318, %v6322
  %v6324 = vrot.slane %v5326, 5
  %v6325 = vsel %vm6237, %v6320, %v6324
  %v6326 = vrot.slane %v5327, 5
  %v6327 = vsel %vm6237, %v6322, %v6326
  %v6328 = vrot.slane %v5328, 5
  %v6329 = vsel %vm6237, %v6324, %v6328
  %v6330 = vrot.slane %v5329, 5
  %v6331 = vsel %vm6237, %v6326, %v6330
  %v6332 = vrot.slane %v5330, 5
  %v6333 = vsel %vm6237, %v6328, %v6332
  %v6334 = vrot.slane %v5331, 5
  %v6335 = vsel %vm6237, %v6330, %v6334
  %v6336 = vrot.slane %v5332, 5
  %v6337 = vsel %vm6237, %v6332, %v6336
  %v6338 = vrot.slane %v5333, 5
  %v6339 = vsel %vm6237, %v6334, %v6338
  %v6340 = vrot.slane %v5334, 5
  %v6341 = vsel %vm6237, %v6336, %v6340
  %v6342 = vrot.slane %v5335, 5
  %v6343 = vsel %vm6237, %v6338, %v6342
  %v6344 = vrot.slane %v5336, 5
  %v6345 = vsel %vm6237, %v6340, %v6344
  %v6346 = vrot.slane %v5337, 5
  %v6347 = vsel %vm6237, %v6342, %v6346
  %v6348 = vrot.slane %v5338, 5
  %v6349 = vsel %vm6237, %v6344, %v6348
  %v6350 = vrot.slane %v5339, 5
  %v6351 = vsel %vm6237, %v6346, %v6350
  %v6352 = vrot.slane %v5340, 5
  %v6353 = vsel %vm6237, %v6348, %v6352
  %v6354 = vrot.slane %v5341, 5
  %v6355 = vsel %vm6237, %v6350, %v6354
  %v6356 = vrot.slane %v5342, 5
  %v6357 = vsel %vm6237, %v6352, %v6356
  %v6358 = vrot.slane %v5343, 5
  %v6359 = vsel %vm6237, %v6354, %v6358
  %v6360 = vrot.slane %v5344, 5
  %v6361 = vsel %vm6237, %v6356, %v6360
  %v6362 = vrot.slane %v5345, 5
  %v6363 = vsel %vm6237, %v6358, %v6362
  %v6364 = vrot.slane %v5346, 5
  %v6365 = vsel %vm6237, %v6360, %v6364
  %v6366 = vrot.slane %v5347, 5
  %v6367 = vsel %vm6237, %v6362, %v6366
  %v6368 = vrot.slane %v5348, 5
  %v6369 = vsel %vm6237, %v6364, %v6368
  %v6370 = vrot.slane %v5349, 5
  %v6371 = vsel %vm6237, %v6366, %v6370
  %v6372 = vrot.slane %v5350, 5
  %v6373 = vsel %vm6237, %v6368, %v6372
  %v6374 = vrot.slane %v5351, 5
  %v6375 = vsel %vm6237, %v6370, %v6374
  %v6376 = vrot.slane %v5352, 5
  %v6377 = vsel %vm6237, %v6372, %v6376
  %v6378 = vrot.slane %v5353, 5
  %v6379 = vsel %vm6237, %v6374, %v6378
  %v6380 = vrot.slane %v5354, 5
  %v6381 = vsel %vm6237, %v6376, %v6380
  %v6382 = vrot.slane %v5355, 5
  %v6383 = vsel %vm6237, %v6378, %v6382
  %v6384 = vrot.slane %v5356, 5
  %v6385 = vsel %vm6237, %v6380, %v6384
  %v6386 = vrot.slane %v5357, 5
  %v6387 = vsel %vm6237, %v6382, %v6386
  %v6388 = vrot.slane %v5358, 5
  %v6389 = vsel %vm6237, %v6384, %v6388
  %v6390 = vrot.slane %v5359, 5
  %v6391 = vsel %vm6237, %v6386, %v6390
  %v6392 = vrot.slane %v5360, 5
  %v6393 = vsel %vm6237, %v6388, %v6392
  %v6394 = vrot.slane %v5361, 5
  %v6395 = vsel %vm6237, %v6390, %v6394
  %v6396 = vrot.slane %v5362, 5
  %v6397 = vsel %vm6237, %v6392, %v6396
  %v6398 = vrot.slane %v5363, 5
  %v6399 = vsel %vm6237, %v6394, %v6398
  %v6400 = vrot.slane %v5364, 5
  %v6401 = vsel %vm6237, %v6396, %v6400
  %v6402 = vrot.slane %v5365, 5
  %v6403 = vsel %vm6237, %v6398, %v6402
  %v6404 = vrot.slane %v5366, 5
  %v6405 = vsel %vm6237, %v6400, %v6404
  %v6406 = vrot.slane %v5367, 5
  %v6407 = vsel %vm6237, %v6402, %v6406
  %v6408 = vrot.slane %v5368, 5
  %v6409 = vsel %vm6237, %v6404, %v6408
  %v6410 = vrot.slane %v5369, 5
  %v6411 = vsel %vm6237, %v6406, %v6410
  %v6412 = vrot.slane %v5370, 5
  %v6413 = vsel %vm6237, %v6408, %v6412
  %v6414 = vrot.slane %v5371, 5
  %v6415 = vsel %vm6237, %v6410, %v6414
  %v6416 = vrot.slane %v5372, 5
  %v6417 = vsel %vm6237, %v6412, %v6416
  %v6418 = vrot.slane %v5373, 5
  %v6419 = vsel %vm6237, %v6414, %v6418
  %v6420 = vrot.slane %v5374, 5
  %v6421 = vsel %vm6237, %v6416, %v6420
  %v6422 = vrot.slane %v5375, 5
  %v6423 = vsel %vm6237, %v6418, %v6422
  %v6424 = vrot.slane %v5376, 5
  %v6425 = vsel %vm6237, %v6420, %v6424
  %v6426 = vrot.slane %v5377, 5
  %v6427 = vsel %vm6237, %v6422, %v6426
  %v6428 = vrot.slane %v5378, 5
  %v6429 = vsel %vm6237, %v6424, %v6428
  %v6430 = vrot.slane %v5379, 5
  %v6431 = vsel %vm6237, %v6426, %v6430
  %v6432 = vrot.slane %v6210, 5
  %v6433 = vsel %vm6237, %v6428, %v6432
  %v6434 = vrot.slane %v6211, 5
  %v6435 = vsel %vm6237, %v6430, %v6434
  %v6485 = vsel %vm994, %v6243, 0
  %v6487 = vsel %vm994, %v6247, 0
  %v6489 = vsel %vm994, %v6251, 0
  %v6491 = vsel %vm994, %v6255, 0
  %v6493 = vsel %vm994, %v6259, 0
  %v6495 = vsel %vm994, %v6263, 0
  %v6497 = vsel %vm994, %v6267, 0
  %v6499 = vsel %vm994, %v6271, 0
  %v6501 = vsel %vm994, %v6275, 0
  %v6503 = vsel %vm994, %v6279, 0
  %v6505 = vsel %vm994, %v6283, 0
  %v6507 = vsel %vm994, %v6287, 0
  %v6509 = vsel %vm994, %v6291, 0
  %v6511 = vsel %vm994, %v6295, 0
  %v6513 = vsel %vm994, %v6299, 0
  %v6515 = vsel %vm994, %v6303, 0
  %v6517 = vsel %vm994, %v6307, 0
  %v6519 = vsel %vm994, %v6311, 0
  %v6521 = vsel %vm994, %v6315, 0
  %v6523 = vsel %vm994, %v6319, 0
  %v6525 = vsel %vm994, %v6323, 0
  %v6527 = vsel %vm994, %v6327, 0
  %v6529 = vsel %vm994, %v6331, 0
  %v6531 = vsel %vm994, %v6335, 0
  %v6533 = vsel %vm994, %v6339, 0
  %v6535 = vsel %vm994, %v6343, 0
  %v6537 = vsel %vm994, %v6347, 0
  %v6539 = vsel %vm994, %v6351, 0
  %v6541 = vsel %vm994, %v6355, 0
  %v6543 = vsel %vm994, %v6359, 0
  %v6545 = vsel %vm994, %v6363, 0
  %v6547 = vsel %vm994, %v6367, 0
  %v6549 = vsel %vm994, %v6371, 0
  %v6551 = vsel %vm994, %v6375, 0
  %v6553 = vsel %vm994, %v6379, 0
  %v6555 = vsel %vm994, %v6383, 0
  %v6557 = vsel %vm994, %v6387, 0
  %v6559 = vsel %vm994, %v6391, 0
  %v6561 = vsel %vm994, %v6395, 0
  %v6563 = vsel %vm994, %v6399, 0
  %v6565 = vsel %vm994, %v6403, 0
  %v6567 = vsel %vm994, %v6407, 0
  %v6569 = vsel %vm994, %v6411, 0
  %v6571 = vsel %vm994, %v6415, 0
  %v6573 = vsel %vm994, %v6419, 0
  %v6575 = vsel %vm994, %v6423, 0
  %v6577 = vsel %vm994, %v6427, 0
  %v6579 = vsel %vm994, %v6431, 0
  %v6581 = vsel %vm994, %v6435, 0
  %6583 = vmatprep.subr.mxu0 0.0
  %6584 = vmatpush1.msra.mxu0 %v6213
  %6585 = vmatprep.subr.mxu0 0.0
  %6586 = vmatpush1.msra.mxu0 %v6214
  %6587 = vmatprep.subr.mxu0 0.0
  %6588 = vmatpush1.msra.mxu0 %v6215
  %6589 = vmatprep.subr.mxu0 0.0
  %6590 = vmatpush1.msra.mxu0 %v6216
  %6591 = vmatprep.subr.mxu0 0.0
  %6592 = vmatpush1.msra.mxu0 %v6217
  %6593 = vmatprep.subr.mxu0 0.0
  %6594 = vmatpush1.msra.mxu0 %v6218
  %6595 = vmatprep.subr.mxu0 0.0
  %6596 = vmatpush1.msra.mxu0 %v6219
  %6597 = vmatprep.subr.mxu0 0.0
  %6598 = vmatpush1.msra.mxu0 %v6220
  %6599 = vmatprep.subr.mxu0 0.0
  %6600 = vmatpush1.msra.mxu0 %v6221
  %6601 = vmatprep.subr.mxu0 0.0
  %6602 = vmatpush1.msra.mxu0 %v6222
  %6603 = vmatprep.subr.mxu0 0.0
  %6604 = vmatpush1.msra.mxu0 %v6223
  %6605 = vmatprep.subr.mxu0 0.0
  %6606 = vmatpush1.msra.mxu0 %v6224
  %6607 = vmatprep.subr.mxu0 0.0
  %6608 = vmatpush1.msra.mxu0 %v6225
  %6609 = vmatprep.subr.mxu0 0.0
  %6610 = vmatpush1.msra.mxu0 %v6226
  %6611 = vmatprep.subr.mxu0 0.0
  %6612 = vmatpush1.msra.mxu0 %v6227
  %6613 = vmatprep.subr.mxu0 0.0
  %6614 = vmatpush1.msra.mxu0 %v6228
  %6615 = vmatprep.subr.mxu0 0.0
  %6616 = vmatpush1.msra.mxu0 %v6229
  %6617 = vmatprep.subr.mxu0 0.0
  %6618 = vmatpush1.msra.mxu0 %v6230
  %6619 = vmatprep.subr.mxu0 0.0
  %6620 = vmatpush1.msra.mxu0 %v6231
  %6621 = vmatprep.subr.mxu0 0.0
  %6622 = vmatpush1.msra.mxu0 %v6232
  %6623 = vmatprep.subr.mxu0 0.0
  %6624 = vmatpush1.msra.mxu0 0.0
  %6625 = vmatprep.subr.mxu0 0.0
  %6626 = vmatpush1.msra.mxu0 0.0
  %6627 = vmatprep.subr.mxu0 0.0
  %6628 = vmatpush1.msra.mxu0 0.0
  %6629 = vmatprep.subr.mxu0 0.0
  %6630 = vmatpush1.msra.mxu0 0.0
  %6631 = vmatprep.subr.mxu0 0.0
  %6632 = vmatpush1.msra.mxu0 0.0
  %6633 = vmatprep.subr.mxu0 0.0
  %6634 = vmatpush1.msra.mxu0 0.0
  %6635 = vmatprep.subr.mxu0 0.0
  %6636 = vmatpush1.msra.mxu0 0.0
  %6637 = vmatprep.subr.mxu0 0.0
  %6638 = vmatpush1.msra.mxu0 0.0
  %6639 = vmatprep.subr.mxu0 0.0
  %6640 = vmatpush1.msra.mxu0 0.0
  %6641 = vmatprep.subr.mxu0 0.0
  %6642 = vmatpush1.msra.mxu0 0.0
  %6643 = vmatprep.subr.mxu0 0.0
  %6644 = vmatpush1.msra.mxu0 0.0
  %6645 = vmatprep.subr.mxu0 0.0
  %6646 = vmatpush1.msra.mxu0 0.0
  %6647 = vmatprep.mubr.f32.mxu0 %v6485
  %6648 = vmatmul.mubr.f32.gmra.mrb[0].mxu0 %v6240
  %v6649 = vpop.f32.mrb[0].mxu0
  %v6650 = vadd.f32 0.0, %v6649
  %v6651 = vpop.f32.mrb[0].mxu0
  %6652 = vmatprep.mubr.f32.mxu0 %v6487
  %6653 = vmatmul.mubr.f32.gmra.mrb[0].mxu0 %v6245
  %v6654 = vpop.f32.mrb[0].mxu0
  %v6655 = vadd.f32 0.0, %v6654
  %v6656 = vpop.f32.mrb[0].mxu0
  %6657 = vmatprep.mubr.f32.mxu0 %v6489
  %6658 = vmatmul.mubr.f32.gmra.mrb[0].mxu0 %v6249
  %v6659 = vpop.f32.mrb[0].mxu0
  %v6660 = vadd.f32 0.0, %v6659
  %v6661 = vpop.f32.mrb[0].mxu0
  %6662 = vmatprep.mubr.f32.mxu0 %v6491
  %6663 = vmatmul.mubr.f32.gmra.mrb[0].mxu0 %v6253
  %v6664 = vpop.f32.mrb[0].mxu0
  %v6665 = vadd.f32 0.0, %v6664
  %v6666 = vpop.f32.mrb[0].mxu0
  %6667 = vmatprep.mubr.f32.mxu0 %v6493
  %6668 = vmatmul.mubr.f32.gmra.mrb[0].mxu0 %v6257
  %v6669 = vpop.f32.mrb[0].mxu0
  %v6670 = vadd.f32 0.0, %v6669
  %v6671 = vpop.f32.mrb[0].mxu0
  %6672 = vmatprep.mubr.f32.mxu0 %v6495
  %6673 = vmatmul.mubr.f32.gmra.mrb[0].mxu0 %v6261
  %v6674 = vpop.f32.mrb[0].mxu0
  %v6675 = vadd.f32 0.0, %v6674
  %v6676 = vpop.f32.mrb[0].mxu0
  %6677 = vmatprep.mubr.f32.mxu0 %v6497
  %6678 = vmatmul.mubr.f32.gmra.mrb[0].mxu0 %v6265
  %v6679 = vpop.f32.mrb[0].mxu0
  %v6680 = vadd.f32 0.0, %v6679
  %v6681 = vpop.f32.mrb[0].mxu0
  %6682 = vmatprep.mubr.f32.mxu0 %v6499
  %6683 = vmatmul.mubr.f32.gmra.mrb[0].mxu0 %v6269
  %v6684 = vpop.f32.mrb[0].mxu0
  %v6685 = vadd.f32 0.0, %v6684
  %v6686 = vpop.f32.mrb[0].mxu0
  %6687 = vmatprep.mubr.f32.mxu0 %v6501
  %6688 = vmatmul.mubr.f32.gmra.mrb[0].mxu0 %v6273
  %v6689 = vpop.f32.mrb[0].mxu0
  %v6690 = vadd.f32 0.0, %v6689
  %v6691 = vpop.f32.mrb[0].mxu0
  %6692 = vmatprep.mubr.f32.mxu0 %v6503
  %6693 = vmatmul.mubr.f32.gmra.mrb[0].mxu0 %v6277
  %v6694 = vpop.f32.mrb[0].mxu0
  %v6695 = vadd.f32 0.0, %v6694
  %v6696 = vpop.f32.mrb[0].mxu0
  %6697 = vmatprep.mubr.f32.mxu0 %v6505
  %6698 = vmatmul.mubr.f32.gmra.mrb[0].mxu0 %v6281
  %v6699 = vpop.f32.mrb[0].mxu0
  %v6700 = vadd.f32 0.0, %v6699
  %v6701 = vpop.f32.mrb[0].mxu0
  %6702 = vmatprep.mubr.f32.mxu0 %v6507
  %6703 = vmatmul.mubr.f32.gmra.mrb[0].mxu0 %v6285
  %v6704 = vpop.f32.mrb[0].mxu0
  %v6705 = vadd.f32 0.0, %v6704
  %v6706 = vpop.f32.mrb[0].mxu0
  %6707 = vmatprep.mubr.f32.mxu0 %v6509
  %6708 = vmatmul.mubr.f32.gmra.mrb[0].mxu0 %v6289
  %v6709 = vpop.f32.mrb[0].mxu0
  %v6710 = vadd.f32 0.0, %v6709
  %v6711 = vpop.f32.mrb[0].mxu0
  %6712 = vmatprep.mubr.f32.mxu0 %v6511
  %6713 = vmatmul.mubr.f32.gmra.mrb[0].mxu0 %v6293
  %v6714 = vpop.f32.mrb[0].mxu0
  %v6715 = vadd.f32 0.0, %v6714
  %v6716 = vpop.f32.mrb[0].mxu0
  %6717 = vmatprep.mubr.f32.mxu0 %v6513
  %6718 = vmatmul.mubr.f32.gmra.mrb[0].mxu0 %v6297
  %v6719 = vpop.f32.mrb[0].mxu0
  %v6720 = vadd.f32 0.0, %v6719
  %v6721 = vpop.f32.mrb[0].mxu0
  %6722 = vmatprep.mubr.f32.mxu0 %v6515
  %6723 = vmatmul.mubr.f32.gmra.mrb[0].mxu0 %v6301
  %v6724 = vpop.f32.mrb[0].mxu0
  %v6725 = vadd.f32 0.0, %v6724
  %v6726 = vpop.f32.mrb[0].mxu0
  %6727 = vmatprep.mubr.f32.mxu0 %v6517
  %6728 = vmatmul.mubr.f32.gmra.mrb[0].mxu0 %v6305
  %v6729 = vpop.f32.mrb[0].mxu0
  %v6730 = vadd.f32 0.0, %v6729
  %v6731 = vpop.f32.mrb[0].mxu0
  %6732 = vmatprep.mubr.f32.mxu0 %v6519
  %6733 = vmatmul.mubr.f32.gmra.mrb[0].mxu0 %v6309
  %v6734 = vpop.f32.mrb[0].mxu0
  %v6735 = vadd.f32 0.0, %v6734
  %v6736 = vpop.f32.mrb[0].mxu0
  %6737 = vmatprep.mubr.f32.mxu0 %v6521
  %6738 = vmatmul.mubr.f32.gmra.mrb[0].mxu0 %v6313
  %v6739 = vpop.f32.mrb[0].mxu0
  %v6740 = vadd.f32 0.0, %v6739
  %v6741 = vpop.f32.mrb[0].mxu0
  %6742 = vmatprep.mubr.f32.mxu0 %v6523
  %6743 = vmatmul.mubr.f32.gmra.mrb[0].mxu0 %v6317
  %v6744 = vpop.f32.mrb[0].mxu0
  %v6745 = vadd.f32 0.0, %v6744
  %v6746 = vpop.f32.mrb[0].mxu0
  %6747 = vmatprep.mubr.f32.mxu0 %v6525
  %6748 = vmatmul.mubr.f32.gmra.mrb[0].mxu0 %v6321
  %v6749 = vpop.f32.mrb[0].mxu0
  %v6750 = vadd.f32 0.0, %v6749
  %v6751 = vpop.f32.mrb[0].mxu0
  %6752 = vmatprep.mubr.f32.mxu0 %v6527
  %6753 = vmatmul.mubr.f32.gmra.mrb[0].mxu0 %v6325
  %v6754 = vpop.f32.mrb[0].mxu0
  %v6755 = vadd.f32 0.0, %v6754
  %v6756 = vpop.f32.mrb[0].mxu0
  %6757 = vmatprep.mubr.f32.mxu0 %v6529
  %6758 = vmatmul.mubr.f32.gmra.mrb[0].mxu0 %v6329
  %v6759 = vpop.f32.mrb[0].mxu0
  %v6760 = vadd.f32 0.0, %v6759
  %v6761 = vpop.f32.mrb[0].mxu0
  %6762 = vmatprep.mubr.f32.mxu0 %v6531
  %6763 = vmatmul.mubr.f32.gmra.mrb[0].mxu0 %v6333
  %v6764 = vpop.f32.mrb[0].mxu0
  %v6765 = vadd.f32 0.0, %v6764
  %v6766 = vpop.f32.mrb[0].mxu0
  %6767 = vmatprep.mubr.f32.mxu0 %v6533
  %6768 = vmatmul.mubr.f32.gmra.mrb[0].mxu0 %v6337
  %v6769 = vpop.f32.mrb[0].mxu0
  %v6770 = vadd.f32 0.0, %v6769
  %v6771 = vpop.f32.mrb[0].mxu0
  %6772 = vmatprep.mubr.f32.mxu0 %v6535
  %6773 = vmatmul.mubr.f32.gmra.mrb[0].mxu0 %v6341
  %v6774 = vpop.f32.mrb[0].mxu0
  %v6775 = vadd.f32 0.0, %v6774
  %v6776 = vpop.f32.mrb[0].mxu0
  %6777 = vmatprep.mubr.f32.mxu0 %v6537
  %6778 = vmatmul.mubr.f32.gmra.mrb[0].mxu0 %v6345
  %v6779 = vpop.f32.mrb[0].mxu0
  %v6780 = vadd.f32 0.0, %v6779
  %v6781 = vpop.f32.mrb[0].mxu0
  %6782 = vmatprep.mubr.f32.mxu0 %v6539
  %6783 = vmatmul.mubr.f32.gmra.mrb[0].mxu0 %v6349
  %v6784 = vpop.f32.mrb[0].mxu0
  %v6785 = vadd.f32 0.0, %v6784
  %v6786 = vpop.f32.mrb[0].mxu0
  %6787 = vmatprep.mubr.f32.mxu0 %v6541
  %6788 = vmatmul.mubr.f32.gmra.mrb[0].mxu0 %v6353
  %v6789 = vpop.f32.mrb[0].mxu0
  %v6790 = vadd.f32 0.0, %v6789
  %v6791 = vpop.f32.mrb[0].mxu0
  %6792 = vmatprep.mubr.f32.mxu0 %v6543
  %6793 = vmatmul.mubr.f32.gmra.mrb[0].mxu0 %v6357
  %v6794 = vpop.f32.mrb[0].mxu0
  %v6795 = vadd.f32 0.0, %v6794
  %v6796 = vpop.f32.mrb[0].mxu0
  %6797 = vmatprep.mubr.f32.mxu0 %v6545
  %6798 = vmatmul.mubr.f32.gmra.mrb[0].mxu0 %v6361
  %v6799 = vpop.f32.mrb[0].mxu0
  %v6800 = vadd.f32 0.0, %v6799
  %v6801 = vpop.f32.mrb[0].mxu0
  %6802 = vmatprep.mubr.f32.mxu0 %v6547
  %6803 = vmatmul.mubr.f32.gmra.mrb[0].mxu0 %v6365
  %v6804 = vpop.f32.mrb[0].mxu0
  %v6805 = vadd.f32 0.0, %v6804
  %v6806 = vpop.f32.mrb[0].mxu0
  %6807 = vmatprep.mubr.f32.mxu0 %v6549
  %6808 = vmatmul.mubr.f32.gmra.mrb[0].mxu0 %v6369
  %v6809 = vpop.f32.mrb[0].mxu0
  %v6810 = vadd.f32 0.0, %v6809
  %v6811 = vpop.f32.mrb[0].mxu0
  %6812 = vmatprep.mubr.f32.mxu0 %v6551
  %6813 = vmatmul.mubr.f32.gmra.mrb[0].mxu0 %v6373
  %v6814 = vpop.f32.mrb[0].mxu0
  %v6815 = vadd.f32 0.0, %v6814
  %v6816 = vpop.f32.mrb[0].mxu0
  %6817 = vmatprep.mubr.f32.mxu0 %v6553
  %6818 = vmatmul.mubr.f32.gmra.mrb[0].mxu0 %v6377
  %v6819 = vpop.f32.mrb[0].mxu0
  %v6820 = vadd.f32 0.0, %v6819
  %v6821 = vpop.f32.mrb[0].mxu0
  %6822 = vmatprep.mubr.f32.mxu0 %v6555
  %6823 = vmatmul.mubr.f32.gmra.mrb[0].mxu0 %v6381
  %v6824 = vpop.f32.mrb[0].mxu0
  %v6825 = vadd.f32 0.0, %v6824
  %v6826 = vpop.f32.mrb[0].mxu0
  %6827 = vmatprep.mubr.f32.mxu0 %v6557
  %6828 = vmatmul.mubr.f32.gmra.mrb[0].mxu0 %v6385
  %v6829 = vpop.f32.mrb[0].mxu0
  %v6830 = vadd.f32 0.0, %v6829
  %v6831 = vpop.f32.mrb[0].mxu0
  %6832 = vmatprep.mubr.f32.mxu0 %v6559
  %6833 = vmatmul.mubr.f32.gmra.mrb[0].mxu0 %v6389
  %v6834 = vpop.f32.mrb[0].mxu0
  %v6835 = vadd.f32 0.0, %v6834
  %v6836 = vpop.f32.mrb[0].mxu0
  %6837 = vmatprep.mubr.f32.mxu0 %v6561
  %6838 = vmatmul.mubr.f32.gmra.mrb[0].mxu0 %v6393
  %v6839 = vpop.f32.mrb[0].mxu0
  %v6840 = vadd.f32 0.0, %v6839
  %v6841 = vpop.f32.mrb[0].mxu0
  %6842 = vmatprep.mubr.f32.mxu0 %v6563
  %6843 = vmatmul.mubr.f32.gmra.mrb[0].mxu0 %v6397
  %v6844 = vpop.f32.mrb[0].mxu0
  %v6845 = vadd.f32 0.0, %v6844
  %v6846 = vpop.f32.mrb[0].mxu0
  %6847 = vmatprep.mubr.f32.mxu0 %v6565
  %6848 = vmatmul.mubr.f32.gmra.mrb[0].mxu0 %v6401
  %v6849 = vpop.f32.mrb[0].mxu0
  %v6850 = vadd.f32 0.0, %v6849
  %v6851 = vpop.f32.mrb[0].mxu0
  %6852 = vmatprep.mubr.f32.mxu0 %v6567
  %6853 = vmatmul.mubr.f32.gmra.mrb[0].mxu0 %v6405
  %v6854 = vpop.f32.mrb[0].mxu0
  %v6855 = vadd.f32 0.0, %v6854
  %v6856 = vpop.f32.mrb[0].mxu0
  %6857 = vmatprep.mubr.f32.mxu0 %v6569
  %6858 = vmatmul.mubr.f32.gmra.mrb[0].mxu0 %v6409
  %v6859 = vpop.f32.mrb[0].mxu0
  %v6860 = vadd.f32 0.0, %v6859
  %v6861 = vpop.f32.mrb[0].mxu0
  %6862 = vmatprep.mubr.f32.mxu0 %v6571
  %6863 = vmatmul.mubr.f32.gmra.mrb[0].mxu0 %v6413
  %v6864 = vpop.f32.mrb[0].mxu0
  %v6865 = vadd.f32 0.0, %v6864
  %v6866 = vpop.f32.mrb[0].mxu0
  %6867 = vmatprep.mubr.f32.mxu0 %v6573
  %6868 = vmatmul.mubr.f32.gmra.mrb[0].mxu0 %v6417
  %v6869 = vpop.f32.mrb[0].mxu0
  %v6870 = vadd.f32 0.0, %v6869
  %v6871 = vpop.f32.mrb[0].mxu0
  %6872 = vmatprep.mubr.f32.mxu0 %v6575
  %6873 = vmatmul.mubr.f32.gmra.mrb[0].mxu0 %v6421
  %v6874 = vpop.f32.mrb[0].mxu0
  %v6875 = vadd.f32 0.0, %v6874
  %v6876 = vpop.f32.mrb[0].mxu0
  %6877 = vmatprep.mubr.f32.mxu0 %v6577
  %6878 = vmatmul.mubr.f32.gmra.mrb[0].mxu0 %v6425
  %v6879 = vpop.f32.mrb[0].mxu0
  %v6880 = vadd.f32 0.0, %v6879
  %v6881 = vpop.f32.mrb[0].mxu0
  %6882 = vmatprep.mubr.f32.mxu0 %v6579
  %6883 = vmatmul.mubr.f32.gmra.mrb[0].mxu0 %v6429
  %v6884 = vpop.f32.mrb[0].mxu0
  %v6885 = vadd.f32 0.0, %v6884
  %v6886 = vpop.f32.mrb[0].mxu0
  %6887 = vmatprep.mubr.f32.mxu0 %v6581
  %6888 = vmatmul.mubr.f32.gmra.mrb[0].mxu0 %v6433
  %v6889 = vpop.f32.mrb[0].mxu0
  %v6890 = vadd.f32 0.0, %v6889
  %v6891 = vpop.f32.mrb[0].mxu0
  %6892 = vdwg.mxu0
  %v6893 = vadd.f32 %v6159, %v6650
  %v6894 = vadd.f32 %v6160, %v6655
  %v6895 = vadd.f32 %v6161, %v6660
  %v6896 = vadd.f32 %v6162, %v6665
  %v6897 = vadd.f32 %v6163, %v6670
  %v6898 = vadd.f32 %v6164, %v6675
  %v6899 = vadd.f32 %v6165, %v6680
  %v6900 = vadd.f32 %v6166, %v6685
  %v6901 = vadd.f32 %v6167, %v6690
  %v6902 = vadd.f32 %v6168, %v6695
  %v6903 = vadd.f32 %v6169, %v6700
  %v6904 = vadd.f32 %v6170, %v6705
  %v6905 = vadd.f32 %v6171, %v6710
  %v6906 = vadd.f32 %v6172, %v6715
  %v6907 = vadd.f32 %v6173, %v6720
  %v6908 = vadd.f32 %v6174, %v6725
  %v6909 = vadd.f32 %v6175, %v6730
  %v6910 = vadd.f32 %v6176, %v6735
  %v6911 = vadd.f32 %v6177, %v6740
  %v6912 = vadd.f32 %v6178, %v6745
  %v6913 = vadd.f32 %v6179, %v6750
  %v6914 = vadd.f32 %v6180, %v6755
  %v6915 = vadd.f32 %v6181, %v6760
  %v6916 = vadd.f32 %v6182, %v6765
  %v6917 = vadd.f32 %v6183, %v6770
  %v6918 = vadd.f32 %v6184, %v6775
  %v6919 = vadd.f32 %v6185, %v6780
  %v6920 = vadd.f32 %v6186, %v6785
  %v6921 = vadd.f32 %v6187, %v6790
  %v6922 = vadd.f32 %v6188, %v6795
  %v6923 = vadd.f32 %v6189, %v6800
  %v6924 = vadd.f32 %v6190, %v6805
  %v6925 = vadd.f32 %v6191, %v6810
  %v6926 = vadd.f32 %v6192, %v6815
  %v6927 = vadd.f32 %v6193, %v6820
  %v6928 = vadd.f32 %v6194, %v6825
  %v6929 = vadd.f32 %v6195, %v6830
  %v6930 = vadd.f32 %v6196, %v6835
  %v6931 = vadd.f32 %v6197, %v6840
  %v6932 = vadd.f32 %v6198, %v6845
  %v6933 = vadd.f32 %v6199, %v6850
  %v6934 = vadd.f32 %v6200, %v6855
  %v6935 = vadd.f32 %v6201, %v6860
  %v6936 = vadd.f32 %v6202, %v6865
  %v6937 = vadd.f32 %v6203, %v6870
  %v6938 = vadd.f32 %v6204, %v6875
  %v6939 = vadd.f32 %v6205, %v6880
  %v6940 = vadd.f32 %v6206, %v6885
  %v6941 = vadd.f32 %v6207, %v6890
  %v6942 = vld [vmem:[#allocation2 + $0x30] sm:$0xc0]
  %v6943 = vld [vmem:[#allocation2 + $0x38] sm:$0xc0]
  %v6944 = vld [vmem:[#allocation2 + $0x340] sm:$0x3f]
  %v6945 = vld [vmem:[#allocation2 + $0x348] sm:$0x3f]
  %s6946 = scalar_lea.vmem %s5, 1280
  %v6947 = vld [vmem:[%s6946] sm:$0xff]
  %v6948 = vld [vmem:[%s6946 + $0x8] sm:$0xff]
  %v6949 = vld [vmem:[%s6946 + $0x10] sm:$0xff]
  %v6950 = vld [vmem:[%s6946 + $0x18] sm:$0xff]
  %v6951 = vld [vmem:[%s6946 + $0x20] sm:$0xff]
  %v6952 = vld [vmem:[%s6946 + $0x28] sm:$0xff]
  %v6953 = vld [vmem:[%s6946 + $0x30] sm:$0xff]
  %v6954 = vld [vmem:[%s6946 + $0x38] sm:$0xff]
  %v6955 = vld [vmem:[%s6946 + $0x40] sm:$0xff]
  %v6956 = vld [vmem:[%s6946 + $0x48] sm:$0xff]
  %v6957 = vld [vmem:[%s6946 + $0x50] sm:$0xff]
  %v6958 = vld [vmem:[%s6946 + $0x58] sm:$0xff]
  %v6959 = vld [vmem:[%s6946 + $0x60] sm:$0xff]
  %v6960 = vld [vmem:[%s6946 + $0x68] sm:$0xff]
  %v6961 = vld [vmem:[%s6946 + $0x70] sm:$0xff]
  %v6962 = vld [vmem:[%s6946 + $0x78] sm:$0xff]
  %v6963 = vld [vmem:[%s6946 + $0x80] sm:$0xff]
  %v6964 = vld [vmem:[%s6946 + $0x88] sm:$0xff]
  %v6965 = vld [vmem:[%s6946 + $0x90] sm:$0xff]
  %v6966 = vld [vmem:[%s6946 + $0x98] sm:$0xff]
  %v6971 = vrot.slane %v6942, 6
  %v6972 = vrot.slane %v5284, 6
  %v6973 = vsel %vm3363, %v6971, %v6972
  %v6974 = vrot.slane %v6943, 6
  %v6975 = vrot.slane %v5285, 6
  %v6976 = vsel %vm3363, %v6974, %v6975
  %v6977 = vrot.slane %v5286, 6
  %v6978 = vsel %vm3363, %v6972, %v6977
  %v6979 = vrot.slane %v5287, 6
  %v6980 = vsel %vm3363, %v6975, %v6979
  %v6981 = vrot.slane %v5288, 6
  %v6982 = vsel %vm3363, %v6977, %v6981
  %v6983 = vrot.slane %v5289, 6
  %v6984 = vsel %vm3363, %v6979, %v6983
  %v6985 = vrot.slane %v5290, 6
  %v6986 = vsel %vm3363, %v6981, %v6985
  %v6987 = vrot.slane %v5291, 6
  %v6988 = vsel %vm3363, %v6983, %v6987
  %v6989 = vrot.slane %v5292, 6
  %v6990 = vsel %vm3363, %v6985, %v6989
  %v6991 = vrot.slane %v5293, 6
  %v6992 = vsel %vm3363, %v6987, %v6991
  %v6993 = vrot.slane %v5294, 6
  %v6994 = vsel %vm3363, %v6989, %v6993
  %v6995 = vrot.slane %v5295, 6
  %v6996 = vsel %vm3363, %v6991, %v6995
  %v6997 = vrot.slane %v5296, 6
  %v6998 = vsel %vm3363, %v6993, %v6997
  %v6999 = vrot.slane %v5297, 6
  %v7000 = vsel %vm3363, %v6995, %v6999
  %v7001 = vrot.slane %v5298, 6
  %v7002 = vsel %vm3363, %v6997, %v7001
  %v7003 = vrot.slane %v5299, 6
  %v7004 = vsel %vm3363, %v6999, %v7003
  %v7005 = vrot.slane %v5300, 6
  %v7006 = vsel %vm3363, %v7001, %v7005
  %v7007 = vrot.slane %v5301, 6
  %v7008 = vsel %vm3363, %v7003, %v7007
  %v7009 = vrot.slane %v5302, 6
  %v7010 = vsel %vm3363, %v7005, %v7009
  %v7011 = vrot.slane %v5303, 6
  %v7012 = vsel %vm3363, %v7007, %v7011
  %v7013 = vrot.slane %v5304, 6
  %v7014 = vsel %vm3363, %v7009, %v7013
  %v7015 = vrot.slane %v5305, 6
  %v7016 = vsel %vm3363, %v7011, %v7015
  %v7017 = vrot.slane %v5306, 6
  %v7018 = vsel %vm3363, %v7013, %v7017
  %v7019 = vrot.slane %v5307, 6
  %v7020 = vsel %vm3363, %v7015, %v7019
  %v7021 = vrot.slane %v5308, 6
  %v7022 = vsel %vm3363, %v7017, %v7021
  %v7023 = vrot.slane %v5309, 6
  %v7024 = vsel %vm3363, %v7019, %v7023
  %v7025 = vrot.slane %v5310, 6
  %v7026 = vsel %vm3363, %v7021, %v7025
  %v7027 = vrot.slane %v5311, 6
  %v7028 = vsel %vm3363, %v7023, %v7027
  %v7029 = vrot.slane %v5312, 6
  %v7030 = vsel %vm3363, %v7025, %v7029
  %v7031 = vrot.slane %v5313, 6
  %v7032 = vsel %vm3363, %v7027, %v7031
  %v7033 = vrot.slane %v5314, 6
  %v7034 = vsel %vm3363, %v7029, %v7033
  %v7035 = vrot.slane %v5315, 6
  %v7036 = vsel %vm3363, %v7031, %v7035
  %v7037 = vrot.slane %v5316, 6
  %v7038 = vsel %vm3363, %v7033, %v7037
  %v7039 = vrot.slane %v5317, 6
  %v7040 = vsel %vm3363, %v7035, %v7039
  %v7041 = vrot.slane %v5318, 6
  %v7042 = vsel %vm3363, %v7037, %v7041
  %v7043 = vrot.slane %v5319, 6
  %v7044 = vsel %vm3363, %v7039, %v7043
  %v7045 = vrot.slane %v5320, 6
  %v7046 = vsel %vm3363, %v7041, %v7045
  %v7047 = vrot.slane %v5321, 6
  %v7048 = vsel %vm3363, %v7043, %v7047
  %v7049 = vrot.slane %v5322, 6
  %v7050 = vsel %vm3363, %v7045, %v7049
  %v7051 = vrot.slane %v5323, 6
  %v7052 = vsel %vm3363, %v7047, %v7051
  %v7053 = vrot.slane %v5324, 6
  %v7054 = vsel %vm3363, %v7049, %v7053
  %v7055 = vrot.slane %v5325, 6
  %v7056 = vsel %vm3363, %v7051, %v7055
  %v7057 = vrot.slane %v5326, 6
  %v7058 = vsel %vm3363, %v7053, %v7057
  %v7059 = vrot.slane %v5327, 6
  %v7060 = vsel %vm3363, %v7055, %v7059
  %v7061 = vrot.slane %v5328, 6
  %v7062 = vsel %vm3363, %v7057, %v7061
  %v7063 = vrot.slane %v5329, 6
  %v7064 = vsel %vm3363, %v7059, %v7063
  %v7065 = vrot.slane %v5330, 6
  %v7066 = vsel %vm3363, %v7061, %v7065
  %v7067 = vrot.slane %v5331, 6
  %v7068 = vsel %vm3363, %v7063, %v7067
  %v7069 = vrot.slane %v5332, 6
  %v7070 = vsel %vm3363, %v7065, %v7069
  %v7071 = vrot.slane %v5333, 6
  %v7072 = vsel %vm3363, %v7067, %v7071
  %v7073 = vrot.slane %v5334, 6
  %v7074 = vsel %vm3363, %v7069, %v7073
  %v7075 = vrot.slane %v5335, 6
  %v7076 = vsel %vm3363, %v7071, %v7075
  %v7077 = vrot.slane %v5336, 6
  %v7078 = vsel %vm3363, %v7073, %v7077
  %v7079 = vrot.slane %v5337, 6
  %v7080 = vsel %vm3363, %v7075, %v7079
  %v7081 = vrot.slane %v5338, 6
  %v7082 = vsel %vm3363, %v7077, %v7081
  %v7083 = vrot.slane %v5339, 6
  %v7084 = vsel %vm3363, %v7079, %v7083
  %v7085 = vrot.slane %v5340, 6
  %v7086 = vsel %vm3363, %v7081, %v7085
  %v7087 = vrot.slane %v5341, 6
  %v7088 = vsel %vm3363, %v7083, %v7087
  %v7089 = vrot.slane %v5342, 6
  %v7090 = vsel %vm3363, %v7085, %v7089
  %v7091 = vrot.slane %v5343, 6
  %v7092 = vsel %vm3363, %v7087, %v7091
  %v7093 = vrot.slane %v5344, 6
  %v7094 = vsel %vm3363, %v7089, %v7093
  %v7095 = vrot.slane %v5345, 6
  %v7096 = vsel %vm3363, %v7091, %v7095
  %v7097 = vrot.slane %v5346, 6
  %v7098 = vsel %vm3363, %v7093, %v7097
  %v7099 = vrot.slane %v5347, 6
  %v7100 = vsel %vm3363, %v7095, %v7099
  %v7101 = vrot.slane %v5348, 6
  %v7102 = vsel %vm3363, %v7097, %v7101
  %v7103 = vrot.slane %v5349, 6
  %v7104 = vsel %vm3363, %v7099, %v7103
  %v7105 = vrot.slane %v5350, 6
  %v7106 = vsel %vm3363, %v7101, %v7105
  %v7107 = vrot.slane %v5351, 6
  %v7108 = vsel %vm3363, %v7103, %v7107
  %v7109 = vrot.slane %v5352, 6
  %v7110 = vsel %vm3363, %v7105, %v7109
  %v7111 = vrot.slane %v5353, 6
  %v7112 = vsel %vm3363, %v7107, %v7111
  %v7113 = vrot.slane %v5354, 6
  %v7114 = vsel %vm3363, %v7109, %v7113
  %v7115 = vrot.slane %v5355, 6
  %v7116 = vsel %vm3363, %v7111, %v7115
  %v7117 = vrot.slane %v5356, 6
  %v7118 = vsel %vm3363, %v7113, %v7117
  %v7119 = vrot.slane %v5357, 6
  %v7120 = vsel %vm3363, %v7115, %v7119
  %v7121 = vrot.slane %v5358, 6
  %v7122 = vsel %vm3363, %v7117, %v7121
  %v7123 = vrot.slane %v5359, 6
  %v7124 = vsel %vm3363, %v7119, %v7123
  %v7125 = vrot.slane %v5360, 6
  %v7126 = vsel %vm3363, %v7121, %v7125
  %v7127 = vrot.slane %v5361, 6
  %v7128 = vsel %vm3363, %v7123, %v7127
  %v7129 = vrot.slane %v5362, 6
  %v7130 = vsel %vm3363, %v7125, %v7129
  %v7131 = vrot.slane %v5363, 6
  %v7132 = vsel %vm3363, %v7127, %v7131
  %v7133 = vrot.slane %v5364, 6
  %v7134 = vsel %vm3363, %v7129, %v7133
  %v7135 = vrot.slane %v5365, 6
  %v7136 = vsel %vm3363, %v7131, %v7135
  %v7137 = vrot.slane %v5366, 6
  %v7138 = vsel %vm3363, %v7133, %v7137
  %v7139 = vrot.slane %v5367, 6
  %v7140 = vsel %vm3363, %v7135, %v7139
  %v7141 = vrot.slane %v5368, 6
  %v7142 = vsel %vm3363, %v7137, %v7141
  %v7143 = vrot.slane %v5369, 6
  %v7144 = vsel %vm3363, %v7139, %v7143
  %v7145 = vrot.slane %v5370, 6
  %v7146 = vsel %vm3363, %v7141, %v7145
  %v7147 = vrot.slane %v5371, 6
  %v7148 = vsel %vm3363, %v7143, %v7147
  %v7149 = vrot.slane %v5372, 6
  %v7150 = vsel %vm3363, %v7145, %v7149
  %v7151 = vrot.slane %v5373, 6
  %v7152 = vsel %vm3363, %v7147, %v7151
  %v7153 = vrot.slane %v5374, 6
  %v7154 = vsel %vm3363, %v7149, %v7153
  %v7155 = vrot.slane %v5375, 6
  %v7156 = vsel %vm3363, %v7151, %v7155
  %v7157 = vrot.slane %v5376, 6
  %v7158 = vsel %vm3363, %v7153, %v7157
  %v7159 = vrot.slane %v5377, 6
  %v7160 = vsel %vm3363, %v7155, %v7159
  %v7161 = vrot.slane %v5378, 6
  %v7162 = vsel %vm3363, %v7157, %v7161
  %v7163 = vrot.slane %v5379, 6
  %v7164 = vsel %vm3363, %v7159, %v7163
  %v7165 = vrot.slane %v6944, 6
  %v7166 = vsel %vm3363, %v7161, %v7165
  %v7167 = vrot.slane %v6945, 6
  %v7168 = vsel %vm3363, %v7163, %v7167
  %v7218 = vsel %vm994, %v6976, 0
  %v7220 = vsel %vm994, %v6980, 0
  %v7222 = vsel %vm994, %v6984, 0
  %v7224 = vsel %vm994, %v6988, 0
  %v7226 = vsel %vm994, %v6992, 0
  %v7228 = vsel %vm994, %v6996, 0
  %v7230 = vsel %vm994, %v7000, 0
  %v7232 = vsel %vm994, %v7004, 0
  %v7234 = vsel %vm994, %v7008, 0
  %v7236 = vsel %vm994, %v7012, 0
  %v7238 = vsel %vm994, %v7016, 0
  %v7240 = vsel %vm994, %v7020, 0
  %v7242 = vsel %vm994, %v7024, 0
  %v7244 = vsel %vm994, %v7028, 0
  %v7246 = vsel %vm994, %v7032, 0
  %v7248 = vsel %vm994, %v7036, 0
  %v7250 = vsel %vm994, %v7040, 0
  %v7252 = vsel %vm994, %v7044, 0
  %v7254 = vsel %vm994, %v7048, 0
  %v7256 = vsel %vm994, %v7052, 0
  %v7258 = vsel %vm994, %v7056, 0
  %v7260 = vsel %vm994, %v7060, 0
  %v7262 = vsel %vm994, %v7064, 0
  %v7264 = vsel %vm994, %v7068, 0
  %v7266 = vsel %vm994, %v7072, 0
  %v7268 = vsel %vm994, %v7076, 0
  %v7270 = vsel %vm994, %v7080, 0
  %v7272 = vsel %vm994, %v7084, 0
  %v7274 = vsel %vm994, %v7088, 0
  %v7276 = vsel %vm994, %v7092, 0
  %v7278 = vsel %vm994, %v7096, 0
  %v7280 = vsel %vm994, %v7100, 0
  %v7282 = vsel %vm994, %v7104, 0
  %v7284 = vsel %vm994, %v7108, 0
  %v7286 = vsel %vm994, %v7112, 0
  %v7288 = vsel %vm994, %v7116, 0
  %v7290 = vsel %vm994, %v7120, 0
  %v7292 = vsel %vm994, %v7124, 0
  %v7294 = vsel %vm994, %v7128, 0
  %v7296 = vsel %vm994, %v7132, 0
  %v7298 = vsel %vm994, %v7136, 0
  %v7300 = vsel %vm994, %v7140, 0
  %v7302 = vsel %vm994, %v7144, 0
  %v7304 = vsel %vm994, %v7148, 0
  %v7306 = vsel %vm994, %v7152, 0
  %v7308 = vsel %vm994, %v7156, 0
  %v7310 = vsel %vm994, %v7160, 0
  %v7312 = vsel %vm994, %v7164, 0
  %v7314 = vsel %vm994, %v7168, 0
  %7316 = vmatprep.subr.mxu0 0.0
  %7317 = vmatpush1.msra.mxu0 %v6947
  %7318 = vmatprep.subr.mxu0 0.0
  %7319 = vmatpush1.msra.mxu0 %v6948
  %7320 = vmatprep.subr.mxu0 0.0
  %7321 = vmatpush1.msra.mxu0 %v6949
  %7322 = vmatprep.subr.mxu0 0.0
  %7323 = vmatpush1.msra.mxu0 %v6950
  %7324 = vmatprep.subr.mxu0 0.0
  %7325 = vmatpush1.msra.mxu0 %v6951
  %7326 = vmatprep.subr.mxu0 0.0
  %7327 = vmatpush1.msra.mxu0 %v6952
  %7328 = vmatprep.subr.mxu0 0.0
  %7329 = vmatpush1.msra.mxu0 %v6953
  %7330 = vmatprep.subr.mxu0 0.0
  %7331 = vmatpush1.msra.mxu0 %v6954
  %7332 = vmatprep.subr.mxu0 0.0
  %7333 = vmatpush1.msra.mxu0 %v6955
  %7334 = vmatprep.subr.mxu0 0.0
  %7335 = vmatpush1.msra.mxu0 %v6956
  %7336 = vmatprep.subr.mxu0 0.0
  %7337 = vmatpush1.msra.mxu0 %v6957
  %7338 = vmatprep.subr.mxu0 0.0
  %7339 = vmatpush1.msra.mxu0 %v6958
  %7340 = vmatprep.subr.mxu0 0.0
  %7341 = vmatpush1.msra.mxu0 %v6959
  %7342 = vmatprep.subr.mxu0 0.0
  %7343 = vmatpush1.msra.mxu0 %v6960
  %7344 = vmatprep.subr.mxu0 0.0
  %7345 = vmatpush1.msra.mxu0 %v6961
  %7346 = vmatprep.subr.mxu0 0.0
  %7347 = vmatpush1.msra.mxu0 %v6962
  %7348 = vmatprep.subr.mxu0 0.0
  %7349 = vmatpush1.msra.mxu0 %v6963
  %7350 = vmatprep.subr.mxu0 0.0
  %7351 = vmatpush1.msra.mxu0 %v6964
  %7352 = vmatprep.subr.mxu0 0.0
  %7353 = vmatpush1.msra.mxu0 %v6965
  %7354 = vmatprep.subr.mxu0 0.0
  %7355 = vmatpush1.msra.mxu0 %v6966
  %7356 = vmatprep.subr.mxu0 0.0
  %7357 = vmatpush1.msra.mxu0 0.0
  %7358 = vmatprep.subr.mxu0 0.0
  %7359 = vmatpush1.msra.mxu0 0.0
  %7360 = vmatprep.subr.mxu0 0.0
  %7361 = vmatpush1.msra.mxu0 0.0
  %7362 = vmatprep.subr.mxu0 0.0
  %7363 = vmatpush1.msra.mxu0 0.0
  %7364 = vmatprep.subr.mxu0 0.0
  %7365 = vmatpush1.msra.mxu0 0.0
  %7366 = vmatprep.subr.mxu0 0.0
  %7367 = vmatpush1.msra.mxu0 0.0
  %7368 = vmatprep.subr.mxu0 0.0
  %7369 = vmatpush1.msra.mxu0 0.0
  %7370 = vmatprep.subr.mxu0 0.0
  %7371 = vmatpush1.msra.mxu0 0.0
  %7372 = vmatprep.subr.mxu0 0.0
  %7373 = vmatpush1.msra.mxu0 0.0
  %7374 = vmatprep.subr.mxu0 0.0
  %7375 = vmatpush1.msra.mxu0 0.0
  %7376 = vmatprep.subr.mxu0 0.0
  %7377 = vmatpush1.msra.mxu0 0.0
  %7378 = vmatprep.subr.mxu0 0.0
  %7379 = vmatpush1.msra.mxu0 0.0
  %7380 = vmatprep.mubr.f32.mxu0 %v7218
  %7381 = vmatmul.mubr.f32.gmra.mrb[0].mxu0 %v6973
  %v7382 = vpop.f32.mrb[0].mxu0
  %v7383 = vadd.f32 0.0, %v7382
  %v7384 = vpop.f32.mrb[0].mxu0
  %7385 = vmatprep.mubr.f32.mxu0 %v7220
  %7386 = vmatmul.mubr.f32.gmra.mrb[0].mxu0 %v6978
  %v7387 = vpop.f32.mrb[0].mxu0
  %v7388 = vadd.f32 0.0, %v7387
  %v7389 = vpop.f32.mrb[0].mxu0
  %7390 = vmatprep.mubr.f32.mxu0 %v7222
  %7391 = vmatmul.mubr.f32.gmra.mrb[0].mxu0 %v6982
  %v7392 = vpop.f32.mrb[0].mxu0
  %v7393 = vadd.f32 0.0, %v7392
  %v7394 = vpop.f32.mrb[0].mxu0
  %7395 = vmatprep.mubr.f32.mxu0 %v7224
  %7396 = vmatmul.mubr.f32.gmra.mrb[0].mxu0 %v6986
  %v7397 = vpop.f32.mrb[0].mxu0
  %v7398 = vadd.f32 0.0, %v7397
  %v7399 = vpop.f32.mrb[0].mxu0
  %7400 = vmatprep.mubr.f32.mxu0 %v7226
  %7401 = vmatmul.mubr.f32.gmra.mrb[0].mxu0 %v6990
  %v7402 = vpop.f32.mrb[0].mxu0
  %v7403 = vadd.f32 0.0, %v7402
  %v7404 = vpop.f32.mrb[0].mxu0
  %7405 = vmatprep.mubr.f32.mxu0 %v7228
  %7406 = vmatmul.mubr.f32.gmra.mrb[0].mxu0 %v6994
  %v7407 = vpop.f32.mrb[0].mxu0
  %v7408 = vadd.f32 0.0, %v7407
  %v7409 = vpop.f32.mrb[0].mxu0
  %7410 = vmatprep.mubr.f32.mxu0 %v7230
  %7411 = vmatmul.mubr.f32.gmra.mrb[0].mxu0 %v6998
  %v7412 = vpop.f32.mrb[0].mxu0
  %v7413 = vadd.f32 0.0, %v7412
  %v7414 = vpop.f32.mrb[0].mxu0
  %7415 = vmatprep.mubr.f32.mxu0 %v7232
  %7416 = vmatmul.mubr.f32.gmra.mrb[0].mxu0 %v7002
  %v7417 = vpop.f32.mrb[0].mxu0
  %v7418 = vadd.f32 0.0, %v7417
  %v7419 = vpop.f32.mrb[0].mxu0
  %7420 = vmatprep.mubr.f32.mxu0 %v7234
  %7421 = vmatmul.mubr.f32.gmra.mrb[0].mxu0 %v7006
  %v7422 = vpop.f32.mrb[0].mxu0
  %v7423 = vadd.f32 0.0, %v7422
  %v7424 = vpop.f32.mrb[0].mxu0
  %7425 = vmatprep.mubr.f32.mxu0 %v7236
  %7426 = vmatmul.mubr.f32.gmra.mrb[0].mxu0 %v7010
  %v7427 = vpop.f32.mrb[0].mxu0
  %v7428 = vadd.f32 0.0, %v7427
  %v7429 = vpop.f32.mrb[0].mxu0
  %7430 = vmatprep.mubr.f32.mxu0 %v7238
  %7431 = vmatmul.mubr.f32.gmra.mrb[0].mxu0 %v7014
  %v7432 = vpop.f32.mrb[0].mxu0
  %v7433 = vadd.f32 0.0, %v7432
  %v7434 = vpop.f32.mrb[0].mxu0
  %7435 = vmatprep.mubr.f32.mxu0 %v7240
  %7436 = vmatmul.mubr.f32.gmra.mrb[0].mxu0 %v7018
  %v7437 = vpop.f32.mrb[0].mxu0
  %v7438 = vadd.f32 0.0, %v7437
  %v7439 = vpop.f32.mrb[0].mxu0
  %7440 = vmatprep.mubr.f32.mxu0 %v7242
  %7441 = vmatmul.mubr.f32.gmra.mrb[0].mxu0 %v7022
  %v7442 = vpop.f32.mrb[0].mxu0
  %v7443 = vadd.f32 0.0, %v7442
  %v7444 = vpop.f32.mrb[0].mxu0
  %7445 = vmatprep.mubr.f32.mxu0 %v7244
  %7446 = vmatmul.mubr.f32.gmra.mrb[0].mxu0 %v7026
  %v7447 = vpop.f32.mrb[0].mxu0
  %v7448 = vadd.f32 0.0, %v7447
  %v7449 = vpop.f32.mrb[0].mxu0
  %7450 = vmatprep.mubr.f32.mxu0 %v7246
  %7451 = vmatmul.mubr.f32.gmra.mrb[0].mxu0 %v7030
  %v7452 = vpop.f32.mrb[0].mxu0
  %v7453 = vadd.f32 0.0, %v7452
  %v7454 = vpop.f32.mrb[0].mxu0
  %7455 = vmatprep.mubr.f32.mxu0 %v7248
  %7456 = vmatmul.mubr.f32.gmra.mrb[0].mxu0 %v7034
  %v7457 = vpop.f32.mrb[0].mxu0
  %v7458 = vadd.f32 0.0, %v7457
  %v7459 = vpop.f32.mrb[0].mxu0
  %7460 = vmatprep.mubr.f32.mxu0 %v7250
  %7461 = vmatmul.mubr.f32.gmra.mrb[0].mxu0 %v7038
  %v7462 = vpop.f32.mrb[0].mxu0
  %v7463 = vadd.f32 0.0, %v7462
  %v7464 = vpop.f32.mrb[0].mxu0
  %7465 = vmatprep.mubr.f32.mxu0 %v7252
  %7466 = vmatmul.mubr.f32.gmra.mrb[0].mxu0 %v7042
  %v7467 = vpop.f32.mrb[0].mxu0
  %v7468 = vadd.f32 0.0, %v7467
  %v7469 = vpop.f32.mrb[0].mxu0
  %7470 = vmatprep.mubr.f32.mxu0 %v7254
  %7471 = vmatmul.mubr.f32.gmra.mrb[0].mxu0 %v7046
  %v7472 = vpop.f32.mrb[0].mxu0
  %v7473 = vadd.f32 0.0, %v7472
  %v7474 = vpop.f32.mrb[0].mxu0
  %7475 = vmatprep.mubr.f32.mxu0 %v7256
  %7476 = vmatmul.mubr.f32.gmra.mrb[0].mxu0 %v7050
  %v7477 = vpop.f32.mrb[0].mxu0
  %v7478 = vadd.f32 0.0, %v7477
  %v7479 = vpop.f32.mrb[0].mxu0
  %7480 = vmatprep.mubr.f32.mxu0 %v7258
  %7481 = vmatmul.mubr.f32.gmra.mrb[0].mxu0 %v7054
  %v7482 = vpop.f32.mrb[0].mxu0
  %v7483 = vadd.f32 0.0, %v7482
  %v7484 = vpop.f32.mrb[0].mxu0
  %7485 = vmatprep.mubr.f32.mxu0 %v7260
  %7486 = vmatmul.mubr.f32.gmra.mrb[0].mxu0 %v7058
  %v7487 = vpop.f32.mrb[0].mxu0
  %v7488 = vadd.f32 0.0, %v7487
  %v7489 = vpop.f32.mrb[0].mxu0
  %7490 = vmatprep.mubr.f32.mxu0 %v7262
  %7491 = vmatmul.mubr.f32.gmra.mrb[0].mxu0 %v7062
  %v7492 = vpop.f32.mrb[0].mxu0
  %v7493 = vadd.f32 0.0, %v7492
  %v7494 = vpop.f32.mrb[0].mxu0
  %7495 = vmatprep.mubr.f32.mxu0 %v7264
  %7496 = vmatmul.mubr.f32.gmra.mrb[0].mxu0 %v7066
  %v7497 = vpop.f32.mrb[0].mxu0
  %v7498 = vadd.f32 0.0, %v7497
  %v7499 = vpop.f32.mrb[0].mxu0
  %7500 = vmatprep.mubr.f32.mxu0 %v7266
  %7501 = vmatmul.mubr.f32.gmra.mrb[0].mxu0 %v7070
  %v7502 = vpop.f32.mrb[0].mxu0
  %v7503 = vadd.f32 0.0, %v7502
  %v7504 = vpop.f32.mrb[0].mxu0
  %7505 = vmatprep.mubr.f32.mxu0 %v7268
  %7506 = vmatmul.mubr.f32.gmra.mrb[0].mxu0 %v7074
  %v7507 = vpop.f32.mrb[0].mxu0
  %v7508 = vadd.f32 0.0, %v7507
  %v7509 = vpop.f32.mrb[0].mxu0
  %7510 = vmatprep.mubr.f32.mxu0 %v7270
  %7511 = vmatmul.mubr.f32.gmra.mrb[0].mxu0 %v7078
  %v7512 = vpop.f32.mrb[0].mxu0
  %v7513 = vadd.f32 0.0, %v7512
  %v7514 = vpop.f32.mrb[0].mxu0
  %7515 = vmatprep.mubr.f32.mxu0 %v7272
  %7516 = vmatmul.mubr.f32.gmra.mrb[0].mxu0 %v7082
  %v7517 = vpop.f32.mrb[0].mxu0
  %v7518 = vadd.f32 0.0, %v7517
  %v7519 = vpop.f32.mrb[0].mxu0
  %7520 = vmatprep.mubr.f32.mxu0 %v7274
  %7521 = vmatmul.mubr.f32.gmra.mrb[0].mxu0 %v7086
  %v7522 = vpop.f32.mrb[0].mxu0
  %v7523 = vadd.f32 0.0, %v7522
  %v7524 = vpop.f32.mrb[0].mxu0
  %7525 = vmatprep.mubr.f32.mxu0 %v7276
  %7526 = vmatmul.mubr.f32.gmra.mrb[0].mxu0 %v7090
  %v7527 = vpop.f32.mrb[0].mxu0
  %v7528 = vadd.f32 0.0, %v7527
  %v7529 = vpop.f32.mrb[0].mxu0
  %7530 = vmatprep.mubr.f32.mxu0 %v7278
  %7531 = vmatmul.mubr.f32.gmra.mrb[0].mxu0 %v7094
  %v7532 = vpop.f32.mrb[0].mxu0
  %v7533 = vadd.f32 0.0, %v7532
  %v7534 = vpop.f32.mrb[0].mxu0
  %7535 = vmatprep.mubr.f32.mxu0 %v7280
  %7536 = vmatmul.mubr.f32.gmra.mrb[0].mxu0 %v7098
  %v7537 = vpop.f32.mrb[0].mxu0
  %v7538 = vadd.f32 0.0, %v7537
  %v7539 = vpop.f32.mrb[0].mxu0
  %7540 = vmatprep.mubr.f32.mxu0 %v7282
  %7541 = vmatmul.mubr.f32.gmra.mrb[0].mxu0 %v7102
  %v7542 = vpop.f32.mrb[0].mxu0
  %v7543 = vadd.f32 0.0, %v7542
  %v7544 = vpop.f32.mrb[0].mxu0
  %7545 = vmatprep.mubr.f32.mxu0 %v7284
  %7546 = vmatmul.mubr.f32.gmra.mrb[0].mxu0 %v7106
  %v7547 = vpop.f32.mrb[0].mxu0
  %v7548 = vadd.f32 0.0, %v7547
  %v7549 = vpop.f32.mrb[0].mxu0
  %7550 = vmatprep.mubr.f32.mxu0 %v7286
  %7551 = vmatmul.mubr.f32.gmra.mrb[0].mxu0 %v7110
  %v7552 = vpop.f32.mrb[0].mxu0
  %v7553 = vadd.f32 0.0, %v7552
  %v7554 = vpop.f32.mrb[0].mxu0
  %7555 = vmatprep.mubr.f32.mxu0 %v7288
  %7556 = vmatmul.mubr.f32.gmra.mrb[0].mxu0 %v7114
  %v7557 = vpop.f32.mrb[0].mxu0
  %v7558 = vadd.f32 0.0, %v7557
  %v7559 = vpop.f32.mrb[0].mxu0
  %7560 = vmatprep.mubr.f32.mxu0 %v7290
  %7561 = vmatmul.mubr.f32.gmra.mrb[0].mxu0 %v7118
  %v7562 = vpop.f32.mrb[0].mxu0
  %v7563 = vadd.f32 0.0, %v7562
  %v7564 = vpop.f32.mrb[0].mxu0
  %7565 = vmatprep.mubr.f32.mxu0 %v7292
  %7566 = vmatmul.mubr.f32.gmra.mrb[0].mxu0 %v7122
  %v7567 = vpop.f32.mrb[0].mxu0
  %v7568 = vadd.f32 0.0, %v7567
  %v7569 = vpop.f32.mrb[0].mxu0
  %7570 = vmatprep.mubr.f32.mxu0 %v7294
  %7571 = vmatmul.mubr.f32.gmra.mrb[0].mxu0 %v7126
  %v7572 = vpop.f32.mrb[0].mxu0
  %v7573 = vadd.f32 0.0, %v7572
  %v7574 = vpop.f32.mrb[0].mxu0
  %7575 = vmatprep.mubr.f32.mxu0 %v7296
  %7576 = vmatmul.mubr.f32.gmra.mrb[0].mxu0 %v7130
  %v7577 = vpop.f32.mrb[0].mxu0
  %v7578 = vadd.f32 0.0, %v7577
  %v7579 = vpop.f32.mrb[0].mxu0
  %7580 = vmatprep.mubr.f32.mxu0 %v7298
  %7581 = vmatmul.mubr.f32.gmra.mrb[0].mxu0 %v7134
  %v7582 = vpop.f32.mrb[0].mxu0
  %v7583 = vadd.f32 0.0, %v7582
  %v7584 = vpop.f32.mrb[0].mxu0
  %7585 = vmatprep.mubr.f32.mxu0 %v7300
  %7586 = vmatmul.mubr.f32.gmra.mrb[0].mxu0 %v7138
  %v7587 = vpop.f32.mrb[0].mxu0
  %v7588 = vadd.f32 0.0, %v7587
  %v7589 = vpop.f32.mrb[0].mxu0
  %7590 = vmatprep.mubr.f32.mxu0 %v7302
  %7591 = vmatmul.mubr.f32.gmra.mrb[0].mxu0 %v7142
  %v7592 = vpop.f32.mrb[0].mxu0
  %v7593 = vadd.f32 0.0, %v7592
  %v7594 = vpop.f32.mrb[0].mxu0
  %7595 = vmatprep.mubr.f32.mxu0 %v7304
  %7596 = vmatmul.mubr.f32.gmra.mrb[0].mxu0 %v7146
  %v7597 = vpop.f32.mrb[0].mxu0
  %v7598 = vadd.f32 0.0, %v7597
  %v7599 = vpop.f32.mrb[0].mxu0
  %7600 = vmatprep.mubr.f32.mxu0 %v7306
  %7601 = vmatmul.mubr.f32.gmra.mrb[0].mxu0 %v7150
  %v7602 = vpop.f32.mrb[0].mxu0
  %v7603 = vadd.f32 0.0, %v7602
  %v7604 = vpop.f32.mrb[0].mxu0
  %7605 = vmatprep.mubr.f32.mxu0 %v7308
  %7606 = vmatmul.mubr.f32.gmra.mrb[0].mxu0 %v7154
  %v7607 = vpop.f32.mrb[0].mxu0
  %v7608 = vadd.f32 0.0, %v7607
  %v7609 = vpop.f32.mrb[0].mxu0
  %7610 = vmatprep.mubr.f32.mxu0 %v7310
  %7611 = vmatmul.mubr.f32.gmra.mrb[0].mxu0 %v7158
  %v7612 = vpop.f32.mrb[0].mxu0
  %v7613 = vadd.f32 0.0, %v7612
  %v7614 = vpop.f32.mrb[0].mxu0
  %7615 = vmatprep.mubr.f32.mxu0 %v7312
  %7616 = vmatmul.mubr.f32.gmra.mrb[0].mxu0 %v7162
  %v7617 = vpop.f32.mrb[0].mxu0
  %v7618 = vadd.f32 0.0, %v7617
  %v7619 = vpop.f32.mrb[0].mxu0
  %7620 = vmatprep.mubr.f32.mxu0 %v7314
  %7621 = vmatmul.mubr.f32.gmra.mrb[0].mxu0 %v7166
  %v7622 = vpop.f32.mrb[0].mxu0
  %v7623 = vadd.f32 0.0, %v7622
  %v7624 = vpop.f32.mrb[0].mxu0
  %7625 = vdwg.mxu0
  %v7626 = vadd.f32 %v6893, %v7383
  %v7627 = vadd.f32 %v6894, %v7388
  %v7628 = vadd.f32 %v6895, %v7393
  %v7629 = vadd.f32 %v6896, %v7398
  %v7630 = vadd.f32 %v6897, %v7403
  %v7631 = vadd.f32 %v6898, %v7408
  %v7632 = vadd.f32 %v6899, %v7413
  %v7633 = vadd.f32 %v6900, %v7418
  %v7634 = vadd.f32 %v6901, %v7423
  %v7635 = vadd.f32 %v6902, %v7428
  %v7636 = vadd.f32 %v6903, %v7433
  %v7637 = vadd.f32 %v6904, %v7438
  %v7638 = vadd.f32 %v6905, %v7443
  %v7639 = vadd.f32 %v6906, %v7448
  %v7640 = vadd.f32 %v6907, %v7453
  %v7641 = vadd.f32 %v6908, %v7458
  %v7642 = vadd.f32 %v6909, %v7463
  %v7643 = vadd.f32 %v6910, %v7468
  %v7644 = vadd.f32 %v6911, %v7473
  %v7645 = vadd.f32 %v6912, %v7478
  %v7646 = vadd.f32 %v6913, %v7483
  %v7647 = vadd.f32 %v6914, %v7488
  %v7648 = vadd.f32 %v6915, %v7493
  %v7649 = vadd.f32 %v6916, %v7498
  %v7650 = vadd.f32 %v6917, %v7503
  %v7651 = vadd.f32 %v6918, %v7508
  %v7652 = vadd.f32 %v6919, %v7513
  %v7653 = vadd.f32 %v6920, %v7518
  %v7654 = vadd.f32 %v6921, %v7523
  %v7655 = vadd.f32 %v6922, %v7528
  %v7656 = vadd.f32 %v6923, %v7533
  %v7657 = vadd.f32 %v6924, %v7538
  %v7658 = vadd.f32 %v6925, %v7543
  %v7659 = vadd.f32 %v6926, %v7548
  %v7660 = vadd.f32 %v6927, %v7553
  %v7661 = vadd.f32 %v6928, %v7558
  %v7662 = vadd.f32 %v6929, %v7563
  %v7663 = vadd.f32 %v6930, %v7568
  %v7664 = vadd.f32 %v6931, %v7573
  %v7665 = vadd.f32 %v6932, %v7578
  %v7666 = vadd.f32 %v6933, %v7583
  %v7667 = vadd.f32 %v6934, %v7588
  %v7668 = vadd.f32 %v6935, %v7593
  %v7669 = vadd.f32 %v6936, %v7598
  %v7670 = vadd.f32 %v6937, %v7603
  %v7671 = vadd.f32 %v6938, %v7608
  %v7672 = vadd.f32 %v6939, %v7613
  %v7673 = vadd.f32 %v6940, %v7618
  %v7674 = vadd.f32 %v6941, %v7623
  %v7675 = vld [vmem:[%s6] sm:$0x1]
  %v7677 = vlaneseq
  %v7678 = vshrl.u32 %v7677, 7
  %v7679 = vsub.s32 0, %v7678
  %v7680 = vrot.slane %v7675, %v7679
  %v7682 = vadd.f32 %v7626, %v7680
  %v7683 = vadd.f32 %v7627, %v7680
  %v7684 = vadd.f32 %v7628, %v7680
  %v7685 = vadd.f32 %v7629, %v7680
  %v7686 = vadd.f32 %v7630, %v7680
  %v7687 = vadd.f32 %v7631, %v7680
  %v7688 = vadd.f32 %v7632, %v7680
  %v7689 = vadd.f32 %v7633, %v7680
  %v7690 = vadd.f32 %v7634, %v7680
  %v7691 = vadd.f32 %v7635, %v7680
  %v7692 = vadd.f32 %v7636, %v7680
  %v7693 = vadd.f32 %v7637, %v7680
  %v7694 = vadd.f32 %v7638, %v7680
  %v7695 = vadd.f32 %v7639, %v7680
  %v7696 = vadd.f32 %v7640, %v7680
  %v7697 = vadd.f32 %v7641, %v7680
  %v7698 = vadd.f32 %v7642, %v7680
  %v7699 = vadd.f32 %v7643, %v7680
  %v7700 = vadd.f32 %v7644, %v7680
  %v7701 = vadd.f32 %v7645, %v7680
  %v7702 = vadd.f32 %v7646, %v7680
  %v7703 = vadd.f32 %v7647, %v7680
  %v7704 = vadd.f32 %v7648, %v7680
  %v7705 = vadd.f32 %v7649, %v7680
  %v7706 = vadd.f32 %v7650, %v7680
  %v7707 = vadd.f32 %v7651, %v7680
  %v7708 = vadd.f32 %v7652, %v7680
  %v7709 = vadd.f32 %v7653, %v7680
  %v7710 = vadd.f32 %v7654, %v7680
  %v7711 = vadd.f32 %v7655, %v7680
  %v7712 = vadd.f32 %v7656, %v7680
  %v7713 = vadd.f32 %v7657, %v7680
  %v7714 = vadd.f32 %v7658, %v7680
  %v7715 = vadd.f32 %v7659, %v7680
  %v7716 = vadd.f32 %v7660, %v7680
  %v7717 = vadd.f32 %v7661, %v7680
  %v7718 = vadd.f32 %v7662, %v7680
  %v7719 = vadd.f32 %v7663, %v7680
  %v7720 = vadd.f32 %v7664, %v7680
  %v7721 = vadd.f32 %v7665, %v7680
  %v7722 = vadd.f32 %v7666, %v7680
  %v7723 = vadd.f32 %v7667, %v7680
  %v7724 = vadd.f32 %v7668, %v7680
  %v7725 = vadd.f32 %v7669, %v7680
  %v7726 = vadd.f32 %v7670, %v7680
  %v7727 = vadd.f32 %v7671, %v7680
  %v7728 = vadd.f32 %v7672, %v7680
  %v7729 = vadd.f32 %v7673, %v7680
  %v7730 = vadd.f32 %v7674, %v7680
  %v7731 = vmax.f32 %v7682, 0.0
  %v7732 = vmax.f32 %v7683, 0.0
  %v7733 = vmax.f32 %v7684, 0.0
  %v7734 = vmax.f32 %v7685, 0.0
  %v7735 = vmax.f32 %v7686, 0.0
  %v7736 = vmax.f32 %v7687, 0.0
  %v7737 = vmax.f32 %v7688, 0.0
  %v7738 = vmax.f32 %v7689, 0.0
  %v7739 = vmax.f32 %v7690, 0.0
  %v7740 = vmax.f32 %v7691, 0.0
  %v7741 = vmax.f32 %v7692, 0.0
  %v7742 = vmax.f32 %v7693, 0.0
  %v7743 = vmax.f32 %v7694, 0.0
  %v7744 = vmax.f32 %v7695, 0.0
  %v7745 = vmax.f32 %v7696, 0.0
  %v7746 = vmax.f32 %v7697, 0.0
  %v7747 = vmax.f32 %v7698, 0.0
  %v7748 = vmax.f32 %v7699, 0.0
  %v7749 = vmax.f32 %v7700, 0.0
  %v7750 = vmax.f32 %v7701, 0.0
  %v7751 = vmax.f32 %v7702, 0.0
  %v7752 = vmax.f32 %v7703, 0.0
  %v7753 = vmax.f32 %v7704, 0.0
  %v7754 = vmax.f32 %v7705, 0.0
  %v7755 = vmax.f32 %v7706, 0.0
  %v7756 = vmax.f32 %v7707, 0.0
  %v7757 = vmax.f32 %v7708, 0.0
  %v7758 = vmax.f32 %v7709, 0.0
  %v7759 = vmax.f32 %v7710, 0.0
  %v7760 = vmax.f32 %v7711, 0.0
  %v7761 = vmax.f32 %v7712, 0.0
  %v7762 = vmax.f32 %v7713, 0.0
  %v7763 = vmax.f32 %v7714, 0.0
  %v7764 = vmax.f32 %v7715, 0.0
  %v7765 = vmax.f32 %v7716, 0.0
  %v7766 = vmax.f32 %v7717, 0.0
  %v7767 = vmax.f32 %v7718, 0.0
  %v7768 = vmax.f32 %v7719, 0.0
  %v7769 = vmax.f32 %v7720, 0.0
  %v7770 = vmax.f32 %v7721, 0.0
  %v7771 = vmax.f32 %v7722, 0.0
  %v7772 = vmax.f32 %v7723, 0.0
  %v7773 = vmax.f32 %v7724, 0.0
  %v7774 = vmax.f32 %v7725, 0.0
  %v7775 = vmax.f32 %v7726, 0.0
  %v7776 = vmax.f32 %v7727, 0.0
  %v7777 = vmax.f32 %v7728, 0.0
  %v7778 = vmax.f32 %v7729, 0.0
  %v7779 = vmax.f32 %v7730, 0.0
  %v7780 = vld [vmem:[%s7] sm:$0x1]
  %v7782 = vlaneseq
  %v7783 = vshrl.u32 %v7782, 7
  %v7784 = vsub.s32 0, %v7783
  %v7785 = vrot.slane %v7780, %v7784
  %v7787 = vmul.f32 %v7731, %v7785
  %v7788 = vmul.f32 %v7732, %v7785
  %v7789 = vmul.f32 %v7733, %v7785
  %v7790 = vmul.f32 %v7734, %v7785
  %v7791 = vmul.f32 %v7735, %v7785
  %v7792 = vmul.f32 %v7736, %v7785
  %v7793 = vmul.f32 %v7737, %v7785
  %v7794 = vmul.f32 %v7738, %v7785
  %v7795 = vmul.f32 %v7739, %v7785
  %v7796 = vmul.f32 %v7740, %v7785
  %v7797 = vmul.f32 %v7741, %v7785
  %v7798 = vmul.f32 %v7742, %v7785
  %v7799 = vmul.f32 %v7743, %v7785
  %v7800 = vmul.f32 %v7744, %v7785
  %v7801 = vmul.f32 %v7745, %v7785
  %v7802 = vmul.f32 %v7746, %v7785
  %v7803 = vmul.f32 %v7747, %v7785
  %v7804 = vmul.f32 %v7748, %v7785
  %v7805 = vmul.f32 %v7749, %v7785
  %v7806 = vmul.f32 %v7750, %v7785
  %v7807 = vmul.f32 %v7751, %v7785
  %v7808 = vmul.f32 %v7752, %v7785
  %v7809 = vmul.f32 %v7753, %v7785
  %v7810 = vmul.f32 %v7754, %v7785
  %v7811 = vmul.f32 %v7755, %v7785
  %v7812 = vmul.f32 %v7756, %v7785
  %v7813 = vmul.f32 %v7757, %v7785
  %v7814 = vmul.f32 %v7758, %v7785
  %v7815 = vmul.f32 %v7759, %v7785
  %v7816 = vmul.f32 %v7760, %v7785
  %v7817 = vmul.f32 %v7761, %v7785
  %v7818 = vmul.f32 %v7762, %v7785
  %v7819 = vmul.f32 %v7763, %v7785
  %v7820 = vmul.f32 %v7764, %v7785
  %v7821 = vmul.f32 %v7765, %v7785
  %v7822 = vmul.f32 %v7766, %v7785
  %v7823 = vmul.f32 %v7767, %v7785
  %v7824 = vmul.f32 %v7768, %v7785
  %v7825 = vmul.f32 %v7769, %v7785
  %v7826 = vmul.f32 %v7770, %v7785
  %v7827 = vmul.f32 %v7771, %v7785
  %v7828 = vmul.f32 %v7772, %v7785
  %v7829 = vmul.f32 %v7773, %v7785
  %v7830 = vmul.f32 %v7774, %v7785
  %v7831 = vmul.f32 %v7775, %v7785
  %v7832 = vmul.f32 %v7776, %v7785
  %v7833 = vmul.f32 %v7777, %v7785
  %v7834 = vmul.f32 %v7778, %v7785
  %v7835 = vmul.f32 %v7779, %v7785
  %v7836 = vld [vmem:[%s8] sm:$0x1]
  %v7838 = vlaneseq
  %v7839 = vshrl.u32 %v7838, 7
  %v7840 = vsub.s32 0, %v7839
  %v7841 = vrot.slane %v7836, %v7840
  %v7843 = vadd.f32 %v7787, %v7841
  %v7844 = vadd.f32 %v7788, %v7841
  %v7845 = vadd.f32 %v7789, %v7841
  %v7846 = vadd.f32 %v7790, %v7841
  %v7847 = vadd.f32 %v7791, %v7841
  %v7848 = vadd.f32 %v7792, %v7841
  %v7849 = vadd.f32 %v7793, %v7841
  %v7850 = vadd.f32 %v7794, %v7841
  %v7851 = vadd.f32 %v7795, %v7841
  %v7852 = vadd.f32 %v7796, %v7841
  %v7853 = vadd.f32 %v7797, %v7841
  %v7854 = vadd.f32 %v7798, %v7841
  %v7855 = vadd.f32 %v7799, %v7841
  %v7856 = vadd.f32 %v7800, %v7841
  %v7857 = vadd.f32 %v7801, %v7841
  %v7858 = vadd.f32 %v7802, %v7841
  %v7859 = vadd.f32 %v7803, %v7841
  %v7860 = vadd.f32 %v7804, %v7841
  %v7861 = vadd.f32 %v7805, %v7841
  %v7862 = vadd.f32 %v7806, %v7841
  %v7863 = vadd.f32 %v7807, %v7841
  %v7864 = vadd.f32 %v7808, %v7841
  %v7865 = vadd.f32 %v7809, %v7841
  %v7866 = vadd.f32 %v7810, %v7841
  %v7867 = vadd.f32 %v7811, %v7841
  %v7868 = vadd.f32 %v7812, %v7841
  %v7869 = vadd.f32 %v7813, %v7841
  %v7870 = vadd.f32 %v7814, %v7841
  %v7871 = vadd.f32 %v7815, %v7841
  %v7872 = vadd.f32 %v7816, %v7841
  %v7873 = vadd.f32 %v7817, %v7841
  %v7874 = vadd.f32 %v7818, %v7841
  %v7875 = vadd.f32 %v7819, %v7841
  %v7876 = vadd.f32 %v7820, %v7841
  %v7877 = vadd.f32 %v7821, %v7841
  %v7878 = vadd.f32 %v7822, %v7841
  %v7879 = vadd.f32 %v7823, %v7841
  %v7880 = vadd.f32 %v7824, %v7841
  %v7881 = vadd.f32 %v7825, %v7841
  %v7882 = vadd.f32 %v7826, %v7841
  %v7883 = vadd.f32 %v7827, %v7841
  %v7884 = vadd.f32 %v7828, %v7841
  %v7885 = vadd.f32 %v7829, %v7841
  %v7886 = vadd.f32 %v7830, %v7841
  %v7887 = vadd.f32 %v7831, %v7841
  %v7888 = vadd.f32 %v7832, %v7841
  %v7889 = vadd.f32 %v7833, %v7841
  %v7890 = vadd.f32 %v7834, %v7841
  %v7891 = vadd.f32 %v7835, %v7841
  %vm7892 = vcmask 162816
  %7893 = vst.msk [vmem:[%s9] sm:$0xff] %vm7892, %v7843
  %7894 = vst.msk [vmem:[%s9 + $0x8] sm:$0xff] %vm7892, %v7844
  %7895 = vst.msk [vmem:[%s9 + $0x10] sm:$0xff] %vm7892, %v7845
  %7896 = vst.msk [vmem:[%s9 + $0x18] sm:$0xff] %vm7892, %v7846
  %7897 = vst.msk [vmem:[%s9 + $0x20] sm:$0xff] %vm7892, %v7847
  %7898 = vst.msk [vmem:[%s9 + $0x28] sm:$0xff] %vm7892, %v7848
  %7899 = vst.msk [vmem:[%s9 + $0x30] sm:$0xff] %vm7892, %v7849
  %7900 = vst.msk [vmem:[%s9 + $0x38] sm:$0xff] %vm7892, %v7850
  %7901 = vst.msk [vmem:[%s9 + $0x40] sm:$0xff] %vm7892, %v7851
  %7902 = vst.msk [vmem:[%s9 + $0x48] sm:$0xff] %vm7892, %v7852
  %7903 = vst.msk [vmem:[%s9 + $0x50] sm:$0xff] %vm7892, %v7853
  %7904 = vst.msk [vmem:[%s9 + $0x58] sm:$0xff] %vm7892, %v7854
  %7905 = vst.msk [vmem:[%s9 + $0x60] sm:$0xff] %vm7892, %v7855
  %7906 = vst.msk [vmem:[%s9 + $0x68] sm:$0xff] %vm7892, %v7856
  %7907 = vst.msk [vmem:[%s9 + $0x70] sm:$0xff] %vm7892, %v7857
  %7908 = vst.msk [vmem:[%s9 + $0x78] sm:$0xff] %vm7892, %v7858
  %7909 = vst.msk [vmem:[%s9 + $0x80] sm:$0xff] %vm7892, %v7859
  %7910 = vst.msk [vmem:[%s9 + $0x88] sm:$0xff] %vm7892, %v7860
  %7911 = vst.msk [vmem:[%s9 + $0x90] sm:$0xff] %vm7892, %v7861
  %7912 = vst.msk [vmem:[%s9 + $0x98] sm:$0xff] %vm7892, %v7862
  %7913 = vst.msk [vmem:[%s9 + $0xa0] sm:$0xff] %vm7892, %v7863
  %7914 = vst.msk [vmem:[%s9 + $0xa8] sm:$0xff] %vm7892, %v7864
  %7915 = vst.msk [vmem:[%s9 + $0xb0] sm:$0xff] %vm7892, %v7865
  %7916 = vst.msk [vmem:[%s9 + $0xb8] sm:$0xff] %vm7892, %v7866
  %7917 = vst.msk [vmem:[%s9 + $0xc0] sm:$0xff] %vm7892, %v7867
  %7918 = vst.msk [vmem:[%s9 + $0xc8] sm:$0xff] %vm7892, %v7868
  %7919 = vst.msk [vmem:[%s9 + $0xd0] sm:$0xff] %vm7892, %v7869
  %7920 = vst.msk [vmem:[%s9 + $0xd8] sm:$0xff] %vm7892, %v7870
  %7921 = vst.msk [vmem:[%s9 + $0xe0] sm:$0xff] %vm7892, %v7871
  %7922 = vst.msk [vmem:[%s9 + $0xe8] sm:$0xff] %vm7892, %v7872
  %7923 = vst.msk [vmem:[%s9 + $0xf0] sm:$0xff] %vm7892, %v7873
  %7924 = vst.msk [vmem:[%s9 + $0xf8] sm:$0xff] %vm7892, %v7874
  %7925 = vst.msk [vmem:[%s9 + $0x100] sm:$0xff] %vm7892, %v7875
  %7926 = vst.msk [vmem:[%s9 + $0x108] sm:$0xff] %vm7892, %v7876
  %7927 = vst.msk [vmem:[%s9 + $0x110] sm:$0xff] %vm7892, %v7877
  %7928 = vst.msk [vmem:[%s9 + $0x118] sm:$0xff] %vm7892, %v7878
  %7929 = vst.msk [vmem:[%s9 + $0x120] sm:$0xff] %vm7892, %v7879
  %7930 = vst.msk [vmem:[%s9 + $0x128] sm:$0xff] %vm7892, %v7880
  %7931 = vst.msk [vmem:[%s9 + $0x130] sm:$0xff] %vm7892, %v7881
  %7932 = vst.msk [vmem:[%s9 + $0x138] sm:$0xff] %vm7892, %v7882
  %7933 = vst.msk [vmem:[%s9 + $0x140] sm:$0xff] %vm7892, %v7883
  %7934 = vst.msk [vmem:[%s9 + $0x148] sm:$0xff] %vm7892, %v7884
  %7935 = vst.msk [vmem:[%s9 + $0x150] sm:$0xff] %vm7892, %v7885
  %7936 = vst.msk [vmem:[%s9 + $0x158] sm:$0xff] %vm7892, %v7886
  %7937 = vst.msk [vmem:[%s9 + $0x160] sm:$0xff] %vm7892, %v7887
  %7938 = vst.msk [vmem:[%s9 + $0x168] sm:$0xff] %vm7892, %v7888
  %7939 = vst.msk [vmem:[%s9 + $0x170] sm:$0xff] %vm7892, %v7889
  %7940 = vst.msk [vmem:[%s9 + $0x178] sm:$0xff] %vm7892, %v7890
  %7941 = vst.msk [vmem:[%s9 + $0x180] sm:$0xff] %vm7892, %v7891
  // Predicated region
  $region38: #{tiny_conv_forward.2} parent=0 // pred_check
    _
  $region39: #{tiny_conv_forward.2} parent=0 // pred_check_branch
    %7943 = sbr.rel (0) target = $region41
  $region40: #{tiny_conv_forward.2} parent=0 // pred_region
    _
  $region41: #{tiny_conv_forward.2} parent=0 // pred_fallthru
    _
  // Predicated region
  $region42: #{tiny_conv_forward.2} parent=0 // pred_check
    _
  $region43: #{tiny_conv_forward.2} parent=0 // pred_check_branch
    %7945 = sbr.rel (0) target = $region45
  $region44: #{tiny_conv_forward.2} parent=0 // pred_region
    _
  $region45: #{tiny_conv_forward.2} parent=0 // pred_fallthru
    _

</llo_original>
